<compile_context>
chip_gen: v7x
topology: tpu7x:2x2x1
jax: 0.10.0
libtpu: 0.0.40
codegen_flags: <defaults>
</compile_context>

<pallas_src>
import functools

import jax
import jax.numpy as jnp
from jax.experimental import pallas as pl
from jax.experimental.pallas import tpu as pltpu

LANE = 128          # lane width / channel padding quantum
PMID = 128          # p1_conv1 / p2_conv1 output channels (fixed by the module)

# bf16 matmul operands: the MXU headline rate on v5e/v6e/v7x.  Accumulation
# stays f32 via preferred_element_type; elementwise math stays f32.
MATMUL_DTYPE = jnp.bfloat16


def _round_up(x, m):
    return (x + m - 1) // m * m


# ----------------------------------------------------------------------------
# In-kernel helpers (traced inside the Pallas kernel; flattened (H*W, C) form)
# ----------------------------------------------------------------------------

def _positions(R, C, W):
    """(h, w) coordinate planes for a flattened (R=H*W, C) activation."""
    row = jax.lax.broadcasted_iota(jnp.int32, (R, C), 0)
    if (W & (W - 1)) == 0:                    # power of two: shifts/ands only
        return row >> (W.bit_length() - 1), row & (W - 1)
    return row // W, row % W


def _shift_rows(a, k, valid):
    """out[i] = a[i + k] where `valid`, else 0.

    Sublane rotation on the XLU (pltpu.roll) + a VPU select: no misaligned
    sublane-slice copies, no -inf/zero pad + concat materializations."""
    R = a.shape[0]
    rolled = pltpu.roll(a, (R - k) % R, axis=0)
    return jnp.where(valid, rolled, 0.0)


def _im2col3x3_flat(x2d, h_pos, w_pos, H, W):
    """(H*W, C) -> (H*W, 9*C) patches of a 3x3 'SAME' conv (zero border).

    dx (column) shifts: roll by +-1 row + w-border mask.
    dy (row) shifts: roll by +-W rows (vreg-aligned when W % 8 == 0) + h mask.
    Piece order is (ky, kx)-major, matching the (3,3,Cin,Cout) weight reshape."""
    left = _shift_rows(x2d, -1, w_pos >= 1)          # x[h, w-1]
    right = _shift_rows(x2d, 1, w_pos <= W - 2)      # x[h, w+1]
    by_dx = (left, x2d, right)
    row_ok = {-1: h_pos >= 1, 1: h_pos <= H - 2}
    pieces = []
    for dy in (-1, 0, 1):
        for a in by_dx:
            pieces.append(a if dy == 0 else _shift_rows(a, dy * W, row_ok[dy]))
    return jnp.concatenate(pieces, axis=1)


def _suffix_max_flat(y, pos, seg, stride):
    """In-segment suffix max along axis 0 of (H*W, C) via log-step doubling.

    pos: position within segment, seg: segment length, stride: rows between
    consecutive segment elements (TopPool: seg=H, stride=W; LeftPool: seg=W,
    stride=1).  Requires y >= 0 (post-ReLU) so the out-of-range pad value 0 is
    a no-op under max."""
    d = 1
    while d < seg:
        y = jnp.maximum(y, _shift_rows(y, d * stride, pos < seg - d))
        d *= 2
    return y


# ----------------------------------------------------------------------------
# Single fused kernel: the whole pool-block forward, per sample
# ----------------------------------------------------------------------------

def _pool_block_kernel(x_ref, w12_ref, b12_ref, pcw_ref, pcb_ref,
                       c2w_ref, c2b_ref, o_ref, *, H, W):
    x2d = x_ref[0]                                    # (H*W, Cin_pad) f32

    def mm(lhs, w_ref, b_ref):
        # BN scale pre-folded into weight columns -> only bias + ReLU on VPU.
        y = jax.lax.dot_general(
            lhs.astype(MATMUL_DTYPE), w_ref[...],
            dimension_numbers=(((1,), (0,)), ((), ())),
            preferred_element_type=jnp.float32)
        return jnp.maximum(y + b_ref[...], 0.0)

    pos_cache = {}

    def coords(C):
        if C not in pos_cache:
            pos_cache[C] = _positions(x2d.shape[0], C, W)
        return pos_cache[C]

    # --- p1_conv1 || p2_conv1: ONE 256-wide MXU pass (K = 9*Cin_pad) ---------
    hx, wx = coords(x2d.shape[1])
    y12 = mm(_im2col3x3_flat(x2d, hx, wx, H, W), w12_ref, b12_ref)
    p1, p2 = y12[:, :PMID], y12[:, PMID:]

    # --- TopPool(p1) + LeftPool(p2): suffix max on the flattened view --------
    hp, wp = coords(PMID)
    pooled = (_suffix_max_flat(p1, hp, H, W)          # reverse cummax over H
              + _suffix_max_flat(p2, wp, W, 1))       # reverse cummax over W

    # --- p_conv1+p_bn1 fused with conv1+bn1: one matmul, K = 9*128+Cin_pad ---
    lhs = jnp.concatenate([_im2col3x3_flat(pooled, hp, wp, H, W), x2d], axis=1)
    r = mm(lhs, pcw_ref, pcb_ref)                     # relu(p_bn1 + bn1)

    # --- conv2 (3x3 + BN + ReLU) ---------------------------------------------
    hr, wr = coords(r.shape[1])
    out = mm(_im2col3x3_flat(r, hr, wr, H, W), c2w_ref, c2b_ref)
    o_ref[0] = out.astype(o_ref.dtype)


def pool_block(x, w12, b12, pc_w, pc_b, c2_w, c2_b, *, H, W):
    N, HW, Cin = x.shape
    Cout = c2_w.shape[1]
    kernel = functools.partial(_pool_block_kernel, H=H, W=W)

    def full(a):
        return pl.BlockSpec(a.shape, lambda n: (0,) * a.ndim)

    return pl.pallas_call(
        kernel,
        out_shape=jax.ShapeDtypeStruct((N, HW, Cout), jnp.float32),
        grid_spec=pltpu.PrefetchScalarGridSpec(
            num_scalar_prefetch=0,
            grid=(N,),
            in_specs=[pl.BlockSpec((1, HW, Cin), lambda n: (n, 0, 0)),
                      full(w12), full(b12), full(pc_w), full(pc_b),
                      full(c2_w), full(c2_b)],
            out_specs=pl.BlockSpec((1, HW, Cout), lambda n: (n, 0, 0)),
        ),
        compiler_params=pltpu.CompilerParams(
            dimension_semantics=("parallel",)),
    )(x, w12, b12, pc_w, pc_b, c2_w, c2_b)


# ----------------------------------------------------------------------------
# Parameters (deterministic, synthetic), packing, and forward pass
# ----------------------------------------------------------------------------

def _bn_fold(gamma, beta, mean, var, eps=1e-5):
    scale = gamma / jnp.sqrt(var + eps)
    bias = beta - mean * scale
    return scale, bias


def _bn_default(c):
    # PyTorch BatchNorm2d default init: gamma=1, beta=0, mean=0, var=1
    return _bn_fold(jnp.ones((c,), jnp.float32), jnp.zeros((c,), jnp.float32),
                    jnp.zeros((c,), jnp.float32), jnp.ones((c,), jnp.float32))


def init_pool_params(key, dim):
    ks = jax.random.split(key, 5)
    s128, b128 = _bn_default(PMID)
    sdim, bdim = _bn_default(dim)
    return dict(
        # p1_conv1 / p2_conv1: 3x3, dim -> 128, BN + ReLU
        p1_w=0.05 * jax.random.normal(ks[0], (3, 3, dim, PMID), jnp.float32),
        p1_scale=s128, p1_bias=b128,
        p2_w=0.05 * jax.random.normal(ks[1], (3, 3, dim, PMID), jnp.float32),
        p2_scale=s128, p2_bias=b128,
        # p_conv1 + p_bn1: 3x3, 128 -> dim, BN (no ReLU here)
        p_w=0.05 * jax.random.normal(ks[2], (3, 3, PMID, dim), jnp.float32),
        p_scale=sdim, p_bias=bdim,
        # conv1 + bn1: 1x1, dim -> dim, BN
        c1_w=0.05 * jax.random.normal(ks[3], (dim, dim), jnp.float32),
        c1_scale=sdim, c1_bias=bdim,
        # conv2: 3x3, dim -> dim, BN + ReLU
        c2_w=0.05 * jax.random.normal(ks[4], (3, 3, dim, dim), jnp.float32),
        c2_scale=sdim, c2_bias=bdim,
    )


def pack_pool_params(p, dim):
    """Fold BN scales into weight columns, pad channels to multiples of 128,
    reshape 3x3 weights HWIO -> (9*Cin_p, Cout_p) to match the in-kernel
    im2col order, concatenate fused weight groups, and cast weights to bf16."""

    def fold3(w, scale):                              # (3,3,ci,co) * scale[co]
        w = w * scale
        ci, co = w.shape[2], w.shape[3]
        cip, cop = _round_up(ci, LANE), _round_up(co, LANE)
        w = jnp.pad(w, ((0, 0), (0, 0), (0, cip - ci), (0, cop - co)))
        return w.reshape(9 * cip, cop).astype(MATMUL_DTYPE)

    def fold1(w, scale):                              # (ci, co) * scale[co]
        w = w * scale
        ci, co = w.shape
        w = jnp.pad(w, ((0, _round_up(ci, LANE) - ci),
                        (0, _round_up(co, LANE) - co)))
        return w.astype(MATMUL_DTYPE)

    def vec(b):
        c = b.shape[0]
        return jnp.pad(b, (0, _round_up(c, LANE) - c)).reshape(1, -1).astype(jnp.float32)

    w12 = jnp.concatenate([fold3(p["p1_w"], p["p1_scale"]),
                           fold3(p["p2_w"], p["p2_scale"])], axis=1)
    b12 = jnp.concatenate([vec(p["p1_bias"]), vec(p["p2_bias"])], axis=1)
    pc_w = jnp.concatenate([fold3(p["p_w"], p["p_scale"]),
                            fold1(p["c1_w"], p["c1_scale"])], axis=0)
    pc_b = vec(p["p_bias"] + p["c1_bias"])
    return dict(w12=w12, b12=b12, pc_w=pc_w, pc_b=pc_b,
                c2_w=fold3(p["c2_w"], p["c2_scale"]), c2_b=vec(p["c2_bias"]))


@functools.partial(jax.jit, static_argnames=("dim",))
def pool_forward(packed, x_nchw, *, dim):
    N, _, H, W = x_nchw.shape
    cp = _round_up(dim, LANE)
    x = jnp.transpose(x_nchw, (0, 2, 3, 1))                      # NCHW -> NHWC
    x = jnp.pad(x, ((0, 0), (0, 0), (0, 0), (0, cp - dim)))      # lane-pad C
    x = x.reshape(N, H * W, cp)                                  # flatten pixels
    out = pool_block(x, packed["w12"], packed["b12"],
                     packed["pc_w"], packed["pc_b"],
                     packed["c2_w"], packed["c2_b"], H=H, W=W)
    out = out.reshape(N, H, W, cp)[..., :dim]                    # drop lane pad
    return jnp.transpose(out, (0, 3, 1, 2))                      # NHWC -> NCHW


# Pure-JAX f32 reference for correctness checking
def pool_forward_ref(p, x_nchw):
    x = jnp.transpose(x_nchw, (0, 2, 3, 1))

    def conv3(xx, w, s, b, relu):
        y = jax.lax.conv_general_dilated(
            xx, w, (1, 1), "SAME",
            dimension_numbers=("NHWC", "HWIO", "NHWC"))
        y = y * s + b
        return jnp.maximum(y, 0.0) if relu else y

    p1 = conv3(x, p["p1_w"], p["p1_scale"], p["p1_bias"], True)
    p2 = conv3(x, p["p2_w"], p["p2_scale"], p["p2_bias"], True)
    top = jax.lax.cummax(p1, axis=1, reverse=True)
    left = jax.lax.cummax(p2, axis=2, reverse=True)
    pbn1 = conv3(top + left, p["p_w"], p["p_scale"], p["p_bias"], False)
    bn1 = jnp.einsum("nhwc,co->nhwo", x, p["c1_w"]) * p["c1_scale"] + p["c1_bias"]
    r = jnp.maximum(pbn1 + bn1, 0.0)
    out = conv3(r, p["c2_w"], p["c2_scale"], p["c2_bias"], True)
    return jnp.transpose(out, (0, 3, 1, 2))


if __name__ == "__main__":
    key = jax.random.PRNGKey(0)
    k_x, k_p = jax.random.split(key)

    N, dim, H, W = 2, 4, 16, 16
    x = jax.random.normal(k_x, (N, dim, H, W), jnp.float32)
    params = init_pool_params(k_p, dim)
    packed = pack_pool_params(params, dim)

    out = pool_forward(packed, x, dim=dim)
    out = jax.block_until_ready(out)
    assert out.shape == (N, dim, H, W) and out.dtype == jnp.float32

    ref = jax.block_until_ready(pool_forward_ref(params, x))
    # bf16 matmul operands -> relaxed tolerance vs the f32 reference.
    assert jnp.allclose(out, ref, rtol=2e-2, atol=2e-2), "mismatch vs. JAX reference"

    print("KERNEL_OK")
</pallas_src>

<mosaic_0001>
module attributes {stable_mosaic.version = 11 : i64} {
  func.func @_pool_block_kernel(%arg0: i32, %arg1: memref<1x256x128xf32, #tpu.memory_space<vmem>>, %arg2: memref<1152x256xbf16, #tpu.memory_space<vmem>>, %arg3: memref<1x256xf32, #tpu.memory_space<vmem>>, %arg4: memref<1280x128xbf16, #tpu.memory_space<vmem>>, %arg5: memref<1x128xf32, #tpu.memory_space<vmem>>, %arg6: memref<1152x128xbf16, #tpu.memory_space<vmem>>, %arg7: memref<1x128xf32, #tpu.memory_space<vmem>>, %arg8: memref<1x256x128xf32, #tpu.memory_space<vmem>>) attributes {dimension_semantics = [#tpu.dimension_semantics<parallel>], iteration_bounds = array<i64: 2>, scalar_prefetch = 0 : i64, scratch_operands = 0 : i64, tpu.core_type = #tpu.core_type<tc>, window_params = [{transform_indices = @transform_0, window_bounds = array<i64: 1, 256, 128>}, {pipeline_mode = #tpu.pipeline_mode<synchronous>, transform_indices = @transform_1, window_bounds = array<i64: 1152, 256>}, {pipeline_mode = #tpu.pipeline_mode<synchronous>, transform_indices = @transform_2, window_bounds = array<i64: 1, 256>}, {pipeline_mode = #tpu.pipeline_mode<synchronous>, transform_indices = @transform_3, window_bounds = array<i64: 1280, 128>}, {pipeline_mode = #tpu.pipeline_mode<synchronous>, transform_indices = @transform_4, window_bounds = array<i64: 1, 128>}, {pipeline_mode = #tpu.pipeline_mode<synchronous>, transform_indices = @transform_5, window_bounds = array<i64: 1152, 128>}, {pipeline_mode = #tpu.pipeline_mode<synchronous>, transform_indices = @transform_6, window_bounds = array<i64: 1, 128>}, {transform_indices = @transform_7, window_bounds = array<i64: 1, 256, 128>}]} {
    %c0 = arith.constant 0 : index
    %c0_0 = arith.constant 0 : index
    %c0_1 = arith.constant 0 : index
    %0 = vector.load %arg1[%c0, %c0_0, %c0_1] : memref<1x256x128xf32, #tpu.memory_space<vmem>>, vector<1x256x128xf32>
    %1 = vector.shape_cast %0 : vector<1x256x128xf32> to vector<256x128xf32>
    %2 = tpu.iota {dimensions = array<i32: 0>} : vector<256x128xi32>
    %c4_i32 = arith.constant 4 : i32
    %3 = vector.broadcast %c4_i32 : i32 to vector<256x128xi32>
    %4 = arith.shrsi %2, %3 : vector<256x128xi32>
    %c15_i32 = arith.constant 15 : i32
    %5 = vector.broadcast %c15_i32 : i32 to vector<256x128xi32>
    %6 = arith.andi %2, %5 : vector<256x128xi32>
    %c1_i32 = arith.constant 1 : i32
    %7 = vector.broadcast %c1_i32 : i32 to vector<256x128xi32>
    %8 = arith.cmpi sge, %6, %7 : vector<256x128xi32>
    %c1_i32_2 = arith.constant 1 : i32
    %9 = tpu.dynamic_rotate %1 by %c1_i32_2 dim 0 : vector<256x128xf32>, i32 -> vector<256x128xf32>
    %cst = arith.constant 0.000000e+00 : f32
    %10 = vector.broadcast %cst : f32 to vector<256x128xf32>
    %11 = arith.select %8, %9, %10 : vector<256x128xi1>, vector<256x128xf32>
    %c14_i32 = arith.constant 14 : i32
    %12 = vector.broadcast %c14_i32 : i32 to vector<256x128xi32>
    %13 = arith.cmpi sle, %6, %12 : vector<256x128xi32>
    %c255_i32 = arith.constant 255 : i32
    %14 = tpu.dynamic_rotate %1 by %c255_i32 dim 0 : vector<256x128xf32>, i32 -> vector<256x128xf32>
    %cst_3 = arith.constant 0.000000e+00 : f32
    %15 = vector.broadcast %cst_3 : f32 to vector<256x128xf32>
    %16 = arith.select %13, %14, %15 : vector<256x128xi1>, vector<256x128xf32>
    %c1_i32_4 = arith.constant 1 : i32
    %17 = vector.broadcast %c1_i32_4 : i32 to vector<256x128xi32>
    %18 = arith.cmpi sge, %4, %17 : vector<256x128xi32>
    %c14_i32_5 = arith.constant 14 : i32
    %19 = vector.broadcast %c14_i32_5 : i32 to vector<256x128xi32>
    %20 = arith.cmpi sle, %4, %19 : vector<256x128xi32>
    %c16_i32 = arith.constant 16 : i32
    %21 = tpu.dynamic_rotate %11 by %c16_i32 dim 0 : vector<256x128xf32>, i32 -> vector<256x128xf32>
    %cst_6 = arith.constant 0.000000e+00 : f32
    %22 = vector.broadcast %cst_6 : f32 to vector<256x128xf32>
    %23 = arith.select %18, %21, %22 : vector<256x128xi1>, vector<256x128xf32>
    %c16_i32_7 = arith.constant 16 : i32
    %24 = tpu.dynamic_rotate %1 by %c16_i32_7 dim 0 : vector<256x128xf32>, i32 -> vector<256x128xf32>
    %cst_8 = arith.constant 0.000000e+00 : f32
    %25 = vector.broadcast %cst_8 : f32 to vector<256x128xf32>
    %26 = arith.select %18, %24, %25 : vector<256x128xi1>, vector<256x128xf32>
    %c16_i32_9 = arith.constant 16 : i32
    %27 = tpu.dynamic_rotate %16 by %c16_i32_9 dim 0 : vector<256x128xf32>, i32 -> vector<256x128xf32>
    %cst_10 = arith.constant 0.000000e+00 : f32
    %28 = vector.broadcast %cst_10 : f32 to vector<256x128xf32>
    %29 = arith.select %18, %27, %28 : vector<256x128xi1>, vector<256x128xf32>
    %c240_i32 = arith.constant 240 : i32
    %30 = tpu.dynamic_rotate %11 by %c240_i32 dim 0 : vector<256x128xf32>, i32 -> vector<256x128xf32>
    %cst_11 = arith.constant 0.000000e+00 : f32
    %31 = vector.broadcast %cst_11 : f32 to vector<256x128xf32>
    %32 = arith.select %20, %30, %31 : vector<256x128xi1>, vector<256x128xf32>
    %c240_i32_12 = arith.constant 240 : i32
    %33 = tpu.dynamic_rotate %1 by %c240_i32_12 dim 0 : vector<256x128xf32>, i32 -> vector<256x128xf32>
    %cst_13 = arith.constant 0.000000e+00 : f32
    %34 = vector.broadcast %cst_13 : f32 to vector<256x128xf32>
    %35 = arith.select %20, %33, %34 : vector<256x128xi1>, vector<256x128xf32>
    %c240_i32_14 = arith.constant 240 : i32
    %36 = tpu.dynamic_rotate %16 by %c240_i32_14 dim 0 : vector<256x128xf32>, i32 -> vector<256x128xf32>
    %cst_15 = arith.constant 0.000000e+00 : f32
    %37 = vector.broadcast %cst_15 : f32 to vector<256x128xf32>
    %38 = arith.select %20, %36, %37 : vector<256x128xi1>, vector<256x128xf32>
    %39 = tpu.concatenate %23, %26, %29, %11, %1, %16, %32, %35, %38 in 1 : vector<256x128xf32>, vector<256x128xf32>, vector<256x128xf32>, vector<256x128xf32>, vector<256x128xf32>, vector<256x128xf32>, vector<256x128xf32>, vector<256x128xf32>, vector<256x128xf32> -> vector<256x1152xf32>
    %40 = arith.truncf %39 : vector<256x1152xf32> to vector<256x1152xbf16>
    %c0_16 = arith.constant 0 : index
    %c0_17 = arith.constant 0 : index
    %41 = vector.load %arg2[%c0_16, %c0_17] : memref<1152x256xbf16, #tpu.memory_space<vmem>>, vector<1152x256xbf16>
    %cst_18 = arith.constant dense<0.000000e+00> : vector<256x256xf32>
    %42 = tpu.matmul %40, %41, %cst_18 {dimension_numbers = #tpu.dot_dimension_numbers<[1], [0], [0], [1], [0, 0, 1, 1], [], []>} : vector<256x1152xbf16>, vector<1152x256xbf16>, vector<256x256xf32> -> vector<256x256xf32>
    %c0_19 = arith.constant 0 : index
    %c0_20 = arith.constant 0 : index
    %43 = vector.load %arg3[%c0_19, %c0_20] : memref<1x256xf32, #tpu.memory_space<vmem>>, vector<1x256xf32>
    %44 = vector.broadcast %43 : vector<1x256xf32> to vector<256x256xf32>
    %45 = arith.addf %42, %44 : vector<256x256xf32>
    %cst_21 = arith.constant 0.000000e+00 : f32
    %46 = vector.broadcast %cst_21 : f32 to vector<256x256xf32>
    %47 = arith.maximumf %45, %46 : vector<256x256xf32>
    %48 = vector.extract_strided_slice %47 {offsets = [0, 0], sizes = [256, 128], strides = [1, 1]} : vector<256x256xf32> to vector<256x128xf32>
    %49 = vector.extract_strided_slice %47 {offsets = [0, 128], sizes = [256, 128], strides = [1, 1]} : vector<256x256xf32> to vector<256x128xf32>
    %c15_i32_22 = arith.constant 15 : i32
    %50 = vector.broadcast %c15_i32_22 : i32 to vector<256x128xi32>
    %51 = arith.cmpi slt, %4, %50 : vector<256x128xi32>
    %c240_i32_23 = arith.constant 240 : i32
    %52 = tpu.dynamic_rotate %48 by %c240_i32_23 dim 0 : vector<256x128xf32>, i32 -> vector<256x128xf32>
    %cst_24 = arith.constant 0.000000e+00 : f32
    %53 = vector.broadcast %cst_24 : f32 to vector<256x128xf32>
    %54 = arith.select %51, %52, %53 : vector<256x128xi1>, vector<256x128xf32>
    %55 = arith.maximumf %48, %54 : vector<256x128xf32>
    %c14_i32_25 = arith.constant 14 : i32
    %56 = vector.broadcast %c14_i32_25 : i32 to vector<256x128xi32>
    %57 = arith.cmpi slt, %4, %56 : vector<256x128xi32>
    %c224_i32 = arith.constant 224 : i32
    %58 = tpu.dynamic_rotate %55 by %c224_i32 dim 0 : vector<256x128xf32>, i32 -> vector<256x128xf32>
    %cst_26 = arith.constant 0.000000e+00 : f32
    %59 = vector.broadcast %cst_26 : f32 to vector<256x128xf32>
    %60 = arith.select %57, %58, %59 : vector<256x128xi1>, vector<256x128xf32>
    %61 = arith.maximumf %55, %60 : vector<256x128xf32>
    %c12_i32 = arith.constant 12 : i32
    %62 = vector.broadcast %c12_i32 : i32 to vector<256x128xi32>
    %63 = arith.cmpi slt, %4, %62 : vector<256x128xi32>
    %c192_i32 = arith.constant 192 : i32
    %64 = tpu.dynamic_rotate %61 by %c192_i32 dim 0 : vector<256x128xf32>, i32 -> vector<256x128xf32>
    %cst_27 = arith.constant 0.000000e+00 : f32
    %65 = vector.broadcast %cst_27 : f32 to vector<256x128xf32>
    %66 = arith.select %63, %64, %65 : vector<256x128xi1>, vector<256x128xf32>
    %67 = arith.maximumf %61, %66 : vector<256x128xf32>
    %c8_i32 = arith.constant 8 : i32
    %68 = vector.broadcast %c8_i32 : i32 to vector<256x128xi32>
    %69 = arith.cmpi slt, %4, %68 : vector<256x128xi32>
    %c128_i32 = arith.constant 128 : i32
    %70 = tpu.dynamic_rotate %67 by %c128_i32 dim 0 : vector<256x128xf32>, i32 -> vector<256x128xf32>
    %cst_28 = arith.constant 0.000000e+00 : f32
    %71 = vector.broadcast %cst_28 : f32 to vector<256x128xf32>
    %72 = arith.select %69, %70, %71 : vector<256x128xi1>, vector<256x128xf32>
    %73 = arith.maximumf %67, %72 : vector<256x128xf32>
    %c15_i32_29 = arith.constant 15 : i32
    %74 = vector.broadcast %c15_i32_29 : i32 to vector<256x128xi32>
    %75 = arith.cmpi slt, %6, %74 : vector<256x128xi32>
    %c255_i32_30 = arith.constant 255 : i32
    %76 = tpu.dynamic_rotate %49 by %c255_i32_30 dim 0 : vector<256x128xf32>, i32 -> vector<256x128xf32>
    %cst_31 = arith.constant 0.000000e+00 : f32
    %77 = vector.broadcast %cst_31 : f32 to vector<256x128xf32>
    %78 = arith.select %75, %76, %77 : vector<256x128xi1>, vector<256x128xf32>
    %79 = arith.maximumf %49, %78 : vector<256x128xf32>
    %c14_i32_32 = arith.constant 14 : i32
    %80 = vector.broadcast %c14_i32_32 : i32 to vector<256x128xi32>
    %81 = arith.cmpi slt, %6, %80 : vector<256x128xi32>
    %c254_i32 = arith.constant 254 : i32
    %82 = tpu.dynamic_rotate %79 by %c254_i32 dim 0 : vector<256x128xf32>, i32 -> vector<256x128xf32>
    %cst_33 = arith.constant 0.000000e+00 : f32
    %83 = vector.broadcast %cst_33 : f32 to vector<256x128xf32>
    %84 = arith.select %81, %82, %83 : vector<256x128xi1>, vector<256x128xf32>
    %85 = arith.maximumf %79, %84 : vector<256x128xf32>
    %c12_i32_34 = arith.constant 12 : i32
    %86 = vector.broadcast %c12_i32_34 : i32 to vector<256x128xi32>
    %87 = arith.cmpi slt, %6, %86 : vector<256x128xi32>
    %c252_i32 = arith.constant 252 : i32
    %88 = tpu.dynamic_rotate %85 by %c252_i32 dim 0 : vector<256x128xf32>, i32 -> vector<256x128xf32>
    %cst_35 = arith.constant 0.000000e+00 : f32
    %89 = vector.broadcast %cst_35 : f32 to vector<256x128xf32>
    %90 = arith.select %87, %88, %89 : vector<256x128xi1>, vector<256x128xf32>
    %91 = arith.maximumf %85, %90 : vector<256x128xf32>
    %c8_i32_36 = arith.constant 8 : i32
    %92 = vector.broadcast %c8_i32_36 : i32 to vector<256x128xi32>
    %93 = arith.cmpi slt, %6, %92 : vector<256x128xi32>
    %c248_i32 = arith.constant 248 : i32
    %94 = tpu.dynamic_rotate %91 by %c248_i32 dim 0 : vector<256x128xf32>, i32 -> vector<256x128xf32>
    %cst_37 = arith.constant 0.000000e+00 : f32
    %95 = vector.broadcast %cst_37 : f32 to vector<256x128xf32>
    %96 = arith.select %93, %94, %95 : vector<256x128xi1>, vector<256x128xf32>
    %97 = arith.maximumf %91, %96 : vector<256x128xf32>
    %98 = arith.addf %73, %97 : vector<256x128xf32>
    %c1_i32_38 = arith.constant 1 : i32
    %99 = vector.broadcast %c1_i32_38 : i32 to vector<256x128xi32>
    %100 = arith.cmpi sge, %6, %99 : vector<256x128xi32>
    %c1_i32_39 = arith.constant 1 : i32
    %101 = tpu.dynamic_rotate %98 by %c1_i32_39 dim 0 : vector<256x128xf32>, i32 -> vector<256x128xf32>
    %cst_40 = arith.constant 0.000000e+00 : f32
    %102 = vector.broadcast %cst_40 : f32 to vector<256x128xf32>
    %103 = arith.select %100, %101, %102 : vector<256x128xi1>, vector<256x128xf32>
    %c14_i32_41 = arith.constant 14 : i32
    %104 = vector.broadcast %c14_i32_41 : i32 to vector<256x128xi32>
    %105 = arith.cmpi sle, %6, %104 : vector<256x128xi32>
    %c255_i32_42 = arith.constant 255 : i32
    %106 = tpu.dynamic_rotate %98 by %c255_i32_42 dim 0 : vector<256x128xf32>, i32 -> vector<256x128xf32>
    %cst_43 = arith.constant 0.000000e+00 : f32
    %107 = vector.broadcast %cst_43 : f32 to vector<256x128xf32>
    %108 = arith.select %105, %106, %107 : vector<256x128xi1>, vector<256x128xf32>
    %c1_i32_44 = arith.constant 1 : i32
    %109 = vector.broadcast %c1_i32_44 : i32 to vector<256x128xi32>
    %110 = arith.cmpi sge, %4, %109 : vector<256x128xi32>
    %c14_i32_45 = arith.constant 14 : i32
    %111 = vector.broadcast %c14_i32_45 : i32 to vector<256x128xi32>
    %112 = arith.cmpi sle, %4, %111 : vector<256x128xi32>
    %c16_i32_46 = arith.constant 16 : i32
    %113 = tpu.dynamic_rotate %103 by %c16_i32_46 dim 0 : vector<256x128xf32>, i32 -> vector<256x128xf32>
    %cst_47 = arith.constant 0.000000e+00 : f32
    %114 = vector.broadcast %cst_47 : f32 to vector<256x128xf32>
    %115 = arith.select %110, %113, %114 : vector<256x128xi1>, vector<256x128xf32>
    %c16_i32_48 = arith.constant 16 : i32
    %116 = tpu.dynamic_rotate %98 by %c16_i32_48 dim 0 : vector<256x128xf32>, i32 -> vector<256x128xf32>
    %cst_49 = arith.constant 0.000000e+00 : f32
    %117 = vector.broadcast %cst_49 : f32 to vector<256x128xf32>
    %118 = arith.select %110, %116, %117 : vector<256x128xi1>, vector<256x128xf32>
    %c16_i32_50 = arith.constant 16 : i32
    %119 = tpu.dynamic_rotate %108 by %c16_i32_50 dim 0 : vector<256x128xf32>, i32 -> vector<256x128xf32>
    %cst_51 = arith.constant 0.000000e+00 : f32
    %120 = vector.broadcast %cst_51 : f32 to vector<256x128xf32>
    %121 = arith.select %110, %119, %120 : vector<256x128xi1>, vector<256x128xf32>
    %c240_i32_52 = arith.constant 240 : i32
    %122 = tpu.dynamic_rotate %103 by %c240_i32_52 dim 0 : vector<256x128xf32>, i32 -> vector<256x128xf32>
    %cst_53 = arith.constant 0.000000e+00 : f32
    %123 = vector.broadcast %cst_53 : f32 to vector<256x128xf32>
    %124 = arith.select %112, %122, %123 : vector<256x128xi1>, vector<256x128xf32>
    %c240_i32_54 = arith.constant 240 : i32
    %125 = tpu.dynamic_rotate %98 by %c240_i32_54 dim 0 : vector<256x128xf32>, i32 -> vector<256x128xf32>
    %cst_55 = arith.constant 0.000000e+00 : f32
    %126 = vector.broadcast %cst_55 : f32 to vector<256x128xf32>
    %127 = arith.select %112, %125, %126 : vector<256x128xi1>, vector<256x128xf32>
    %c240_i32_56 = arith.constant 240 : i32
    %128 = tpu.dynamic_rotate %108 by %c240_i32_56 dim 0 : vector<256x128xf32>, i32 -> vector<256x128xf32>
    %cst_57 = arith.constant 0.000000e+00 : f32
    %129 = vector.broadcast %cst_57 : f32 to vector<256x128xf32>
    %130 = arith.select %112, %128, %129 : vector<256x128xi1>, vector<256x128xf32>
    %131 = tpu.concatenate %115, %118, %121, %103, %98, %108, %124, %127, %130 in 1 : vector<256x128xf32>, vector<256x128xf32>, vector<256x128xf32>, vector<256x128xf32>, vector<256x128xf32>, vector<256x128xf32>, vector<256x128xf32>, vector<256x128xf32>, vector<256x128xf32> -> vector<256x1152xf32>
    %132 = tpu.concatenate %131, %1 in 1 : vector<256x1152xf32>, vector<256x128xf32> -> vector<256x1280xf32>
    %133 = arith.truncf %132 : vector<256x1280xf32> to vector<256x1280xbf16>
    %c0_58 = arith.constant 0 : index
    %c0_59 = arith.constant 0 : index
    %134 = vector.load %arg4[%c0_58, %c0_59] : memref<1280x128xbf16, #tpu.memory_space<vmem>>, vector<1280x128xbf16>
    %cst_60 = arith.constant dense<0.000000e+00> : vector<256x128xf32>
    %135 = tpu.matmul %133, %134, %cst_60 {dimension_numbers = #tpu.dot_dimension_numbers<[1], [0], [0], [1], [0, 0, 1, 1], [], []>} : vector<256x1280xbf16>, vector<1280x128xbf16>, vector<256x128xf32> -> vector<256x128xf32>
    %c0_61 = arith.constant 0 : index
    %c0_62 = arith.constant 0 : index
    %136 = vector.load %arg5[%c0_61, %c0_62] : memref<1x128xf32, #tpu.memory_space<vmem>>, vector<1x128xf32>
    %137 = vector.broadcast %136 : vector<1x128xf32> to vector<256x128xf32>
    %138 = arith.addf %135, %137 : vector<256x128xf32>
    %cst_63 = arith.constant 0.000000e+00 : f32
    %139 = vector.broadcast %cst_63 : f32 to vector<256x128xf32>
    %140 = arith.maximumf %138, %139 : vector<256x128xf32>
    %c1_i32_64 = arith.constant 1 : i32
    %141 = vector.broadcast %c1_i32_64 : i32 to vector<256x128xi32>
    %142 = arith.cmpi sge, %6, %141 : vector<256x128xi32>
    %c1_i32_65 = arith.constant 1 : i32
    %143 = tpu.dynamic_rotate %140 by %c1_i32_65 dim 0 : vector<256x128xf32>, i32 -> vector<256x128xf32>
    %cst_66 = arith.constant 0.000000e+00 : f32
    %144 = vector.broadcast %cst_66 : f32 to vector<256x128xf32>
    %145 = arith.select %142, %143, %144 : vector<256x128xi1>, vector<256x128xf32>
    %c14_i32_67 = arith.constant 14 : i32
    %146 = vector.broadcast %c14_i32_67 : i32 to vector<256x128xi32>
    %147 = arith.cmpi sle, %6, %146 : vector<256x128xi32>
    %c255_i32_68 = arith.constant 255 : i32
    %148 = tpu.dynamic_rotate %140 by %c255_i32_68 dim 0 : vector<256x128xf32>, i32 -> vector<256x128xf32>
    %cst_69 = arith.constant 0.000000e+00 : f32
    %149 = vector.broadcast %cst_69 : f32 to vector<256x128xf32>
    %150 = arith.select %147, %148, %149 : vector<256x128xi1>, vector<256x128xf32>
    %c1_i32_70 = arith.constant 1 : i32
    %151 = vector.broadcast %c1_i32_70 : i32 to vector<256x128xi32>
    %152 = arith.cmpi sge, %4, %151 : vector<256x128xi32>
    %c14_i32_71 = arith.constant 14 : i32
    %153 = vector.broadcast %c14_i32_71 : i32 to vector<256x128xi32>
    %154 = arith.cmpi sle, %4, %153 : vector<256x128xi32>
    %c16_i32_72 = arith.constant 16 : i32
    %155 = tpu.dynamic_rotate %145 by %c16_i32_72 dim 0 : vector<256x128xf32>, i32 -> vector<256x128xf32>
    %cst_73 = arith.constant 0.000000e+00 : f32
    %156 = vector.broadcast %cst_73 : f32 to vector<256x128xf32>
    %157 = arith.select %152, %155, %156 : vector<256x128xi1>, vector<256x128xf32>
    %c16_i32_74 = arith.constant 16 : i32
    %158 = tpu.dynamic_rotate %140 by %c16_i32_74 dim 0 : vector<256x128xf32>, i32 -> vector<256x128xf32>
    %cst_75 = arith.constant 0.000000e+00 : f32
    %159 = vector.broadcast %cst_75 : f32 to vector<256x128xf32>
    %160 = arith.select %152, %158, %159 : vector<256x128xi1>, vector<256x128xf32>
    %c16_i32_76 = arith.constant 16 : i32
    %161 = tpu.dynamic_rotate %150 by %c16_i32_76 dim 0 : vector<256x128xf32>, i32 -> vector<256x128xf32>
    %cst_77 = arith.constant 0.000000e+00 : f32
    %162 = vector.broadcast %cst_77 : f32 to vector<256x128xf32>
    %163 = arith.select %152, %161, %162 : vector<256x128xi1>, vector<256x128xf32>
    %c240_i32_78 = arith.constant 240 : i32
    %164 = tpu.dynamic_rotate %145 by %c240_i32_78 dim 0 : vector<256x128xf32>, i32 -> vector<256x128xf32>
    %cst_79 = arith.constant 0.000000e+00 : f32
    %165 = vector.broadcast %cst_79 : f32 to vector<256x128xf32>
    %166 = arith.select %154, %164, %165 : vector<256x128xi1>, vector<256x128xf32>
    %c240_i32_80 = arith.constant 240 : i32
    %167 = tpu.dynamic_rotate %140 by %c240_i32_80 dim 0 : vector<256x128xf32>, i32 -> vector<256x128xf32>
    %cst_81 = arith.constant 0.000000e+00 : f32
    %168 = vector.broadcast %cst_81 : f32 to vector<256x128xf32>
    %169 = arith.select %154, %167, %168 : vector<256x128xi1>, vector<256x128xf32>
    %c240_i32_82 = arith.constant 240 : i32
    %170 = tpu.dynamic_rotate %150 by %c240_i32_82 dim 0 : vector<256x128xf32>, i32 -> vector<256x128xf32>
    %cst_83 = arith.constant 0.000000e+00 : f32
    %171 = vector.broadcast %cst_83 : f32 to vector<256x128xf32>
    %172 = arith.select %154, %170, %171 : vector<256x128xi1>, vector<256x128xf32>
    %173 = tpu.concatenate %157, %160, %163, %145, %140, %150, %166, %169, %172 in 1 : vector<256x128xf32>, vector<256x128xf32>, vector<256x128xf32>, vector<256x128xf32>, vector<256x128xf32>, vector<256x128xf32>, vector<256x128xf32>, vector<256x128xf32>, vector<256x128xf32> -> vector<256x1152xf32>
    %174 = arith.truncf %173 : vector<256x1152xf32> to vector<256x1152xbf16>
    %c0_84 = arith.constant 0 : index
    %c0_85 = arith.constant 0 : index
    %175 = vector.load %arg6[%c0_84, %c0_85] : memref<1152x128xbf16, #tpu.memory_space<vmem>>, vector<1152x128xbf16>
    %cst_86 = arith.constant dense<0.000000e+00> : vector<256x128xf32>
    %176 = tpu.matmul %174, %175, %cst_86 {dimension_numbers = #tpu.dot_dimension_numbers<[1], [0], [0], [1], [0, 0, 1, 1], [], []>} : vector<256x1152xbf16>, vector<1152x128xbf16>, vector<256x128xf32> -> vector<256x128xf32>
    %c0_87 = arith.constant 0 : index
    %c0_88 = arith.constant 0 : index
    %177 = vector.load %arg7[%c0_87, %c0_88] : memref<1x128xf32, #tpu.memory_space<vmem>>, vector<1x128xf32>
    %178 = vector.broadcast %177 : vector<1x128xf32> to vector<256x128xf32>
    %179 = arith.addf %176, %178 : vector<256x128xf32>
    %cst_89 = arith.constant 0.000000e+00 : f32
    %180 = vector.broadcast %cst_89 : f32 to vector<256x128xf32>
    %181 = arith.maximumf %179, %180 : vector<256x128xf32>
    %c0_90 = arith.constant 0 : index
    %c0_91 = arith.constant 0 : index
    %c0_92 = arith.constant 0 : index
    %182 = vector.load %arg8[%c0_90, %c0_91, %c0_92] : memref<1x256x128xf32, #tpu.memory_space<vmem>>, vector<1x256x128xf32>
    %183 = vector.shape_cast %182 : vector<1x256x128xf32> to vector<256x128xf32>
    %184 = vector.shape_cast %181 : vector<256x128xf32> to vector<1x256x128xf32>
    tpu.vector_store %arg8[%c0_90, %c0_91, %c0_92], %184 {strides = array<i32>} : memref<1x256x128xf32, #tpu.memory_space<vmem>>, vector<1x256x128xf32>,
    return
  }
  func.func @transform_0(%arg0: i32) -> (i32, i32, i32) {
    %c0_i32 = arith.constant 0 : i32
    %c0_i32_0 = arith.constant 0 : i32
    %c0_i32_1 = arith.constant 0 : i32
    return %arg0, %c0_i32, %c0_i32_0 : i32, i32, i32
  }
  func.func @transform_1(%arg0: i32) -> (i32, i32) {
    %c0_i32 = arith.constant 0 : i32
    %c0_i32_0 = arith.constant 0 : i32
    %c0_i32_1 = arith.constant 0 : i32
    return %c0_i32, %c0_i32_0 : i32, i32
  }
  func.func @transform_2(%arg0: i32) -> (i32, i32) {
    %c0_i32 = arith.constant 0 : i32
    %c0_i32_0 = arith.constant 0 : i32
    %c0_i32_1 = arith.constant 0 : i32
    return %c0_i32, %c0_i32_0 : i32, i32
  }
  func.func @transform_3(%arg0: i32) -> (i32, i32) {
    %c0_i32 = arith.constant 0 : i32
    %c0_i32_0 = arith.constant 0 : i32
    %c0_i32_1 = arith.constant 0 : i32
    return %c0_i32, %c0_i32_0 : i32, i32
  }
  func.func @transform_4(%arg0: i32) -> (i32, i32) {
    %c0_i32 = arith.constant 0 : i32
    %c0_i32_0 = arith.constant 0 : i32
    %c0_i32_1 = arith.constant 0 : i32
    return %c0_i32, %c0_i32_0 : i32, i32
  }
  func.func @transform_5(%arg0: i32) -> (i32, i32) {
    %c0_i32 = arith.constant 0 : i32
    %c0_i32_0 = arith.constant 0 : i32
    %c0_i32_1 = arith.constant 0 : i32
    return %c0_i32, %c0_i32_0 : i32, i32
  }
  func.func @transform_6(%arg0: i32) -> (i32, i32) {
    %c0_i32 = arith.constant 0 : i32
    %c0_i32_0 = arith.constant 0 : i32
    %c0_i32_1 = arith.constant 0 : i32
    return %c0_i32, %c0_i32_0 : i32, i32
  }
  func.func @transform_7(%arg0: i32) -> (i32, i32, i32) {
    %c0_i32 = arith.constant 0 : i32
    %c0_i32_0 = arith.constant 0 : i32
    %c0_i32_1 = arith.constant 0 : i32
    return %arg0, %c0_i32, %c0_i32_0 : i32, i32, i32
  }
}

</mosaic_0001>

<llo_original>
// kernel: pool_forward.1
$region0: #{pool_forward.1}
  #allocation0 [shape = 'u32[]', space=smem, size = 0x4, offset = 0x4, fixed_abs, tag = 'smem constant byte address 0x4 - core index']
  #allocation1 [shape = 'u32[144,128]{1,0:T(1,128)}', space=vmem, size = 0x12000, scoped, tag = 'internal scratch']
  %s0 = inlined_call_operand.vmem [shape: f32[2,256,128], index: 0, kind: input, shape index: {}]
  %s1 = inlined_call_operand.vmem [shape: bf16[1152,256], index: 1, kind: input, shape index: {}]
  %s2 = inlined_call_operand.vmem [shape: f32[1,256], index: 2, kind: input, shape index: {}]
  %s3 = inlined_call_operand.hbm [shape: bf16[1280,128], index: 3, kind: input, shape index: {}]
  %s4 = inlined_call_operand.vmem [shape: f32[1,128], index: 4, kind: input, shape index: {}]
  %s5 = inlined_call_operand.hbm [shape: bf16[1152,128], index: 5, kind: input, shape index: {}]
  %s6 = inlined_call_operand.vmem [shape: f32[1,128], index: 6, kind: input, shape index: {}]
  %s7 = inlined_call_operand.vmem [shape: f32[2,256,128], index: 7, kind: output, shape index: {}]
  %s8 = sld [smem:[#allocation0]]
  $region69: #{pool_forward.1} parent=0
    _
  %s10 = ssub.s32 1, %s8
  %s11 = scalar_select 0, %s10, %s8
  $region1: #{pool_forward.1} parent=0
    #allocation2 [shape = 'u8[327680]{0}', space=vmem, size = 0x50000, scoped, tag = 'input window, operand 3, single buffered']
    #allocation3 [shape = 's32[2]{0}', space=sflag, size = 0x8, scoped, tag = 'scoped memory for pool_forward.1']
    #allocation4 [shape = 'u8[294912]{0}', space=vmem, size = 0x48000, scoped, tag = 'input window, operand 5, single buffered']
    #allocation5 [shape = 's32[1]{0}', space=sflag, size = 0x4, scoped, tag = 'scoped memory for pool_forward.1']
    %12 = vsyncpa [#allocation3], 0
    %13 = vsyncpa [#allocation5], 0
    loop: start=0, step=1, limit=4
    $region2: #{pool_forward.1} parent=1 // loop_pre_header
      _
    $region3: #{pool_forward.1} parent=1 // loop_header
      %s15 = sphi 0, %s19
      %p16 = scmp.ge.s32.totalorder %s15, 4
      %s25 = sphi 0, %s27
      %s28 = sphi 0, %s25
      %s29 = sphi 0, %s28
      %s45 = sphi 0, %s29
      %s49 = sphi 0, %s49
      %s51 = sphi 0, %s49
      %s52 = sphi 0, %s51
      %s66 = sphi 0, %s52
      %s70 = sphi 0, %s70
      %s72 = sphi 0, %s70
      %s73 = sphi 0, %s72
      %s87 = sphi 0, %s73
      %s91 = sphi 0, %s91
      %s93 = sphi 0, %s91
      %s94 = sphi 0, %s93
      %s108 = sphi 0, %s94
      %s112 = sphi 0, %s112
      %s114 = sphi 0, %s112
      %s115 = sphi 0, %s114
      %s129 = sphi 0, %s115
      %s133 = sphi 0, %s133
      %s135 = sphi 0, %s133
      %s136 = sphi 0, %s135
      %s150 = sphi 0, %s136
      %s154 = sphi 0, %s154
      %s156 = sphi 0, %s154
      %s157 = sphi 0, %s156
      %s171 = sphi 0, %s157
      %s177 = sphi 0, %s179
      %s180 = sphi 0, %s177
      %s181 = sphi 0, %s180
      %s197 = sphi 0, %s181
    $region4: #{pool_forward.1} parent=1 // loop_header_branch
      %18 = sbr.rel (%p16) target = $region8
    $region5: #{pool_forward.1} parent=1 // loop_body
      %s20 = ssub.s32 %s15, 1
      %s21 = ssub.s32 %s15, 2
      %s22 = sadd.s32 %s15, 1
      %s23 = ssub.s32 %s15, %s22
      %p24 = scmp.eq.s32.totalorder %s23, 0
      %s26 = sadd.s32 %s25, 1
      %s27 = scalar_select %p24, %s25, %s26
      %p30 = pneg %p24
      %p31 = scmp.eq.s32.totalorder %s15, 1
      %p32 = por %p30, %p31
      %p33 = scmp.ne.s32.totalorder %s25, %s28
      %p34 = scmp.eq.s32.totalorder %s15, 0
      %p35 = por %p33, %p34
      %p36 = scmp.ne.s32.totalorder %s25, %s28
      %p37 = scmp.eq.s32.totalorder %s20, 1
      %p38 = por %p36, %p37
      %p39 = scmp.ne.s32.totalorder %s28, %s29
      %p40 = scmp.eq.s32.totalorder %s20, 0
      %p41 = por %p39, %p40
      %p42 = scmp.ne.s32.totalorder %s28, %s29
      %p43 = scmp.eq.s32.totalorder %s21, 1
      %p44 = por %p42, %p43
      %p46 = scmp.ne.s32.totalorder %s29, %s45
      %p47 = scmp.eq.s32.totalorder %s21, 0
      %p48 = por %p46, %p47
      %s50 = sadd.s32 %s49, 1
      %p53 = scmp.eq.s32.totalorder %s15, 1
      %p54 = scmp.ne.s32.totalorder %s49, %s51
      %p55 = scmp.eq.s32.totalorder %s15, 0
      %p56 = por %p54, %p55
      %p57 = scmp.ne.s32.totalorder %s49, %s51
      %p58 = scmp.eq.s32.totalorder %s20, 1
      %p59 = por %p57, %p58
      %p60 = scmp.ne.s32.totalorder %s51, %s52
      %p61 = scmp.eq.s32.totalorder %s20, 0
      %p62 = por %p60, %p61
      %p63 = scmp.ne.s32.totalorder %s51, %s52
      %p64 = scmp.eq.s32.totalorder %s21, 1
      %p65 = por %p63, %p64
      %p67 = scmp.ne.s32.totalorder %s52, %s66
      %p68 = scmp.eq.s32.totalorder %s21, 0
      %p69 = por %p67, %p68
      %s71 = sadd.s32 %s70, 1
      %p74 = scmp.eq.s32.totalorder %s15, 1
      %p75 = scmp.ne.s32.totalorder %s70, %s72
      %p76 = scmp.eq.s32.totalorder %s15, 0
      %p77 = por %p75, %p76
      %p78 = scmp.ne.s32.totalorder %s70, %s72
      %p79 = scmp.eq.s32.totalorder %s20, 1
      %p80 = por %p78, %p79
      %p81 = scmp.ne.s32.totalorder %s72, %s73
      %p82 = scmp.eq.s32.totalorder %s20, 0
      %p83 = por %p81, %p82
      %p84 = scmp.ne.s32.totalorder %s72, %s73
      %p85 = scmp.eq.s32.totalorder %s21, 1
      %p86 = por %p84, %p85
      %p88 = scmp.ne.s32.totalorder %s73, %s87
      %p89 = scmp.eq.s32.totalorder %s21, 0
      %p90 = por %p88, %p89
      %s92 = sadd.s32 %s91, 1
      %p95 = scmp.eq.s32.totalorder %s15, 1
      %p96 = scmp.ne.s32.totalorder %s91, %s93
      %p97 = scmp.eq.s32.totalorder %s15, 0
      %p98 = por %p96, %p97
      %p99 = scmp.ne.s32.totalorder %s91, %s93
      %p100 = scmp.eq.s32.totalorder %s20, 1
      %p101 = por %p99, %p100
      %p102 = scmp.ne.s32.totalorder %s93, %s94
      %p103 = scmp.eq.s32.totalorder %s20, 0
      %p104 = por %p102, %p103
      %p105 = scmp.ne.s32.totalorder %s93, %s94
      %p106 = scmp.eq.s32.totalorder %s21, 1
      %p107 = por %p105, %p106
      %p109 = scmp.ne.s32.totalorder %s94, %s108
      %p110 = scmp.eq.s32.totalorder %s21, 0
      %p111 = por %p109, %p110
      %s113 = sadd.s32 %s112, 1
      %p116 = scmp.eq.s32.totalorder %s15, 1
      %p117 = scmp.ne.s32.totalorder %s112, %s114
      %p118 = scmp.eq.s32.totalorder %s15, 0
      %p119 = por %p117, %p118
      %p120 = scmp.ne.s32.totalorder %s112, %s114
      %p121 = scmp.eq.s32.totalorder %s20, 1
      %p122 = por %p120, %p121
      %p123 = scmp.ne.s32.totalorder %s114, %s115
      %p124 = scmp.eq.s32.totalorder %s20, 0
      %p125 = por %p123, %p124
      %p126 = scmp.ne.s32.totalorder %s114, %s115
      %p127 = scmp.eq.s32.totalorder %s21, 1
      %p128 = por %p126, %p127
      %p130 = scmp.ne.s32.totalorder %s115, %s129
      %p131 = scmp.eq.s32.totalorder %s21, 0
      %p132 = por %p130, %p131
      %s134 = sadd.s32 %s133, 1
      %p137 = scmp.eq.s32.totalorder %s15, 1
      %p138 = scmp.ne.s32.totalorder %s133, %s135
      %p139 = scmp.eq.s32.totalorder %s15, 0
      %p140 = por %p138, %p139
      %p141 = scmp.ne.s32.totalorder %s133, %s135
      %p142 = scmp.eq.s32.totalorder %s20, 1
      %p143 = por %p141, %p142
      %p144 = scmp.ne.s32.totalorder %s135, %s136
      %p145 = scmp.eq.s32.totalorder %s20, 0
      %p146 = por %p144, %p145
      %p147 = scmp.ne.s32.totalorder %s135, %s136
      %p148 = scmp.eq.s32.totalorder %s21, 1
      %p149 = por %p147, %p148
      %p151 = scmp.ne.s32.totalorder %s136, %s150
      %p152 = scmp.eq.s32.totalorder %s21, 0
      %p153 = por %p151, %p152
      %s155 = sadd.s32 %s154, 1
      %p158 = scmp.eq.s32.totalorder %s15, 1
      %p159 = scmp.ne.s32.totalorder %s154, %s156
      %p160 = scmp.eq.s32.totalorder %s15, 0
      %p161 = por %p159, %p160
      %p162 = scmp.ne.s32.totalorder %s154, %s156
      %p163 = scmp.eq.s32.totalorder %s20, 1
      %p164 = por %p162, %p163
      %p165 = scmp.ne.s32.totalorder %s156, %s157
      %p166 = scmp.eq.s32.totalorder %s20, 0
      %p167 = por %p165, %p166
      %p168 = scmp.ne.s32.totalorder %s156, %s157
      %p169 = scmp.eq.s32.totalorder %s21, 1
      %p170 = por %p168, %p169
      %p172 = scmp.ne.s32.totalorder %s157, %s171
      %p173 = scmp.eq.s32.totalorder %s21, 0
      %p174 = por %p172, %p173
      %s175 = ssub.s32 %s15, %s22
      %p176 = scmp.eq.s32.totalorder %s175, 0
      %s178 = sadd.s32 %s177, 1
      %s179 = scalar_select %p176, %s177, %s178
      %p182 = pneg %p176
      %p183 = scmp.eq.s32.totalorder %s15, 1
      %p184 = por %p182, %p183
      %p185 = scmp.ne.s32.totalorder %s177, %s180
      %p186 = scmp.eq.s32.totalorder %s15, 0
      %p187 = por %p185, %p186
      %p188 = scmp.ne.s32.totalorder %s177, %s180
      %p189 = scmp.eq.s32.totalorder %s20, 1
      %p190 = por %p188, %p189
      %p191 = scmp.ne.s32.totalorder %s180, %s181
      %p192 = scmp.eq.s32.totalorder %s20, 0
      %p193 = por %p191, %p192
      %p194 = scmp.ne.s32.totalorder %s180, %s181
      %p195 = scmp.eq.s32.totalorder %s21, 1
      %p196 = por %p194, %p195
      %p198 = scmp.ne.s32.totalorder %s181, %s197
      %p199 = scmp.eq.s32.totalorder %s21, 0
      %p200 = por %p198, %p199
      %p201 = scmp.le.s32.totalorder 1, %s15
      %p202 = scmp.lt.s32.totalorder %s15, 3
      %p203 = pnand %p201, %p202
      %p204 = pneg %p203
      // Predicated region
      $region9: #{pool_forward.1} parent=5 // pred_check
        _
      $region10: #{pool_forward.1} parent=5 // pred_check_branch
        %206 = sbr.rel (%p203) target = $region12
      $region11: #{pool_forward.1} parent=5 // pred_region
        %s207 = ssub.s32 %s15, 1
        // Predicated region
        $region13: #{pool_forward.1} parent=11 // pred_check
          %p208 = pneg %p62
        $region14: #{pool_forward.1} parent=11 // pred_check_branch
          %210 = sbr.rel (%p208) target = $region16
        $region15: #{pool_forward.1} parent=11 // pred_region
          _
        $region16: #{pool_forward.1} parent=11 // pred_fallthru
          _
        // Predicated region
        $region17: #{pool_forward.1} parent=11 // pred_check
          %p211 = pneg %p83
        $region18: #{pool_forward.1} parent=11 // pred_check_branch
          %213 = sbr.rel (%p211) target = $region20
        $region19: #{pool_forward.1} parent=11 // pred_region
          _
        $region20: #{pool_forward.1} parent=11 // pred_fallthru
          _
        // Predicated region
        $region21: #{pool_forward.1} parent=11 // pred_check
          %p214 = pneg %p104
        $region22: #{pool_forward.1} parent=11 // pred_check_branch
          %216 = sbr.rel (%p214) target = $region24
        $region23: #{pool_forward.1} parent=11 // pred_region
          %s218 = ssub.s32 10240, 10240
          %219 = vsyncadd [#allocation3], %s218
          %s220 = sshll.u32 [#allocation2], 4
          %s221 = int_to_ptr.vmem [resolvable:$true] %s220
          %226 = dma.hbm_to_vmem [thread:$0]  %s3, 10240, %s221, [#allocation3], 64, 64, 4
        $region24: #{pool_forward.1} parent=11 // pred_fallthru
          _
        // Predicated region
        $region25: #{pool_forward.1} parent=11 // pred_check
          %p227 = pneg %p125
        $region26: #{pool_forward.1} parent=11 // pred_check_branch
          %229 = sbr.rel (%p227) target = $region28
        $region27: #{pool_forward.1} parent=11 // pred_region
          _
        $region28: #{pool_forward.1} parent=11 // pred_fallthru
          _
        // Predicated region
        $region29: #{pool_forward.1} parent=11 // pred_check
          %p230 = pneg %p146
        $region30: #{pool_forward.1} parent=11 // pred_check_branch
          %232 = sbr.rel (%p230) target = $region32
        $region31: #{pool_forward.1} parent=11 // pred_region
          %s234 = ssub.s32 9216, 9216
          %235 = vsyncadd [#allocation5], %s234
          %s236 = sshll.u32 [#allocation4], 4
          %s237 = int_to_ptr.vmem [resolvable:$true] %s236
          %242 = dma.hbm_to_vmem [thread:$0]  %s5, 9216, %s237, [#allocation5], 64, 64, 4
        $region32: #{pool_forward.1} parent=11 // pred_fallthru
          _
        // Predicated region
        $region33: #{pool_forward.1} parent=11 // pred_check
          %p243 = pneg %p167
        $region34: #{pool_forward.1} parent=11 // pred_check_branch
          %245 = sbr.rel (%p243) target = $region36
        $region35: #{pool_forward.1} parent=11 // pred_region
          _
        $region36: #{pool_forward.1} parent=11 // pred_fallthru
          _
      $region12: #{pool_forward.1} parent=5 // pred_fallthru
        _
      %p246 = scmp.lt.s32.totalorder %s15, 2
      // Predicated region
      $region37: #{pool_forward.1} parent=5 // pred_check
        %p247 = pneg %p246
      $region38: #{pool_forward.1} parent=5 // pred_check_branch
        %249 = sbr.rel (%p247) target = $region40
      $region39: #{pool_forward.1} parent=5 // pred_region
        // Predicated region
        $region41: #{pool_forward.1} parent=39 // pred_check
          %p250 = pneg %p35
        $region42: #{pool_forward.1} parent=39 // pred_check_branch
          %252 = sbr.rel (%p250) target = $region44
        $region43: #{pool_forward.1} parent=39 // pred_region
          %p253 = scmp.lt.s32.totalorder %s15, 1
          %s254 = scalar_select %p253, %s15, 1
          %s255 = smul.addr %s254, 32
          %s256 = smul.addr %s255, 8
          %s257 = scalar_lea.vmem %s0, %s256
        $region44: #{pool_forward.1} parent=39 // pred_fallthru
          _
      $region40: #{pool_forward.1} parent=5 // pred_fallthru
        _
      %p258 = scmp.le.s32.totalorder 1, %s15
      %p259 = scmp.lt.s32.totalorder %s15, 3
      %p260 = pnand %p258, %p259
      %p261 = pneg %p260
      // Predicated region
      $region45: #{pool_forward.1} parent=5 // pred_check
        _
      $region46: #{pool_forward.1} parent=5 // pred_check_branch
        %263 = sbr.rel (%p260) target = $region48
      $region47: #{pool_forward.1} parent=5 // pred_region
        %s264 = ssub.s32 %s15, 1
        // Predicated region
        $region49: #{pool_forward.1} parent=47 // pred_check
          %p265 = pneg %p104
        $region50: #{pool_forward.1} parent=47 // pred_check_branch
          %267 = sbr.rel (%p265) target = $region52
        $region51: #{pool_forward.1} parent=47 // pred_region
          %268 = dma.done [#allocation3], 10240
        $region52: #{pool_forward.1} parent=47 // pred_fallthru
          _
        // Predicated region
        $region53: #{pool_forward.1} parent=47 // pred_check
          %p269 = pneg %p146
        $region54: #{pool_forward.1} parent=47 // pred_check_branch
          %271 = sbr.rel (%p269) target = $region56
        $region55: #{pool_forward.1} parent=47 // pred_region
          %272 = dma.done [#allocation5], 9216
        $region56: #{pool_forward.1} parent=47 // pred_fallthru
          _
        %p273 = scmp.lt.s32.totalorder %s20, 1
        %s274 = scalar_select %p273, %s20, 1
        %s275 = smul.addr %s274, 32
        %s276 = smul.addr %s275, 8
        %s277 = scalar_lea.vmem %s0, %s276
        %p278 = pneg %p41
        %p279 = pneg %p38
        %p280 = pneg %p62
        %p281 = pneg %p59
        %p282 = pneg %p83
        %p283 = pneg %p80
        %p284 = pneg %p104
        %p285 = pneg %p101
        %p286 = pneg %p125
        %p287 = pneg %p122
        %p288 = pneg %p146
        %p289 = pneg %p143
        %p290 = pneg %p167
        %p291 = pneg %p164
        %p292 = pneg %p193
        %p293 = pneg %p190
        %p294 = scmp.lt.s32.totalorder %s20, 1
        %s295 = scalar_select %p294, %s20, 1
        %s296 = smul.addr %s295, 32
        %s297 = smul.addr %s296, 8
        %s298 = scalar_lea.vmem %s7, %s297
        %p299 = scmp.lt.s32.totalorder %s20, 1
        %s300 = scalar_select %p299, %s20, 1
        %s301 = smul.addr %s300, 32
        %s302 = smul.addr %s301, 8
        %s303 = scalar_lea.vmem %s0, %s302
        %p304 = scmp.lt.s32.totalorder %s20, 1
        %s305 = scalar_select %p304, %s20, 1
        %s306 = smul.addr %s305, 32
        %s307 = smul.addr %s306, 8
        %s308 = scalar_lea.vmem %s7, %s307
        %v310 = vld [vmem:[%s303] sm:$0xff]
        %v311 = vld [vmem:[%s303 + $0x8] sm:$0xff]
        %v312 = vld [vmem:[%s303 + $0x10] sm:$0xff]
        %v313 = vld [vmem:[%s303 + $0x18] sm:$0xff]
        %v314 = vld [vmem:[%s303 + $0x20] sm:$0xff]
        %v315 = vld [vmem:[%s303 + $0x28] sm:$0xff]
        %v316 = vld [vmem:[%s303 + $0x30] sm:$0xff]
        %v317 = vld [vmem:[%s303 + $0x38] sm:$0xff]
        %v318 = vld [vmem:[%s303 + $0x40] sm:$0xff]
        %v319 = vld [vmem:[%s303 + $0x48] sm:$0xff]
        %v320 = vld [vmem:[%s303 + $0x50] sm:$0xff]
        %v321 = vld [vmem:[%s303 + $0x58] sm:$0xff]
        %v322 = vld [vmem:[%s303 + $0x60] sm:$0xff]
        %v323 = vld [vmem:[%s303 + $0x68] sm:$0xff]
        %v324 = vld [vmem:[%s303 + $0x70] sm:$0xff]
        %v325 = vld [vmem:[%s303 + $0x78] sm:$0xff]
        %v326 = vld [vmem:[%s303 + $0x80] sm:$0xff]
        %v327 = vld [vmem:[%s303 + $0x88] sm:$0xff]
        %v328 = vld [vmem:[%s303 + $0x90] sm:$0xff]
        %v329 = vld [vmem:[%s303 + $0x98] sm:$0xff]
        %v330 = vld [vmem:[%s303 + $0xa0] sm:$0xff]
        %v331 = vld [vmem:[%s303 + $0xa8] sm:$0xff]
        %v332 = vld [vmem:[%s303 + $0xb0] sm:$0xff]
        %v333 = vld [vmem:[%s303 + $0xb8] sm:$0xff]
        %v334 = vld [vmem:[%s303 + $0xc0] sm:$0xff]
        %v335 = vld [vmem:[%s303 + $0xc8] sm:$0xff]
        %v336 = vld [vmem:[%s303 + $0xd0] sm:$0xff]
        %v337 = vld [vmem:[%s303 + $0xd8] sm:$0xff]
        %v338 = vld [vmem:[%s303 + $0xe0] sm:$0xff]
        %v339 = vld [vmem:[%s303 + $0xe8] sm:$0xff]
        %v340 = vld [vmem:[%s303 + $0xf0] sm:$0xff]
        %v341 = vld [vmem:[%s303 + $0xf8] sm:$0xff]
        %v342 = vlaneseq
        %v343 = vshrl.u32 %v342, 7
        %v344 = vadd.s32 %v343, 8
        %v345 = vadd.s32 %v343, 16
        %v346 = vadd.s32 %v343, 24
        %v347 = vadd.s32 %v343, 32
        %v348 = vadd.s32 %v343, 40
        %v349 = vadd.s32 %v343, 48
        %v350 = vadd.s32 %v343, 56
        %v351 = vadd.s32 %v343, 64
        %v352 = vadd.s32 %v343, 72
        %v353 = vadd.s32 %v343, 80
        %v354 = vadd.s32 %v343, 88
        %v355 = vadd.s32 %v343, 96
        %v356 = vadd.s32 %v343, 104
        %v357 = vadd.s32 %v343, 112
        %v358 = vadd.s32 %v343, 120
        %v359 = vadd.s32 %v343, 128
        %v360 = vadd.s32 %v343, 136
        %v361 = vadd.s32 %v343, 144
        %v362 = vadd.s32 %v343, 152
        %v363 = vadd.s32 %v343, 160
        %v364 = vadd.s32 %v343, 168
        %v365 = vadd.s32 %v343, 176
        %v366 = vadd.s32 %v343, 184
        %v367 = vadd.s32 %v343, 192
        %v368 = vadd.s32 %v343, 200
        %v369 = vadd.s32 %v343, 208
        %v370 = vadd.s32 %v343, 216
        %v371 = vadd.s32 %v343, 224
        %v372 = vadd.s32 %v343, 232
        %v373 = vadd.s32 %v343, 240
        %v374 = vadd.s32 %v343, 248
        %v375 = vshra.s32 %v343, 4
        %v376 = vshra.s32 %v344, 4
        %v377 = vshra.s32 %v345, 4
        %v378 = vshra.s32 %v346, 4
        %v379 = vshra.s32 %v347, 4
        %v380 = vshra.s32 %v348, 4
        %v381 = vshra.s32 %v349, 4
        %v382 = vshra.s32 %v350, 4
        %v383 = vshra.s32 %v351, 4
        %v384 = vshra.s32 %v352, 4
        %v385 = vshra.s32 %v353, 4
        %v386 = vshra.s32 %v354, 4
        %v387 = vshra.s32 %v355, 4
        %v388 = vshra.s32 %v356, 4
        %v389 = vshra.s32 %v357, 4
        %v390 = vshra.s32 %v358, 4
        %v391 = vshra.s32 %v359, 4
        %v392 = vshra.s32 %v360, 4
        %v393 = vshra.s32 %v361, 4
        %v394 = vshra.s32 %v362, 4
        %v395 = vshra.s32 %v363, 4
        %v396 = vshra.s32 %v364, 4
        %v397 = vshra.s32 %v365, 4
        %v398 = vshra.s32 %v366, 4
        %v399 = vshra.s32 %v367, 4
        %v400 = vshra.s32 %v368, 4
        %v401 = vshra.s32 %v369, 4
        %v402 = vshra.s32 %v370, 4
        %v403 = vshra.s32 %v371, 4
        %v404 = vshra.s32 %v372, 4
        %v405 = vshra.s32 %v373, 4
        %v406 = vshra.s32 %v374, 4
        %v407 = vand.u32 %v343, 15
        %v408 = vand.u32 %v344, 15
        %v409 = vand.u32 %v345, 15
        %v410 = vand.u32 %v346, 15
        %v411 = vand.u32 %v347, 15
        %v412 = vand.u32 %v348, 15
        %v413 = vand.u32 %v349, 15
        %v414 = vand.u32 %v350, 15
        %v415 = vand.u32 %v351, 15
        %v416 = vand.u32 %v352, 15
        %v417 = vand.u32 %v353, 15
        %v418 = vand.u32 %v354, 15
        %v419 = vand.u32 %v355, 15
        %v420 = vand.u32 %v356, 15
        %v421 = vand.u32 %v357, 15
        %v422 = vand.u32 %v358, 15
        %v423 = vand.u32 %v359, 15
        %v424 = vand.u32 %v360, 15
        %v425 = vand.u32 %v361, 15
        %v426 = vand.u32 %v362, 15
        %v427 = vand.u32 %v363, 15
        %v428 = vand.u32 %v364, 15
        %v429 = vand.u32 %v365, 15
        %v430 = vand.u32 %v366, 15
        %v431 = vand.u32 %v367, 15
        %v432 = vand.u32 %v368, 15
        %v433 = vand.u32 %v369, 15
        %v434 = vand.u32 %v370, 15
        %v435 = vand.u32 %v371, 15
        %v436 = vand.u32 %v372, 15
        %v437 = vand.u32 %v373, 15
        %v438 = vand.u32 %v374, 15
        %vm439 = vcmp.ge.s32.totalorder %v407, 1
        %vm440 = vcmp.ge.s32.totalorder %v408, 1
        %vm441 = vcmp.ge.s32.totalorder %v409, 1
        %vm442 = vcmp.ge.s32.totalorder %v410, 1
        %vm443 = vcmp.ge.s32.totalorder %v411, 1
        %vm444 = vcmp.ge.s32.totalorder %v412, 1
        %vm445 = vcmp.ge.s32.totalorder %v413, 1
        %vm446 = vcmp.ge.s32.totalorder %v414, 1
        %vm447 = vcmp.ge.s32.totalorder %v415, 1
        %vm448 = vcmp.ge.s32.totalorder %v416, 1
        %vm449 = vcmp.ge.s32.totalorder %v417, 1
        %vm450 = vcmp.ge.s32.totalorder %v418, 1
        %vm451 = vcmp.ge.s32.totalorder %v419, 1
        %vm452 = vcmp.ge.s32.totalorder %v420, 1
        %vm453 = vcmp.ge.s32.totalorder %v421, 1
        %vm454 = vcmp.ge.s32.totalorder %v422, 1
        %vm455 = vcmp.ge.s32.totalorder %v423, 1
        %vm456 = vcmp.ge.s32.totalorder %v424, 1
        %vm457 = vcmp.ge.s32.totalorder %v425, 1
        %vm458 = vcmp.ge.s32.totalorder %v426, 1
        %vm459 = vcmp.ge.s32.totalorder %v427, 1
        %vm460 = vcmp.ge.s32.totalorder %v428, 1
        %vm461 = vcmp.ge.s32.totalorder %v429, 1
        %vm462 = vcmp.ge.s32.totalorder %v430, 1
        %vm463 = vcmp.ge.s32.totalorder %v431, 1
        %vm464 = vcmp.ge.s32.totalorder %v432, 1
        %vm465 = vcmp.ge.s32.totalorder %v433, 1
        %vm466 = vcmp.ge.s32.totalorder %v434, 1
        %vm467 = vcmp.ge.s32.totalorder %v435, 1
        %vm468 = vcmp.ge.s32.totalorder %v436, 1
        %vm469 = vcmp.ge.s32.totalorder %v437, 1
        %vm470 = vcmp.ge.s32.totalorder %v438, 1
        %v471 = vrot.slane %v310, 7
        %v472 = vrot.slane %v311, 7
        %v473 = vrot.slane %v312, 7
        %v474 = vrot.slane %v313, 7
        %v475 = vrot.slane %v314, 7
        %v476 = vrot.slane %v315, 7
        %v477 = vrot.slane %v316, 7
        %v478 = vrot.slane %v317, 7
        %v479 = vrot.slane %v318, 7
        %v480 = vrot.slane %v319, 7
        %v481 = vrot.slane %v320, 7
        %v482 = vrot.slane %v321, 7
        %v483 = vrot.slane %v322, 7
        %v484 = vrot.slane %v323, 7
        %v485 = vrot.slane %v324, 7
        %v486 = vrot.slane %v325, 7
        %v487 = vrot.slane %v326, 7
        %v488 = vrot.slane %v327, 7
        %v489 = vrot.slane %v328, 7
        %v490 = vrot.slane %v329, 7
        %v491 = vrot.slane %v330, 7
        %v492 = vrot.slane %v331, 7
        %v493 = vrot.slane %v332, 7
        %v494 = vrot.slane %v333, 7
        %v495 = vrot.slane %v334, 7
        %v496 = vrot.slane %v335, 7
        %v497 = vrot.slane %v336, 7
        %v498 = vrot.slane %v337, 7
        %v499 = vrot.slane %v338, 7
        %v500 = vrot.slane %v339, 7
        %v501 = vrot.slane %v340, 7
        %v502 = vrot.slane %v341, 7
        %vm503 = vcmp.lt.s32.totalorder %v343, 1
        %v504 = vsel %vm503, %v501, %v502
        %v505 = vsel %vm503, %v500, %v501
        %v506 = vsel %vm503, %v499, %v500
        %v507 = vsel %vm503, %v498, %v499
        %v508 = vsel %vm503, %v497, %v498
        %v509 = vsel %vm503, %v496, %v497
        %v510 = vsel %vm503, %v495, %v496
        %v511 = vsel %vm503, %v494, %v495
        %v512 = vsel %vm503, %v493, %v494
        %v513 = vsel %vm503, %v492, %v493
        %v514 = vsel %vm503, %v491, %v492
        %v515 = vsel %vm503, %v490, %v491
        %v516 = vsel %vm503, %v489, %v490
        %v517 = vsel %vm503, %v488, %v489
        %v518 = vsel %vm503, %v487, %v488
        %v519 = vsel %vm503, %v486, %v487
        %v520 = vsel %vm503, %v485, %v486
        %v521 = vsel %vm503, %v484, %v485
        %v522 = vsel %vm503, %v483, %v484
        %v523 = vsel %vm503, %v482, %v483
        %v524 = vsel %vm503, %v481, %v482
        %v525 = vsel %vm503, %v480, %v481
        %v526 = vsel %vm503, %v479, %v480
        %v527 = vsel %vm503, %v478, %v479
        %v528 = vsel %vm503, %v477, %v478
        %v529 = vsel %vm503, %v476, %v477
        %v530 = vsel %vm503, %v475, %v476
        %v531 = vsel %vm503, %v474, %v475
        %v532 = vsel %vm503, %v473, %v474
        %v533 = vsel %vm503, %v472, %v473
        %v534 = vsel %vm503, %v471, %v472
        %v535 = vsel %vm503, %v502, %v471
        %v536 = vsel %vm439, %v535, 0.0
        %v537 = vsel %vm440, %v534, 0.0
        %v538 = vsel %vm441, %v533, 0.0
        %v539 = vsel %vm442, %v532, 0.0
        %v540 = vsel %vm443, %v531, 0.0
        %v541 = vsel %vm444, %v530, 0.0
        %v542 = vsel %vm445, %v529, 0.0
        %v543 = vsel %vm446, %v528, 0.0
        %v544 = vsel %vm447, %v527, 0.0
        %v545 = vsel %vm448, %v526, 0.0
        %v546 = vsel %vm449, %v525, 0.0
        %v547 = vsel %vm450, %v524, 0.0
        %v548 = vsel %vm451, %v523, 0.0
        %v549 = vsel %vm452, %v522, 0.0
        %v550 = vsel %vm453, %v521, 0.0
        %v551 = vsel %vm454, %v520, 0.0
        %v552 = vsel %vm455, %v519, 0.0
        %v553 = vsel %vm456, %v518, 0.0
        %v554 = vsel %vm457, %v517, 0.0
        %v555 = vsel %vm458, %v516, 0.0
        %v556 = vsel %vm459, %v515, 0.0
        %v557 = vsel %vm460, %v514, 0.0
        %v558 = vsel %vm461, %v513, 0.0
        %v559 = vsel %vm462, %v512, 0.0
        %v560 = vsel %vm463, %v511, 0.0
        %v561 = vsel %vm464, %v510, 0.0
        %v562 = vsel %vm465, %v509, 0.0
        %v563 = vsel %vm466, %v508, 0.0
        %v564 = vsel %vm467, %v507, 0.0
        %v565 = vsel %vm468, %v506, 0.0
        %v566 = vsel %vm469, %v505, 0.0
        %v567 = vsel %vm470, %v504, 0.0
        %vm568 = vcmp.le.s32.totalorder %v407, 14
        %vm569 = vcmp.le.s32.totalorder %v408, 14
        %vm570 = vcmp.le.s32.totalorder %v409, 14
        %vm571 = vcmp.le.s32.totalorder %v410, 14
        %vm572 = vcmp.le.s32.totalorder %v411, 14
        %vm573 = vcmp.le.s32.totalorder %v412, 14
        %vm574 = vcmp.le.s32.totalorder %v413, 14
        %vm575 = vcmp.le.s32.totalorder %v414, 14
        %vm576 = vcmp.le.s32.totalorder %v415, 14
        %vm577 = vcmp.le.s32.totalorder %v416, 14
        %vm578 = vcmp.le.s32.totalorder %v417, 14
        %vm579 = vcmp.le.s32.totalorder %v418, 14
        %vm580 = vcmp.le.s32.totalorder %v419, 14
        %vm581 = vcmp.le.s32.totalorder %v420, 14
        %vm582 = vcmp.le.s32.totalorder %v421, 14
        %vm583 = vcmp.le.s32.totalorder %v422, 14
        %vm584 = vcmp.le.s32.totalorder %v423, 14
        %vm585 = vcmp.le.s32.totalorder %v424, 14
        %vm586 = vcmp.le.s32.totalorder %v425, 14
        %vm587 = vcmp.le.s32.totalorder %v426, 14
        %vm588 = vcmp.le.s32.totalorder %v427, 14
        %vm589 = vcmp.le.s32.totalorder %v428, 14
        %vm590 = vcmp.le.s32.totalorder %v429, 14
        %vm591 = vcmp.le.s32.totalorder %v430, 14
        %vm592 = vcmp.le.s32.totalorder %v431, 14
        %vm593 = vcmp.le.s32.totalorder %v432, 14
        %vm594 = vcmp.le.s32.totalorder %v433, 14
        %vm595 = vcmp.le.s32.totalorder %v434, 14
        %vm596 = vcmp.le.s32.totalorder %v435, 14
        %vm597 = vcmp.le.s32.totalorder %v436, 14
        %vm598 = vcmp.le.s32.totalorder %v437, 14
        %vm599 = vcmp.le.s32.totalorder %v438, 14
        %v600 = vrot.slane %v310, 1
        %v601 = vrot.slane %v311, 1
        %v602 = vrot.slane %v312, 1
        %v603 = vrot.slane %v313, 1
        %v604 = vrot.slane %v314, 1
        %v605 = vrot.slane %v315, 1
        %v606 = vrot.slane %v316, 1
        %v607 = vrot.slane %v317, 1
        %v608 = vrot.slane %v318, 1
        %v609 = vrot.slane %v319, 1
        %v610 = vrot.slane %v320, 1
        %v611 = vrot.slane %v321, 1
        %v612 = vrot.slane %v322, 1
        %v613 = vrot.slane %v323, 1
        %v614 = vrot.slane %v324, 1
        %v615 = vrot.slane %v325, 1
        %v616 = vrot.slane %v326, 1
        %v617 = vrot.slane %v327, 1
        %v618 = vrot.slane %v328, 1
        %v619 = vrot.slane %v329, 1
        %v620 = vrot.slane %v330, 1
        %v621 = vrot.slane %v331, 1
        %v622 = vrot.slane %v332, 1
        %v623 = vrot.slane %v333, 1
        %v624 = vrot.slane %v334, 1
        %v625 = vrot.slane %v335, 1
        %v626 = vrot.slane %v336, 1
        %v627 = vrot.slane %v337, 1
        %v628 = vrot.slane %v338, 1
        %v629 = vrot.slane %v339, 1
        %v630 = vrot.slane %v340, 1
        %v631 = vrot.slane %v341, 1
        %vm632 = vcmp.lt.s32.totalorder %v343, 7
        %v633 = vsel %vm632, %v630, %v631
        %v634 = vsel %vm632, %v629, %v630
        %v635 = vsel %vm632, %v628, %v629
        %v636 = vsel %vm632, %v627, %v628
        %v637 = vsel %vm632, %v626, %v627
        %v638 = vsel %vm632, %v625, %v626
        %v639 = vsel %vm632, %v624, %v625
        %v640 = vsel %vm632, %v623, %v624
        %v641 = vsel %vm632, %v622, %v623
        %v642 = vsel %vm632, %v621, %v622
        %v643 = vsel %vm632, %v620, %v621
        %v644 = vsel %vm632, %v619, %v620
        %v645 = vsel %vm632, %v618, %v619
        %v646 = vsel %vm632, %v617, %v618
        %v647 = vsel %vm632, %v616, %v617
        %v648 = vsel %vm632, %v615, %v616
        %v649 = vsel %vm632, %v614, %v615
        %v650 = vsel %vm632, %v613, %v614
        %v651 = vsel %vm632, %v612, %v613
        %v652 = vsel %vm632, %v611, %v612
        %v653 = vsel %vm632, %v610, %v611
        %v654 = vsel %vm632, %v609, %v610
        %v655 = vsel %vm632, %v608, %v609
        %v656 = vsel %vm632, %v607, %v608
        %v657 = vsel %vm632, %v606, %v607
        %v658 = vsel %vm632, %v605, %v606
        %v659 = vsel %vm632, %v604, %v605
        %v660 = vsel %vm632, %v603, %v604
        %v661 = vsel %vm632, %v602, %v603
        %v662 = vsel %vm632, %v601, %v602
        %v663 = vsel %vm632, %v600, %v601
        %v664 = vsel %vm632, %v631, %v600
        %v665 = vsel %vm568, %v663, 0.0
        %v666 = vsel %vm569, %v662, 0.0
        %v667 = vsel %vm570, %v661, 0.0
        %v668 = vsel %vm571, %v660, 0.0
        %v669 = vsel %vm572, %v659, 0.0
        %v670 = vsel %vm573, %v658, 0.0
        %v671 = vsel %vm574, %v657, 0.0
        %v672 = vsel %vm575, %v656, 0.0
        %v673 = vsel %vm576, %v655, 0.0
        %v674 = vsel %vm577, %v654, 0.0
        %v675 = vsel %vm578, %v653, 0.0
        %v676 = vsel %vm579, %v652, 0.0
        %v677 = vsel %vm580, %v651, 0.0
        %v678 = vsel %vm581, %v650, 0.0
        %v679 = vsel %vm582, %v649, 0.0
        %v680 = vsel %vm583, %v648, 0.0
        %v681 = vsel %vm584, %v647, 0.0
        %v682 = vsel %vm585, %v646, 0.0
        %v683 = vsel %vm586, %v645, 0.0
        %v684 = vsel %vm587, %v644, 0.0
        %v685 = vsel %vm588, %v643, 0.0
        %v686 = vsel %vm589, %v642, 0.0
        %v687 = vsel %vm590, %v641, 0.0
        %v688 = vsel %vm591, %v640, 0.0
        %v689 = vsel %vm592, %v639, 0.0
        %v690 = vsel %vm593, %v638, 0.0
        %v691 = vsel %vm594, %v637, 0.0
        %v692 = vsel %vm595, %v636, 0.0
        %v693 = vsel %vm596, %v635, 0.0
        %v694 = vsel %vm597, %v634, 0.0
        %v695 = vsel %vm598, %v633, 0.0
        %v696 = vsel %vm599, %v664, 0.0
        %vm697 = vcmp.ge.s32.totalorder %v375, 1
        %vm698 = vcmp.ge.s32.totalorder %v376, 1
        %vm699 = vcmp.ge.s32.totalorder %v377, 1
        %vm700 = vcmp.ge.s32.totalorder %v378, 1
        %vm701 = vcmp.ge.s32.totalorder %v379, 1
        %vm702 = vcmp.ge.s32.totalorder %v380, 1
        %vm703 = vcmp.ge.s32.totalorder %v381, 1
        %vm704 = vcmp.ge.s32.totalorder %v382, 1
        %vm705 = vcmp.ge.s32.totalorder %v383, 1
        %vm706 = vcmp.ge.s32.totalorder %v384, 1
        %vm707 = vcmp.ge.s32.totalorder %v385, 1
        %vm708 = vcmp.ge.s32.totalorder %v386, 1
        %vm709 = vcmp.ge.s32.totalorder %v387, 1
        %vm710 = vcmp.ge.s32.totalorder %v388, 1
        %vm711 = vcmp.ge.s32.totalorder %v389, 1
        %vm712 = vcmp.ge.s32.totalorder %v390, 1
        %vm713 = vcmp.ge.s32.totalorder %v391, 1
        %vm714 = vcmp.ge.s32.totalorder %v392, 1
        %vm715 = vcmp.ge.s32.totalorder %v393, 1
        %vm716 = vcmp.ge.s32.totalorder %v394, 1
        %vm717 = vcmp.ge.s32.totalorder %v395, 1
        %vm718 = vcmp.ge.s32.totalorder %v396, 1
        %vm719 = vcmp.ge.s32.totalorder %v397, 1
        %vm720 = vcmp.ge.s32.totalorder %v398, 1
        %vm721 = vcmp.ge.s32.totalorder %v399, 1
        %vm722 = vcmp.ge.s32.totalorder %v400, 1
        %vm723 = vcmp.ge.s32.totalorder %v401, 1
        %vm724 = vcmp.ge.s32.totalorder %v402, 1
        %vm725 = vcmp.ge.s32.totalorder %v403, 1
        %vm726 = vcmp.ge.s32.totalorder %v404, 1
        %vm727 = vcmp.ge.s32.totalorder %v405, 1
        %vm728 = vcmp.ge.s32.totalorder %v406, 1
        %vm729 = vcmp.le.s32.totalorder %v375, 14
        %vm730 = vcmp.le.s32.totalorder %v376, 14
        %vm731 = vcmp.le.s32.totalorder %v377, 14
        %vm732 = vcmp.le.s32.totalorder %v378, 14
        %vm733 = vcmp.le.s32.totalorder %v379, 14
        %vm734 = vcmp.le.s32.totalorder %v380, 14
        %vm735 = vcmp.le.s32.totalorder %v381, 14
        %vm736 = vcmp.le.s32.totalorder %v382, 14
        %vm737 = vcmp.le.s32.totalorder %v383, 14
        %vm738 = vcmp.le.s32.totalorder %v384, 14
        %vm739 = vcmp.le.s32.totalorder %v385, 14
        %vm740 = vcmp.le.s32.totalorder %v386, 14
        %vm741 = vcmp.le.s32.totalorder %v387, 14
        %vm742 = vcmp.le.s32.totalorder %v388, 14
        %vm743 = vcmp.le.s32.totalorder %v389, 14
        %vm744 = vcmp.le.s32.totalorder %v390, 14
        %vm745 = vcmp.le.s32.totalorder %v391, 14
        %vm746 = vcmp.le.s32.totalorder %v392, 14
        %vm747 = vcmp.le.s32.totalorder %v393, 14
        %vm748 = vcmp.le.s32.totalorder %v394, 14
        %vm749 = vcmp.le.s32.totalorder %v395, 14
        %vm750 = vcmp.le.s32.totalorder %v396, 14
        %vm751 = vcmp.le.s32.totalorder %v397, 14
        %vm752 = vcmp.le.s32.totalorder %v398, 14
        %vm753 = vcmp.le.s32.totalorder %v399, 14
        %vm754 = vcmp.le.s32.totalorder %v400, 14
        %vm755 = vcmp.le.s32.totalorder %v401, 14
        %vm756 = vcmp.le.s32.totalorder %v402, 14
        %vm757 = vcmp.le.s32.totalorder %v403, 14
        %vm758 = vcmp.le.s32.totalorder %v404, 14
        %vm759 = vcmp.le.s32.totalorder %v405, 14
        %vm760 = vcmp.le.s32.totalorder %v406, 14
        %v761 = vsel %vm697, %v566, 0.0
        %v762 = vsel %vm698, %v567, 0.0
        %v763 = vsel %vm699, %v536, 0.0
        %v764 = vsel %vm700, %v537, 0.0
        %v765 = vsel %vm701, %v538, 0.0
        %v766 = vsel %vm702, %v539, 0.0
        %v767 = vsel %vm703, %v540, 0.0
        %v768 = vsel %vm704, %v541, 0.0
        %v769 = vsel %vm705, %v542, 0.0
        %v770 = vsel %vm706, %v543, 0.0
        %v771 = vsel %vm707, %v544, 0.0
        %v772 = vsel %vm708, %v545, 0.0
        %v773 = vsel %vm709, %v546, 0.0
        %v774 = vsel %vm710, %v547, 0.0
        %v775 = vsel %vm711, %v548, 0.0
        %v776 = vsel %vm712, %v549, 0.0
        %v777 = vsel %vm713, %v550, 0.0
        %v778 = vsel %vm714, %v551, 0.0
        %v779 = vsel %vm715, %v552, 0.0
        %v780 = vsel %vm716, %v553, 0.0
        %v781 = vsel %vm717, %v554, 0.0
        %v782 = vsel %vm718, %v555, 0.0
        %v783 = vsel %vm719, %v556, 0.0
        %v784 = vsel %vm720, %v557, 0.0
        %v785 = vsel %vm721, %v558, 0.0
        %v786 = vsel %vm722, %v559, 0.0
        %v787 = vsel %vm723, %v560, 0.0
        %v788 = vsel %vm724, %v561, 0.0
        %v789 = vsel %vm725, %v562, 0.0
        %v790 = vsel %vm726, %v563, 0.0
        %v791 = vsel %vm727, %v564, 0.0
        %v792 = vsel %vm728, %v565, 0.0
        %v793 = vsel %vm697, %v340, 0.0
        %v794 = vsel %vm698, %v341, 0.0
        %v795 = vsel %vm699, %v310, 0.0
        %v796 = vsel %vm700, %v311, 0.0
        %v797 = vsel %vm701, %v312, 0.0
        %v798 = vsel %vm702, %v313, 0.0
        %v799 = vsel %vm703, %v314, 0.0
        %v800 = vsel %vm704, %v315, 0.0
        %v801 = vsel %vm705, %v316, 0.0
        %v802 = vsel %vm706, %v317, 0.0
        %v803 = vsel %vm707, %v318, 0.0
        %v804 = vsel %vm708, %v319, 0.0
        %v805 = vsel %vm709, %v320, 0.0
        %v806 = vsel %vm710, %v321, 0.0
        %v807 = vsel %vm711, %v322, 0.0
        %v808 = vsel %vm712, %v323, 0.0
        %v809 = vsel %vm713, %v324, 0.0
        %v810 = vsel %vm714, %v325, 0.0
        %v811 = vsel %vm715, %v326, 0.0
        %v812 = vsel %vm716, %v327, 0.0
        %v813 = vsel %vm717, %v328, 0.0
        %v814 = vsel %vm718, %v329, 0.0
        %v815 = vsel %vm719, %v330, 0.0
        %v816 = vsel %vm720, %v331, 0.0
        %v817 = vsel %vm721, %v332, 0.0
        %v818 = vsel %vm722, %v333, 0.0
        %v819 = vsel %vm723, %v334, 0.0
        %v820 = vsel %vm724, %v335, 0.0
        %v821 = vsel %vm725, %v336, 0.0
        %v822 = vsel %vm726, %v337, 0.0
        %v823 = vsel %vm727, %v338, 0.0
        %v824 = vsel %vm728, %v339, 0.0
        %v825 = vsel %vm697, %v695, 0.0
        %v826 = vsel %vm698, %v696, 0.0
        %v827 = vsel %vm699, %v665, 0.0
        %v828 = vsel %vm700, %v666, 0.0
        %v829 = vsel %vm701, %v667, 0.0
        %v830 = vsel %vm702, %v668, 0.0
        %v831 = vsel %vm703, %v669, 0.0
        %v832 = vsel %vm704, %v670, 0.0
        %v833 = vsel %vm705, %v671, 0.0
        %v834 = vsel %vm706, %v672, 0.0
        %v835 = vsel %vm707, %v673, 0.0
        %v836 = vsel %vm708, %v674, 0.0
        %v837 = vsel %vm709, %v675, 0.0
        %v838 = vsel %vm710, %v676, 0.0
        %v839 = vsel %vm711, %v677, 0.0
        %v840 = vsel %vm712, %v678, 0.0
        %v841 = vsel %vm713, %v679, 0.0
        %v842 = vsel %vm714, %v680, 0.0
        %v843 = vsel %vm715, %v681, 0.0
        %v844 = vsel %vm716, %v682, 0.0
        %v845 = vsel %vm717, %v683, 0.0
        %v846 = vsel %vm718, %v684, 0.0
        %v847 = vsel %vm719, %v685, 0.0
        %v848 = vsel %vm720, %v686, 0.0
        %v849 = vsel %vm721, %v687, 0.0
        %v850 = vsel %vm722, %v688, 0.0
        %v851 = vsel %vm723, %v689, 0.0
        %v852 = vsel %vm724, %v690, 0.0
        %v853 = vsel %vm725, %v691, 0.0
        %v854 = vsel %vm726, %v692, 0.0
        %v855 = vsel %vm727, %v693, 0.0
        %v856 = vsel %vm728, %v694, 0.0
        %v857 = vsel %vm729, %v538, 0.0
        %v858 = vsel %vm730, %v539, 0.0
        %v859 = vsel %vm731, %v540, 0.0
        %v860 = vsel %vm732, %v541, 0.0
        %v861 = vsel %vm733, %v542, 0.0
        %v862 = vsel %vm734, %v543, 0.0
        %v863 = vsel %vm735, %v544, 0.0
        %v864 = vsel %vm736, %v545, 0.0
        %v865 = vsel %vm737, %v546, 0.0
        %v866 = vsel %vm738, %v547, 0.0
        %v867 = vsel %vm739, %v548, 0.0
        %v868 = vsel %vm740, %v549, 0.0
        %v869 = vsel %vm741, %v550, 0.0
        %v870 = vsel %vm742, %v551, 0.0
        %v871 = vsel %vm743, %v552, 0.0
        %v872 = vsel %vm744, %v553, 0.0
        %v873 = vsel %vm745, %v554, 0.0
        %v874 = vsel %vm746, %v555, 0.0
        %v875 = vsel %vm747, %v556, 0.0
        %v876 = vsel %vm748, %v557, 0.0
        %v877 = vsel %vm749, %v558, 0.0
        %v878 = vsel %vm750, %v559, 0.0
        %v879 = vsel %vm751, %v560, 0.0
        %v880 = vsel %vm752, %v561, 0.0
        %v881 = vsel %vm753, %v562, 0.0
        %v882 = vsel %vm754, %v563, 0.0
        %v883 = vsel %vm755, %v564, 0.0
        %v884 = vsel %vm756, %v565, 0.0
        %v885 = vsel %vm757, %v566, 0.0
        %v886 = vsel %vm758, %v567, 0.0
        %v887 = vsel %vm759, %v536, 0.0
        %v888 = vsel %vm760, %v537, 0.0
        %v889 = vsel %vm729, %v312, 0.0
        %v890 = vsel %vm730, %v313, 0.0
        %v891 = vsel %vm731, %v314, 0.0
        %v892 = vsel %vm732, %v315, 0.0
        %v893 = vsel %vm733, %v316, 0.0
        %v894 = vsel %vm734, %v317, 0.0
        %v895 = vsel %vm735, %v318, 0.0
        %v896 = vsel %vm736, %v319, 0.0
        %v897 = vsel %vm737, %v320, 0.0
        %v898 = vsel %vm738, %v321, 0.0
        %v899 = vsel %vm739, %v322, 0.0
        %v900 = vsel %vm740, %v323, 0.0
        %v901 = vsel %vm741, %v324, 0.0
        %v902 = vsel %vm742, %v325, 0.0
        %v903 = vsel %vm743, %v326, 0.0
        %v904 = vsel %vm744, %v327, 0.0
        %v905 = vsel %vm745, %v328, 0.0
        %v906 = vsel %vm746, %v329, 0.0
        %v907 = vsel %vm747, %v330, 0.0
        %v908 = vsel %vm748, %v331, 0.0
        %v909 = vsel %vm749, %v332, 0.0
        %v910 = vsel %vm750, %v333, 0.0
        %v911 = vsel %vm751, %v334, 0.0
        %v912 = vsel %vm752, %v335, 0.0
        %v913 = vsel %vm753, %v336, 0.0
        %v914 = vsel %vm754, %v337, 0.0
        %v915 = vsel %vm755, %v338, 0.0
        %v916 = vsel %vm756, %v339, 0.0
        %v917 = vsel %vm757, %v340, 0.0
        %v918 = vsel %vm758, %v341, 0.0
        %v919 = vsel %vm759, %v310, 0.0
        %v920 = vsel %vm760, %v311, 0.0
        %v921 = vsel %vm729, %v667, 0.0
        %v922 = vsel %vm730, %v668, 0.0
        %v923 = vsel %vm731, %v669, 0.0
        %v924 = vsel %vm732, %v670, 0.0
        %v925 = vsel %vm733, %v671, 0.0
        %v926 = vsel %vm734, %v672, 0.0
        %v927 = vsel %vm735, %v673, 0.0
        %v928 = vsel %vm736, %v674, 0.0
        %v929 = vsel %vm737, %v675, 0.0
        %v930 = vsel %vm738, %v676, 0.0
        %v931 = vsel %vm739, %v677, 0.0
        %v932 = vsel %vm740, %v678, 0.0
        %v933 = vsel %vm741, %v679, 0.0
        %v934 = vsel %vm742, %v680, 0.0
        %v935 = vsel %vm743, %v681, 0.0
        %v936 = vsel %vm744, %v682, 0.0
        %v937 = vsel %vm745, %v683, 0.0
        %v938 = vsel %vm746, %v684, 0.0
        %v939 = vsel %vm747, %v685, 0.0
        %v940 = vsel %vm748, %v686, 0.0
        %v941 = vsel %vm749, %v687, 0.0
        %v942 = vsel %vm750, %v688, 0.0
        %v943 = vsel %vm751, %v689, 0.0
        %v944 = vsel %vm752, %v690, 0.0
        %v945 = vsel %vm753, %v691, 0.0
        %v946 = vsel %vm754, %v692, 0.0
        %v947 = vsel %vm755, %v693, 0.0
        %v948 = vsel %vm756, %v694, 0.0
        %v949 = vsel %vm757, %v695, 0.0
        %v950 = vsel %vm758, %v696, 0.0
        %v951 = vsel %vm759, %v665, 0.0
        %v952 = vsel %vm760, %v666, 0.0
        %v953 = vpack.c.bf16 %v762, %v761
        %v954 = vpack.c.bf16 %v794, %v793
        %v955 = vpack.c.bf16 %v826, %v825
        %v956 = vpack.c.bf16 %v537, %v536
        %v957 = vpack.c.bf16 %v311, %v310
        %v958 = vpack.c.bf16 %v666, %v665
        %v959 = vpack.c.bf16 %v858, %v857
        %v960 = vpack.c.bf16 %v890, %v889
        %v961 = vpack.c.bf16 %v922, %v921
        %v962 = vpack.c.bf16 %v764, %v763
        %v963 = vpack.c.bf16 %v796, %v795
        %v964 = vpack.c.bf16 %v828, %v827
        %v965 = vpack.c.bf16 %v539, %v538
        %v966 = vpack.c.bf16 %v313, %v312
        %v967 = vpack.c.bf16 %v668, %v667
        %v968 = vpack.c.bf16 %v860, %v859
        %v969 = vpack.c.bf16 %v892, %v891
        %v970 = vpack.c.bf16 %v924, %v923
        %v971 = vpack.c.bf16 %v766, %v765
        %v972 = vpack.c.bf16 %v798, %v797
        %v973 = vpack.c.bf16 %v830, %v829
        %v974 = vpack.c.bf16 %v541, %v540
        %v975 = vpack.c.bf16 %v315, %v314
        %v976 = vpack.c.bf16 %v670, %v669
        %v977 = vpack.c.bf16 %v862, %v861
        %v978 = vpack.c.bf16 %v894, %v893
        %v979 = vpack.c.bf16 %v926, %v925
        %v980 = vpack.c.bf16 %v768, %v767
        %v981 = vpack.c.bf16 %v800, %v799
        %v982 = vpack.c.bf16 %v832, %v831
        %v983 = vpack.c.bf16 %v543, %v542
        %v984 = vpack.c.bf16 %v317, %v316
        %v985 = vpack.c.bf16 %v672, %v671
        %v986 = vpack.c.bf16 %v864, %v863
        %v987 = vpack.c.bf16 %v896, %v895
        %v988 = vpack.c.bf16 %v928, %v927
        %v989 = vpack.c.bf16 %v770, %v769
        %v990 = vpack.c.bf16 %v802, %v801
        %v991 = vpack.c.bf16 %v834, %v833
        %v992 = vpack.c.bf16 %v545, %v544
        %v993 = vpack.c.bf16 %v319, %v318
        %v994 = vpack.c.bf16 %v674, %v673
        %v995 = vpack.c.bf16 %v866, %v865
        %v996 = vpack.c.bf16 %v898, %v897
        %v997 = vpack.c.bf16 %v930, %v929
        %v998 = vpack.c.bf16 %v772, %v771
        %v999 = vpack.c.bf16 %v804, %v803
        %v1000 = vpack.c.bf16 %v836, %v835
        %v1001 = vpack.c.bf16 %v547, %v546
        %v1002 = vpack.c.bf16 %v321, %v320
        %v1003 = vpack.c.bf16 %v676, %v675
        %v1004 = vpack.c.bf16 %v868, %v867
        %v1005 = vpack.c.bf16 %v900, %v899
        %v1006 = vpack.c.bf16 %v932, %v931
        %v1007 = vpack.c.bf16 %v774, %v773
        %v1008 = vpack.c.bf16 %v806, %v805
        %v1009 = vpack.c.bf16 %v838, %v837
        %v1010 = vpack.c.bf16 %v549, %v548
        %v1011 = vpack.c.bf16 %v323, %v322
        %v1012 = vpack.c.bf16 %v678, %v677
        %v1013 = vpack.c.bf16 %v870, %v869
        %v1014 = vpack.c.bf16 %v902, %v901
        %v1015 = vpack.c.bf16 %v934, %v933
        %v1016 = vpack.c.bf16 %v776, %v775
        %v1017 = vpack.c.bf16 %v808, %v807
        %v1018 = vpack.c.bf16 %v840, %v839
        %v1019 = vpack.c.bf16 %v551, %v550
        %v1020 = vpack.c.bf16 %v325, %v324
        %v1021 = vpack.c.bf16 %v680, %v679
        %v1022 = vpack.c.bf16 %v872, %v871
        %v1023 = vpack.c.bf16 %v904, %v903
        %v1024 = vpack.c.bf16 %v936, %v935
        %v1025 = vpack.c.bf16 %v778, %v777
        %v1026 = vpack.c.bf16 %v810, %v809
        %v1027 = vpack.c.bf16 %v842, %v841
        %v1028 = vpack.c.bf16 %v553, %v552
        %v1029 = vpack.c.bf16 %v327, %v326
        %v1030 = vpack.c.bf16 %v682, %v681
        %v1031 = vpack.c.bf16 %v874, %v873
        %v1032 = vpack.c.bf16 %v906, %v905
        %v1033 = vpack.c.bf16 %v938, %v937
        %v1034 = vpack.c.bf16 %v780, %v779
        %v1035 = vpack.c.bf16 %v812, %v811
        %v1036 = vpack.c.bf16 %v844, %v843
        %v1037 = vpack.c.bf16 %v555, %v554
        %v1038 = vpack.c.bf16 %v329, %v328
        %v1039 = vpack.c.bf16 %v684, %v683
        %v1040 = vpack.c.bf16 %v876, %v875
        %v1041 = vpack.c.bf16 %v908, %v907
        %v1042 = vpack.c.bf16 %v940, %v939
        %v1043 = vpack.c.bf16 %v782, %v781
        %v1044 = vpack.c.bf16 %v814, %v813
        %v1045 = vpack.c.bf16 %v846, %v845
        %v1046 = vpack.c.bf16 %v557, %v556
        %v1047 = vpack.c.bf16 %v331, %v330
        %v1048 = vpack.c.bf16 %v686, %v685
        %v1049 = vpack.c.bf16 %v878, %v877
        %v1050 = vpack.c.bf16 %v910, %v909
        %v1051 = vpack.c.bf16 %v942, %v941
        %v1052 = vpack.c.bf16 %v784, %v783
        %v1053 = vpack.c.bf16 %v816, %v815
        %v1054 = vpack.c.bf16 %v848, %v847
        %v1055 = vpack.c.bf16 %v559, %v558
        %v1056 = vpack.c.bf16 %v333, %v332
        %v1057 = vpack.c.bf16 %v688, %v687
        %v1058 = vpack.c.bf16 %v880, %v879
        %v1059 = vpack.c.bf16 %v912, %v911
        %v1060 = vpack.c.bf16 %v944, %v943
        %v1061 = vpack.c.bf16 %v786, %v785
        %v1062 = vpack.c.bf16 %v818, %v817
        %v1063 = vpack.c.bf16 %v850, %v849
        %v1064 = vpack.c.bf16 %v561, %v560
        %v1065 = vpack.c.bf16 %v335, %v334
        %v1066 = vpack.c.bf16 %v690, %v689
        %v1067 = vpack.c.bf16 %v882, %v881
        %v1068 = vpack.c.bf16 %v914, %v913
        %v1069 = vpack.c.bf16 %v946, %v945
        %v1070 = vpack.c.bf16 %v788, %v787
        %v1071 = vpack.c.bf16 %v820, %v819
        %v1072 = vpack.c.bf16 %v852, %v851
        %v1073 = vpack.c.bf16 %v563, %v562
        %v1074 = vpack.c.bf16 %v337, %v336
        %v1075 = vpack.c.bf16 %v692, %v691
        %v1076 = vpack.c.bf16 %v884, %v883
        %v1077 = vpack.c.bf16 %v916, %v915
        %v1078 = vpack.c.bf16 %v948, %v947
        %v1079 = vpack.c.bf16 %v790, %v789
        %v1080 = vpack.c.bf16 %v822, %v821
        %v1081 = vpack.c.bf16 %v854, %v853
        %v1082 = vpack.c.bf16 %v565, %v564
        %v1083 = vpack.c.bf16 %v339, %v338
        %v1084 = vpack.c.bf16 %v694, %v693
        %v1085 = vpack.c.bf16 %v886, %v885
        %v1086 = vpack.c.bf16 %v918, %v917
        %v1087 = vpack.c.bf16 %v950, %v949
        %v1088 = vpack.c.bf16 %v792, %v791
        %v1089 = vpack.c.bf16 %v824, %v823
        %v1090 = vpack.c.bf16 %v856, %v855
        %v1091 = vpack.c.bf16 %v567, %v566
        %v1092 = vpack.c.bf16 %v341, %v340
        %v1093 = vpack.c.bf16 %v696, %v695
        %v1094 = vpack.c.bf16 %v888, %v887
        %v1095 = vpack.c.bf16 %v920, %v919
        %v1096 = vpack.c.bf16 %v952, %v951
        %v1097 = vld [vmem:[%s1] sm:$0xff]
        %v1098 = vld [vmem:[%s1 + $0x8] sm:$0xff]
        %v1099 = vld [vmem:[%s1 + $0x10] sm:$0xff]
        %v1100 = vld [vmem:[%s1 + $0x18] sm:$0xff]
        %v1101 = vld [vmem:[%s1 + $0x20] sm:$0xff]
        %v1102 = vld [vmem:[%s1 + $0x28] sm:$0xff]
        %v1103 = vld [vmem:[%s1 + $0x30] sm:$0xff]
        %v1104 = vld [vmem:[%s1 + $0x38] sm:$0xff]
        %v1105 = vld [vmem:[%s1 + $0x40] sm:$0xff]
        %v1106 = vld [vmem:[%s1 + $0x48] sm:$0xff]
        %v1107 = vld [vmem:[%s1 + $0x50] sm:$0xff]
        %v1108 = vld [vmem:[%s1 + $0x58] sm:$0xff]
        %v1109 = vld [vmem:[%s1 + $0x60] sm:$0xff]
        %v1110 = vld [vmem:[%s1 + $0x68] sm:$0xff]
        %v1111 = vld [vmem:[%s1 + $0x70] sm:$0xff]
        %v1112 = vld [vmem:[%s1 + $0x78] sm:$0xff]
        %v1113 = vld [vmem:[%s1 + $0x80] sm:$0xff]
        %v1114 = vld [vmem:[%s1 + $0x88] sm:$0xff]
        %v1115 = vld [vmem:[%s1 + $0x90] sm:$0xff]
        %v1116 = vld [vmem:[%s1 + $0x98] sm:$0xff]
        %v1117 = vld [vmem:[%s1 + $0xa0] sm:$0xff]
        %v1118 = vld [vmem:[%s1 + $0xa8] sm:$0xff]
        %v1119 = vld [vmem:[%s1 + $0xb0] sm:$0xff]
        %v1120 = vld [vmem:[%s1 + $0xb8] sm:$0xff]
        %v1121 = vld [vmem:[%s1 + $0xc0] sm:$0xff]
        %v1122 = vld [vmem:[%s1 + $0xc8] sm:$0xff]
        %v1123 = vld [vmem:[%s1 + $0xd0] sm:$0xff]
        %v1124 = vld [vmem:[%s1 + $0xd8] sm:$0xff]
        %v1125 = vld [vmem:[%s1 + $0xe0] sm:$0xff]
        %v1126 = vld [vmem:[%s1 + $0xe8] sm:$0xff]
        %v1127 = vld [vmem:[%s1 + $0xf0] sm:$0xff]
        %v1128 = vld [vmem:[%s1 + $0xf8] sm:$0xff]
        %v1129 = vld [vmem:[%s1 + $0x100] sm:$0xff]
        %v1130 = vld [vmem:[%s1 + $0x108] sm:$0xff]
        %v1131 = vld [vmem:[%s1 + $0x110] sm:$0xff]
        %v1132 = vld [vmem:[%s1 + $0x118] sm:$0xff]
        %v1133 = vld [vmem:[%s1 + $0x120] sm:$0xff]
        %v1134 = vld [vmem:[%s1 + $0x128] sm:$0xff]
        %v1135 = vld [vmem:[%s1 + $0x130] sm:$0xff]
        %v1136 = vld [vmem:[%s1 + $0x138] sm:$0xff]
        %v1137 = vld [vmem:[%s1 + $0x140] sm:$0xff]
        %v1138 = vld [vmem:[%s1 + $0x148] sm:$0xff]
        %v1139 = vld [vmem:[%s1 + $0x150] sm:$0xff]
        %v1140 = vld [vmem:[%s1 + $0x158] sm:$0xff]
        %v1141 = vld [vmem:[%s1 + $0x160] sm:$0xff]
        %v1142 = vld [vmem:[%s1 + $0x168] sm:$0xff]
        %v1143 = vld [vmem:[%s1 + $0x170] sm:$0xff]
        %v1144 = vld [vmem:[%s1 + $0x178] sm:$0xff]
        %v1145 = vld [vmem:[%s1 + $0x180] sm:$0xff]
        %v1146 = vld [vmem:[%s1 + $0x188] sm:$0xff]
        %v1147 = vld [vmem:[%s1 + $0x190] sm:$0xff]
        %v1148 = vld [vmem:[%s1 + $0x198] sm:$0xff]
        %v1149 = vld [vmem:[%s1 + $0x1a0] sm:$0xff]
        %v1150 = vld [vmem:[%s1 + $0x1a8] sm:$0xff]
        %v1151 = vld [vmem:[%s1 + $0x1b0] sm:$0xff]
        %v1152 = vld [vmem:[%s1 + $0x1b8] sm:$0xff]
        %v1153 = vld [vmem:[%s1 + $0x1c0] sm:$0xff]
        %v1154 = vld [vmem:[%s1 + $0x1c8] sm:$0xff]
        %v1155 = vld [vmem:[%s1 + $0x1d0] sm:$0xff]
        %v1156 = vld [vmem:[%s1 + $0x1d8] sm:$0xff]
        %v1157 = vld [vmem:[%s1 + $0x1e0] sm:$0xff]
        %v1158 = vld [vmem:[%s1 + $0x1e8] sm:$0xff]
        %v1159 = vld [vmem:[%s1 + $0x1f0] sm:$0xff]
        %v1160 = vld [vmem:[%s1 + $0x1f8] sm:$0xff]
        %v1161 = vld [vmem:[%s1 + $0x200] sm:$0xff]
        %v1162 = vld [vmem:[%s1 + $0x208] sm:$0xff]
        %v1163 = vld [vmem:[%s1 + $0x210] sm:$0xff]
        %v1164 = vld [vmem:[%s1 + $0x218] sm:$0xff]
        %v1165 = vld [vmem:[%s1 + $0x220] sm:$0xff]
        %v1166 = vld [vmem:[%s1 + $0x228] sm:$0xff]
        %v1167 = vld [vmem:[%s1 + $0x230] sm:$0xff]
        %v1168 = vld [vmem:[%s1 + $0x238] sm:$0xff]
        %v1169 = vld [vmem:[%s1 + $0x240] sm:$0xff]
        %v1170 = vld [vmem:[%s1 + $0x248] sm:$0xff]
        %v1171 = vld [vmem:[%s1 + $0x250] sm:$0xff]
        %v1172 = vld [vmem:[%s1 + $0x258] sm:$0xff]
        %v1173 = vld [vmem:[%s1 + $0x260] sm:$0xff]
        %v1174 = vld [vmem:[%s1 + $0x268] sm:$0xff]
        %v1175 = vld [vmem:[%s1 + $0x270] sm:$0xff]
        %v1176 = vld [vmem:[%s1 + $0x278] sm:$0xff]
        %v1177 = vld [vmem:[%s1 + $0x280] sm:$0xff]
        %v1178 = vld [vmem:[%s1 + $0x288] sm:$0xff]
        %v1179 = vld [vmem:[%s1 + $0x290] sm:$0xff]
        %v1180 = vld [vmem:[%s1 + $0x298] sm:$0xff]
        %v1181 = vld [vmem:[%s1 + $0x2a0] sm:$0xff]
        %v1182 = vld [vmem:[%s1 + $0x2a8] sm:$0xff]
        %v1183 = vld [vmem:[%s1 + $0x2b0] sm:$0xff]
        %v1184 = vld [vmem:[%s1 + $0x2b8] sm:$0xff]
        %v1185 = vld [vmem:[%s1 + $0x2c0] sm:$0xff]
        %v1186 = vld [vmem:[%s1 + $0x2c8] sm:$0xff]
        %v1187 = vld [vmem:[%s1 + $0x2d0] sm:$0xff]
        %v1188 = vld [vmem:[%s1 + $0x2d8] sm:$0xff]
        %v1189 = vld [vmem:[%s1 + $0x2e0] sm:$0xff]
        %v1190 = vld [vmem:[%s1 + $0x2e8] sm:$0xff]
        %v1191 = vld [vmem:[%s1 + $0x2f0] sm:$0xff]
        %v1192 = vld [vmem:[%s1 + $0x2f8] sm:$0xff]
        %v1193 = vld [vmem:[%s1 + $0x300] sm:$0xff]
        %v1194 = vld [vmem:[%s1 + $0x308] sm:$0xff]
        %v1195 = vld [vmem:[%s1 + $0x310] sm:$0xff]
        %v1196 = vld [vmem:[%s1 + $0x318] sm:$0xff]
        %v1197 = vld [vmem:[%s1 + $0x320] sm:$0xff]
        %v1198 = vld [vmem:[%s1 + $0x328] sm:$0xff]
        %v1199 = vld [vmem:[%s1 + $0x330] sm:$0xff]
        %v1200 = vld [vmem:[%s1 + $0x338] sm:$0xff]
        %v1201 = vld [vmem:[%s1 + $0x340] sm:$0xff]
        %v1202 = vld [vmem:[%s1 + $0x348] sm:$0xff]
        %v1203 = vld [vmem:[%s1 + $0x350] sm:$0xff]
        %v1204 = vld [vmem:[%s1 + $0x358] sm:$0xff]
        %v1205 = vld [vmem:[%s1 + $0x360] sm:$0xff]
        %v1206 = vld [vmem:[%s1 + $0x368] sm:$0xff]
        %v1207 = vld [vmem:[%s1 + $0x370] sm:$0xff]
        %v1208 = vld [vmem:[%s1 + $0x378] sm:$0xff]
        %v1209 = vld [vmem:[%s1 + $0x380] sm:$0xff]
        %v1210 = vld [vmem:[%s1 + $0x388] sm:$0xff]
        %v1211 = vld [vmem:[%s1 + $0x390] sm:$0xff]
        %v1212 = vld [vmem:[%s1 + $0x398] sm:$0xff]
        %v1213 = vld [vmem:[%s1 + $0x3a0] sm:$0xff]
        %v1214 = vld [vmem:[%s1 + $0x3a8] sm:$0xff]
        %v1215 = vld [vmem:[%s1 + $0x3b0] sm:$0xff]
        %v1216 = vld [vmem:[%s1 + $0x3b8] sm:$0xff]
        %v1217 = vld [vmem:[%s1 + $0x3c0] sm:$0xff]
        %v1218 = vld [vmem:[%s1 + $0x3c8] sm:$0xff]
        %v1219 = vld [vmem:[%s1 + $0x3d0] sm:$0xff]
        %v1220 = vld [vmem:[%s1 + $0x3d8] sm:$0xff]
        %v1221 = vld [vmem:[%s1 + $0x3e0] sm:$0xff]
        %v1222 = vld [vmem:[%s1 + $0x3e8] sm:$0xff]
        %v1223 = vld [vmem:[%s1 + $0x3f0] sm:$0xff]
        %v1224 = vld [vmem:[%s1 + $0x3f8] sm:$0xff]
        %v1225 = vld [vmem:[%s1 + $0x400] sm:$0xff]
        %v1226 = vld [vmem:[%s1 + $0x408] sm:$0xff]
        %v1227 = vld [vmem:[%s1 + $0x410] sm:$0xff]
        %v1228 = vld [vmem:[%s1 + $0x418] sm:$0xff]
        %v1229 = vld [vmem:[%s1 + $0x420] sm:$0xff]
        %v1230 = vld [vmem:[%s1 + $0x428] sm:$0xff]
        %v1231 = vld [vmem:[%s1 + $0x430] sm:$0xff]
        %v1232 = vld [vmem:[%s1 + $0x438] sm:$0xff]
        %v1233 = vld [vmem:[%s1 + $0x440] sm:$0xff]
        %v1234 = vld [vmem:[%s1 + $0x448] sm:$0xff]
        %v1235 = vld [vmem:[%s1 + $0x450] sm:$0xff]
        %v1236 = vld [vmem:[%s1 + $0x458] sm:$0xff]
        %v1237 = vld [vmem:[%s1 + $0x460] sm:$0xff]
        %v1238 = vld [vmem:[%s1 + $0x468] sm:$0xff]
        %v1239 = vld [vmem:[%s1 + $0x470] sm:$0xff]
        %v1240 = vld [vmem:[%s1 + $0x478] sm:$0xff]
        %v1241 = vld [vmem:[%s2] sm:$0x3]
        %v1243 = vlaneseq
        %v1244 = vshrl.u32 %v1243, 7
        %v1245 = vsub.s32 0, %v1244
        %v1246 = vrot.slane %v1241, %v1245
        %v1247 = vlaneseq
        %v1248 = vshrl.u32 %v1247, 7
        %v1249 = vsub.s32 1, %v1248
        %v1250 = vrot.slane %v1241, %v1249
        %v1397 = vunpack.c.l.b16 %v1097
        %v1398 = vunpack.c.h.b16 %v1097
        %v1399 = vunpack.c.l.b16 %v1098
        %v1400 = vunpack.c.h.b16 %v1098
        %v1401 = vunpack.c.l.b16 %v1099
        %v1402 = vunpack.c.h.b16 %v1099
        %v1403 = vunpack.c.l.b16 %v1100
        %v1404 = vunpack.c.h.b16 %v1100
        %v1405 = vunpack.c.l.b16 %v1101
        %v1406 = vunpack.c.h.b16 %v1101
        %v1407 = vunpack.c.l.b16 %v1102
        %v1408 = vunpack.c.h.b16 %v1102
        %v1409 = vunpack.c.l.b16 %v1103
        %v1410 = vunpack.c.h.b16 %v1103
        %v1411 = vunpack.c.l.b16 %v1104
        %v1412 = vunpack.c.h.b16 %v1104
        %v1413 = vunpack.c.l.b16 %v1105
        %v1414 = vunpack.c.h.b16 %v1105
        %v1415 = vunpack.c.l.b16 %v1106
        %v1416 = vunpack.c.h.b16 %v1106
        %v1417 = vunpack.c.l.b16 %v1107
        %v1418 = vunpack.c.h.b16 %v1107
        %v1419 = vunpack.c.l.b16 %v1108
        %v1420 = vunpack.c.h.b16 %v1108
        %v1421 = vunpack.c.l.b16 %v1109
        %v1422 = vunpack.c.h.b16 %v1109
        %v1423 = vunpack.c.l.b16 %v1110
        %v1424 = vunpack.c.h.b16 %v1110
        %v1425 = vunpack.c.l.b16 %v1111
        %v1426 = vunpack.c.h.b16 %v1111
        %v1427 = vunpack.c.l.b16 %v1112
        %v1428 = vunpack.c.h.b16 %v1112
        %v1429 = vunpack.c.l.b16 %v1113
        %v1430 = vunpack.c.h.b16 %v1113
        %v1431 = vunpack.c.l.b16 %v1114
        %v1432 = vunpack.c.h.b16 %v1114
        %v1433 = vunpack.c.l.b16 %v1115
        %v1434 = vunpack.c.h.b16 %v1115
        %v1435 = vunpack.c.l.b16 %v1116
        %v1436 = vunpack.c.h.b16 %v1116
        %v1437 = vunpack.c.l.b16 %v1117
        %v1438 = vunpack.c.h.b16 %v1117
        %v1439 = vunpack.c.l.b16 %v1118
        %v1440 = vunpack.c.h.b16 %v1118
        %v1441 = vunpack.c.l.b16 %v1119
        %v1442 = vunpack.c.h.b16 %v1119
        %v1443 = vunpack.c.l.b16 %v1120
        %v1444 = vunpack.c.h.b16 %v1120
        %v1445 = vunpack.c.l.b16 %v1121
        %v1446 = vunpack.c.h.b16 %v1121
        %v1447 = vunpack.c.l.b16 %v1122
        %v1448 = vunpack.c.h.b16 %v1122
        %v1449 = vunpack.c.l.b16 %v1123
        %v1450 = vunpack.c.h.b16 %v1123
        %v1451 = vunpack.c.l.b16 %v1124
        %v1452 = vunpack.c.h.b16 %v1124
        %v1453 = vunpack.c.l.b16 %v1125
        %v1454 = vunpack.c.h.b16 %v1125
        %v1455 = vunpack.c.l.b16 %v1126
        %v1456 = vunpack.c.h.b16 %v1126
        %v1457 = vunpack.c.l.b16 %v1127
        %v1458 = vunpack.c.h.b16 %v1127
        %v1459 = vunpack.c.l.b16 %v1128
        %v1460 = vunpack.c.h.b16 %v1128
        %v1461 = vunpack.c.l.b16 %v1129
        %v1462 = vunpack.c.h.b16 %v1129
        %v1463 = vunpack.c.l.b16 %v1130
        %v1464 = vunpack.c.h.b16 %v1130
        %v1465 = vunpack.c.l.b16 %v1131
        %v1466 = vunpack.c.h.b16 %v1131
        %v1467 = vunpack.c.l.b16 %v1132
        %v1468 = vunpack.c.h.b16 %v1132
        %v1469 = vunpack.c.l.b16 %v1133
        %v1470 = vunpack.c.h.b16 %v1133
        %v1471 = vunpack.c.l.b16 %v1134
        %v1472 = vunpack.c.h.b16 %v1134
        %v1473 = vunpack.c.l.b16 %v1135
        %v1474 = vunpack.c.h.b16 %v1135
        %v1475 = vunpack.c.l.b16 %v1136
        %v1476 = vunpack.c.h.b16 %v1136
        %v1477 = vunpack.c.l.b16 %v1137
        %v1478 = vunpack.c.h.b16 %v1137
        %v1479 = vunpack.c.l.b16 %v1138
        %v1480 = vunpack.c.h.b16 %v1138
        %v1481 = vunpack.c.l.b16 %v1139
        %v1482 = vunpack.c.h.b16 %v1139
        %v1483 = vunpack.c.l.b16 %v1140
        %v1484 = vunpack.c.h.b16 %v1140
        %v1485 = vunpack.c.l.b16 %v1141
        %v1486 = vunpack.c.h.b16 %v1141
        %v1487 = vunpack.c.l.b16 %v1142
        %v1488 = vunpack.c.h.b16 %v1142
        %v1489 = vunpack.c.l.b16 %v1143
        %v1490 = vunpack.c.h.b16 %v1143
        %v1491 = vunpack.c.l.b16 %v1144
        %v1492 = vunpack.c.h.b16 %v1144
        %v1493 = vunpack.c.l.b16 %v1145
        %v1494 = vunpack.c.h.b16 %v1145
        %v1495 = vunpack.c.l.b16 %v1146
        %v1496 = vunpack.c.h.b16 %v1146
        %v1497 = vunpack.c.l.b16 %v1147
        %v1498 = vunpack.c.h.b16 %v1147
        %v1499 = vunpack.c.l.b16 %v1148
        %v1500 = vunpack.c.h.b16 %v1148
        %v1501 = vunpack.c.l.b16 %v1149
        %v1502 = vunpack.c.h.b16 %v1149
        %v1503 = vunpack.c.l.b16 %v1150
        %v1504 = vunpack.c.h.b16 %v1150
        %v1505 = vunpack.c.l.b16 %v1151
        %v1506 = vunpack.c.h.b16 %v1151
        %v1507 = vunpack.c.l.b16 %v1152
        %v1508 = vunpack.c.h.b16 %v1152
        %v1509 = vunpack.c.l.b16 %v1153
        %v1510 = vunpack.c.h.b16 %v1153
        %v1511 = vunpack.c.l.b16 %v1154
        %v1512 = vunpack.c.h.b16 %v1154
        %v1513 = vunpack.c.l.b16 %v1155
        %v1514 = vunpack.c.h.b16 %v1155
        %v1515 = vunpack.c.l.b16 %v1156
        %v1516 = vunpack.c.h.b16 %v1156
        %v1517 = vunpack.c.l.b16 %v1157
        %v1518 = vunpack.c.h.b16 %v1157
        %v1519 = vunpack.c.l.b16 %v1158
        %v1520 = vunpack.c.h.b16 %v1158
        %v1521 = vunpack.c.l.b16 %v1159
        %v1522 = vunpack.c.h.b16 %v1159
        %v1523 = vunpack.c.l.b16 %v1160
        %v1524 = vunpack.c.h.b16 %v1160
        %v1525 = vunpack.c.l.b16 %v1161
        %v1526 = vunpack.c.h.b16 %v1161
        %v1527 = vunpack.c.l.b16 %v1162
        %v1528 = vunpack.c.h.b16 %v1162
        %v1529 = vunpack.c.l.b16 %v1163
        %v1530 = vunpack.c.h.b16 %v1163
        %v1531 = vunpack.c.l.b16 %v1164
        %v1532 = vunpack.c.h.b16 %v1164
        %v1533 = vunpack.c.l.b16 %v1165
        %v1534 = vunpack.c.h.b16 %v1165
        %v1535 = vunpack.c.l.b16 %v1166
        %v1536 = vunpack.c.h.b16 %v1166
        %v1537 = vunpack.c.l.b16 %v1167
        %v1538 = vunpack.c.h.b16 %v1167
        %v1539 = vunpack.c.l.b16 %v1168
        %v1540 = vunpack.c.h.b16 %v1168
        %v1541 = vunpack.c.l.b16 %v1169
        %v1542 = vunpack.c.h.b16 %v1169
        %v1543 = vunpack.c.l.b16 %v1170
        %v1544 = vunpack.c.h.b16 %v1170
        %v1545 = vunpack.c.l.b16 %v1171
        %v1546 = vunpack.c.h.b16 %v1171
        %v1547 = vunpack.c.l.b16 %v1172
        %v1548 = vunpack.c.h.b16 %v1172
        %v1549 = vunpack.c.l.b16 %v1173
        %v1550 = vunpack.c.h.b16 %v1173
        %v1551 = vunpack.c.l.b16 %v1174
        %v1552 = vunpack.c.h.b16 %v1174
        %v1553 = vunpack.c.l.b16 %v1175
        %v1554 = vunpack.c.h.b16 %v1175
        %v1555 = vunpack.c.l.b16 %v1176
        %v1556 = vunpack.c.h.b16 %v1176
        %v1557 = vunpack.c.l.b16 %v1177
        %v1558 = vunpack.c.h.b16 %v1177
        %v1559 = vunpack.c.l.b16 %v1178
        %v1560 = vunpack.c.h.b16 %v1178
        %v1561 = vunpack.c.l.b16 %v1179
        %v1562 = vunpack.c.h.b16 %v1179
        %v1563 = vunpack.c.l.b16 %v1180
        %v1564 = vunpack.c.h.b16 %v1180
        %v1565 = vunpack.c.l.b16 %v1181
        %v1566 = vunpack.c.h.b16 %v1181
        %v1567 = vunpack.c.l.b16 %v1182
        %v1568 = vunpack.c.h.b16 %v1182
        %v1569 = vunpack.c.l.b16 %v1183
        %v1570 = vunpack.c.h.b16 %v1183
        %v1571 = vunpack.c.l.b16 %v1184
        %v1572 = vunpack.c.h.b16 %v1184
        %v1573 = vunpack.c.l.b16 %v1185
        %v1574 = vunpack.c.h.b16 %v1185
        %v1575 = vunpack.c.l.b16 %v1186
        %v1576 = vunpack.c.h.b16 %v1186
        %v1577 = vunpack.c.l.b16 %v1187
        %v1578 = vunpack.c.h.b16 %v1187
        %v1579 = vunpack.c.l.b16 %v1188
        %v1580 = vunpack.c.h.b16 %v1188
        %v1581 = vunpack.c.l.b16 %v1189
        %v1582 = vunpack.c.h.b16 %v1189
        %v1583 = vunpack.c.l.b16 %v1190
        %v1584 = vunpack.c.h.b16 %v1190
        %v1585 = vunpack.c.l.b16 %v1191
        %v1586 = vunpack.c.h.b16 %v1191
        %v1587 = vunpack.c.l.b16 %v1192
        %v1588 = vunpack.c.h.b16 %v1192
        %v1589 = vunpack.c.l.b16 %v1193
        %v1590 = vunpack.c.h.b16 %v1193
        %v1591 = vunpack.c.l.b16 %v1194
        %v1592 = vunpack.c.h.b16 %v1194
        %v1593 = vunpack.c.l.b16 %v1195
        %v1594 = vunpack.c.h.b16 %v1195
        %v1595 = vunpack.c.l.b16 %v1196
        %v1596 = vunpack.c.h.b16 %v1196
        %v1597 = vunpack.c.l.b16 %v1197
        %v1598 = vunpack.c.h.b16 %v1197
        %v1599 = vunpack.c.l.b16 %v1198
        %v1600 = vunpack.c.h.b16 %v1198
        %v1601 = vunpack.c.l.b16 %v1199
        %v1602 = vunpack.c.h.b16 %v1199
        %v1603 = vunpack.c.l.b16 %v1200
        %v1604 = vunpack.c.h.b16 %v1200
        %v1605 = vunpack.c.l.b16 %v1201
        %v1606 = vunpack.c.h.b16 %v1201
        %v1607 = vunpack.c.l.b16 %v1202
        %v1608 = vunpack.c.h.b16 %v1202
        %v1609 = vunpack.c.l.b16 %v1203
        %v1610 = vunpack.c.h.b16 %v1203
        %v1611 = vunpack.c.l.b16 %v1204
        %v1612 = vunpack.c.h.b16 %v1204
        %v1613 = vunpack.c.l.b16 %v1205
        %v1614 = vunpack.c.h.b16 %v1205
        %v1615 = vunpack.c.l.b16 %v1206
        %v1616 = vunpack.c.h.b16 %v1206
        %v1617 = vunpack.c.l.b16 %v1207
        %v1618 = vunpack.c.h.b16 %v1207
        %v1619 = vunpack.c.l.b16 %v1208
        %v1620 = vunpack.c.h.b16 %v1208
        %v1621 = vunpack.c.l.b16 %v1209
        %v1622 = vunpack.c.h.b16 %v1209
        %v1623 = vunpack.c.l.b16 %v1210
        %v1624 = vunpack.c.h.b16 %v1210
        %v1625 = vunpack.c.l.b16 %v1211
        %v1626 = vunpack.c.h.b16 %v1211
        %v1627 = vunpack.c.l.b16 %v1212
        %v1628 = vunpack.c.h.b16 %v1212
        %v1629 = vunpack.c.l.b16 %v1213
        %v1630 = vunpack.c.h.b16 %v1213
        %v1631 = vunpack.c.l.b16 %v1214
        %v1632 = vunpack.c.h.b16 %v1214
        %v1633 = vunpack.c.l.b16 %v1215
        %v1634 = vunpack.c.h.b16 %v1215
        %v1635 = vunpack.c.l.b16 %v1216
        %v1636 = vunpack.c.h.b16 %v1216
        %v1637 = vunpack.c.l.b16 %v1217
        %v1638 = vunpack.c.h.b16 %v1217
        %v1639 = vunpack.c.l.b16 %v1218
        %v1640 = vunpack.c.h.b16 %v1218
        %v1641 = vunpack.c.l.b16 %v1219
        %v1642 = vunpack.c.h.b16 %v1219
        %v1643 = vunpack.c.l.b16 %v1220
        %v1644 = vunpack.c.h.b16 %v1220
        %v1645 = vunpack.c.l.b16 %v1221
        %v1646 = vunpack.c.h.b16 %v1221
        %v1647 = vunpack.c.l.b16 %v1222
        %v1648 = vunpack.c.h.b16 %v1222
        %v1649 = vunpack.c.l.b16 %v1223
        %v1650 = vunpack.c.h.b16 %v1223
        %v1651 = vunpack.c.l.b16 %v1224
        %v1652 = vunpack.c.h.b16 %v1224
        %v1653 = vunpack.c.l.b16 %v1225
        %v1654 = vunpack.c.h.b16 %v1225
        %v1655 = vunpack.c.l.b16 %v1226
        %v1656 = vunpack.c.h.b16 %v1226
        %v1657 = vunpack.c.l.b16 %v1227
        %v1658 = vunpack.c.h.b16 %v1227
        %v1659 = vunpack.c.l.b16 %v1228
        %v1660 = vunpack.c.h.b16 %v1228
        %v1661 = vunpack.c.l.b16 %v1229
        %v1662 = vunpack.c.h.b16 %v1229
        %v1663 = vunpack.c.l.b16 %v1230
        %v1664 = vunpack.c.h.b16 %v1230
        %v1665 = vunpack.c.l.b16 %v1231
        %v1666 = vunpack.c.h.b16 %v1231
        %v1667 = vunpack.c.l.b16 %v1232
        %v1668 = vunpack.c.h.b16 %v1232
        %v1669 = vunpack.c.l.b16 %v1233
        %v1670 = vunpack.c.h.b16 %v1233
        %v1671 = vunpack.c.l.b16 %v1234
        %v1672 = vunpack.c.h.b16 %v1234
        %v1673 = vunpack.c.l.b16 %v1235
        %v1674 = vunpack.c.h.b16 %v1235
        %v1675 = vunpack.c.l.b16 %v1236
        %v1676 = vunpack.c.h.b16 %v1236
        %v1677 = vunpack.c.l.b16 %v1237
        %v1678 = vunpack.c.h.b16 %v1237
        %v1679 = vunpack.c.l.b16 %v1238
        %v1680 = vunpack.c.h.b16 %v1238
        %v1681 = vunpack.c.l.b16 %v1239
        %v1682 = vunpack.c.h.b16 %v1239
        %v1683 = vunpack.c.l.b16 %v1240
        %v1684 = vunpack.c.h.b16 %v1240
        %v1685 = vpack.c.b16 %v1399, %v1397
        %v1686 = vpack.c.b16 %v1400, %v1398
        %v1687 = vpack.c.b16 %v1403, %v1401
        %v1688 = vpack.c.b16 %v1404, %v1402
        %v1689 = vpack.c.b16 %v1407, %v1405
        %v1690 = vpack.c.b16 %v1408, %v1406
        %v1691 = vpack.c.b16 %v1411, %v1409
        %v1692 = vpack.c.b16 %v1412, %v1410
        %v1693 = vpack.c.b16 %v1415, %v1413
        %v1694 = vpack.c.b16 %v1416, %v1414
        %v1695 = vpack.c.b16 %v1419, %v1417
        %v1696 = vpack.c.b16 %v1420, %v1418
        %v1697 = vpack.c.b16 %v1423, %v1421
        %v1698 = vpack.c.b16 %v1424, %v1422
        %v1699 = vpack.c.b16 %v1427, %v1425
        %v1700 = vpack.c.b16 %v1428, %v1426
        %v1701 = vpack.c.b16 %v1431, %v1429
        %v1702 = vpack.c.b16 %v1432, %v1430
        %v1703 = vpack.c.b16 %v1435, %v1433
        %v1704 = vpack.c.b16 %v1436, %v1434
        %v1705 = vpack.c.b16 %v1439, %v1437
        %v1706 = vpack.c.b16 %v1440, %v1438
        %v1707 = vpack.c.b16 %v1443, %v1441
        %v1708 = vpack.c.b16 %v1444, %v1442
        %v1709 = vpack.c.b16 %v1447, %v1445
        %v1710 = vpack.c.b16 %v1448, %v1446
        %v1711 = vpack.c.b16 %v1451, %v1449
        %v1712 = vpack.c.b16 %v1452, %v1450
        %v1713 = vpack.c.b16 %v1455, %v1453
        %v1714 = vpack.c.b16 %v1456, %v1454
        %v1715 = vpack.c.b16 %v1459, %v1457
        %v1716 = vpack.c.b16 %v1460, %v1458
        %v1717 = vpack.c.b16 %v1463, %v1461
        %v1718 = vpack.c.b16 %v1464, %v1462
        %v1719 = vpack.c.b16 %v1467, %v1465
        %v1720 = vpack.c.b16 %v1468, %v1466
        %v1721 = vpack.c.b16 %v1471, %v1469
        %v1722 = vpack.c.b16 %v1472, %v1470
        %v1723 = vpack.c.b16 %v1475, %v1473
        %v1724 = vpack.c.b16 %v1476, %v1474
        %v1725 = vpack.c.b16 %v1479, %v1477
        %v1726 = vpack.c.b16 %v1480, %v1478
        %v1727 = vpack.c.b16 %v1483, %v1481
        %v1728 = vpack.c.b16 %v1484, %v1482
        %v1729 = vpack.c.b16 %v1487, %v1485
        %v1730 = vpack.c.b16 %v1488, %v1486
        %v1731 = vpack.c.b16 %v1491, %v1489
        %v1732 = vpack.c.b16 %v1492, %v1490
        %v1733 = vpack.c.b16 %v1495, %v1493
        %v1734 = vpack.c.b16 %v1496, %v1494
        %v1735 = vpack.c.b16 %v1499, %v1497
        %v1736 = vpack.c.b16 %v1500, %v1498
        %v1737 = vpack.c.b16 %v1503, %v1501
        %v1738 = vpack.c.b16 %v1504, %v1502
        %v1739 = vpack.c.b16 %v1507, %v1505
        %v1740 = vpack.c.b16 %v1508, %v1506
        %v1741 = vpack.c.b16 %v1511, %v1509
        %v1742 = vpack.c.b16 %v1512, %v1510
        %v1743 = vpack.c.b16 %v1515, %v1513
        %v1744 = vpack.c.b16 %v1516, %v1514
        %v1745 = vpack.c.b16 %v1519, %v1517
        %v1746 = vpack.c.b16 %v1520, %v1518
        %v1747 = vpack.c.b16 %v1523, %v1521
        %v1748 = vpack.c.b16 %v1524, %v1522
        %v1749 = vpack.c.b16 %v1527, %v1525
        %v1750 = vpack.c.b16 %v1528, %v1526
        %v1751 = vpack.c.b16 %v1531, %v1529
        %v1752 = vpack.c.b16 %v1532, %v1530
        %v1753 = vpack.c.b16 %v1535, %v1533
        %v1754 = vpack.c.b16 %v1536, %v1534
        %v1755 = vpack.c.b16 %v1539, %v1537
        %v1756 = vpack.c.b16 %v1540, %v1538
        %v1757 = vpack.c.b16 %v1543, %v1541
        %v1758 = vpack.c.b16 %v1544, %v1542
        %v1759 = vpack.c.b16 %v1547, %v1545
        %v1760 = vpack.c.b16 %v1548, %v1546
        %v1761 = vpack.c.b16 %v1551, %v1549
        %v1762 = vpack.c.b16 %v1552, %v1550
        %v1763 = vpack.c.b16 %v1555, %v1553
        %v1764 = vpack.c.b16 %v1556, %v1554
        %v1765 = vpack.c.b16 %v1559, %v1557
        %v1766 = vpack.c.b16 %v1560, %v1558
        %v1767 = vpack.c.b16 %v1563, %v1561
        %v1768 = vpack.c.b16 %v1564, %v1562
        %v1769 = vpack.c.b16 %v1567, %v1565
        %v1770 = vpack.c.b16 %v1568, %v1566
        %v1771 = vpack.c.b16 %v1571, %v1569
        %v1772 = vpack.c.b16 %v1572, %v1570
        %v1773 = vpack.c.b16 %v1575, %v1573
        %v1774 = vpack.c.b16 %v1576, %v1574
        %v1775 = vpack.c.b16 %v1579, %v1577
        %v1776 = vpack.c.b16 %v1580, %v1578
        %v1777 = vpack.c.b16 %v1583, %v1581
        %v1778 = vpack.c.b16 %v1584, %v1582
        %v1779 = vpack.c.b16 %v1587, %v1585
        %v1780 = vpack.c.b16 %v1588, %v1586
        %v1781 = vpack.c.b16 %v1591, %v1589
        %v1782 = vpack.c.b16 %v1592, %v1590
        %v1783 = vpack.c.b16 %v1595, %v1593
        %v1784 = vpack.c.b16 %v1596, %v1594
        %v1785 = vpack.c.b16 %v1599, %v1597
        %v1786 = vpack.c.b16 %v1600, %v1598
        %v1787 = vpack.c.b16 %v1603, %v1601
        %v1788 = vpack.c.b16 %v1604, %v1602
        %v1789 = vpack.c.b16 %v1607, %v1605
        %v1790 = vpack.c.b16 %v1608, %v1606
        %v1791 = vpack.c.b16 %v1611, %v1609
        %v1792 = vpack.c.b16 %v1612, %v1610
        %v1793 = vpack.c.b16 %v1615, %v1613
        %v1794 = vpack.c.b16 %v1616, %v1614
        %v1795 = vpack.c.b16 %v1619, %v1617
        %v1796 = vpack.c.b16 %v1620, %v1618
        %v1797 = vpack.c.b16 %v1623, %v1621
        %v1798 = vpack.c.b16 %v1624, %v1622
        %v1799 = vpack.c.b16 %v1627, %v1625
        %v1800 = vpack.c.b16 %v1628, %v1626
        %v1801 = vpack.c.b16 %v1631, %v1629
        %v1802 = vpack.c.b16 %v1632, %v1630
        %v1803 = vpack.c.b16 %v1635, %v1633
        %v1804 = vpack.c.b16 %v1636, %v1634
        %v1805 = vpack.c.b16 %v1639, %v1637
        %v1806 = vpack.c.b16 %v1640, %v1638
        %v1807 = vpack.c.b16 %v1643, %v1641
        %v1808 = vpack.c.b16 %v1644, %v1642
        %v1809 = vpack.c.b16 %v1647, %v1645
        %v1810 = vpack.c.b16 %v1648, %v1646
        %v1811 = vpack.c.b16 %v1651, %v1649
        %v1812 = vpack.c.b16 %v1652, %v1650
        %v1813 = vpack.c.b16 %v1655, %v1653
        %v1814 = vpack.c.b16 %v1656, %v1654
        %v1815 = vpack.c.b16 %v1659, %v1657
        %v1816 = vpack.c.b16 %v1660, %v1658
        %v1817 = vpack.c.b16 %v1663, %v1661
        %v1818 = vpack.c.b16 %v1664, %v1662
        %v1819 = vpack.c.b16 %v1667, %v1665
        %v1820 = vpack.c.b16 %v1668, %v1666
        %v1821 = vpack.c.b16 %v1671, %v1669
        %v1822 = vpack.c.b16 %v1672, %v1670
        %v1823 = vpack.c.b16 %v1675, %v1673
        %v1824 = vpack.c.b16 %v1676, %v1674
        %v1825 = vpack.c.b16 %v1679, %v1677
        %v1826 = vpack.c.b16 %v1680, %v1678
        %v1827 = vpack.c.b16 %v1683, %v1681
        %v1828 = vpack.c.b16 %v1684, %v1682
        %1973 = vmatprep.subr.bf16.mxu0 %v1686
        %1974 = vmatpush1.bf16.msra.mxu0 %v1685
        %1975 = vmatprep.subr.bf16.mxu0 %v1688
        %1976 = vmatpush1.bf16.msra.mxu0 %v1687
        %1977 = vmatprep.subr.bf16.mxu0 %v1690
        %1978 = vmatpush1.bf16.msra.mxu0 %v1689
        %1979 = vmatprep.subr.bf16.mxu0 %v1692
        %1980 = vmatpush1.bf16.msra.mxu0 %v1691
        %1981 = vmatprep.subr.bf16.mxu0 %v1694
        %1982 = vmatpush1.bf16.msra.mxu0 %v1693
        %1983 = vmatprep.subr.bf16.mxu0 %v1696
        %1984 = vmatpush1.bf16.msra.mxu0 %v1695
        %1985 = vmatprep.subr.bf16.mxu0 %v1698
        %1986 = vmatpush1.bf16.msra.mxu0 %v1697
        %1987 = vmatprep.subr.bf16.mxu0 %v1700
        %1988 = vmatpush1.bf16.msra.mxu0 %v1699
        %1989 = vmatprep.subr.bf16.mxu0 %v1702
        %1990 = vmatpush1.bf16.msra.mxu0 %v1701
        %1991 = vmatprep.subr.bf16.mxu0 %v1704
        %1992 = vmatpush1.bf16.msra.mxu0 %v1703
        %1993 = vmatprep.subr.bf16.mxu0 %v1706
        %1994 = vmatpush1.bf16.msra.mxu0 %v1705
        %1995 = vmatprep.subr.bf16.mxu0 %v1708
        %1996 = vmatpush1.bf16.msra.mxu0 %v1707
        %1997 = vmatprep.subr.bf16.mxu0 %v1710
        %1998 = vmatpush1.bf16.msra.mxu0 %v1709
        %1999 = vmatprep.subr.bf16.mxu0 %v1712
        %2000 = vmatpush1.bf16.msra.mxu0 %v1711
        %2001 = vmatprep.subr.bf16.mxu0 %v1714
        %2002 = vmatpush1.bf16.msra.mxu0 %v1713
        %2003 = vmatprep.subr.bf16.mxu0 %v1716
        %2004 = vmatpush1.bf16.msra.mxu0 %v1715
        %2005 = vmatprep.mubr.bf16.mxu0 %v954
        %2006 = vmatmul.mubr.bf16.gmra.mrb[0].mxu0 %v953
        %v2007 = vpop.f32.mrb[0].mxu0
        %v2008 = vadd.f32 %v1246, %v2007
        %v2009 = vpop.f32.mrb[0].mxu0
        %v2010 = vadd.f32 %v1250, %v2009
        %v2011 = vpop.f32.mrb[0].mxu0
        %v2012 = vadd.f32 %v1246, %v2011
        %v2013 = vpop.f32.mrb[0].mxu0
        %v2014 = vadd.f32 %v1250, %v2013
        %2015 = vmatprep.mubr.bf16.mxu0 %v963
        %2016 = vmatmul.mubr.bf16.gmra.mrb[0].mxu0 %v962
        %v2017 = vpop.f32.mrb[0].mxu0
        %v2018 = vadd.f32 %v1246, %v2017
        %v2019 = vpop.f32.mrb[0].mxu0
        %v2020 = vadd.f32 %v1250, %v2019
        %v2021 = vpop.f32.mrb[0].mxu0
        %v2022 = vadd.f32 %v1246, %v2021
        %v2023 = vpop.f32.mrb[0].mxu0
        %v2024 = vadd.f32 %v1250, %v2023
        %2025 = vmatprep.mubr.bf16.mxu0 %v972
        %2026 = vmatmul.mubr.bf16.gmra.mrb[0].mxu0 %v971
        %v2027 = vpop.f32.mrb[0].mxu0
        %v2028 = vadd.f32 %v1246, %v2027
        %v2029 = vpop.f32.mrb[0].mxu0
        %v2030 = vadd.f32 %v1250, %v2029
        %v2031 = vpop.f32.mrb[0].mxu0
        %v2032 = vadd.f32 %v1246, %v2031
        %v2033 = vpop.f32.mrb[0].mxu0
        %v2034 = vadd.f32 %v1250, %v2033
        %2035 = vmatprep.mubr.bf16.mxu0 %v981
        %2036 = vmatmul.mubr.bf16.gmra.mrb[0].mxu0 %v980
        %v2037 = vpop.f32.mrb[0].mxu0
        %v2038 = vadd.f32 %v1246, %v2037
        %v2039 = vpop.f32.mrb[0].mxu0
        %v2040 = vadd.f32 %v1250, %v2039
        %v2041 = vpop.f32.mrb[0].mxu0
        %v2042 = vadd.f32 %v1246, %v2041
        %v2043 = vpop.f32.mrb[0].mxu0
        %v2044 = vadd.f32 %v1250, %v2043
        %2045 = vmatprep.mubr.bf16.mxu0 %v990
        %2046 = vmatmul.mubr.bf16.gmra.mrb[0].mxu0 %v989
        %v2047 = vpop.f32.mrb[0].mxu0
        %v2048 = vadd.f32 %v1246, %v2047
        %v2049 = vpop.f32.mrb[0].mxu0
        %v2050 = vadd.f32 %v1250, %v2049
        %v2051 = vpop.f32.mrb[0].mxu0
        %v2052 = vadd.f32 %v1246, %v2051
        %v2053 = vpop.f32.mrb[0].mxu0
        %v2054 = vadd.f32 %v1250, %v2053
        %2055 = vmatprep.mubr.bf16.mxu0 %v999
        %2056 = vmatmul.mubr.bf16.gmra.mrb[0].mxu0 %v998
        %v2057 = vpop.f32.mrb[0].mxu0
        %v2058 = vadd.f32 %v1246, %v2057
        %v2059 = vpop.f32.mrb[0].mxu0
        %v2060 = vadd.f32 %v1250, %v2059
        %v2061 = vpop.f32.mrb[0].mxu0
        %v2062 = vadd.f32 %v1246, %v2061
        %v2063 = vpop.f32.mrb[0].mxu0
        %v2064 = vadd.f32 %v1250, %v2063
        %2065 = vmatprep.mubr.bf16.mxu0 %v1008
        %2066 = vmatmul.mubr.bf16.gmra.mrb[0].mxu0 %v1007
        %v2067 = vpop.f32.mrb[0].mxu0
        %v2068 = vadd.f32 %v1246, %v2067
        %v2069 = vpop.f32.mrb[0].mxu0
        %v2070 = vadd.f32 %v1250, %v2069
        %v2071 = vpop.f32.mrb[0].mxu0
        %v2072 = vadd.f32 %v1246, %v2071
        %v2073 = vpop.f32.mrb[0].mxu0
        %v2074 = vadd.f32 %v1250, %v2073
        %2075 = vmatprep.mubr.bf16.mxu0 %v1017
        %2076 = vmatmul.mubr.bf16.gmra.mrb[0].mxu0 %v1016
        %v2077 = vpop.f32.mrb[0].mxu0
        %v2078 = vadd.f32 %v1246, %v2077
        %v2079 = vpop.f32.mrb[0].mxu0
        %v2080 = vadd.f32 %v1250, %v2079
        %v2081 = vpop.f32.mrb[0].mxu0
        %v2082 = vadd.f32 %v1246, %v2081
        %v2083 = vpop.f32.mrb[0].mxu0
        %v2084 = vadd.f32 %v1250, %v2083
        %2085 = vmatprep.mubr.bf16.mxu0 %v1026
        %2086 = vmatmul.mubr.bf16.gmra.mrb[0].mxu0 %v1025
        %v2087 = vpop.f32.mrb[0].mxu0
        %v2088 = vadd.f32 %v1246, %v2087
        %v2089 = vpop.f32.mrb[0].mxu0
        %v2090 = vadd.f32 %v1250, %v2089
        %v2091 = vpop.f32.mrb[0].mxu0
        %v2092 = vadd.f32 %v1246, %v2091
        %v2093 = vpop.f32.mrb[0].mxu0
        %v2094 = vadd.f32 %v1250, %v2093
        %2095 = vmatprep.mubr.bf16.mxu0 %v1035
        %2096 = vmatmul.mubr.bf16.gmra.mrb[0].mxu0 %v1034
        %v2097 = vpop.f32.mrb[0].mxu0
        %v2098 = vadd.f32 %v1246, %v2097
        %v2099 = vpop.f32.mrb[0].mxu0
        %v2100 = vadd.f32 %v1250, %v2099
        %v2101 = vpop.f32.mrb[0].mxu0
        %v2102 = vadd.f32 %v1246, %v2101
        %v2103 = vpop.f32.mrb[0].mxu0
        %v2104 = vadd.f32 %v1250, %v2103
        %2105 = vmatprep.mubr.bf16.mxu0 %v1044
        %2106 = vmatmul.mubr.bf16.gmra.mrb[0].mxu0 %v1043
        %v2107 = vpop.f32.mrb[0].mxu0
        %v2108 = vadd.f32 %v1246, %v2107
        %v2109 = vpop.f32.mrb[0].mxu0
        %v2110 = vadd.f32 %v1250, %v2109
        %v2111 = vpop.f32.mrb[0].mxu0
        %v2112 = vadd.f32 %v1246, %v2111
        %v2113 = vpop.f32.mrb[0].mxu0
        %v2114 = vadd.f32 %v1250, %v2113
        %2115 = vmatprep.mubr.bf16.mxu0 %v1053
        %2116 = vmatmul.mubr.bf16.gmra.mrb[0].mxu0 %v1052
        %v2117 = vpop.f32.mrb[0].mxu0
        %v2118 = vadd.f32 %v1246, %v2117
        %v2119 = vpop.f32.mrb[0].mxu0
        %v2120 = vadd.f32 %v1250, %v2119
        %v2121 = vpop.f32.mrb[0].mxu0
        %v2122 = vadd.f32 %v1246, %v2121
        %v2123 = vpop.f32.mrb[0].mxu0
        %v2124 = vadd.f32 %v1250, %v2123
        %2125 = vmatprep.mubr.bf16.mxu0 %v1062
        %2126 = vmatmul.mubr.bf16.gmra.mrb[0].mxu0 %v1061
        %v2127 = vpop.f32.mrb[0].mxu0
        %v2128 = vadd.f32 %v1246, %v2127
        %v2129 = vpop.f32.mrb[0].mxu0
        %v2130 = vadd.f32 %v1250, %v2129
        %v2131 = vpop.f32.mrb[0].mxu0
        %v2132 = vadd.f32 %v1246, %v2131
        %v2133 = vpop.f32.mrb[0].mxu0
        %v2134 = vadd.f32 %v1250, %v2133
        %2135 = vmatprep.mubr.bf16.mxu0 %v1071
        %2136 = vmatmul.mubr.bf16.gmra.mrb[0].mxu0 %v1070
        %v2137 = vpop.f32.mrb[0].mxu0
        %v2138 = vadd.f32 %v1246, %v2137
        %v2139 = vpop.f32.mrb[0].mxu0
        %v2140 = vadd.f32 %v1250, %v2139
        %v2141 = vpop.f32.mrb[0].mxu0
        %v2142 = vadd.f32 %v1246, %v2141
        %v2143 = vpop.f32.mrb[0].mxu0
        %v2144 = vadd.f32 %v1250, %v2143
        %2145 = vmatprep.mubr.bf16.mxu0 %v1080
        %2146 = vmatmul.mubr.bf16.gmra.mrb[0].mxu0 %v1079
        %v2147 = vpop.f32.mrb[0].mxu0
        %v2148 = vadd.f32 %v1246, %v2147
        %v2149 = vpop.f32.mrb[0].mxu0
        %v2150 = vadd.f32 %v1250, %v2149
        %v2151 = vpop.f32.mrb[0].mxu0
        %v2152 = vadd.f32 %v1246, %v2151
        %v2153 = vpop.f32.mrb[0].mxu0
        %v2154 = vadd.f32 %v1250, %v2153
        %2155 = vmatprep.mubr.bf16.mxu0 %v1089
        %2156 = vmatmul.mubr.bf16.gmra.mrb[0].mxu0 %v1088
        %v2157 = vpop.f32.mrb[0].mxu0
        %v2158 = vadd.f32 %v1246, %v2157
        %v2159 = vpop.f32.mrb[0].mxu0
        %v2160 = vadd.f32 %v1250, %v2159
        %v2161 = vpop.f32.mrb[0].mxu0
        %v2162 = vadd.f32 %v1246, %v2161
        %v2163 = vpop.f32.mrb[0].mxu0
        %v2164 = vadd.f32 %v1250, %v2163
        %2165 = vdwg.mxu0
        %2166 = vmatprep.subr.bf16.mxu0 %v1718
        %2167 = vmatpush1.bf16.msra.mxu0 %v1717
        %2168 = vmatprep.subr.bf16.mxu0 %v1720
        %2169 = vmatpush1.bf16.msra.mxu0 %v1719
        %2170 = vmatprep.subr.bf16.mxu0 %v1722
        %2171 = vmatpush1.bf16.msra.mxu0 %v1721
        %2172 = vmatprep.subr.bf16.mxu0 %v1724
        %2173 = vmatpush1.bf16.msra.mxu0 %v1723
        %2174 = vmatprep.subr.bf16.mxu0 %v1726
        %2175 = vmatpush1.bf16.msra.mxu0 %v1725
        %2176 = vmatprep.subr.bf16.mxu0 %v1728
        %2177 = vmatpush1.bf16.msra.mxu0 %v1727
        %2178 = vmatprep.subr.bf16.mxu0 %v1730
        %2179 = vmatpush1.bf16.msra.mxu0 %v1729
        %2180 = vmatprep.subr.bf16.mxu0 %v1732
        %2181 = vmatpush1.bf16.msra.mxu0 %v1731
        %2182 = vmatprep.subr.bf16.mxu0 %v1734
        %2183 = vmatpush1.bf16.msra.mxu0 %v1733
        %2184 = vmatprep.subr.bf16.mxu0 %v1736
        %2185 = vmatpush1.bf16.msra.mxu0 %v1735
        %2186 = vmatprep.subr.bf16.mxu0 %v1738
        %2187 = vmatpush1.bf16.msra.mxu0 %v1737
        %2188 = vmatprep.subr.bf16.mxu0 %v1740
        %2189 = vmatpush1.bf16.msra.mxu0 %v1739
        %2190 = vmatprep.subr.bf16.mxu0 %v1742
        %2191 = vmatpush1.bf16.msra.mxu0 %v1741
        %2192 = vmatprep.subr.bf16.mxu0 %v1744
        %2193 = vmatpush1.bf16.msra.mxu0 %v1743
        %2194 = vmatprep.subr.bf16.mxu0 %v1746
        %2195 = vmatpush1.bf16.msra.mxu0 %v1745
        %2196 = vmatprep.subr.bf16.mxu0 %v1748
        %2197 = vmatpush1.bf16.msra.mxu0 %v1747
        %2198 = vmatprep.mubr.bf16.mxu0 %v956
        %2199 = vmatmul.mubr.bf16.gmra.mrb[0].mxu0 %v955
        %v2200 = vpop.f32.mrb[0].mxu0
        %v2201 = vadd.f32 %v2008, %v2200
        %v2202 = vpop.f32.mrb[0].mxu0
        %v2203 = vadd.f32 %v2010, %v2202
        %v2204 = vpop.f32.mrb[0].mxu0
        %v2205 = vadd.f32 %v2012, %v2204
        %v2206 = vpop.f32.mrb[0].mxu0
        %v2207 = vadd.f32 %v2014, %v2206
        %2208 = vmatprep.mubr.bf16.mxu0 %v965
        %2209 = vmatmul.mubr.bf16.gmra.mrb[0].mxu0 %v964
        %v2210 = vpop.f32.mrb[0].mxu0
        %v2211 = vadd.f32 %v2018, %v2210
        %v2212 = vpop.f32.mrb[0].mxu0
        %v2213 = vadd.f32 %v2020, %v2212
        %v2214 = vpop.f32.mrb[0].mxu0
        %v2215 = vadd.f32 %v2022, %v2214
        %v2216 = vpop.f32.mrb[0].mxu0
        %v2217 = vadd.f32 %v2024, %v2216
        %2218 = vmatprep.mubr.bf16.mxu0 %v974
        %2219 = vmatmul.mubr.bf16.gmra.mrb[0].mxu0 %v973
        %v2220 = vpop.f32.mrb[0].mxu0
        %v2221 = vadd.f32 %v2028, %v2220
        %v2222 = vpop.f32.mrb[0].mxu0
        %v2223 = vadd.f32 %v2030, %v2222
        %v2224 = vpop.f32.mrb[0].mxu0
        %v2225 = vadd.f32 %v2032, %v2224
        %v2226 = vpop.f32.mrb[0].mxu0
        %v2227 = vadd.f32 %v2034, %v2226
        %2228 = vmatprep.mubr.bf16.mxu0 %v983
        %2229 = vmatmul.mubr.bf16.gmra.mrb[0].mxu0 %v982
        %v2230 = vpop.f32.mrb[0].mxu0
        %v2231 = vadd.f32 %v2038, %v2230
        %v2232 = vpop.f32.mrb[0].mxu0
        %v2233 = vadd.f32 %v2040, %v2232
        %v2234 = vpop.f32.mrb[0].mxu0
        %v2235 = vadd.f32 %v2042, %v2234
        %v2236 = vpop.f32.mrb[0].mxu0
        %v2237 = vadd.f32 %v2044, %v2236
        %2238 = vmatprep.mubr.bf16.mxu0 %v992
        %2239 = vmatmul.mubr.bf16.gmra.mrb[0].mxu0 %v991
        %v2240 = vpop.f32.mrb[0].mxu0
        %v2241 = vadd.f32 %v2048, %v2240
        %v2242 = vpop.f32.mrb[0].mxu0
        %v2243 = vadd.f32 %v2050, %v2242
        %v2244 = vpop.f32.mrb[0].mxu0
        %v2245 = vadd.f32 %v2052, %v2244
        %v2246 = vpop.f32.mrb[0].mxu0
        %v2247 = vadd.f32 %v2054, %v2246
        %2248 = vmatprep.mubr.bf16.mxu0 %v1001
        %2249 = vmatmul.mubr.bf16.gmra.mrb[0].mxu0 %v1000
        %v2250 = vpop.f32.mrb[0].mxu0
        %v2251 = vadd.f32 %v2058, %v2250
        %v2252 = vpop.f32.mrb[0].mxu0
        %v2253 = vadd.f32 %v2060, %v2252
        %v2254 = vpop.f32.mrb[0].mxu0
        %v2255 = vadd.f32 %v2062, %v2254
        %v2256 = vpop.f32.mrb[0].mxu0
        %v2257 = vadd.f32 %v2064, %v2256
        %2258 = vmatprep.mubr.bf16.mxu0 %v1010
        %2259 = vmatmul.mubr.bf16.gmra.mrb[0].mxu0 %v1009
        %v2260 = vpop.f32.mrb[0].mxu0
        %v2261 = vadd.f32 %v2068, %v2260
        %v2262 = vpop.f32.mrb[0].mxu0
        %v2263 = vadd.f32 %v2070, %v2262
        %v2264 = vpop.f32.mrb[0].mxu0
        %v2265 = vadd.f32 %v2072, %v2264
        %v2266 = vpop.f32.mrb[0].mxu0
        %v2267 = vadd.f32 %v2074, %v2266
        %2268 = vmatprep.mubr.bf16.mxu0 %v1019
        %2269 = vmatmul.mubr.bf16.gmra.mrb[0].mxu0 %v1018
        %v2270 = vpop.f32.mrb[0].mxu0
        %v2271 = vadd.f32 %v2078, %v2270
        %v2272 = vpop.f32.mrb[0].mxu0
        %v2273 = vadd.f32 %v2080, %v2272
        %v2274 = vpop.f32.mrb[0].mxu0
        %v2275 = vadd.f32 %v2082, %v2274
        %v2276 = vpop.f32.mrb[0].mxu0
        %v2277 = vadd.f32 %v2084, %v2276
        %2278 = vmatprep.mubr.bf16.mxu0 %v1028
        %2279 = vmatmul.mubr.bf16.gmra.mrb[0].mxu0 %v1027
        %v2280 = vpop.f32.mrb[0].mxu0
        %v2281 = vadd.f32 %v2088, %v2280
        %v2282 = vpop.f32.mrb[0].mxu0
        %v2283 = vadd.f32 %v2090, %v2282
        %v2284 = vpop.f32.mrb[0].mxu0
        %v2285 = vadd.f32 %v2092, %v2284
        %v2286 = vpop.f32.mrb[0].mxu0
        %v2287 = vadd.f32 %v2094, %v2286
        %2288 = vmatprep.mubr.bf16.mxu0 %v1037
        %2289 = vmatmul.mubr.bf16.gmra.mrb[0].mxu0 %v1036
        %v2290 = vpop.f32.mrb[0].mxu0
        %v2291 = vadd.f32 %v2098, %v2290
        %v2292 = vpop.f32.mrb[0].mxu0
        %v2293 = vadd.f32 %v2100, %v2292
        %v2294 = vpop.f32.mrb[0].mxu0
        %v2295 = vadd.f32 %v2102, %v2294
        %v2296 = vpop.f32.mrb[0].mxu0
        %v2297 = vadd.f32 %v2104, %v2296
        %2298 = vmatprep.mubr.bf16.mxu0 %v1046
        %2299 = vmatmul.mubr.bf16.gmra.mrb[0].mxu0 %v1045
        %v2300 = vpop.f32.mrb[0].mxu0
        %v2301 = vadd.f32 %v2108, %v2300
        %v2302 = vpop.f32.mrb[0].mxu0
        %v2303 = vadd.f32 %v2110, %v2302
        %v2304 = vpop.f32.mrb[0].mxu0
        %v2305 = vadd.f32 %v2112, %v2304
        %v2306 = vpop.f32.mrb[0].mxu0
        %v2307 = vadd.f32 %v2114, %v2306
        %2308 = vmatprep.mubr.bf16.mxu0 %v1055
        %2309 = vmatmul.mubr.bf16.gmra.mrb[0].mxu0 %v1054
        %v2310 = vpop.f32.mrb[0].mxu0
        %v2311 = vadd.f32 %v2118, %v2310
        %v2312 = vpop.f32.mrb[0].mxu0
        %v2313 = vadd.f32 %v2120, %v2312
        %v2314 = vpop.f32.mrb[0].mxu0
        %v2315 = vadd.f32 %v2122, %v2314
        %v2316 = vpop.f32.mrb[0].mxu0
        %v2317 = vadd.f32 %v2124, %v2316
        %2318 = vmatprep.mubr.bf16.mxu0 %v1064
        %2319 = vmatmul.mubr.bf16.gmra.mrb[0].mxu0 %v1063
        %v2320 = vpop.f32.mrb[0].mxu0
        %v2321 = vadd.f32 %v2128, %v2320
        %v2322 = vpop.f32.mrb[0].mxu0
        %v2323 = vadd.f32 %v2130, %v2322
        %v2324 = vpop.f32.mrb[0].mxu0
        %v2325 = vadd.f32 %v2132, %v2324
        %v2326 = vpop.f32.mrb[0].mxu0
        %v2327 = vadd.f32 %v2134, %v2326
        %2328 = vmatprep.mubr.bf16.mxu0 %v1073
        %2329 = vmatmul.mubr.bf16.gmra.mrb[0].mxu0 %v1072
        %v2330 = vpop.f32.mrb[0].mxu0
        %v2331 = vadd.f32 %v2138, %v2330
        %v2332 = vpop.f32.mrb[0].mxu0
        %v2333 = vadd.f32 %v2140, %v2332
        %v2334 = vpop.f32.mrb[0].mxu0
        %v2335 = vadd.f32 %v2142, %v2334
        %v2336 = vpop.f32.mrb[0].mxu0
        %v2337 = vadd.f32 %v2144, %v2336
        %2338 = vmatprep.mubr.bf16.mxu0 %v1082
        %2339 = vmatmul.mubr.bf16.gmra.mrb[0].mxu0 %v1081
        %v2340 = vpop.f32.mrb[0].mxu0
        %v2341 = vadd.f32 %v2148, %v2340
        %v2342 = vpop.f32.mrb[0].mxu0
        %v2343 = vadd.f32 %v2150, %v2342
        %v2344 = vpop.f32.mrb[0].mxu0
        %v2345 = vadd.f32 %v2152, %v2344
        %v2346 = vpop.f32.mrb[0].mxu0
        %v2347 = vadd.f32 %v2154, %v2346
        %2348 = vmatprep.mubr.bf16.mxu0 %v1091
        %2349 = vmatmul.mubr.bf16.gmra.mrb[0].mxu0 %v1090
        %v2350 = vpop.f32.mrb[0].mxu0
        %v2351 = vadd.f32 %v2158, %v2350
        %v2352 = vpop.f32.mrb[0].mxu0
        %v2353 = vadd.f32 %v2160, %v2352
        %v2354 = vpop.f32.mrb[0].mxu0
        %v2355 = vadd.f32 %v2162, %v2354
        %v2356 = vpop.f32.mrb[0].mxu0
        %v2357 = vadd.f32 %v2164, %v2356
        %2358 = vdwg.mxu0
        %2359 = vmatprep.subr.bf16.mxu0 %v1750
        %2360 = vmatpush1.bf16.msra.mxu0 %v1749
        %2361 = vmatprep.subr.bf16.mxu0 %v1752
        %2362 = vmatpush1.bf16.msra.mxu0 %v1751
        %2363 = vmatprep.subr.bf16.mxu0 %v1754
        %2364 = vmatpush1.bf16.msra.mxu0 %v1753
        %2365 = vmatprep.subr.bf16.mxu0 %v1756
        %2366 = vmatpush1.bf16.msra.mxu0 %v1755
        %2367 = vmatprep.subr.bf16.mxu0 %v1758
        %2368 = vmatpush1.bf16.msra.mxu0 %v1757
        %2369 = vmatprep.subr.bf16.mxu0 %v1760
        %2370 = vmatpush1.bf16.msra.mxu0 %v1759
        %2371 = vmatprep.subr.bf16.mxu0 %v1762
        %2372 = vmatpush1.bf16.msra.mxu0 %v1761
        %2373 = vmatprep.subr.bf16.mxu0 %v1764
        %2374 = vmatpush1.bf16.msra.mxu0 %v1763
        %2375 = vmatprep.subr.bf16.mxu0 %v1766
        %2376 = vmatpush1.bf16.msra.mxu0 %v1765
        %2377 = vmatprep.subr.bf16.mxu0 %v1768
        %2378 = vmatpush1.bf16.msra.mxu0 %v1767
        %2379 = vmatprep.subr.bf16.mxu0 %v1770
        %2380 = vmatpush1.bf16.msra.mxu0 %v1769
        %2381 = vmatprep.subr.bf16.mxu0 %v1772
        %2382 = vmatpush1.bf16.msra.mxu0 %v1771
        %2383 = vmatprep.subr.bf16.mxu0 %v1774
        %2384 = vmatpush1.bf16.msra.mxu0 %v1773
        %2385 = vmatprep.subr.bf16.mxu0 %v1776
        %2386 = vmatpush1.bf16.msra.mxu0 %v1775
        %2387 = vmatprep.subr.bf16.mxu0 %v1778
        %2388 = vmatpush1.bf16.msra.mxu0 %v1777
        %2389 = vmatprep.subr.bf16.mxu0 %v1780
        %2390 = vmatpush1.bf16.msra.mxu0 %v1779
        %2391 = vmatprep.mubr.bf16.mxu0 %v958
        %2392 = vmatmul.mubr.bf16.gmra.mrb[0].mxu0 %v957
        %v2393 = vpop.f32.mrb[0].mxu0
        %v2394 = vadd.f32 %v2201, %v2393
        %v2395 = vpop.f32.mrb[0].mxu0
        %v2396 = vadd.f32 %v2203, %v2395
        %v2397 = vpop.f32.mrb[0].mxu0
        %v2398 = vadd.f32 %v2205, %v2397
        %v2399 = vpop.f32.mrb[0].mxu0
        %v2400 = vadd.f32 %v2207, %v2399
        %2401 = vmatprep.mubr.bf16.mxu0 %v967
        %2402 = vmatmul.mubr.bf16.gmra.mrb[0].mxu0 %v966
        %v2403 = vpop.f32.mrb[0].mxu0
        %v2404 = vadd.f32 %v2211, %v2403
        %v2405 = vpop.f32.mrb[0].mxu0
        %v2406 = vadd.f32 %v2213, %v2405
        %v2407 = vpop.f32.mrb[0].mxu0
        %v2408 = vadd.f32 %v2215, %v2407
        %v2409 = vpop.f32.mrb[0].mxu0
        %v2410 = vadd.f32 %v2217, %v2409
        %2411 = vmatprep.mubr.bf16.mxu0 %v976
        %2412 = vmatmul.mubr.bf16.gmra.mrb[0].mxu0 %v975
        %v2413 = vpop.f32.mrb[0].mxu0
        %v2414 = vadd.f32 %v2221, %v2413
        %v2415 = vpop.f32.mrb[0].mxu0
        %v2416 = vadd.f32 %v2223, %v2415
        %v2417 = vpop.f32.mrb[0].mxu0
        %v2418 = vadd.f32 %v2225, %v2417
        %v2419 = vpop.f32.mrb[0].mxu0
        %v2420 = vadd.f32 %v2227, %v2419
        %2421 = vmatprep.mubr.bf16.mxu0 %v985
        %2422 = vmatmul.mubr.bf16.gmra.mrb[0].mxu0 %v984
        %v2423 = vpop.f32.mrb[0].mxu0
        %v2424 = vadd.f32 %v2231, %v2423
        %v2425 = vpop.f32.mrb[0].mxu0
        %v2426 = vadd.f32 %v2233, %v2425
        %v2427 = vpop.f32.mrb[0].mxu0
        %v2428 = vadd.f32 %v2235, %v2427
        %v2429 = vpop.f32.mrb[0].mxu0
        %v2430 = vadd.f32 %v2237, %v2429
        %2431 = vmatprep.mubr.bf16.mxu0 %v994
        %2432 = vmatmul.mubr.bf16.gmra.mrb[0].mxu0 %v993
        %v2433 = vpop.f32.mrb[0].mxu0
        %v2434 = vadd.f32 %v2241, %v2433
        %v2435 = vpop.f32.mrb[0].mxu0
        %v2436 = vadd.f32 %v2243, %v2435
        %v2437 = vpop.f32.mrb[0].mxu0
        %v2438 = vadd.f32 %v2245, %v2437
        %v2439 = vpop.f32.mrb[0].mxu0
        %v2440 = vadd.f32 %v2247, %v2439
        %2441 = vmatprep.mubr.bf16.mxu0 %v1003
        %2442 = vmatmul.mubr.bf16.gmra.mrb[0].mxu0 %v1002
        %v2443 = vpop.f32.mrb[0].mxu0
        %v2444 = vadd.f32 %v2251, %v2443
        %v2445 = vpop.f32.mrb[0].mxu0
        %v2446 = vadd.f32 %v2253, %v2445
        %v2447 = vpop.f32.mrb[0].mxu0
        %v2448 = vadd.f32 %v2255, %v2447
        %v2449 = vpop.f32.mrb[0].mxu0
        %v2450 = vadd.f32 %v2257, %v2449
        %2451 = vmatprep.mubr.bf16.mxu0 %v1012
        %2452 = vmatmul.mubr.bf16.gmra.mrb[0].mxu0 %v1011
        %v2453 = vpop.f32.mrb[0].mxu0
        %v2454 = vadd.f32 %v2261, %v2453
        %v2455 = vpop.f32.mrb[0].mxu0
        %v2456 = vadd.f32 %v2263, %v2455
        %v2457 = vpop.f32.mrb[0].mxu0
        %v2458 = vadd.f32 %v2265, %v2457
        %v2459 = vpop.f32.mrb[0].mxu0
        %v2460 = vadd.f32 %v2267, %v2459
        %2461 = vmatprep.mubr.bf16.mxu0 %v1021
        %2462 = vmatmul.mubr.bf16.gmra.mrb[0].mxu0 %v1020
        %v2463 = vpop.f32.mrb[0].mxu0
        %v2464 = vadd.f32 %v2271, %v2463
        %v2465 = vpop.f32.mrb[0].mxu0
        %v2466 = vadd.f32 %v2273, %v2465
        %v2467 = vpop.f32.mrb[0].mxu0
        %v2468 = vadd.f32 %v2275, %v2467
        %v2469 = vpop.f32.mrb[0].mxu0
        %v2470 = vadd.f32 %v2277, %v2469
        %2471 = vmatprep.mubr.bf16.mxu0 %v1030
        %2472 = vmatmul.mubr.bf16.gmra.mrb[0].mxu0 %v1029
        %v2473 = vpop.f32.mrb[0].mxu0
        %v2474 = vadd.f32 %v2281, %v2473
        %v2475 = vpop.f32.mrb[0].mxu0
        %v2476 = vadd.f32 %v2283, %v2475
        %v2477 = vpop.f32.mrb[0].mxu0
        %v2478 = vadd.f32 %v2285, %v2477
        %v2479 = vpop.f32.mrb[0].mxu0
        %v2480 = vadd.f32 %v2287, %v2479
        %2481 = vmatprep.mubr.bf16.mxu0 %v1039
        %2482 = vmatmul.mubr.bf16.gmra.mrb[0].mxu0 %v1038
        %v2483 = vpop.f32.mrb[0].mxu0
        %v2484 = vadd.f32 %v2291, %v2483
        %v2485 = vpop.f32.mrb[0].mxu0
        %v2486 = vadd.f32 %v2293, %v2485
        %v2487 = vpop.f32.mrb[0].mxu0
        %v2488 = vadd.f32 %v2295, %v2487
        %v2489 = vpop.f32.mrb[0].mxu0
        %v2490 = vadd.f32 %v2297, %v2489
        %2491 = vmatprep.mubr.bf16.mxu0 %v1048
        %2492 = vmatmul.mubr.bf16.gmra.mrb[0].mxu0 %v1047
        %v2493 = vpop.f32.mrb[0].mxu0
        %v2494 = vadd.f32 %v2301, %v2493
        %v2495 = vpop.f32.mrb[0].mxu0
        %v2496 = vadd.f32 %v2303, %v2495
        %v2497 = vpop.f32.mrb[0].mxu0
        %v2498 = vadd.f32 %v2305, %v2497
        %v2499 = vpop.f32.mrb[0].mxu0
        %v2500 = vadd.f32 %v2307, %v2499
        %2501 = vmatprep.mubr.bf16.mxu0 %v1057
        %2502 = vmatmul.mubr.bf16.gmra.mrb[0].mxu0 %v1056
        %v2503 = vpop.f32.mrb[0].mxu0
        %v2504 = vadd.f32 %v2311, %v2503
        %v2505 = vpop.f32.mrb[0].mxu0
        %v2506 = vadd.f32 %v2313, %v2505
        %v2507 = vpop.f32.mrb[0].mxu0
        %v2508 = vadd.f32 %v2315, %v2507
        %v2509 = vpop.f32.mrb[0].mxu0
        %v2510 = vadd.f32 %v2317, %v2509
        %2511 = vmatprep.mubr.bf16.mxu0 %v1066
        %2512 = vmatmul.mubr.bf16.gmra.mrb[0].mxu0 %v1065
        %v2513 = vpop.f32.mrb[0].mxu0
        %v2514 = vadd.f32 %v2321, %v2513
        %v2515 = vpop.f32.mrb[0].mxu0
        %v2516 = vadd.f32 %v2323, %v2515
        %v2517 = vpop.f32.mrb[0].mxu0
        %v2518 = vadd.f32 %v2325, %v2517
        %v2519 = vpop.f32.mrb[0].mxu0
        %v2520 = vadd.f32 %v2327, %v2519
        %2521 = vmatprep.mubr.bf16.mxu0 %v1075
        %2522 = vmatmul.mubr.bf16.gmra.mrb[0].mxu0 %v1074
        %v2523 = vpop.f32.mrb[0].mxu0
        %v2524 = vadd.f32 %v2331, %v2523
        %v2525 = vpop.f32.mrb[0].mxu0
        %v2526 = vadd.f32 %v2333, %v2525
        %v2527 = vpop.f32.mrb[0].mxu0
        %v2528 = vadd.f32 %v2335, %v2527
        %v2529 = vpop.f32.mrb[0].mxu0
        %v2530 = vadd.f32 %v2337, %v2529
        %2531 = vmatprep.mubr.bf16.mxu0 %v1084
        %2532 = vmatmul.mubr.bf16.gmra.mrb[0].mxu0 %v1083
        %v2533 = vpop.f32.mrb[0].mxu0
        %v2534 = vadd.f32 %v2341, %v2533
        %v2535 = vpop.f32.mrb[0].mxu0
        %v2536 = vadd.f32 %v2343, %v2535
        %v2537 = vpop.f32.mrb[0].mxu0
        %v2538 = vadd.f32 %v2345, %v2537
        %v2539 = vpop.f32.mrb[0].mxu0
        %v2540 = vadd.f32 %v2347, %v2539
        %2541 = vmatprep.mubr.bf16.mxu0 %v1093
        %2542 = vmatmul.mubr.bf16.gmra.mrb[0].mxu0 %v1092
        %v2543 = vpop.f32.mrb[0].mxu0
        %v2544 = vadd.f32 %v2351, %v2543
        %v2545 = vpop.f32.mrb[0].mxu0
        %v2546 = vadd.f32 %v2353, %v2545
        %v2547 = vpop.f32.mrb[0].mxu0
        %v2548 = vadd.f32 %v2355, %v2547
        %v2549 = vpop.f32.mrb[0].mxu0
        %v2550 = vadd.f32 %v2357, %v2549
        %2551 = vdwg.mxu0
        %2552 = vmatprep.subr.bf16.mxu0 %v1782
        %2553 = vmatpush1.bf16.msra.mxu0 %v1781
        %2554 = vmatprep.subr.bf16.mxu0 %v1784
        %2555 = vmatpush1.bf16.msra.mxu0 %v1783
        %2556 = vmatprep.subr.bf16.mxu0 %v1786
        %2557 = vmatpush1.bf16.msra.mxu0 %v1785
        %2558 = vmatprep.subr.bf16.mxu0 %v1788
        %2559 = vmatpush1.bf16.msra.mxu0 %v1787
        %2560 = vmatprep.subr.bf16.mxu0 %v1790
        %2561 = vmatpush1.bf16.msra.mxu0 %v1789
        %2562 = vmatprep.subr.bf16.mxu0 %v1792
        %2563 = vmatpush1.bf16.msra.mxu0 %v1791
        %2564 = vmatprep.subr.bf16.mxu0 %v1794
        %2565 = vmatpush1.bf16.msra.mxu0 %v1793
        %2566 = vmatprep.subr.bf16.mxu0 %v1796
        %2567 = vmatpush1.bf16.msra.mxu0 %v1795
        %2568 = vmatprep.subr.bf16.mxu0 %v1798
        %2569 = vmatpush1.bf16.msra.mxu0 %v1797
        %2570 = vmatprep.subr.bf16.mxu0 %v1800
        %2571 = vmatpush1.bf16.msra.mxu0 %v1799
        %2572 = vmatprep.subr.bf16.mxu0 %v1802
        %2573 = vmatpush1.bf16.msra.mxu0 %v1801
        %2574 = vmatprep.subr.bf16.mxu0 %v1804
        %2575 = vmatpush1.bf16.msra.mxu0 %v1803
        %2576 = vmatprep.subr.bf16.mxu0 %v1806
        %2577 = vmatpush1.bf16.msra.mxu0 %v1805
        %2578 = vmatprep.subr.bf16.mxu0 %v1808
        %2579 = vmatpush1.bf16.msra.mxu0 %v1807
        %2580 = vmatprep.subr.bf16.mxu0 %v1810
        %2581 = vmatpush1.bf16.msra.mxu0 %v1809
        %2582 = vmatprep.subr.bf16.mxu0 %v1812
        %2583 = vmatpush1.bf16.msra.mxu0 %v1811
        %2584 = vmatprep.mubr.bf16.mxu0 %v960
        %2585 = vmatmul.mubr.bf16.gmra.mrb[0].mxu0 %v959
        %v2586 = vpop.f32.mrb[0].mxu0
        %v2587 = vadd.f32 %v2394, %v2586
        %v2588 = vpop.f32.mrb[0].mxu0
        %v2589 = vadd.f32 %v2396, %v2588
        %v2590 = vpop.f32.mrb[0].mxu0
        %v2591 = vadd.f32 %v2398, %v2590
        %v2592 = vpop.f32.mrb[0].mxu0
        %v2593 = vadd.f32 %v2400, %v2592
        %2594 = vmatprep.mubr.bf16.mxu0 %v969
        %2595 = vmatmul.mubr.bf16.gmra.mrb[0].mxu0 %v968
        %v2596 = vpop.f32.mrb[0].mxu0
        %v2597 = vadd.f32 %v2404, %v2596
        %v2598 = vpop.f32.mrb[0].mxu0
        %v2599 = vadd.f32 %v2406, %v2598
        %v2600 = vpop.f32.mrb[0].mxu0
        %v2601 = vadd.f32 %v2408, %v2600
        %v2602 = vpop.f32.mrb[0].mxu0
        %v2603 = vadd.f32 %v2410, %v2602
        %2604 = vmatprep.mubr.bf16.mxu0 %v978
        %2605 = vmatmul.mubr.bf16.gmra.mrb[0].mxu0 %v977
        %v2606 = vpop.f32.mrb[0].mxu0
        %v2607 = vadd.f32 %v2414, %v2606
        %v2608 = vpop.f32.mrb[0].mxu0
        %v2609 = vadd.f32 %v2416, %v2608
        %v2610 = vpop.f32.mrb[0].mxu0
        %v2611 = vadd.f32 %v2418, %v2610
        %v2612 = vpop.f32.mrb[0].mxu0
        %v2613 = vadd.f32 %v2420, %v2612
        %2614 = vmatprep.mubr.bf16.mxu0 %v987
        %2615 = vmatmul.mubr.bf16.gmra.mrb[0].mxu0 %v986
        %v2616 = vpop.f32.mrb[0].mxu0
        %v2617 = vadd.f32 %v2424, %v2616
        %v2618 = vpop.f32.mrb[0].mxu0
        %v2619 = vadd.f32 %v2426, %v2618
        %v2620 = vpop.f32.mrb[0].mxu0
        %v2621 = vadd.f32 %v2428, %v2620
        %v2622 = vpop.f32.mrb[0].mxu0
        %v2623 = vadd.f32 %v2430, %v2622
        %2624 = vmatprep.mubr.bf16.mxu0 %v996
        %2625 = vmatmul.mubr.bf16.gmra.mrb[0].mxu0 %v995
        %v2626 = vpop.f32.mrb[0].mxu0
        %v2627 = vadd.f32 %v2434, %v2626
        %v2628 = vpop.f32.mrb[0].mxu0
        %v2629 = vadd.f32 %v2436, %v2628
        %v2630 = vpop.f32.mrb[0].mxu0
        %v2631 = vadd.f32 %v2438, %v2630
        %v2632 = vpop.f32.mrb[0].mxu0
        %v2633 = vadd.f32 %v2440, %v2632
        %2634 = vmatprep.mubr.bf16.mxu0 %v1005
        %2635 = vmatmul.mubr.bf16.gmra.mrb[0].mxu0 %v1004
        %v2636 = vpop.f32.mrb[0].mxu0
        %v2637 = vadd.f32 %v2444, %v2636
        %v2638 = vpop.f32.mrb[0].mxu0
        %v2639 = vadd.f32 %v2446, %v2638
        %v2640 = vpop.f32.mrb[0].mxu0
        %v2641 = vadd.f32 %v2448, %v2640
        %v2642 = vpop.f32.mrb[0].mxu0
        %v2643 = vadd.f32 %v2450, %v2642
        %2644 = vmatprep.mubr.bf16.mxu0 %v1014
        %2645 = vmatmul.mubr.bf16.gmra.mrb[0].mxu0 %v1013
        %v2646 = vpop.f32.mrb[0].mxu0
        %v2647 = vadd.f32 %v2454, %v2646
        %v2648 = vpop.f32.mrb[0].mxu0
        %v2649 = vadd.f32 %v2456, %v2648
        %v2650 = vpop.f32.mrb[0].mxu0
        %v2651 = vadd.f32 %v2458, %v2650
        %v2652 = vpop.f32.mrb[0].mxu0
        %v2653 = vadd.f32 %v2460, %v2652
        %2654 = vmatprep.mubr.bf16.mxu0 %v1023
        %2655 = vmatmul.mubr.bf16.gmra.mrb[0].mxu0 %v1022
        %v2656 = vpop.f32.mrb[0].mxu0
        %v2657 = vadd.f32 %v2464, %v2656
        %v2658 = vpop.f32.mrb[0].mxu0
        %v2659 = vadd.f32 %v2466, %v2658
        %v2660 = vpop.f32.mrb[0].mxu0
        %v2661 = vadd.f32 %v2468, %v2660
        %v2662 = vpop.f32.mrb[0].mxu0
        %v2663 = vadd.f32 %v2470, %v2662
        %2664 = vmatprep.mubr.bf16.mxu0 %v1032
        %2665 = vmatmul.mubr.bf16.gmra.mrb[0].mxu0 %v1031
        %v2666 = vpop.f32.mrb[0].mxu0
        %v2667 = vadd.f32 %v2474, %v2666
        %v2668 = vpop.f32.mrb[0].mxu0
        %v2669 = vadd.f32 %v2476, %v2668
        %v2670 = vpop.f32.mrb[0].mxu0
        %v2671 = vadd.f32 %v2478, %v2670
        %v2672 = vpop.f32.mrb[0].mxu0
        %v2673 = vadd.f32 %v2480, %v2672
        %2674 = vmatprep.mubr.bf16.mxu0 %v1041
        %2675 = vmatmul.mubr.bf16.gmra.mrb[0].mxu0 %v1040
        %v2676 = vpop.f32.mrb[0].mxu0
        %v2677 = vadd.f32 %v2484, %v2676
        %v2678 = vpop.f32.mrb[0].mxu0
        %v2679 = vadd.f32 %v2486, %v2678
        %v2680 = vpop.f32.mrb[0].mxu0
        %v2681 = vadd.f32 %v2488, %v2680
        %v2682 = vpop.f32.mrb[0].mxu0
        %v2683 = vadd.f32 %v2490, %v2682
        %2684 = vmatprep.mubr.bf16.mxu0 %v1050
        %2685 = vmatmul.mubr.bf16.gmra.mrb[0].mxu0 %v1049
        %v2686 = vpop.f32.mrb[0].mxu0
        %v2687 = vadd.f32 %v2494, %v2686
        %v2688 = vpop.f32.mrb[0].mxu0
        %v2689 = vadd.f32 %v2496, %v2688
        %v2690 = vpop.f32.mrb[0].mxu0
        %v2691 = vadd.f32 %v2498, %v2690
        %v2692 = vpop.f32.mrb[0].mxu0
        %v2693 = vadd.f32 %v2500, %v2692
        %2694 = vmatprep.mubr.bf16.mxu0 %v1059
        %2695 = vmatmul.mubr.bf16.gmra.mrb[0].mxu0 %v1058
        %v2696 = vpop.f32.mrb[0].mxu0
        %v2697 = vadd.f32 %v2504, %v2696
        %v2698 = vpop.f32.mrb[0].mxu0
        %v2699 = vadd.f32 %v2506, %v2698
        %v2700 = vpop.f32.mrb[0].mxu0
        %v2701 = vadd.f32 %v2508, %v2700
        %v2702 = vpop.f32.mrb[0].mxu0
        %v2703 = vadd.f32 %v2510, %v2702
        %2704 = vmatprep.mubr.bf16.mxu0 %v1068
        %2705 = vmatmul.mubr.bf16.gmra.mrb[0].mxu0 %v1067
        %v2706 = vpop.f32.mrb[0].mxu0
        %v2707 = vadd.f32 %v2514, %v2706
        %v2708 = vpop.f32.mrb[0].mxu0
        %v2709 = vadd.f32 %v2516, %v2708
        %v2710 = vpop.f32.mrb[0].mxu0
        %v2711 = vadd.f32 %v2518, %v2710
        %v2712 = vpop.f32.mrb[0].mxu0
        %v2713 = vadd.f32 %v2520, %v2712
        %2714 = vmatprep.mubr.bf16.mxu0 %v1077
        %2715 = vmatmul.mubr.bf16.gmra.mrb[0].mxu0 %v1076
        %v2716 = vpop.f32.mrb[0].mxu0
        %v2717 = vadd.f32 %v2524, %v2716
        %v2718 = vpop.f32.mrb[0].mxu0
        %v2719 = vadd.f32 %v2526, %v2718
        %v2720 = vpop.f32.mrb[0].mxu0
        %v2721 = vadd.f32 %v2528, %v2720
        %v2722 = vpop.f32.mrb[0].mxu0
        %v2723 = vadd.f32 %v2530, %v2722
        %2724 = vmatprep.mubr.bf16.mxu0 %v1086
        %2725 = vmatmul.mubr.bf16.gmra.mrb[0].mxu0 %v1085
        %v2726 = vpop.f32.mrb[0].mxu0
        %v2727 = vadd.f32 %v2534, %v2726
        %v2728 = vpop.f32.mrb[0].mxu0
        %v2729 = vadd.f32 %v2536, %v2728
        %v2730 = vpop.f32.mrb[0].mxu0
        %v2731 = vadd.f32 %v2538, %v2730
        %v2732 = vpop.f32.mrb[0].mxu0
        %v2733 = vadd.f32 %v2540, %v2732
        %2734 = vmatprep.mubr.bf16.mxu0 %v1095
        %2735 = vmatmul.mubr.bf16.gmra.mrb[0].mxu0 %v1094
        %v2736 = vpop.f32.mrb[0].mxu0
        %v2737 = vadd.f32 %v2544, %v2736
        %v2738 = vpop.f32.mrb[0].mxu0
        %v2739 = vadd.f32 %v2546, %v2738
        %v2740 = vpop.f32.mrb[0].mxu0
        %v2741 = vadd.f32 %v2548, %v2740
        %v2742 = vpop.f32.mrb[0].mxu0
        %v2743 = vadd.f32 %v2550, %v2742
        %2744 = vdwg.mxu0
        %2745 = vmatprep.subr.bf16.mxu0 %v1814
        %2746 = vmatpush1.bf16.msra.mxu0 %v1813
        %2747 = vmatprep.subr.bf16.mxu0 %v1816
        %2748 = vmatpush1.bf16.msra.mxu0 %v1815
        %2749 = vmatprep.subr.bf16.mxu0 %v1818
        %2750 = vmatpush1.bf16.msra.mxu0 %v1817
        %2751 = vmatprep.subr.bf16.mxu0 %v1820
        %2752 = vmatpush1.bf16.msra.mxu0 %v1819
        %2753 = vmatprep.subr.bf16.mxu0 %v1822
        %2754 = vmatpush1.bf16.msra.mxu0 %v1821
        %2755 = vmatprep.subr.bf16.mxu0 %v1824
        %2756 = vmatpush1.bf16.msra.mxu0 %v1823
        %2757 = vmatprep.subr.bf16.mxu0 %v1826
        %2758 = vmatpush1.bf16.msra.mxu0 %v1825
        %2759 = vmatprep.subr.bf16.mxu0 %v1828
        %2760 = vmatpush1.bf16.msra.mxu0 %v1827
        %2761 = vmatprep.subr.bf16.mxu0 0
        %2762 = vmatpush1.bf16.msra.mxu0 0
        %2763 = vmatprep.subr.bf16.mxu0 0
        %2764 = vmatpush1.bf16.msra.mxu0 0
        %2765 = vmatprep.subr.bf16.mxu0 0
        %2766 = vmatpush1.bf16.msra.mxu0 0
        %2767 = vmatprep.subr.bf16.mxu0 0
        %2768 = vmatpush1.bf16.msra.mxu0 0
        %2769 = vmatprep.subr.bf16.mxu0 0
        %2770 = vmatpush1.bf16.msra.mxu0 0
        %2771 = vmatprep.subr.bf16.mxu0 0
        %2772 = vmatpush1.bf16.msra.mxu0 0
        %2773 = vmatprep.subr.bf16.mxu0 0
        %2774 = vmatpush1.bf16.msra.mxu0 0
        %2775 = vmatprep.subr.bf16.mxu0 0
        %2776 = vmatpush1.bf16.msra.mxu0 0
        %2777 = vmatprep.mubr.bf16.mxu0 0
        %2778 = vmatmul.mubr.bf16.gmra.mrb[0].mxu0 %v961
        %v2779 = vpop.f32.mrb[0].mxu0
        %v2780 = vadd.f32 %v2587, %v2779
        %v2781 = vpop.f32.mrb[0].mxu0
        %v2782 = vadd.f32 %v2589, %v2781
        %v2783 = vpop.f32.mrb[0].mxu0
        %v2784 = vadd.f32 %v2591, %v2783
        %v2785 = vpop.f32.mrb[0].mxu0
        %v2786 = vadd.f32 %v2593, %v2785
        %2787 = vmatprep.mubr.bf16.mxu0 0
        %2788 = vmatmul.mubr.bf16.gmra.mrb[0].mxu0 %v970
        %v2789 = vpop.f32.mrb[0].mxu0
        %v2790 = vadd.f32 %v2597, %v2789
        %v2791 = vpop.f32.mrb[0].mxu0
        %v2792 = vadd.f32 %v2599, %v2791
        %v2793 = vpop.f32.mrb[0].mxu0
        %v2794 = vadd.f32 %v2601, %v2793
        %v2795 = vpop.f32.mrb[0].mxu0
        %v2796 = vadd.f32 %v2603, %v2795
        %2797 = vmatprep.mubr.bf16.mxu0 0
        %2798 = vmatmul.mubr.bf16.gmra.mrb[0].mxu0 %v979
        %v2799 = vpop.f32.mrb[0].mxu0
        %v2800 = vadd.f32 %v2607, %v2799
        %v2801 = vpop.f32.mrb[0].mxu0
        %v2802 = vadd.f32 %v2609, %v2801
        %v2803 = vpop.f32.mrb[0].mxu0
        %v2804 = vadd.f32 %v2611, %v2803
        %v2805 = vpop.f32.mrb[0].mxu0
        %v2806 = vadd.f32 %v2613, %v2805
        %2807 = vmatprep.mubr.bf16.mxu0 0
        %2808 = vmatmul.mubr.bf16.gmra.mrb[0].mxu0 %v988
        %v2809 = vpop.f32.mrb[0].mxu0
        %v2810 = vadd.f32 %v2617, %v2809
        %v2811 = vpop.f32.mrb[0].mxu0
        %v2812 = vadd.f32 %v2619, %v2811
        %v2813 = vpop.f32.mrb[0].mxu0
        %v2814 = vadd.f32 %v2621, %v2813
        %v2815 = vpop.f32.mrb[0].mxu0
        %v2816 = vadd.f32 %v2623, %v2815
        %2817 = vmatprep.mubr.bf16.mxu0 0
        %2818 = vmatmul.mubr.bf16.gmra.mrb[0].mxu0 %v997
        %v2819 = vpop.f32.mrb[0].mxu0
        %v2820 = vadd.f32 %v2627, %v2819
        %v2821 = vpop.f32.mrb[0].mxu0
        %v2822 = vadd.f32 %v2629, %v2821
        %v2823 = vpop.f32.mrb[0].mxu0
        %v2824 = vadd.f32 %v2631, %v2823
        %v2825 = vpop.f32.mrb[0].mxu0
        %v2826 = vadd.f32 %v2633, %v2825
        %2827 = vmatprep.mubr.bf16.mxu0 0
        %2828 = vmatmul.mubr.bf16.gmra.mrb[0].mxu0 %v1006
        %v2829 = vpop.f32.mrb[0].mxu0
        %v2830 = vadd.f32 %v2637, %v2829
        %v2831 = vpop.f32.mrb[0].mxu0
        %v2832 = vadd.f32 %v2639, %v2831
        %v2833 = vpop.f32.mrb[0].mxu0
        %v2834 = vadd.f32 %v2641, %v2833
        %v2835 = vpop.f32.mrb[0].mxu0
        %v2836 = vadd.f32 %v2643, %v2835
        %2837 = vmatprep.mubr.bf16.mxu0 0
        %2838 = vmatmul.mubr.bf16.gmra.mrb[0].mxu0 %v1015
        %v2839 = vpop.f32.mrb[0].mxu0
        %v2840 = vadd.f32 %v2647, %v2839
        %v2841 = vpop.f32.mrb[0].mxu0
        %v2842 = vadd.f32 %v2649, %v2841
        %v2843 = vpop.f32.mrb[0].mxu0
        %v2844 = vadd.f32 %v2651, %v2843
        %v2845 = vpop.f32.mrb[0].mxu0
        %v2846 = vadd.f32 %v2653, %v2845
        %2847 = vmatprep.mubr.bf16.mxu0 0
        %2848 = vmatmul.mubr.bf16.gmra.mrb[0].mxu0 %v1024
        %v2849 = vpop.f32.mrb[0].mxu0
        %v2850 = vadd.f32 %v2657, %v2849
        %v2851 = vpop.f32.mrb[0].mxu0
        %v2852 = vadd.f32 %v2659, %v2851
        %v2853 = vpop.f32.mrb[0].mxu0
        %v2854 = vadd.f32 %v2661, %v2853
        %v2855 = vpop.f32.mrb[0].mxu0
        %v2856 = vadd.f32 %v2663, %v2855
        %2857 = vmatprep.mubr.bf16.mxu0 0
        %2858 = vmatmul.mubr.bf16.gmra.mrb[0].mxu0 %v1033
        %v2859 = vpop.f32.mrb[0].mxu0
        %v2860 = vadd.f32 %v2667, %v2859
        %v2861 = vpop.f32.mrb[0].mxu0
        %v2862 = vadd.f32 %v2669, %v2861
        %v2863 = vpop.f32.mrb[0].mxu0
        %v2864 = vadd.f32 %v2671, %v2863
        %v2865 = vpop.f32.mrb[0].mxu0
        %v2866 = vadd.f32 %v2673, %v2865
        %2867 = vmatprep.mubr.bf16.mxu0 0
        %2868 = vmatmul.mubr.bf16.gmra.mrb[0].mxu0 %v1042
        %v2869 = vpop.f32.mrb[0].mxu0
        %v2870 = vadd.f32 %v2677, %v2869
        %v2871 = vpop.f32.mrb[0].mxu0
        %v2872 = vadd.f32 %v2679, %v2871
        %v2873 = vpop.f32.mrb[0].mxu0
        %v2874 = vadd.f32 %v2681, %v2873
        %v2875 = vpop.f32.mrb[0].mxu0
        %v2876 = vadd.f32 %v2683, %v2875
        %2877 = vmatprep.mubr.bf16.mxu0 0
        %2878 = vmatmul.mubr.bf16.gmra.mrb[0].mxu0 %v1051
        %v2879 = vpop.f32.mrb[0].mxu0
        %v2880 = vadd.f32 %v2687, %v2879
        %v2881 = vpop.f32.mrb[0].mxu0
        %v2882 = vadd.f32 %v2689, %v2881
        %v2883 = vpop.f32.mrb[0].mxu0
        %v2884 = vadd.f32 %v2691, %v2883
        %v2885 = vpop.f32.mrb[0].mxu0
        %v2886 = vadd.f32 %v2693, %v2885
        %2887 = vmatprep.mubr.bf16.mxu0 0
        %2888 = vmatmul.mubr.bf16.gmra.mrb[0].mxu0 %v1060
        %v2889 = vpop.f32.mrb[0].mxu0
        %v2890 = vadd.f32 %v2697, %v2889
        %v2891 = vpop.f32.mrb[0].mxu0
        %v2892 = vadd.f32 %v2699, %v2891
        %v2893 = vpop.f32.mrb[0].mxu0
        %v2894 = vadd.f32 %v2701, %v2893
        %v2895 = vpop.f32.mrb[0].mxu0
        %v2896 = vadd.f32 %v2703, %v2895
        %2897 = vmatprep.mubr.bf16.mxu0 0
        %2898 = vmatmul.mubr.bf16.gmra.mrb[0].mxu0 %v1069
        %v2899 = vpop.f32.mrb[0].mxu0
        %v2900 = vadd.f32 %v2707, %v2899
        %v2901 = vpop.f32.mrb[0].mxu0
        %v2902 = vadd.f32 %v2709, %v2901
        %v2903 = vpop.f32.mrb[0].mxu0
        %v2904 = vadd.f32 %v2711, %v2903
        %v2905 = vpop.f32.mrb[0].mxu0
        %v2906 = vadd.f32 %v2713, %v2905
        %2907 = vmatprep.mubr.bf16.mxu0 0
        %2908 = vmatmul.mubr.bf16.gmra.mrb[0].mxu0 %v1078
        %v2909 = vpop.f32.mrb[0].mxu0
        %v2910 = vadd.f32 %v2717, %v2909
        %v2911 = vpop.f32.mrb[0].mxu0
        %v2912 = vadd.f32 %v2719, %v2911
        %v2913 = vpop.f32.mrb[0].mxu0
        %v2914 = vadd.f32 %v2721, %v2913
        %v2915 = vpop.f32.mrb[0].mxu0
        %v2916 = vadd.f32 %v2723, %v2915
        %2917 = vmatprep.mubr.bf16.mxu0 0
        %2918 = vmatmul.mubr.bf16.gmra.mrb[0].mxu0 %v1087
        %v2919 = vpop.f32.mrb[0].mxu0
        %v2920 = vadd.f32 %v2727, %v2919
        %v2921 = vpop.f32.mrb[0].mxu0
        %v2922 = vadd.f32 %v2729, %v2921
        %v2923 = vpop.f32.mrb[0].mxu0
        %v2924 = vadd.f32 %v2731, %v2923
        %v2925 = vpop.f32.mrb[0].mxu0
        %v2926 = vadd.f32 %v2733, %v2925
        %2927 = vmatprep.mubr.bf16.mxu0 0
        %2928 = vmatmul.mubr.bf16.gmra.mrb[0].mxu0 %v1096
        %v2929 = vpop.f32.mrb[0].mxu0
        %v2930 = vadd.f32 %v2737, %v2929
        %v2931 = vpop.f32.mrb[0].mxu0
        %v2932 = vadd.f32 %v2739, %v2931
        %v2933 = vpop.f32.mrb[0].mxu0
        %v2934 = vadd.f32 %v2741, %v2933
        %v2935 = vpop.f32.mrb[0].mxu0
        %v2936 = vadd.f32 %v2743, %v2935
        %2937 = vdwg.mxu0
        %v2938 = vmax.f32 %v2780, 0.0
        %v2939 = vmax.f32 %v2782, 0.0
        %v2940 = vmax.f32 %v2784, 0.0
        %v2941 = vmax.f32 %v2786, 0.0
        %v2942 = vmax.f32 %v2790, 0.0
        %v2943 = vmax.f32 %v2792, 0.0
        %v2944 = vmax.f32 %v2794, 0.0
        %v2945 = vmax.f32 %v2796, 0.0
        %v2946 = vmax.f32 %v2800, 0.0
        %v2947 = vmax.f32 %v2802, 0.0
        %v2948 = vmax.f32 %v2804, 0.0
        %v2949 = vmax.f32 %v2806, 0.0
        %v2950 = vmax.f32 %v2810, 0.0
        %v2951 = vmax.f32 %v2812, 0.0
        %v2952 = vmax.f32 %v2814, 0.0
        %v2953 = vmax.f32 %v2816, 0.0
        %v2954 = vmax.f32 %v2820, 0.0
        %v2955 = vmax.f32 %v2822, 0.0
        %v2956 = vmax.f32 %v2824, 0.0
        %v2957 = vmax.f32 %v2826, 0.0
        %v2958 = vmax.f32 %v2830, 0.0
        %v2959 = vmax.f32 %v2832, 0.0
        %v2960 = vmax.f32 %v2834, 0.0
        %v2961 = vmax.f32 %v2836, 0.0
        %v2962 = vmax.f32 %v2840, 0.0
        %v2963 = vmax.f32 %v2842, 0.0
        %v2964 = vmax.f32 %v2844, 0.0
        %v2965 = vmax.f32 %v2846, 0.0
        %v2966 = vmax.f32 %v2850, 0.0
        %v2967 = vmax.f32 %v2852, 0.0
        %v2968 = vmax.f32 %v2854, 0.0
        %v2969 = vmax.f32 %v2856, 0.0
        %v2970 = vmax.f32 %v2860, 0.0
        %v2971 = vmax.f32 %v2862, 0.0
        %v2972 = vmax.f32 %v2864, 0.0
        %v2973 = vmax.f32 %v2866, 0.0
        %v2974 = vmax.f32 %v2870, 0.0
        %v2975 = vmax.f32 %v2872, 0.0
        %v2976 = vmax.f32 %v2874, 0.0
        %v2977 = vmax.f32 %v2876, 0.0
        %v2978 = vmax.f32 %v2880, 0.0
        %v2979 = vmax.f32 %v2882, 0.0
        %v2980 = vmax.f32 %v2884, 0.0
        %v2981 = vmax.f32 %v2886, 0.0
        %v2982 = vmax.f32 %v2890, 0.0
        %v2983 = vmax.f32 %v2892, 0.0
        %v2984 = vmax.f32 %v2894, 0.0
        %v2985 = vmax.f32 %v2896, 0.0
        %v2986 = vmax.f32 %v2900, 0.0
        %v2987 = vmax.f32 %v2902, 0.0
        %v2988 = vmax.f32 %v2904, 0.0
        %v2989 = vmax.f32 %v2906, 0.0
        %v2990 = vmax.f32 %v2910, 0.0
        %v2991 = vmax.f32 %v2912, 0.0
        %v2992 = vmax.f32 %v2914, 0.0
        %v2993 = vmax.f32 %v2916, 0.0
        %v2994 = vmax.f32 %v2920, 0.0
        %v2995 = vmax.f32 %v2922, 0.0
        %v2996 = vmax.f32 %v2924, 0.0
        %v2997 = vmax.f32 %v2926, 0.0
        %v2998 = vmax.f32 %v2930, 0.0
        %v2999 = vmax.f32 %v2932, 0.0
        %v3000 = vmax.f32 %v2934, 0.0
        %v3001 = vmax.f32 %v2936, 0.0
        %vm3002 = vcmp.lt.s32.totalorder %v375, 15
        %vm3003 = vcmp.lt.s32.totalorder %v376, 15
        %vm3004 = vcmp.lt.s32.totalorder %v377, 15
        %vm3005 = vcmp.lt.s32.totalorder %v378, 15
        %vm3006 = vcmp.lt.s32.totalorder %v379, 15
        %vm3007 = vcmp.lt.s32.totalorder %v380, 15
        %vm3008 = vcmp.lt.s32.totalorder %v381, 15
        %vm3009 = vcmp.lt.s32.totalorder %v382, 15
        %vm3010 = vcmp.lt.s32.totalorder %v383, 15
        %vm3011 = vcmp.lt.s32.totalorder %v384, 15
        %vm3012 = vcmp.lt.s32.totalorder %v385, 15
        %vm3013 = vcmp.lt.s32.totalorder %v386, 15
        %vm3014 = vcmp.lt.s32.totalorder %v387, 15
        %vm3015 = vcmp.lt.s32.totalorder %v388, 15
        %vm3016 = vcmp.lt.s32.totalorder %v389, 15
        %vm3017 = vcmp.lt.s32.totalorder %v390, 15
        %vm3018 = vcmp.lt.s32.totalorder %v391, 15
        %vm3019 = vcmp.lt.s32.totalorder %v392, 15
        %vm3020 = vcmp.lt.s32.totalorder %v393, 15
        %vm3021 = vcmp.lt.s32.totalorder %v394, 15
        %vm3022 = vcmp.lt.s32.totalorder %v395, 15
        %vm3023 = vcmp.lt.s32.totalorder %v396, 15
        %vm3024 = vcmp.lt.s32.totalorder %v397, 15
        %vm3025 = vcmp.lt.s32.totalorder %v398, 15
        %vm3026 = vcmp.lt.s32.totalorder %v399, 15
        %vm3027 = vcmp.lt.s32.totalorder %v400, 15
        %vm3028 = vcmp.lt.s32.totalorder %v401, 15
        %vm3029 = vcmp.lt.s32.totalorder %v402, 15
        %vm3030 = vcmp.lt.s32.totalorder %v403, 15
        %vm3031 = vcmp.lt.s32.totalorder %v404, 15
        %vm3032 = vcmp.lt.s32.totalorder %v405, 15
        %vm3033 = vcmp.lt.s32.totalorder %v406, 15
        %v3034 = vsel %vm3002, %v2942, 0.0
        %v3035 = vsel %vm3003, %v2944, 0.0
        %v3036 = vsel %vm3004, %v2946, 0.0
        %v3037 = vsel %vm3005, %v2948, 0.0
        %v3038 = vsel %vm3006, %v2950, 0.0
        %v3039 = vsel %vm3007, %v2952, 0.0
        %v3040 = vsel %vm3008, %v2954, 0.0
        %v3041 = vsel %vm3009, %v2956, 0.0
        %v3042 = vsel %vm3010, %v2958, 0.0
        %v3043 = vsel %vm3011, %v2960, 0.0
        %v3044 = vsel %vm3012, %v2962, 0.0
        %v3045 = vsel %vm3013, %v2964, 0.0
        %v3046 = vsel %vm3014, %v2966, 0.0
        %v3047 = vsel %vm3015, %v2968, 0.0
        %v3048 = vsel %vm3016, %v2970, 0.0
        %v3049 = vsel %vm3017, %v2972, 0.0
        %v3050 = vsel %vm3018, %v2974, 0.0
        %v3051 = vsel %vm3019, %v2976, 0.0
        %v3052 = vsel %vm3020, %v2978, 0.0
        %v3053 = vsel %vm3021, %v2980, 0.0
        %v3054 = vsel %vm3022, %v2982, 0.0
        %v3055 = vsel %vm3023, %v2984, 0.0
        %v3056 = vsel %vm3024, %v2986, 0.0
        %v3057 = vsel %vm3025, %v2988, 0.0
        %v3058 = vsel %vm3026, %v2990, 0.0
        %v3059 = vsel %vm3027, %v2992, 0.0
        %v3060 = vsel %vm3028, %v2994, 0.0
        %v3061 = vsel %vm3029, %v2996, 0.0
        %v3062 = vsel %vm3030, %v2998, 0.0
        %v3063 = vsel %vm3031, %v3000, 0.0
        %v3064 = vsel %vm3032, %v2938, 0.0
        %v3065 = vsel %vm3033, %v2940, 0.0
        %v3066 = vmax.f32 %v2938, %v3034
        %v3067 = vmax.f32 %v2940, %v3035
        %v3068 = vmax.f32 %v2942, %v3036
        %v3069 = vmax.f32 %v2944, %v3037
        %v3070 = vmax.f32 %v2946, %v3038
        %v3071 = vmax.f32 %v2948, %v3039
        %v3072 = vmax.f32 %v2950, %v3040
        %v3073 = vmax.f32 %v2952, %v3041
        %v3074 = vmax.f32 %v2954, %v3042
        %v3075 = vmax.f32 %v2956, %v3043
        %v3076 = vmax.f32 %v2958, %v3044
        %v3077 = vmax.f32 %v2960, %v3045
        %v3078 = vmax.f32 %v2962, %v3046
        %v3079 = vmax.f32 %v2964, %v3047
        %v3080 = vmax.f32 %v2966, %v3048
        %v3081 = vmax.f32 %v2968, %v3049
        %v3082 = vmax.f32 %v2970, %v3050
        %v3083 = vmax.f32 %v2972, %v3051
        %v3084 = vmax.f32 %v2974, %v3052
        %v3085 = vmax.f32 %v2976, %v3053
        %v3086 = vmax.f32 %v2978, %v3054
        %v3087 = vmax.f32 %v2980, %v3055
        %v3088 = vmax.f32 %v2982, %v3056
        %v3089 = vmax.f32 %v2984, %v3057
        %v3090 = vmax.f32 %v2986, %v3058
        %v3091 = vmax.f32 %v2988, %v3059
        %v3092 = vmax.f32 %v2990, %v3060
        %v3093 = vmax.f32 %v2992, %v3061
        %v3094 = vmax.f32 %v2994, %v3062
        %v3095 = vmax.f32 %v2996, %v3063
        %v3096 = vmax.f32 %v2998, %v3064
        %v3097 = vmax.f32 %v3000, %v3065
        %vm3098 = vcmp.lt.s32.totalorder %v375, 14
        %vm3099 = vcmp.lt.s32.totalorder %v376, 14
        %vm3100 = vcmp.lt.s32.totalorder %v377, 14
        %vm3101 = vcmp.lt.s32.totalorder %v378, 14
        %vm3102 = vcmp.lt.s32.totalorder %v379, 14
        %vm3103 = vcmp.lt.s32.totalorder %v380, 14
        %vm3104 = vcmp.lt.s32.totalorder %v381, 14
        %vm3105 = vcmp.lt.s32.totalorder %v382, 14
        %vm3106 = vcmp.lt.s32.totalorder %v383, 14
        %vm3107 = vcmp.lt.s32.totalorder %v384, 14
        %vm3108 = vcmp.lt.s32.totalorder %v385, 14
        %vm3109 = vcmp.lt.s32.totalorder %v386, 14
        %vm3110 = vcmp.lt.s32.totalorder %v387, 14
        %vm3111 = vcmp.lt.s32.totalorder %v388, 14
        %vm3112 = vcmp.lt.s32.totalorder %v389, 14
        %vm3113 = vcmp.lt.s32.totalorder %v390, 14
        %vm3114 = vcmp.lt.s32.totalorder %v391, 14
        %vm3115 = vcmp.lt.s32.totalorder %v392, 14
        %vm3116 = vcmp.lt.s32.totalorder %v393, 14
        %vm3117 = vcmp.lt.s32.totalorder %v394, 14
        %vm3118 = vcmp.lt.s32.totalorder %v395, 14
        %vm3119 = vcmp.lt.s32.totalorder %v396, 14
        %vm3120 = vcmp.lt.s32.totalorder %v397, 14
        %vm3121 = vcmp.lt.s32.totalorder %v398, 14
        %vm3122 = vcmp.lt.s32.totalorder %v399, 14
        %vm3123 = vcmp.lt.s32.totalorder %v400, 14
        %vm3124 = vcmp.lt.s32.totalorder %v401, 14
        %vm3125 = vcmp.lt.s32.totalorder %v402, 14
        %vm3126 = vcmp.lt.s32.totalorder %v403, 14
        %vm3127 = vcmp.lt.s32.totalorder %v404, 14
        %vm3128 = vcmp.lt.s32.totalorder %v405, 14
        %vm3129 = vcmp.lt.s32.totalorder %v406, 14
        %v3130 = vsel %vm3098, %v3070, 0.0
        %v3131 = vsel %vm3099, %v3071, 0.0
        %v3132 = vsel %vm3100, %v3072, 0.0
        %v3133 = vsel %vm3101, %v3073, 0.0
        %v3134 = vsel %vm3102, %v3074, 0.0
        %v3135 = vsel %vm3103, %v3075, 0.0
        %v3136 = vsel %vm3104, %v3076, 0.0
        %v3137 = vsel %vm3105, %v3077, 0.0
        %v3138 = vsel %vm3106, %v3078, 0.0
        %v3139 = vsel %vm3107, %v3079, 0.0
        %v3140 = vsel %vm3108, %v3080, 0.0
        %v3141 = vsel %vm3109, %v3081, 0.0
        %v3142 = vsel %vm3110, %v3082, 0.0
        %v3143 = vsel %vm3111, %v3083, 0.0
        %v3144 = vsel %vm3112, %v3084, 0.0
        %v3145 = vsel %vm3113, %v3085, 0.0
        %v3146 = vsel %vm3114, %v3086, 0.0
        %v3147 = vsel %vm3115, %v3087, 0.0
        %v3148 = vsel %vm3116, %v3088, 0.0
        %v3149 = vsel %vm3117, %v3089, 0.0
        %v3150 = vsel %vm3118, %v3090, 0.0
        %v3151 = vsel %vm3119, %v3091, 0.0
        %v3152 = vsel %vm3120, %v3092, 0.0
        %v3153 = vsel %vm3121, %v3093, 0.0
        %v3154 = vsel %vm3122, %v3094, 0.0
        %v3155 = vsel %vm3123, %v3095, 0.0
        %v3156 = vsel %vm3124, %v3096, 0.0
        %v3157 = vsel %vm3125, %v3097, 0.0
        %v3158 = vsel %vm3126, %v3066, 0.0
        %v3159 = vsel %vm3127, %v3067, 0.0
        %v3160 = vsel %vm3128, %v3068, 0.0
        %v3161 = vsel %vm3129, %v3069, 0.0
        %v3162 = vmax.f32 %v3066, %v3130
        %v3163 = vmax.f32 %v3067, %v3131
        %v3164 = vmax.f32 %v3068, %v3132
        %v3165 = vmax.f32 %v3069, %v3133
        %v3166 = vmax.f32 %v3070, %v3134
        %v3167 = vmax.f32 %v3071, %v3135
        %v3168 = vmax.f32 %v3072, %v3136
        %v3169 = vmax.f32 %v3073, %v3137
        %v3170 = vmax.f32 %v3074, %v3138
        %v3171 = vmax.f32 %v3075, %v3139
        %v3172 = vmax.f32 %v3076, %v3140
        %v3173 = vmax.f32 %v3077, %v3141
        %v3174 = vmax.f32 %v3078, %v3142
        %v3175 = vmax.f32 %v3079, %v3143
        %v3176 = vmax.f32 %v3080, %v3144
        %v3177 = vmax.f32 %v3081, %v3145
        %v3178 = vmax.f32 %v3082, %v3146
        %v3179 = vmax.f32 %v3083, %v3147
        %v3180 = vmax.f32 %v3084, %v3148
        %v3181 = vmax.f32 %v3085, %v3149
        %v3182 = vmax.f32 %v3086, %v3150
        %v3183 = vmax.f32 %v3087, %v3151
        %v3184 = vmax.f32 %v3088, %v3152
        %v3185 = vmax.f32 %v3089, %v3153
        %v3186 = vmax.f32 %v3090, %v3154
        %v3187 = vmax.f32 %v3091, %v3155
        %v3188 = vmax.f32 %v3092, %v3156
        %v3189 = vmax.f32 %v3093, %v3157
        %v3190 = vmax.f32 %v3094, %v3158
        %v3191 = vmax.f32 %v3095, %v3159
        %v3192 = vmax.f32 %v3096, %v3160
        %v3193 = vmax.f32 %v3097, %v3161
        %vm3194 = vcmp.lt.s32.totalorder %v375, 12
        %vm3195 = vcmp.lt.s32.totalorder %v376, 12
        %vm3196 = vcmp.lt.s32.totalorder %v377, 12
        %vm3197 = vcmp.lt.s32.totalorder %v378, 12
        %vm3198 = vcmp.lt.s32.totalorder %v379, 12
        %vm3199 = vcmp.lt.s32.totalorder %v380, 12
        %vm3200 = vcmp.lt.s32.totalorder %v381, 12
        %vm3201 = vcmp.lt.s32.totalorder %v382, 12
        %vm3202 = vcmp.lt.s32.totalorder %v383, 12
        %vm3203 = vcmp.lt.s32.totalorder %v384, 12
        %vm3204 = vcmp.lt.s32.totalorder %v385, 12
        %vm3205 = vcmp.lt.s32.totalorder %v386, 12
        %vm3206 = vcmp.lt.s32.totalorder %v387, 12
        %vm3207 = vcmp.lt.s32.totalorder %v388, 12
        %vm3208 = vcmp.lt.s32.totalorder %v389, 12
        %vm3209 = vcmp.lt.s32.totalorder %v390, 12
        %vm3210 = vcmp.lt.s32.totalorder %v391, 12
        %vm3211 = vcmp.lt.s32.totalorder %v392, 12
        %vm3212 = vcmp.lt.s32.totalorder %v393, 12
        %vm3213 = vcmp.lt.s32.totalorder %v394, 12
        %vm3214 = vcmp.lt.s32.totalorder %v395, 12
        %vm3215 = vcmp.lt.s32.totalorder %v396, 12
        %vm3216 = vcmp.lt.s32.totalorder %v397, 12
        %vm3217 = vcmp.lt.s32.totalorder %v398, 12
        %vm3218 = vcmp.lt.s32.totalorder %v399, 12
        %vm3219 = vcmp.lt.s32.totalorder %v400, 12
        %vm3220 = vcmp.lt.s32.totalorder %v401, 12
        %vm3221 = vcmp.lt.s32.totalorder %v402, 12
        %vm3222 = vcmp.lt.s32.totalorder %v403, 12
        %vm3223 = vcmp.lt.s32.totalorder %v404, 12
        %vm3224 = vcmp.lt.s32.totalorder %v405, 12
        %vm3225 = vcmp.lt.s32.totalorder %v406, 12
        %v3226 = vsel %vm3194, %v3170, 0.0
        %v3227 = vsel %vm3195, %v3171, 0.0
        %v3228 = vsel %vm3196, %v3172, 0.0
        %v3229 = vsel %vm3197, %v3173, 0.0
        %v3230 = vsel %vm3198, %v3174, 0.0
        %v3231 = vsel %vm3199, %v3175, 0.0
        %v3232 = vsel %vm3200, %v3176, 0.0
        %v3233 = vsel %vm3201, %v3177, 0.0
        %v3234 = vsel %vm3202, %v3178, 0.0
        %v3235 = vsel %vm3203, %v3179, 0.0
        %v3236 = vsel %vm3204, %v3180, 0.0
        %v3237 = vsel %vm3205, %v3181, 0.0
        %v3238 = vsel %vm3206, %v3182, 0.0
        %v3239 = vsel %vm3207, %v3183, 0.0
        %v3240 = vsel %vm3208, %v3184, 0.0
        %v3241 = vsel %vm3209, %v3185, 0.0
        %v3242 = vsel %vm3210, %v3186, 0.0
        %v3243 = vsel %vm3211, %v3187, 0.0
        %v3244 = vsel %vm3212, %v3188, 0.0
        %v3245 = vsel %vm3213, %v3189, 0.0
        %v3246 = vsel %vm3214, %v3190, 0.0
        %v3247 = vsel %vm3215, %v3191, 0.0
        %v3248 = vsel %vm3216, %v3192, 0.0
        %v3249 = vsel %vm3217, %v3193, 0.0
        %v3250 = vsel %vm3218, %v3162, 0.0
        %v3251 = vsel %vm3219, %v3163, 0.0
        %v3252 = vsel %vm3220, %v3164, 0.0
        %v3253 = vsel %vm3221, %v3165, 0.0
        %v3254 = vsel %vm3222, %v3166, 0.0
        %v3255 = vsel %vm3223, %v3167, 0.0
        %v3256 = vsel %vm3224, %v3168, 0.0
        %v3257 = vsel %vm3225, %v3169, 0.0
        %v3258 = vmax.f32 %v3162, %v3226
        %v3259 = vmax.f32 %v3163, %v3227
        %v3260 = vmax.f32 %v3164, %v3228
        %v3261 = vmax.f32 %v3165, %v3229
        %v3262 = vmax.f32 %v3166, %v3230
        %v3263 = vmax.f32 %v3167, %v3231
        %v3264 = vmax.f32 %v3168, %v3232
        %v3265 = vmax.f32 %v3169, %v3233
        %v3266 = vmax.f32 %v3170, %v3234
        %v3267 = vmax.f32 %v3171, %v3235
        %v3268 = vmax.f32 %v3172, %v3236
        %v3269 = vmax.f32 %v3173, %v3237
        %v3270 = vmax.f32 %v3174, %v3238
        %v3271 = vmax.f32 %v3175, %v3239
        %v3272 = vmax.f32 %v3176, %v3240
        %v3273 = vmax.f32 %v3177, %v3241
        %v3274 = vmax.f32 %v3178, %v3242
        %v3275 = vmax.f32 %v3179, %v3243
        %v3276 = vmax.f32 %v3180, %v3244
        %v3277 = vmax.f32 %v3181, %v3245
        %v3278 = vmax.f32 %v3182, %v3246
        %v3279 = vmax.f32 %v3183, %v3247
        %v3280 = vmax.f32 %v3184, %v3248
        %v3281 = vmax.f32 %v3185, %v3249
        %v3282 = vmax.f32 %v3186, %v3250
        %v3283 = vmax.f32 %v3187, %v3251
        %v3284 = vmax.f32 %v3188, %v3252
        %v3285 = vmax.f32 %v3189, %v3253
        %v3286 = vmax.f32 %v3190, %v3254
        %v3287 = vmax.f32 %v3191, %v3255
        %v3288 = vmax.f32 %v3192, %v3256
        %v3289 = vmax.f32 %v3193, %v3257
        %vm3290 = vcmp.lt.s32.totalorder %v375, 8
        %vm3291 = vcmp.lt.s32.totalorder %v376, 8
        %vm3292 = vcmp.lt.s32.totalorder %v377, 8
        %vm3293 = vcmp.lt.s32.totalorder %v378, 8
        %vm3294 = vcmp.lt.s32.totalorder %v379, 8
        %vm3295 = vcmp.lt.s32.totalorder %v380, 8
        %vm3296 = vcmp.lt.s32.totalorder %v381, 8
        %vm3297 = vcmp.lt.s32.totalorder %v382, 8
        %vm3298 = vcmp.lt.s32.totalorder %v383, 8
        %vm3299 = vcmp.lt.s32.totalorder %v384, 8
        %vm3300 = vcmp.lt.s32.totalorder %v385, 8
        %vm3301 = vcmp.lt.s32.totalorder %v386, 8
        %vm3302 = vcmp.lt.s32.totalorder %v387, 8
        %vm3303 = vcmp.lt.s32.totalorder %v388, 8
        %vm3304 = vcmp.lt.s32.totalorder %v389, 8
        %vm3305 = vcmp.lt.s32.totalorder %v390, 8
        %vm3306 = vcmp.lt.s32.totalorder %v391, 8
        %vm3307 = vcmp.lt.s32.totalorder %v392, 8
        %vm3308 = vcmp.lt.s32.totalorder %v393, 8
        %vm3309 = vcmp.lt.s32.totalorder %v394, 8
        %vm3310 = vcmp.lt.s32.totalorder %v395, 8
        %vm3311 = vcmp.lt.s32.totalorder %v396, 8
        %vm3312 = vcmp.lt.s32.totalorder %v397, 8
        %vm3313 = vcmp.lt.s32.totalorder %v398, 8
        %vm3314 = vcmp.lt.s32.totalorder %v399, 8
        %vm3315 = vcmp.lt.s32.totalorder %v400, 8
        %vm3316 = vcmp.lt.s32.totalorder %v401, 8
        %vm3317 = vcmp.lt.s32.totalorder %v402, 8
        %vm3318 = vcmp.lt.s32.totalorder %v403, 8
        %vm3319 = vcmp.lt.s32.totalorder %v404, 8
        %vm3320 = vcmp.lt.s32.totalorder %v405, 8
        %vm3321 = vcmp.lt.s32.totalorder %v406, 8
        %v3322 = vsel %vm3290, %v3274, 0.0
        %v3323 = vsel %vm3291, %v3275, 0.0
        %v3324 = vsel %vm3292, %v3276, 0.0
        %v3325 = vsel %vm3293, %v3277, 0.0
        %v3326 = vsel %vm3294, %v3278, 0.0
        %v3327 = vsel %vm3295, %v3279, 0.0
        %v3328 = vsel %vm3296, %v3280, 0.0
        %v3329 = vsel %vm3297, %v3281, 0.0
        %v3330 = vsel %vm3298, %v3282, 0.0
        %v3331 = vsel %vm3299, %v3283, 0.0
        %v3332 = vsel %vm3300, %v3284, 0.0
        %v3333 = vsel %vm3301, %v3285, 0.0
        %v3334 = vsel %vm3302, %v3286, 0.0
        %v3335 = vsel %vm3303, %v3287, 0.0
        %v3336 = vsel %vm3304, %v3288, 0.0
        %v3337 = vsel %vm3305, %v3289, 0.0
        %v3338 = vsel %vm3306, %v3258, 0.0
        %v3339 = vsel %vm3307, %v3259, 0.0
        %v3340 = vsel %vm3308, %v3260, 0.0
        %v3341 = vsel %vm3309, %v3261, 0.0
        %v3342 = vsel %vm3310, %v3262, 0.0
        %v3343 = vsel %vm3311, %v3263, 0.0
        %v3344 = vsel %vm3312, %v3264, 0.0
        %v3345 = vsel %vm3313, %v3265, 0.0
        %v3346 = vsel %vm3314, %v3266, 0.0
        %v3347 = vsel %vm3315, %v3267, 0.0
        %v3348 = vsel %vm3316, %v3268, 0.0
        %v3349 = vsel %vm3317, %v3269, 0.0
        %v3350 = vsel %vm3318, %v3270, 0.0
        %v3351 = vsel %vm3319, %v3271, 0.0
        %v3352 = vsel %vm3320, %v3272, 0.0
        %v3353 = vsel %vm3321, %v3273, 0.0
        %v3354 = vmax.f32 %v3258, %v3322
        %v3355 = vmax.f32 %v3259, %v3323
        %v3356 = vmax.f32 %v3260, %v3324
        %v3357 = vmax.f32 %v3261, %v3325
        %v3358 = vmax.f32 %v3262, %v3326
        %v3359 = vmax.f32 %v3263, %v3327
        %v3360 = vmax.f32 %v3264, %v3328
        %v3361 = vmax.f32 %v3265, %v3329
        %v3362 = vmax.f32 %v3266, %v3330
        %v3363 = vmax.f32 %v3267, %v3331
        %v3364 = vmax.f32 %v3268, %v3332
        %v3365 = vmax.f32 %v3269, %v3333
        %v3366 = vmax.f32 %v3270, %v3334
        %v3367 = vmax.f32 %v3271, %v3335
        %v3368 = vmax.f32 %v3272, %v3336
        %v3369 = vmax.f32 %v3273, %v3337
        %v3370 = vmax.f32 %v3274, %v3338
        %v3371 = vmax.f32 %v3275, %v3339
        %v3372 = vmax.f32 %v3276, %v3340
        %v3373 = vmax.f32 %v3277, %v3341
        %v3374 = vmax.f32 %v3278, %v3342
        %v3375 = vmax.f32 %v3279, %v3343
        %v3376 = vmax.f32 %v3280, %v3344
        %v3377 = vmax.f32 %v3281, %v3345
        %v3378 = vmax.f32 %v3282, %v3346
        %v3379 = vmax.f32 %v3283, %v3347
        %v3380 = vmax.f32 %v3284, %v3348
        %v3381 = vmax.f32 %v3285, %v3349
        %v3382 = vmax.f32 %v3286, %v3350
        %v3383 = vmax.f32 %v3287, %v3351
        %v3384 = vmax.f32 %v3288, %v3352
        %v3385 = vmax.f32 %v3289, %v3353
        %vm3386 = vcmp.lt.s32.totalorder %v407, 15
        %vm3387 = vcmp.lt.s32.totalorder %v408, 15
        %vm3388 = vcmp.lt.s32.totalorder %v409, 15
        %vm3389 = vcmp.lt.s32.totalorder %v410, 15
        %vm3390 = vcmp.lt.s32.totalorder %v411, 15
        %vm3391 = vcmp.lt.s32.totalorder %v412, 15
        %vm3392 = vcmp.lt.s32.totalorder %v413, 15
        %vm3393 = vcmp.lt.s32.totalorder %v414, 15
        %vm3394 = vcmp.lt.s32.totalorder %v415, 15
        %vm3395 = vcmp.lt.s32.totalorder %v416, 15
        %vm3396 = vcmp.lt.s32.totalorder %v417, 15
        %vm3397 = vcmp.lt.s32.totalorder %v418, 15
        %vm3398 = vcmp.lt.s32.totalorder %v419, 15
        %vm3399 = vcmp.lt.s32.totalorder %v420, 15
        %vm3400 = vcmp.lt.s32.totalorder %v421, 15
        %vm3401 = vcmp.lt.s32.totalorder %v422, 15
        %vm3402 = vcmp.lt.s32.totalorder %v423, 15
        %vm3403 = vcmp.lt.s32.totalorder %v424, 15
        %vm3404 = vcmp.lt.s32.totalorder %v425, 15
        %vm3405 = vcmp.lt.s32.totalorder %v426, 15
        %vm3406 = vcmp.lt.s32.totalorder %v427, 15
        %vm3407 = vcmp.lt.s32.totalorder %v428, 15
        %vm3408 = vcmp.lt.s32.totalorder %v429, 15
        %vm3409 = vcmp.lt.s32.totalorder %v430, 15
        %vm3410 = vcmp.lt.s32.totalorder %v431, 15
        %vm3411 = vcmp.lt.s32.totalorder %v432, 15
        %vm3412 = vcmp.lt.s32.totalorder %v433, 15
        %vm3413 = vcmp.lt.s32.totalorder %v434, 15
        %vm3414 = vcmp.lt.s32.totalorder %v435, 15
        %vm3415 = vcmp.lt.s32.totalorder %v436, 15
        %vm3416 = vcmp.lt.s32.totalorder %v437, 15
        %vm3417 = vcmp.lt.s32.totalorder %v438, 15
        %v3418 = vrot.slane %v2939, 1
        %v3419 = vrot.slane %v2941, 1
        %v3420 = vrot.slane %v2943, 1
        %v3421 = vrot.slane %v2945, 1
        %v3422 = vrot.slane %v2947, 1
        %v3423 = vrot.slane %v2949, 1
        %v3424 = vrot.slane %v2951, 1
        %v3425 = vrot.slane %v2953, 1
        %v3426 = vrot.slane %v2955, 1
        %v3427 = vrot.slane %v2957, 1
        %v3428 = vrot.slane %v2959, 1
        %v3429 = vrot.slane %v2961, 1
        %v3430 = vrot.slane %v2963, 1
        %v3431 = vrot.slane %v2965, 1
        %v3432 = vrot.slane %v2967, 1
        %v3433 = vrot.slane %v2969, 1
        %v3434 = vrot.slane %v2971, 1
        %v3435 = vrot.slane %v2973, 1
        %v3436 = vrot.slane %v2975, 1
        %v3437 = vrot.slane %v2977, 1
        %v3438 = vrot.slane %v2979, 1
        %v3439 = vrot.slane %v2981, 1
        %v3440 = vrot.slane %v2983, 1
        %v3441 = vrot.slane %v2985, 1
        %v3442 = vrot.slane %v2987, 1
        %v3443 = vrot.slane %v2989, 1
        %v3444 = vrot.slane %v2991, 1
        %v3445 = vrot.slane %v2993, 1
        %v3446 = vrot.slane %v2995, 1
        %v3447 = vrot.slane %v2997, 1
        %v3448 = vrot.slane %v2999, 1
        %v3449 = vrot.slane %v3001, 1
        %v3450 = vsel %vm632, %v3448, %v3449
        %v3451 = vsel %vm632, %v3447, %v3448
        %v3452 = vsel %vm632, %v3446, %v3447
        %v3453 = vsel %vm632, %v3445, %v3446
        %v3454 = vsel %vm632, %v3444, %v3445
        %v3455 = vsel %vm632, %v3443, %v3444
        %v3456 = vsel %vm632, %v3442, %v3443
        %v3457 = vsel %vm632, %v3441, %v3442
        %v3458 = vsel %vm632, %v3440, %v3441
        %v3459 = vsel %vm632, %v3439, %v3440
        %v3460 = vsel %vm632, %v3438, %v3439
        %v3461 = vsel %vm632, %v3437, %v3438
        %v3462 = vsel %vm632, %v3436, %v3437
        %v3463 = vsel %vm632, %v3435, %v3436
        %v3464 = vsel %vm632, %v3434, %v3435
        %v3465 = vsel %vm632, %v3433, %v3434
        %v3466 = vsel %vm632, %v3432, %v3433
        %v3467 = vsel %vm632, %v3431, %v3432
        %v3468 = vsel %vm632, %v3430, %v3431
        %v3469 = vsel %vm632, %v3429, %v3430
        %v3470 = vsel %vm632, %v3428, %v3429
        %v3471 = vsel %vm632, %v3427, %v3428
        %v3472 = vsel %vm632, %v3426, %v3427
        %v3473 = vsel %vm632, %v3425, %v3426
        %v3474 = vsel %vm632, %v3424, %v3425
        %v3475 = vsel %vm632, %v3423, %v3424
        %v3476 = vsel %vm632, %v3422, %v3423
        %v3477 = vsel %vm632, %v3421, %v3422
        %v3478 = vsel %vm632, %v3420, %v3421
        %v3479 = vsel %vm632, %v3419, %v3420
        %v3480 = vsel %vm632, %v3418, %v3419
        %v3481 = vsel %vm632, %v3449, %v3418
        %v3482 = vsel %vm3386, %v3480, 0.0
        %v3483 = vsel %vm3387, %v3479, 0.0
        %v3484 = vsel %vm3388, %v3478, 0.0
        %v3485 = vsel %vm3389, %v3477, 0.0
        %v3486 = vsel %vm3390, %v3476, 0.0
        %v3487 = vsel %vm3391, %v3475, 0.0
        %v3488 = vsel %vm3392, %v3474, 0.0
        %v3489 = vsel %vm3393, %v3473, 0.0
        %v3490 = vsel %vm3394, %v3472, 0.0
        %v3491 = vsel %vm3395, %v3471, 0.0
        %v3492 = vsel %vm3396, %v3470, 0.0
        %v3493 = vsel %vm3397, %v3469, 0.0
        %v3494 = vsel %vm3398, %v3468, 0.0
        %v3495 = vsel %vm3399, %v3467, 0.0
        %v3496 = vsel %vm3400, %v3466, 0.0
        %v3497 = vsel %vm3401, %v3465, 0.0
        %v3498 = vsel %vm3402, %v3464, 0.0
        %v3499 = vsel %vm3403, %v3463, 0.0
        %v3500 = vsel %vm3404, %v3462, 0.0
        %v3501 = vsel %vm3405, %v3461, 0.0
        %v3502 = vsel %vm3406, %v3460, 0.0
        %v3503 = vsel %vm3407, %v3459, 0.0
        %v3504 = vsel %vm3408, %v3458, 0.0
        %v3505 = vsel %vm3409, %v3457, 0.0
        %v3506 = vsel %vm3410, %v3456, 0.0
        %v3507 = vsel %vm3411, %v3455, 0.0
        %v3508 = vsel %vm3412, %v3454, 0.0
        %v3509 = vsel %vm3413, %v3453, 0.0
        %v3510 = vsel %vm3414, %v3452, 0.0
        %v3511 = vsel %vm3415, %v3451, 0.0
        %v3512 = vsel %vm3416, %v3450, 0.0
        %v3513 = vsel %vm3417, %v3481, 0.0
        %v3514 = vmax.f32 %v2939, %v3482
        %v3515 = vmax.f32 %v2941, %v3483
        %v3516 = vmax.f32 %v2943, %v3484
        %v3517 = vmax.f32 %v2945, %v3485
        %v3518 = vmax.f32 %v2947, %v3486
        %v3519 = vmax.f32 %v2949, %v3487
        %v3520 = vmax.f32 %v2951, %v3488
        %v3521 = vmax.f32 %v2953, %v3489
        %v3522 = vmax.f32 %v2955, %v3490
        %v3523 = vmax.f32 %v2957, %v3491
        %v3524 = vmax.f32 %v2959, %v3492
        %v3525 = vmax.f32 %v2961, %v3493
        %v3526 = vmax.f32 %v2963, %v3494
        %v3527 = vmax.f32 %v2965, %v3495
        %v3528 = vmax.f32 %v2967, %v3496
        %v3529 = vmax.f32 %v2969, %v3497
        %v3530 = vmax.f32 %v2971, %v3498
        %v3531 = vmax.f32 %v2973, %v3499
        %v3532 = vmax.f32 %v2975, %v3500
        %v3533 = vmax.f32 %v2977, %v3501
        %v3534 = vmax.f32 %v2979, %v3502
        %v3535 = vmax.f32 %v2981, %v3503
        %v3536 = vmax.f32 %v2983, %v3504
        %v3537 = vmax.f32 %v2985, %v3505
        %v3538 = vmax.f32 %v2987, %v3506
        %v3539 = vmax.f32 %v2989, %v3507
        %v3540 = vmax.f32 %v2991, %v3508
        %v3541 = vmax.f32 %v2993, %v3509
        %v3542 = vmax.f32 %v2995, %v3510
        %v3543 = vmax.f32 %v2997, %v3511
        %v3544 = vmax.f32 %v2999, %v3512
        %v3545 = vmax.f32 %v3001, %v3513
        %vm3546 = vcmp.lt.s32.totalorder %v407, 14
        %vm3547 = vcmp.lt.s32.totalorder %v408, 14
        %vm3548 = vcmp.lt.s32.totalorder %v409, 14
        %vm3549 = vcmp.lt.s32.totalorder %v410, 14
        %vm3550 = vcmp.lt.s32.totalorder %v411, 14
        %vm3551 = vcmp.lt.s32.totalorder %v412, 14
        %vm3552 = vcmp.lt.s32.totalorder %v413, 14
        %vm3553 = vcmp.lt.s32.totalorder %v414, 14
        %vm3554 = vcmp.lt.s32.totalorder %v415, 14
        %vm3555 = vcmp.lt.s32.totalorder %v416, 14
        %vm3556 = vcmp.lt.s32.totalorder %v417, 14
        %vm3557 = vcmp.lt.s32.totalorder %v418, 14
        %vm3558 = vcmp.lt.s32.totalorder %v419, 14
        %vm3559 = vcmp.lt.s32.totalorder %v420, 14
        %vm3560 = vcmp.lt.s32.totalorder %v421, 14
        %vm3561 = vcmp.lt.s32.totalorder %v422, 14
        %vm3562 = vcmp.lt.s32.totalorder %v423, 14
        %vm3563 = vcmp.lt.s32.totalorder %v424, 14
        %vm3564 = vcmp.lt.s32.totalorder %v425, 14
        %vm3565 = vcmp.lt.s32.totalorder %v426, 14
        %vm3566 = vcmp.lt.s32.totalorder %v427, 14
        %vm3567 = vcmp.lt.s32.totalorder %v428, 14
        %vm3568 = vcmp.lt.s32.totalorder %v429, 14
        %vm3569 = vcmp.lt.s32.totalorder %v430, 14
        %vm3570 = vcmp.lt.s32.totalorder %v431, 14
        %vm3571 = vcmp.lt.s32.totalorder %v432, 14
        %vm3572 = vcmp.lt.s32.totalorder %v433, 14
        %vm3573 = vcmp.lt.s32.totalorder %v434, 14
        %vm3574 = vcmp.lt.s32.totalorder %v435, 14
        %vm3575 = vcmp.lt.s32.totalorder %v436, 14
        %vm3576 = vcmp.lt.s32.totalorder %v437, 14
        %vm3577 = vcmp.lt.s32.totalorder %v438, 14
        %v3578 = vrot.slane %v3514, 2
        %v3579 = vrot.slane %v3515, 2
        %v3580 = vrot.slane %v3516, 2
        %v3581 = vrot.slane %v3517, 2
        %v3582 = vrot.slane %v3518, 2
        %v3583 = vrot.slane %v3519, 2
        %v3584 = vrot.slane %v3520, 2
        %v3585 = vrot.slane %v3521, 2
        %v3586 = vrot.slane %v3522, 2
        %v3587 = vrot.slane %v3523, 2
        %v3588 = vrot.slane %v3524, 2
        %v3589 = vrot.slane %v3525, 2
        %v3590 = vrot.slane %v3526, 2
        %v3591 = vrot.slane %v3527, 2
        %v3592 = vrot.slane %v3528, 2
        %v3593 = vrot.slane %v3529, 2
        %v3594 = vrot.slane %v3530, 2
        %v3595 = vrot.slane %v3531, 2
        %v3596 = vrot.slane %v3532, 2
        %v3597 = vrot.slane %v3533, 2
        %v3598 = vrot.slane %v3534, 2
        %v3599 = vrot.slane %v3535, 2
        %v3600 = vrot.slane %v3536, 2
        %v3601 = vrot.slane %v3537, 2
        %v3602 = vrot.slane %v3538, 2
        %v3603 = vrot.slane %v3539, 2
        %v3604 = vrot.slane %v3540, 2
        %v3605 = vrot.slane %v3541, 2
        %v3606 = vrot.slane %v3542, 2
        %v3607 = vrot.slane %v3543, 2
        %v3608 = vrot.slane %v3544, 2
        %v3609 = vrot.slane %v3545, 2
        %vm3610 = vcmp.lt.s32.totalorder %v343, 6
        %v3611 = vsel %vm3610, %v3608, %v3609
        %v3612 = vsel %vm3610, %v3607, %v3608
        %v3613 = vsel %vm3610, %v3606, %v3607
        %v3614 = vsel %vm3610, %v3605, %v3606
        %v3615 = vsel %vm3610, %v3604, %v3605
        %v3616 = vsel %vm3610, %v3603, %v3604
        %v3617 = vsel %vm3610, %v3602, %v3603
        %v3618 = vsel %vm3610, %v3601, %v3602
        %v3619 = vsel %vm3610, %v3600, %v3601
        %v3620 = vsel %vm3610, %v3599, %v3600
        %v3621 = vsel %vm3610, %v3598, %v3599
        %v3622 = vsel %vm3610, %v3597, %v3598
        %v3623 = vsel %vm3610, %v3596, %v3597
        %v3624 = vsel %vm3610, %v3595, %v3596
        %v3625 = vsel %vm3610, %v3594, %v3595
        %v3626 = vsel %vm3610, %v3593, %v3594
        %v3627 = vsel %vm3610, %v3592, %v3593
        %v3628 = vsel %vm3610, %v3591, %v3592
        %v3629 = vsel %vm3610, %v3590, %v3591
        %v3630 = vsel %vm3610, %v3589, %v3590
        %v3631 = vsel %vm3610, %v3588, %v3589
        %v3632 = vsel %vm3610, %v3587, %v3588
        %v3633 = vsel %vm3610, %v3586, %v3587
        %v3634 = vsel %vm3610, %v3585, %v3586
        %v3635 = vsel %vm3610, %v3584, %v3585
        %v3636 = vsel %vm3610, %v3583, %v3584
        %v3637 = vsel %vm3610, %v3582, %v3583
        %v3638 = vsel %vm3610, %v3581, %v3582
        %v3639 = vsel %vm3610, %v3580, %v3581
        %v3640 = vsel %vm3610, %v3579, %v3580
        %v3641 = vsel %vm3610, %v3578, %v3579
        %v3642 = vsel %vm3610, %v3609, %v3578
        %v3643 = vsel %vm3546, %v3641, 0.0
        %v3644 = vsel %vm3547, %v3640, 0.0
        %v3645 = vsel %vm3548, %v3639, 0.0
        %v3646 = vsel %vm3549, %v3638, 0.0
        %v3647 = vsel %vm3550, %v3637, 0.0
        %v3648 = vsel %vm3551, %v3636, 0.0
        %v3649 = vsel %vm3552, %v3635, 0.0
        %v3650 = vsel %vm3553, %v3634, 0.0
        %v3651 = vsel %vm3554, %v3633, 0.0
        %v3652 = vsel %vm3555, %v3632, 0.0
        %v3653 = vsel %vm3556, %v3631, 0.0
        %v3654 = vsel %vm3557, %v3630, 0.0
        %v3655 = vsel %vm3558, %v3629, 0.0
        %v3656 = vsel %vm3559, %v3628, 0.0
        %v3657 = vsel %vm3560, %v3627, 0.0
        %v3658 = vsel %vm3561, %v3626, 0.0
        %v3659 = vsel %vm3562, %v3625, 0.0
        %v3660 = vsel %vm3563, %v3624, 0.0
        %v3661 = vsel %vm3564, %v3623, 0.0
        %v3662 = vsel %vm3565, %v3622, 0.0
        %v3663 = vsel %vm3566, %v3621, 0.0
        %v3664 = vsel %vm3567, %v3620, 0.0
        %v3665 = vsel %vm3568, %v3619, 0.0
        %v3666 = vsel %vm3569, %v3618, 0.0
        %v3667 = vsel %vm3570, %v3617, 0.0
        %v3668 = vsel %vm3571, %v3616, 0.0
        %v3669 = vsel %vm3572, %v3615, 0.0
        %v3670 = vsel %vm3573, %v3614, 0.0
        %v3671 = vsel %vm3574, %v3613, 0.0
        %v3672 = vsel %vm3575, %v3612, 0.0
        %v3673 = vsel %vm3576, %v3611, 0.0
        %v3674 = vsel %vm3577, %v3642, 0.0
        %v3675 = vmax.f32 %v3514, %v3643
        %v3676 = vmax.f32 %v3515, %v3644
        %v3677 = vmax.f32 %v3516, %v3645
        %v3678 = vmax.f32 %v3517, %v3646
        %v3679 = vmax.f32 %v3518, %v3647
        %v3680 = vmax.f32 %v3519, %v3648
        %v3681 = vmax.f32 %v3520, %v3649
        %v3682 = vmax.f32 %v3521, %v3650
        %v3683 = vmax.f32 %v3522, %v3651
        %v3684 = vmax.f32 %v3523, %v3652
        %v3685 = vmax.f32 %v3524, %v3653
        %v3686 = vmax.f32 %v3525, %v3654
        %v3687 = vmax.f32 %v3526, %v3655
        %v3688 = vmax.f32 %v3527, %v3656
        %v3689 = vmax.f32 %v3528, %v3657
        %v3690 = vmax.f32 %v3529, %v3658
        %v3691 = vmax.f32 %v3530, %v3659
        %v3692 = vmax.f32 %v3531, %v3660
        %v3693 = vmax.f32 %v3532, %v3661
        %v3694 = vmax.f32 %v3533, %v3662
        %v3695 = vmax.f32 %v3534, %v3663
        %v3696 = vmax.f32 %v3535, %v3664
        %v3697 = vmax.f32 %v3536, %v3665
        %v3698 = vmax.f32 %v3537, %v3666
        %v3699 = vmax.f32 %v3538, %v3667
        %v3700 = vmax.f32 %v3539, %v3668
        %v3701 = vmax.f32 %v3540, %v3669
        %v3702 = vmax.f32 %v3541, %v3670
        %v3703 = vmax.f32 %v3542, %v3671
        %v3704 = vmax.f32 %v3543, %v3672
        %v3705 = vmax.f32 %v3544, %v3673
        %v3706 = vmax.f32 %v3545, %v3674
        %vm3707 = vcmp.lt.s32.totalorder %v407, 12
        %vm3708 = vcmp.lt.s32.totalorder %v408, 12
        %vm3709 = vcmp.lt.s32.totalorder %v409, 12
        %vm3710 = vcmp.lt.s32.totalorder %v410, 12
        %vm3711 = vcmp.lt.s32.totalorder %v411, 12
        %vm3712 = vcmp.lt.s32.totalorder %v412, 12
        %vm3713 = vcmp.lt.s32.totalorder %v413, 12
        %vm3714 = vcmp.lt.s32.totalorder %v414, 12
        %vm3715 = vcmp.lt.s32.totalorder %v415, 12
        %vm3716 = vcmp.lt.s32.totalorder %v416, 12
        %vm3717 = vcmp.lt.s32.totalorder %v417, 12
        %vm3718 = vcmp.lt.s32.totalorder %v418, 12
        %vm3719 = vcmp.lt.s32.totalorder %v419, 12
        %vm3720 = vcmp.lt.s32.totalorder %v420, 12
        %vm3721 = vcmp.lt.s32.totalorder %v421, 12
        %vm3722 = vcmp.lt.s32.totalorder %v422, 12
        %vm3723 = vcmp.lt.s32.totalorder %v423, 12
        %vm3724 = vcmp.lt.s32.totalorder %v424, 12
        %vm3725 = vcmp.lt.s32.totalorder %v425, 12
        %vm3726 = vcmp.lt.s32.totalorder %v426, 12
        %vm3727 = vcmp.lt.s32.totalorder %v427, 12
        %vm3728 = vcmp.lt.s32.totalorder %v428, 12
        %vm3729 = vcmp.lt.s32.totalorder %v429, 12
        %vm3730 = vcmp.lt.s32.totalorder %v430, 12
        %vm3731 = vcmp.lt.s32.totalorder %v431, 12
        %vm3732 = vcmp.lt.s32.totalorder %v432, 12
        %vm3733 = vcmp.lt.s32.totalorder %v433, 12
        %vm3734 = vcmp.lt.s32.totalorder %v434, 12
        %vm3735 = vcmp.lt.s32.totalorder %v435, 12
        %vm3736 = vcmp.lt.s32.totalorder %v436, 12
        %vm3737 = vcmp.lt.s32.totalorder %v437, 12
        %vm3738 = vcmp.lt.s32.totalorder %v438, 12
        %v3739 = vrot.slane %v3675, 4
        %v3740 = vrot.slane %v3676, 4
        %v3741 = vrot.slane %v3677, 4
        %v3742 = vrot.slane %v3678, 4
        %v3743 = vrot.slane %v3679, 4
        %v3744 = vrot.slane %v3680, 4
        %v3745 = vrot.slane %v3681, 4
        %v3746 = vrot.slane %v3682, 4
        %v3747 = vrot.slane %v3683, 4
        %v3748 = vrot.slane %v3684, 4
        %v3749 = vrot.slane %v3685, 4
        %v3750 = vrot.slane %v3686, 4
        %v3751 = vrot.slane %v3687, 4
        %v3752 = vrot.slane %v3688, 4
        %v3753 = vrot.slane %v3689, 4
        %v3754 = vrot.slane %v3690, 4
        %v3755 = vrot.slane %v3691, 4
        %v3756 = vrot.slane %v3692, 4
        %v3757 = vrot.slane %v3693, 4
        %v3758 = vrot.slane %v3694, 4
        %v3759 = vrot.slane %v3695, 4
        %v3760 = vrot.slane %v3696, 4
        %v3761 = vrot.slane %v3697, 4
        %v3762 = vrot.slane %v3698, 4
        %v3763 = vrot.slane %v3699, 4
        %v3764 = vrot.slane %v3700, 4
        %v3765 = vrot.slane %v3701, 4
        %v3766 = vrot.slane %v3702, 4
        %v3767 = vrot.slane %v3703, 4
        %v3768 = vrot.slane %v3704, 4
        %v3769 = vrot.slane %v3705, 4
        %v3770 = vrot.slane %v3706, 4
        %vm3771 = vcmp.lt.s32.totalorder %v343, 4
        %v3772 = vsel %vm3771, %v3769, %v3770
        %v3773 = vsel %vm3771, %v3768, %v3769
        %v3774 = vsel %vm3771, %v3767, %v3768
        %v3775 = vsel %vm3771, %v3766, %v3767
        %v3776 = vsel %vm3771, %v3765, %v3766
        %v3777 = vsel %vm3771, %v3764, %v3765
        %v3778 = vsel %vm3771, %v3763, %v3764
        %v3779 = vsel %vm3771, %v3762, %v3763
        %v3780 = vsel %vm3771, %v3761, %v3762
        %v3781 = vsel %vm3771, %v3760, %v3761
        %v3782 = vsel %vm3771, %v3759, %v3760
        %v3783 = vsel %vm3771, %v3758, %v3759
        %v3784 = vsel %vm3771, %v3757, %v3758
        %v3785 = vsel %vm3771, %v3756, %v3757
        %v3786 = vsel %vm3771, %v3755, %v3756
        %v3787 = vsel %vm3771, %v3754, %v3755
        %v3788 = vsel %vm3771, %v3753, %v3754
        %v3789 = vsel %vm3771, %v3752, %v3753
        %v3790 = vsel %vm3771, %v3751, %v3752
        %v3791 = vsel %vm3771, %v3750, %v3751
        %v3792 = vsel %vm3771, %v3749, %v3750
        %v3793 = vsel %vm3771, %v3748, %v3749
        %v3794 = vsel %vm3771, %v3747, %v3748
        %v3795 = vsel %vm3771, %v3746, %v3747
        %v3796 = vsel %vm3771, %v3745, %v3746
        %v3797 = vsel %vm3771, %v3744, %v3745
        %v3798 = vsel %vm3771, %v3743, %v3744
        %v3799 = vsel %vm3771, %v3742, %v3743
        %v3800 = vsel %vm3771, %v3741, %v3742
        %v3801 = vsel %vm3771, %v3740, %v3741
        %v3802 = vsel %vm3771, %v3739, %v3740
        %v3803 = vsel %vm3771, %v3770, %v3739
        %v3804 = vsel %vm3707, %v3802, 0.0
        %v3805 = vsel %vm3708, %v3801, 0.0
        %v3806 = vsel %vm3709, %v3800, 0.0
        %v3807 = vsel %vm3710, %v3799, 0.0
        %v3808 = vsel %vm3711, %v3798, 0.0
        %v3809 = vsel %vm3712, %v3797, 0.0
        %v3810 = vsel %vm3713, %v3796, 0.0
        %v3811 = vsel %vm3714, %v3795, 0.0
        %v3812 = vsel %vm3715, %v3794, 0.0
        %v3813 = vsel %vm3716, %v3793, 0.0
        %v3814 = vsel %vm3717, %v3792, 0.0
        %v3815 = vsel %vm3718, %v3791, 0.0
        %v3816 = vsel %vm3719, %v3790, 0.0
        %v3817 = vsel %vm3720, %v3789, 0.0
        %v3818 = vsel %vm3721, %v3788, 0.0
        %v3819 = vsel %vm3722, %v3787, 0.0
        %v3820 = vsel %vm3723, %v3786, 0.0
        %v3821 = vsel %vm3724, %v3785, 0.0
        %v3822 = vsel %vm3725, %v3784, 0.0
        %v3823 = vsel %vm3726, %v3783, 0.0
        %v3824 = vsel %vm3727, %v3782, 0.0
        %v3825 = vsel %vm3728, %v3781, 0.0
        %v3826 = vsel %vm3729, %v3780, 0.0
        %v3827 = vsel %vm3730, %v3779, 0.0
        %v3828 = vsel %vm3731, %v3778, 0.0
        %v3829 = vsel %vm3732, %v3777, 0.0
        %v3830 = vsel %vm3733, %v3776, 0.0
        %v3831 = vsel %vm3734, %v3775, 0.0
        %v3832 = vsel %vm3735, %v3774, 0.0
        %v3833 = vsel %vm3736, %v3773, 0.0
        %v3834 = vsel %vm3737, %v3772, 0.0
        %v3835 = vsel %vm3738, %v3803, 0.0
        %v3836 = vmax.f32 %v3675, %v3804
        %v3837 = vmax.f32 %v3676, %v3805
        %v3838 = vmax.f32 %v3677, %v3806
        %v3839 = vmax.f32 %v3678, %v3807
        %v3840 = vmax.f32 %v3679, %v3808
        %v3841 = vmax.f32 %v3680, %v3809
        %v3842 = vmax.f32 %v3681, %v3810
        %v3843 = vmax.f32 %v3682, %v3811
        %v3844 = vmax.f32 %v3683, %v3812
        %v3845 = vmax.f32 %v3684, %v3813
        %v3846 = vmax.f32 %v3685, %v3814
        %v3847 = vmax.f32 %v3686, %v3815
        %v3848 = vmax.f32 %v3687, %v3816
        %v3849 = vmax.f32 %v3688, %v3817
        %v3850 = vmax.f32 %v3689, %v3818
        %v3851 = vmax.f32 %v3690, %v3819
        %v3852 = vmax.f32 %v3691, %v3820
        %v3853 = vmax.f32 %v3692, %v3821
        %v3854 = vmax.f32 %v3693, %v3822
        %v3855 = vmax.f32 %v3694, %v3823
        %v3856 = vmax.f32 %v3695, %v3824
        %v3857 = vmax.f32 %v3696, %v3825
        %v3858 = vmax.f32 %v3697, %v3826
        %v3859 = vmax.f32 %v3698, %v3827
        %v3860 = vmax.f32 %v3699, %v3828
        %v3861 = vmax.f32 %v3700, %v3829
        %v3862 = vmax.f32 %v3701, %v3830
        %v3863 = vmax.f32 %v3702, %v3831
        %v3864 = vmax.f32 %v3703, %v3832
        %v3865 = vmax.f32 %v3704, %v3833
        %v3866 = vmax.f32 %v3705, %v3834
        %v3867 = vmax.f32 %v3706, %v3835
        %vm3868 = vcmp.lt.s32.totalorder %v407, 8
        %vm3869 = vcmp.lt.s32.totalorder %v408, 8
        %vm3870 = vcmp.lt.s32.totalorder %v409, 8
        %vm3871 = vcmp.lt.s32.totalorder %v410, 8
        %vm3872 = vcmp.lt.s32.totalorder %v411, 8
        %vm3873 = vcmp.lt.s32.totalorder %v412, 8
        %vm3874 = vcmp.lt.s32.totalorder %v413, 8
        %vm3875 = vcmp.lt.s32.totalorder %v414, 8
        %vm3876 = vcmp.lt.s32.totalorder %v415, 8
        %vm3877 = vcmp.lt.s32.totalorder %v416, 8
        %vm3878 = vcmp.lt.s32.totalorder %v417, 8
        %vm3879 = vcmp.lt.s32.totalorder %v418, 8
        %vm3880 = vcmp.lt.s32.totalorder %v419, 8
        %vm3881 = vcmp.lt.s32.totalorder %v420, 8
        %vm3882 = vcmp.lt.s32.totalorder %v421, 8
        %vm3883 = vcmp.lt.s32.totalorder %v422, 8
        %vm3884 = vcmp.lt.s32.totalorder %v423, 8
        %vm3885 = vcmp.lt.s32.totalorder %v424, 8
        %vm3886 = vcmp.lt.s32.totalorder %v425, 8
        %vm3887 = vcmp.lt.s32.totalorder %v426, 8
        %vm3888 = vcmp.lt.s32.totalorder %v427, 8
        %vm3889 = vcmp.lt.s32.totalorder %v428, 8
        %vm3890 = vcmp.lt.s32.totalorder %v429, 8
        %vm3891 = vcmp.lt.s32.totalorder %v430, 8
        %vm3892 = vcmp.lt.s32.totalorder %v431, 8
        %vm3893 = vcmp.lt.s32.totalorder %v432, 8
        %vm3894 = vcmp.lt.s32.totalorder %v433, 8
        %vm3895 = vcmp.lt.s32.totalorder %v434, 8
        %vm3896 = vcmp.lt.s32.totalorder %v435, 8
        %vm3897 = vcmp.lt.s32.totalorder %v436, 8
        %vm3898 = vcmp.lt.s32.totalorder %v437, 8
        %vm3899 = vcmp.lt.s32.totalorder %v438, 8
        %v3900 = vsel %vm3868, %v3837, 0.0
        %v3901 = vsel %vm3869, %v3838, 0.0
        %v3902 = vsel %vm3870, %v3839, 0.0
        %v3903 = vsel %vm3871, %v3840, 0.0
        %v3904 = vsel %vm3872, %v3841, 0.0
        %v3905 = vsel %vm3873, %v3842, 0.0
        %v3906 = vsel %vm3874, %v3843, 0.0
        %v3907 = vsel %vm3875, %v3844, 0.0
        %v3908 = vsel %vm3876, %v3845, 0.0
        %v3909 = vsel %vm3877, %v3846, 0.0
        %v3910 = vsel %vm3878, %v3847, 0.0
        %v3911 = vsel %vm3879, %v3848, 0.0
        %v3912 = vsel %vm3880, %v3849, 0.0
        %v3913 = vsel %vm3881, %v3850, 0.0
        %v3914 = vsel %vm3882, %v3851, 0.0
        %v3915 = vsel %vm3883, %v3852, 0.0
        %v3916 = vsel %vm3884, %v3853, 0.0
        %v3917 = vsel %vm3885, %v3854, 0.0
        %v3918 = vsel %vm3886, %v3855, 0.0
        %v3919 = vsel %vm3887, %v3856, 0.0
        %v3920 = vsel %vm3888, %v3857, 0.0
        %v3921 = vsel %vm3889, %v3858, 0.0
        %v3922 = vsel %vm3890, %v3859, 0.0
        %v3923 = vsel %vm3891, %v3860, 0.0
        %v3924 = vsel %vm3892, %v3861, 0.0
        %v3925 = vsel %vm3893, %v3862, 0.0
        %v3926 = vsel %vm3894, %v3863, 0.0
        %v3927 = vsel %vm3895, %v3864, 0.0
        %v3928 = vsel %vm3896, %v3865, 0.0
        %v3929 = vsel %vm3897, %v3866, 0.0
        %v3930 = vsel %vm3898, %v3867, 0.0
        %v3931 = vsel %vm3899, %v3836, 0.0
        %v3932 = vmax.f32 %v3836, %v3900
        %v3933 = vmax.f32 %v3837, %v3901
        %v3934 = vmax.f32 %v3838, %v3902
        %v3935 = vmax.f32 %v3839, %v3903
        %v3936 = vmax.f32 %v3840, %v3904
        %v3937 = vmax.f32 %v3841, %v3905
        %v3938 = vmax.f32 %v3842, %v3906
        %v3939 = vmax.f32 %v3843, %v3907
        %v3940 = vmax.f32 %v3844, %v3908
        %v3941 = vmax.f32 %v3845, %v3909
        %v3942 = vmax.f32 %v3846, %v3910
        %v3943 = vmax.f32 %v3847, %v3911
        %v3944 = vmax.f32 %v3848, %v3912
        %v3945 = vmax.f32 %v3849, %v3913
        %v3946 = vmax.f32 %v3850, %v3914
        %v3947 = vmax.f32 %v3851, %v3915
        %v3948 = vmax.f32 %v3852, %v3916
        %v3949 = vmax.f32 %v3853, %v3917
        %v3950 = vmax.f32 %v3854, %v3918
        %v3951 = vmax.f32 %v3855, %v3919
        %v3952 = vmax.f32 %v3856, %v3920
        %v3953 = vmax.f32 %v3857, %v3921
        %v3954 = vmax.f32 %v3858, %v3922
        %v3955 = vmax.f32 %v3859, %v3923
        %v3956 = vmax.f32 %v3860, %v3924
        %v3957 = vmax.f32 %v3861, %v3925
        %v3958 = vmax.f32 %v3862, %v3926
        %v3959 = vmax.f32 %v3863, %v3927
        %v3960 = vmax.f32 %v3864, %v3928
        %v3961 = vmax.f32 %v3865, %v3929
        %v3962 = vmax.f32 %v3866, %v3930
        %v3963 = vmax.f32 %v3867, %v3931
        %v3964 = vadd.f32 %v3354, %v3932
        %v3965 = vadd.f32 %v3355, %v3933
        %v3966 = vadd.f32 %v3356, %v3934
        %v3967 = vadd.f32 %v3357, %v3935
        %v3968 = vadd.f32 %v3358, %v3936
        %v3969 = vadd.f32 %v3359, %v3937
        %v3970 = vadd.f32 %v3360, %v3938
        %v3971 = vadd.f32 %v3361, %v3939
        %v3972 = vadd.f32 %v3362, %v3940
        %v3973 = vadd.f32 %v3363, %v3941
        %v3974 = vadd.f32 %v3364, %v3942
        %v3975 = vadd.f32 %v3365, %v3943
        %v3976 = vadd.f32 %v3366, %v3944
        %v3977 = vadd.f32 %v3367, %v3945
        %v3978 = vadd.f32 %v3368, %v3946
        %v3979 = vadd.f32 %v3369, %v3947
        %v3980 = vadd.f32 %v3370, %v3948
        %v3981 = vadd.f32 %v3371, %v3949
        %v3982 = vadd.f32 %v3372, %v3950
        %v3983 = vadd.f32 %v3373, %v3951
        %v3984 = vadd.f32 %v3374, %v3952
        %v3985 = vadd.f32 %v3375, %v3953
        %v3986 = vadd.f32 %v3376, %v3954
        %v3987 = vadd.f32 %v3377, %v3955
        %v3988 = vadd.f32 %v3378, %v3956
        %v3989 = vadd.f32 %v3379, %v3957
        %v3990 = vadd.f32 %v3380, %v3958
        %v3991 = vadd.f32 %v3381, %v3959
        %v3992 = vadd.f32 %v3382, %v3960
        %v3993 = vadd.f32 %v3383, %v3961
        %v3994 = vadd.f32 %v3384, %v3962
        %v3995 = vadd.f32 %v3385, %v3963
        %v3996 = vrot.slane %v3964, 7
        %v3997 = vrot.slane %v3965, 7
        %v3998 = vrot.slane %v3966, 7
        %v3999 = vrot.slane %v3967, 7
        %v4000 = vrot.slane %v3968, 7
        %v4001 = vrot.slane %v3969, 7
        %v4002 = vrot.slane %v3970, 7
        %v4003 = vrot.slane %v3971, 7
        %v4004 = vrot.slane %v3972, 7
        %v4005 = vrot.slane %v3973, 7
        %v4006 = vrot.slane %v3974, 7
        %v4007 = vrot.slane %v3975, 7
        %v4008 = vrot.slane %v3976, 7
        %v4009 = vrot.slane %v3977, 7
        %v4010 = vrot.slane %v3978, 7
        %v4011 = vrot.slane %v3979, 7
        %v4012 = vrot.slane %v3980, 7
        %v4013 = vrot.slane %v3981, 7
        %v4014 = vrot.slane %v3982, 7
        %v4015 = vrot.slane %v3983, 7
        %v4016 = vrot.slane %v3984, 7
        %v4017 = vrot.slane %v3985, 7
        %v4018 = vrot.slane %v3986, 7
        %v4019 = vrot.slane %v3987, 7
        %v4020 = vrot.slane %v3988, 7
        %v4021 = vrot.slane %v3989, 7
        %v4022 = vrot.slane %v3990, 7
        %v4023 = vrot.slane %v3991, 7
        %v4024 = vrot.slane %v3992, 7
        %v4025 = vrot.slane %v3993, 7
        %v4026 = vrot.slane %v3994, 7
        %v4027 = vrot.slane %v3995, 7
        %v4028 = vsel %vm503, %v4026, %v4027
        %v4029 = vsel %vm503, %v4025, %v4026
        %v4030 = vsel %vm503, %v4024, %v4025
        %v4031 = vsel %vm503, %v4023, %v4024
        %v4032 = vsel %vm503, %v4022, %v4023
        %v4033 = vsel %vm503, %v4021, %v4022
        %v4034 = vsel %vm503, %v4020, %v4021
        %v4035 = vsel %vm503, %v4019, %v4020
        %v4036 = vsel %vm503, %v4018, %v4019
        %v4037 = vsel %vm503, %v4017, %v4018
        %v4038 = vsel %vm503, %v4016, %v4017
        %v4039 = vsel %vm503, %v4015, %v4016
        %v4040 = vsel %vm503, %v4014, %v4015
        %v4041 = vsel %vm503, %v4013, %v4014
        %v4042 = vsel %vm503, %v4012, %v4013
        %v4043 = vsel %vm503, %v4011, %v4012
        %v4044 = vsel %vm503, %v4010, %v4011
        %v4045 = vsel %vm503, %v4009, %v4010
        %v4046 = vsel %vm503, %v4008, %v4009
        %v4047 = vsel %vm503, %v4007, %v4008
        %v4048 = vsel %vm503, %v4006, %v4007
        %v4049 = vsel %vm503, %v4005, %v4006
        %v4050 = vsel %vm503, %v4004, %v4005
        %v4051 = vsel %vm503, %v4003, %v4004
        %v4052 = vsel %vm503, %v4002, %v4003
        %v4053 = vsel %vm503, %v4001, %v4002
        %v4054 = vsel %vm503, %v4000, %v4001
        %v4055 = vsel %vm503, %v3999, %v4000
        %v4056 = vsel %vm503, %v3998, %v3999
        %v4057 = vsel %vm503, %v3997, %v3998
        %v4058 = vsel %vm503, %v3996, %v3997
        %v4059 = vsel %vm503, %v4027, %v3996
        %v4060 = vsel %vm439, %v4059, 0.0
        %v4061 = vsel %vm440, %v4058, 0.0
        %v4062 = vsel %vm441, %v4057, 0.0
        %v4063 = vsel %vm442, %v4056, 0.0
        %v4064 = vsel %vm443, %v4055, 0.0
        %v4065 = vsel %vm444, %v4054, 0.0
        %v4066 = vsel %vm445, %v4053, 0.0
        %v4067 = vsel %vm446, %v4052, 0.0
        %v4068 = vsel %vm447, %v4051, 0.0
        %v4069 = vsel %vm448, %v4050, 0.0
        %v4070 = vsel %vm449, %v4049, 0.0
        %v4071 = vsel %vm450, %v4048, 0.0
        %v4072 = vsel %vm451, %v4047, 0.0
        %v4073 = vsel %vm452, %v4046, 0.0
        %v4074 = vsel %vm453, %v4045, 0.0
        %v4075 = vsel %vm454, %v4044, 0.0
        %v4076 = vsel %vm455, %v4043, 0.0
        %v4077 = vsel %vm456, %v4042, 0.0
        %v4078 = vsel %vm457, %v4041, 0.0
        %v4079 = vsel %vm458, %v4040, 0.0
        %v4080 = vsel %vm459, %v4039, 0.0
        %v4081 = vsel %vm460, %v4038, 0.0
        %v4082 = vsel %vm461, %v4037, 0.0
        %v4083 = vsel %vm462, %v4036, 0.0
        %v4084 = vsel %vm463, %v4035, 0.0
        %v4085 = vsel %vm464, %v4034, 0.0
        %v4086 = vsel %vm465, %v4033, 0.0
        %v4087 = vsel %vm466, %v4032, 0.0
        %v4088 = vsel %vm467, %v4031, 0.0
        %v4089 = vsel %vm468, %v4030, 0.0
        %v4090 = vsel %vm469, %v4029, 0.0
        %v4091 = vsel %vm470, %v4028, 0.0
        %v4092 = vrot.slane %v3964, 1
        %v4093 = vrot.slane %v3965, 1
        %v4094 = vrot.slane %v3966, 1
        %v4095 = vrot.slane %v3967, 1
        %v4096 = vrot.slane %v3968, 1
        %v4097 = vrot.slane %v3969, 1
        %v4098 = vrot.slane %v3970, 1
        %v4099 = vrot.slane %v3971, 1
        %v4100 = vrot.slane %v3972, 1
        %v4101 = vrot.slane %v3973, 1
        %v4102 = vrot.slane %v3974, 1
        %v4103 = vrot.slane %v3975, 1
        %v4104 = vrot.slane %v3976, 1
        %v4105 = vrot.slane %v3977, 1
        %v4106 = vrot.slane %v3978, 1
        %v4107 = vrot.slane %v3979, 1
        %v4108 = vrot.slane %v3980, 1
        %v4109 = vrot.slane %v3981, 1
        %v4110 = vrot.slane %v3982, 1
        %v4111 = vrot.slane %v3983, 1
        %v4112 = vrot.slane %v3984, 1
        %v4113 = vrot.slane %v3985, 1
        %v4114 = vrot.slane %v3986, 1
        %v4115 = vrot.slane %v3987, 1
        %v4116 = vrot.slane %v3988, 1
        %v4117 = vrot.slane %v3989, 1
        %v4118 = vrot.slane %v3990, 1
        %v4119 = vrot.slane %v3991, 1
        %v4120 = vrot.slane %v3992, 1
        %v4121 = vrot.slane %v3993, 1
        %v4122 = vrot.slane %v3994, 1
        %v4123 = vrot.slane %v3995, 1
        %v4124 = vsel %vm632, %v4122, %v4123
        %v4125 = vsel %vm632, %v4121, %v4122
        %v4126 = vsel %vm632, %v4120, %v4121
        %v4127 = vsel %vm632, %v4119, %v4120
        %v4128 = vsel %vm632, %v4118, %v4119
        %v4129 = vsel %vm632, %v4117, %v4118
        %v4130 = vsel %vm632, %v4116, %v4117
        %v4131 = vsel %vm632, %v4115, %v4116
        %v4132 = vsel %vm632, %v4114, %v4115
        %v4133 = vsel %vm632, %v4113, %v4114
        %v4134 = vsel %vm632, %v4112, %v4113
        %v4135 = vsel %vm632, %v4111, %v4112
        %v4136 = vsel %vm632, %v4110, %v4111
        %v4137 = vsel %vm632, %v4109, %v4110
        %v4138 = vsel %vm632, %v4108, %v4109
        %v4139 = vsel %vm632, %v4107, %v4108
        %v4140 = vsel %vm632, %v4106, %v4107
        %v4141 = vsel %vm632, %v4105, %v4106
        %v4142 = vsel %vm632, %v4104, %v4105
        %v4143 = vsel %vm632, %v4103, %v4104
        %v4144 = vsel %vm632, %v4102, %v4103
        %v4145 = vsel %vm632, %v4101, %v4102
        %v4146 = vsel %vm632, %v4100, %v4101
        %v4147 = vsel %vm632, %v4099, %v4100
        %v4148 = vsel %vm632, %v4098, %v4099
        %v4149 = vsel %vm632, %v4097, %v4098
        %v4150 = vsel %vm632, %v4096, %v4097
        %v4151 = vsel %vm632, %v4095, %v4096
        %v4152 = vsel %vm632, %v4094, %v4095
        %v4153 = vsel %vm632, %v4093, %v4094
        %v4154 = vsel %vm632, %v4092, %v4093
        %v4155 = vsel %vm632, %v4123, %v4092
        %v4156 = vsel %vm568, %v4154, 0.0
        %v4157 = vsel %vm569, %v4153, 0.0
        %v4158 = vsel %vm570, %v4152, 0.0
        %v4159 = vsel %vm571, %v4151, 0.0
        %v4160 = vsel %vm572, %v4150, 0.0
        %v4161 = vsel %vm573, %v4149, 0.0
        %v4162 = vsel %vm574, %v4148, 0.0
        %v4163 = vsel %vm575, %v4147, 0.0
        %v4164 = vsel %vm576, %v4146, 0.0
        %v4165 = vsel %vm577, %v4145, 0.0
        %v4166 = vsel %vm578, %v4144, 0.0
        %v4167 = vsel %vm579, %v4143, 0.0
        %v4168 = vsel %vm580, %v4142, 0.0
        %v4169 = vsel %vm581, %v4141, 0.0
        %v4170 = vsel %vm582, %v4140, 0.0
        %v4171 = vsel %vm583, %v4139, 0.0
        %v4172 = vsel %vm584, %v4138, 0.0
        %v4173 = vsel %vm585, %v4137, 0.0
        %v4174 = vsel %vm586, %v4136, 0.0
        %v4175 = vsel %vm587, %v4135, 0.0
        %v4176 = vsel %vm588, %v4134, 0.0
        %v4177 = vsel %vm589, %v4133, 0.0
        %v4178 = vsel %vm590, %v4132, 0.0
        %v4179 = vsel %vm591, %v4131, 0.0
        %v4180 = vsel %vm592, %v4130, 0.0
        %v4181 = vsel %vm593, %v4129, 0.0
        %v4182 = vsel %vm594, %v4128, 0.0
        %v4183 = vsel %vm595, %v4127, 0.0
        %v4184 = vsel %vm596, %v4126, 0.0
        %v4185 = vsel %vm597, %v4125, 0.0
        %v4186 = vsel %vm598, %v4124, 0.0
        %v4187 = vsel %vm599, %v4155, 0.0
        %v4188 = vsel %vm697, %v4090, 0.0
        %v4189 = vsel %vm698, %v4091, 0.0
        %v4190 = vsel %vm699, %v4060, 0.0
        %v4191 = vsel %vm700, %v4061, 0.0
        %v4192 = vsel %vm701, %v4062, 0.0
        %v4193 = vsel %vm702, %v4063, 0.0
        %v4194 = vsel %vm703, %v4064, 0.0
        %v4195 = vsel %vm704, %v4065, 0.0
        %v4196 = vsel %vm705, %v4066, 0.0
        %v4197 = vsel %vm706, %v4067, 0.0
        %v4198 = vsel %vm707, %v4068, 0.0
        %v4199 = vsel %vm708, %v4069, 0.0
        %v4200 = vsel %vm709, %v4070, 0.0
        %v4201 = vsel %vm710, %v4071, 0.0
        %v4202 = vsel %vm711, %v4072, 0.0
        %v4203 = vsel %vm712, %v4073, 0.0
        %v4204 = vsel %vm713, %v4074, 0.0
        %v4205 = vsel %vm714, %v4075, 0.0
        %v4206 = vsel %vm715, %v4076, 0.0
        %v4207 = vsel %vm716, %v4077, 0.0
        %v4208 = vsel %vm717, %v4078, 0.0
        %v4209 = vsel %vm718, %v4079, 0.0
        %v4210 = vsel %vm719, %v4080, 0.0
        %v4211 = vsel %vm720, %v4081, 0.0
        %v4212 = vsel %vm721, %v4082, 0.0
        %v4213 = vsel %vm722, %v4083, 0.0
        %v4214 = vsel %vm723, %v4084, 0.0
        %v4215 = vsel %vm724, %v4085, 0.0
        %v4216 = vsel %vm725, %v4086, 0.0
        %v4217 = vsel %vm726, %v4087, 0.0
        %v4218 = vsel %vm727, %v4088, 0.0
        %v4219 = vsel %vm728, %v4089, 0.0
        %v4220 = vsel %vm697, %v3994, 0.0
        %v4221 = vsel %vm698, %v3995, 0.0
        %v4222 = vsel %vm699, %v3964, 0.0
        %v4223 = vsel %vm700, %v3965, 0.0
        %v4224 = vsel %vm701, %v3966, 0.0
        %v4225 = vsel %vm702, %v3967, 0.0
        %v4226 = vsel %vm703, %v3968, 0.0
        %v4227 = vsel %vm704, %v3969, 0.0
        %v4228 = vsel %vm705, %v3970, 0.0
        %v4229 = vsel %vm706, %v3971, 0.0
        %v4230 = vsel %vm707, %v3972, 0.0
        %v4231 = vsel %vm708, %v3973, 0.0
        %v4232 = vsel %vm709, %v3974, 0.0
        %v4233 = vsel %vm710, %v3975, 0.0
        %v4234 = vsel %vm711, %v3976, 0.0
        %v4235 = vsel %vm712, %v3977, 0.0
        %v4236 = vsel %vm713, %v3978, 0.0
        %v4237 = vsel %vm714, %v3979, 0.0
        %v4238 = vsel %vm715, %v3980, 0.0
        %v4239 = vsel %vm716, %v3981, 0.0
        %v4240 = vsel %vm717, %v3982, 0.0
        %v4241 = vsel %vm718, %v3983, 0.0
        %v4242 = vsel %vm719, %v3984, 0.0
        %v4243 = vsel %vm720, %v3985, 0.0
        %v4244 = vsel %vm721, %v3986, 0.0
        %v4245 = vsel %vm722, %v3987, 0.0
        %v4246 = vsel %vm723, %v3988, 0.0
        %v4247 = vsel %vm724, %v3989, 0.0
        %v4248 = vsel %vm725, %v3990, 0.0
        %v4249 = vsel %vm726, %v3991, 0.0
        %v4250 = vsel %vm727, %v3992, 0.0
        %v4251 = vsel %vm728, %v3993, 0.0
        %v4252 = vsel %vm697, %v4186, 0.0
        %v4253 = vsel %vm698, %v4187, 0.0
        %v4254 = vsel %vm699, %v4156, 0.0
        %v4255 = vsel %vm700, %v4157, 0.0
        %v4256 = vsel %vm701, %v4158, 0.0
        %v4257 = vsel %vm702, %v4159, 0.0
        %v4258 = vsel %vm703, %v4160, 0.0
        %v4259 = vsel %vm704, %v4161, 0.0
        %v4260 = vsel %vm705, %v4162, 0.0
        %v4261 = vsel %vm706, %v4163, 0.0
        %v4262 = vsel %vm707, %v4164, 0.0
        %v4263 = vsel %vm708, %v4165, 0.0
        %v4264 = vsel %vm709, %v4166, 0.0
        %v4265 = vsel %vm710, %v4167, 0.0
        %v4266 = vsel %vm711, %v4168, 0.0
        %v4267 = vsel %vm712, %v4169, 0.0
        %v4268 = vsel %vm713, %v4170, 0.0
        %v4269 = vsel %vm714, %v4171, 0.0
        %v4270 = vsel %vm715, %v4172, 0.0
        %v4271 = vsel %vm716, %v4173, 0.0
        %v4272 = vsel %vm717, %v4174, 0.0
        %v4273 = vsel %vm718, %v4175, 0.0
        %v4274 = vsel %vm719, %v4176, 0.0
        %v4275 = vsel %vm720, %v4177, 0.0
        %v4276 = vsel %vm721, %v4178, 0.0
        %v4277 = vsel %vm722, %v4179, 0.0
        %v4278 = vsel %vm723, %v4180, 0.0
        %v4279 = vsel %vm724, %v4181, 0.0
        %v4280 = vsel %vm725, %v4182, 0.0
        %v4281 = vsel %vm726, %v4183, 0.0
        %v4282 = vsel %vm727, %v4184, 0.0
        %v4283 = vsel %vm728, %v4185, 0.0
        %v4284 = vsel %vm729, %v4062, 0.0
        %v4285 = vsel %vm730, %v4063, 0.0
        %v4286 = vsel %vm731, %v4064, 0.0
        %v4287 = vsel %vm732, %v4065, 0.0
        %v4288 = vsel %vm733, %v4066, 0.0
        %v4289 = vsel %vm734, %v4067, 0.0
        %v4290 = vsel %vm735, %v4068, 0.0
        %v4291 = vsel %vm736, %v4069, 0.0
        %v4292 = vsel %vm737, %v4070, 0.0
        %v4293 = vsel %vm738, %v4071, 0.0
        %v4294 = vsel %vm739, %v4072, 0.0
        %v4295 = vsel %vm740, %v4073, 0.0
        %v4296 = vsel %vm741, %v4074, 0.0
        %v4297 = vsel %vm742, %v4075, 0.0
        %v4298 = vsel %vm743, %v4076, 0.0
        %v4299 = vsel %vm744, %v4077, 0.0
        %v4300 = vsel %vm745, %v4078, 0.0
        %v4301 = vsel %vm746, %v4079, 0.0
        %v4302 = vsel %vm747, %v4080, 0.0
        %v4303 = vsel %vm748, %v4081, 0.0
        %v4304 = vsel %vm749, %v4082, 0.0
        %v4305 = vsel %vm750, %v4083, 0.0
        %v4306 = vsel %vm751, %v4084, 0.0
        %v4307 = vsel %vm752, %v4085, 0.0
        %v4308 = vsel %vm753, %v4086, 0.0
        %v4309 = vsel %vm754, %v4087, 0.0
        %v4310 = vsel %vm755, %v4088, 0.0
        %v4311 = vsel %vm756, %v4089, 0.0
        %v4312 = vsel %vm757, %v4090, 0.0
        %v4313 = vsel %vm758, %v4091, 0.0
        %v4314 = vsel %vm759, %v4060, 0.0
        %v4315 = vsel %vm760, %v4061, 0.0
        %v4316 = vsel %vm729, %v3966, 0.0
        %v4317 = vsel %vm730, %v3967, 0.0
        %v4318 = vsel %vm731, %v3968, 0.0
        %v4319 = vsel %vm732, %v3969, 0.0
        %v4320 = vsel %vm733, %v3970, 0.0
        %v4321 = vsel %vm734, %v3971, 0.0
        %v4322 = vsel %vm735, %v3972, 0.0
        %v4323 = vsel %vm736, %v3973, 0.0
        %v4324 = vsel %vm737, %v3974, 0.0
        %v4325 = vsel %vm738, %v3975, 0.0
        %v4326 = vsel %vm739, %v3976, 0.0
        %v4327 = vsel %vm740, %v3977, 0.0
        %v4328 = vsel %vm741, %v3978, 0.0
        %v4329 = vsel %vm742, %v3979, 0.0
        %v4330 = vsel %vm743, %v3980, 0.0
        %v4331 = vsel %vm744, %v3981, 0.0
        %v4332 = vsel %vm745, %v3982, 0.0
        %v4333 = vsel %vm746, %v3983, 0.0
        %v4334 = vsel %vm747, %v3984, 0.0
        %v4335 = vsel %vm748, %v3985, 0.0
        %v4336 = vsel %vm749, %v3986, 0.0
        %v4337 = vsel %vm750, %v3987, 0.0
        %v4338 = vsel %vm751, %v3988, 0.0
        %v4339 = vsel %vm752, %v3989, 0.0
        %v4340 = vsel %vm753, %v3990, 0.0
        %v4341 = vsel %vm754, %v3991, 0.0
        %v4342 = vsel %vm755, %v3992, 0.0
        %v4343 = vsel %vm756, %v3993, 0.0
        %v4344 = vsel %vm757, %v3994, 0.0
        %v4345 = vsel %vm758, %v3995, 0.0
        %v4346 = vsel %vm759, %v3964, 0.0
        %v4347 = vsel %vm760, %v3965, 0.0
        %v4348 = vsel %vm729, %v4158, 0.0
        %v4349 = vsel %vm730, %v4159, 0.0
        %v4350 = vsel %vm731, %v4160, 0.0
        %v4351 = vsel %vm732, %v4161, 0.0
        %v4352 = vsel %vm733, %v4162, 0.0
        %v4353 = vsel %vm734, %v4163, 0.0
        %v4354 = vsel %vm735, %v4164, 0.0
        %v4355 = vsel %vm736, %v4165, 0.0
        %v4356 = vsel %vm737, %v4166, 0.0
        %v4357 = vsel %vm738, %v4167, 0.0
        %v4358 = vsel %vm739, %v4168, 0.0
        %v4359 = vsel %vm740, %v4169, 0.0
        %v4360 = vsel %vm741, %v4170, 0.0
        %v4361 = vsel %vm742, %v4171, 0.0
        %v4362 = vsel %vm743, %v4172, 0.0
        %v4363 = vsel %vm744, %v4173, 0.0
        %v4364 = vsel %vm745, %v4174, 0.0
        %v4365 = vsel %vm746, %v4175, 0.0
        %v4366 = vsel %vm747, %v4176, 0.0
        %v4367 = vsel %vm748, %v4177, 0.0
        %v4368 = vsel %vm749, %v4178, 0.0
        %v4369 = vsel %vm750, %v4179, 0.0
        %v4370 = vsel %vm751, %v4180, 0.0
        %v4371 = vsel %vm752, %v4181, 0.0
        %v4372 = vsel %vm753, %v4182, 0.0
        %v4373 = vsel %vm754, %v4183, 0.0
        %v4374 = vsel %vm755, %v4184, 0.0
        %v4375 = vsel %vm756, %v4185, 0.0
        %v4376 = vsel %vm757, %v4186, 0.0
        %v4377 = vsel %vm758, %v4187, 0.0
        %v4378 = vsel %vm759, %v4156, 0.0
        %v4379 = vsel %vm760, %v4157, 0.0
        %v4380 = vpack.c.bf16 %v4189, %v4188
        %v4381 = vpack.c.bf16 %v4221, %v4220
        %v4382 = vpack.c.bf16 %v4253, %v4252
        %v4383 = vpack.c.bf16 %v4061, %v4060
        %v4384 = vpack.c.bf16 %v3965, %v3964
        %v4385 = vpack.c.bf16 %v4157, %v4156
        %v4386 = vpack.c.bf16 %v4285, %v4284
        %v4387 = vpack.c.bf16 %v4317, %v4316
        %v4388 = vpack.c.bf16 %v4349, %v4348
        %v4389 = vpack.c.bf16 %v4191, %v4190
        %v4390 = vpack.c.bf16 %v4223, %v4222
        %v4391 = vpack.c.bf16 %v4255, %v4254
        %v4392 = vpack.c.bf16 %v4063, %v4062
        %v4393 = vpack.c.bf16 %v3967, %v3966
        %v4394 = vpack.c.bf16 %v4159, %v4158
        %v4395 = vpack.c.bf16 %v4287, %v4286
        %v4396 = vpack.c.bf16 %v4319, %v4318
        %v4397 = vpack.c.bf16 %v4351, %v4350
        %v4398 = vpack.c.bf16 %v4193, %v4192
        %v4399 = vpack.c.bf16 %v4225, %v4224
        %v4400 = vpack.c.bf16 %v4257, %v4256
        %v4401 = vpack.c.bf16 %v4065, %v4064
        %v4402 = vpack.c.bf16 %v3969, %v3968
        %v4403 = vpack.c.bf16 %v4161, %v4160
        %v4404 = vpack.c.bf16 %v4289, %v4288
        %v4405 = vpack.c.bf16 %v4321, %v4320
        %v4406 = vpack.c.bf16 %v4353, %v4352
        %v4407 = vpack.c.bf16 %v4195, %v4194
        %v4408 = vpack.c.bf16 %v4227, %v4226
        %v4409 = vpack.c.bf16 %v4259, %v4258
        %v4410 = vpack.c.bf16 %v4067, %v4066
        %v4411 = vpack.c.bf16 %v3971, %v3970
        %v4412 = vpack.c.bf16 %v4163, %v4162
        %v4413 = vpack.c.bf16 %v4291, %v4290
        %v4414 = vpack.c.bf16 %v4323, %v4322
        %v4415 = vpack.c.bf16 %v4355, %v4354
        %v4416 = vpack.c.bf16 %v4197, %v4196
        %v4417 = vpack.c.bf16 %v4229, %v4228
        %v4418 = vpack.c.bf16 %v4261, %v4260
        %v4419 = vpack.c.bf16 %v4069, %v4068
        %v4420 = vpack.c.bf16 %v3973, %v3972
        %v4421 = vpack.c.bf16 %v4165, %v4164
        %v4422 = vpack.c.bf16 %v4293, %v4292
        %v4423 = vpack.c.bf16 %v4325, %v4324
        %v4424 = vpack.c.bf16 %v4357, %v4356
        %v4425 = vpack.c.bf16 %v4199, %v4198
        %v4426 = vpack.c.bf16 %v4231, %v4230
        %v4427 = vpack.c.bf16 %v4263, %v4262
        %v4428 = vpack.c.bf16 %v4071, %v4070
        %v4429 = vpack.c.bf16 %v3975, %v3974
        %v4430 = vpack.c.bf16 %v4167, %v4166
        %v4431 = vpack.c.bf16 %v4295, %v4294
        %v4432 = vpack.c.bf16 %v4327, %v4326
        %v4433 = vpack.c.bf16 %v4359, %v4358
        %v4434 = vpack.c.bf16 %v4201, %v4200
        %v4435 = vpack.c.bf16 %v4233, %v4232
        %v4436 = vpack.c.bf16 %v4265, %v4264
        %v4437 = vpack.c.bf16 %v4073, %v4072
        %v4438 = vpack.c.bf16 %v3977, %v3976
        %v4439 = vpack.c.bf16 %v4169, %v4168
        %v4440 = vpack.c.bf16 %v4297, %v4296
        %v4441 = vpack.c.bf16 %v4329, %v4328
        %v4442 = vpack.c.bf16 %v4361, %v4360
        %v4443 = vpack.c.bf16 %v4203, %v4202
        %v4444 = vpack.c.bf16 %v4235, %v4234
        %v4445 = vpack.c.bf16 %v4267, %v4266
        %v4446 = vpack.c.bf16 %v4075, %v4074
        %v4447 = vpack.c.bf16 %v3979, %v3978
        %v4448 = vpack.c.bf16 %v4171, %v4170
        %v4449 = vpack.c.bf16 %v4299, %v4298
        %v4450 = vpack.c.bf16 %v4331, %v4330
        %v4451 = vpack.c.bf16 %v4363, %v4362
        %v4452 = vpack.c.bf16 %v4205, %v4204
        %v4453 = vpack.c.bf16 %v4237, %v4236
        %v4454 = vpack.c.bf16 %v4269, %v4268
        %v4455 = vpack.c.bf16 %v4077, %v4076
        %v4456 = vpack.c.bf16 %v3981, %v3980
        %v4457 = vpack.c.bf16 %v4173, %v4172
        %v4458 = vpack.c.bf16 %v4301, %v4300
        %v4459 = vpack.c.bf16 %v4333, %v4332
        %v4460 = vpack.c.bf16 %v4365, %v4364
        %v4461 = vpack.c.bf16 %v4207, %v4206
        %v4462 = vpack.c.bf16 %v4239, %v4238
        %v4463 = vpack.c.bf16 %v4271, %v4270
        %v4464 = vpack.c.bf16 %v4079, %v4078
        %v4465 = vpack.c.bf16 %v3983, %v3982
        %v4466 = vpack.c.bf16 %v4175, %v4174
        %v4467 = vpack.c.bf16 %v4303, %v4302
        %v4468 = vpack.c.bf16 %v4335, %v4334
        %v4469 = vpack.c.bf16 %v4367, %v4366
        %v4470 = vpack.c.bf16 %v4209, %v4208
        %v4471 = vpack.c.bf16 %v4241, %v4240
        %v4472 = vpack.c.bf16 %v4273, %v4272
        %v4473 = vpack.c.bf16 %v4081, %v4080
        %v4474 = vpack.c.bf16 %v3985, %v3984
        %v4475 = vpack.c.bf16 %v4177, %v4176
        %v4476 = vpack.c.bf16 %v4305, %v4304
        %v4477 = vpack.c.bf16 %v4337, %v4336
        %v4478 = vpack.c.bf16 %v4369, %v4368
        %v4479 = vpack.c.bf16 %v4211, %v4210
        %v4480 = vpack.c.bf16 %v4243, %v4242
        %v4481 = vpack.c.bf16 %v4275, %v4274
        %v4482 = vpack.c.bf16 %v4083, %v4082
        %v4483 = vpack.c.bf16 %v3987, %v3986
        %v4484 = vpack.c.bf16 %v4179, %v4178
        %v4485 = vpack.c.bf16 %v4307, %v4306
        %v4486 = vpack.c.bf16 %v4339, %v4338
        %v4487 = vpack.c.bf16 %v4371, %v4370
        %v4488 = vpack.c.bf16 %v4213, %v4212
        %v4489 = vpack.c.bf16 %v4245, %v4244
        %v4490 = vpack.c.bf16 %v4277, %v4276
        %v4491 = vpack.c.bf16 %v4085, %v4084
        %v4492 = vpack.c.bf16 %v3989, %v3988
        %v4493 = vpack.c.bf16 %v4181, %v4180
        %v4494 = vpack.c.bf16 %v4309, %v4308
        %v4495 = vpack.c.bf16 %v4341, %v4340
        %v4496 = vpack.c.bf16 %v4373, %v4372
        %v4497 = vpack.c.bf16 %v4215, %v4214
        %v4498 = vpack.c.bf16 %v4247, %v4246
        %v4499 = vpack.c.bf16 %v4279, %v4278
        %v4500 = vpack.c.bf16 %v4087, %v4086
        %v4501 = vpack.c.bf16 %v3991, %v3990
        %v4502 = vpack.c.bf16 %v4183, %v4182
        %v4503 = vpack.c.bf16 %v4311, %v4310
        %v4504 = vpack.c.bf16 %v4343, %v4342
        %v4505 = vpack.c.bf16 %v4375, %v4374
        %v4506 = vpack.c.bf16 %v4217, %v4216
        %v4507 = vpack.c.bf16 %v4249, %v4248
        %v4508 = vpack.c.bf16 %v4281, %v4280
        %v4509 = vpack.c.bf16 %v4089, %v4088
        %v4510 = vpack.c.bf16 %v3993, %v3992
        %v4511 = vpack.c.bf16 %v4185, %v4184
        %v4512 = vpack.c.bf16 %v4313, %v4312
        %v4513 = vpack.c.bf16 %v4345, %v4344
        %v4514 = vpack.c.bf16 %v4377, %v4376
        %v4515 = vpack.c.bf16 %v4219, %v4218
        %v4516 = vpack.c.bf16 %v4251, %v4250
        %v4517 = vpack.c.bf16 %v4283, %v4282
        %v4518 = vpack.c.bf16 %v4091, %v4090
        %v4519 = vpack.c.bf16 %v3995, %v3994
        %v4520 = vpack.c.bf16 %v4187, %v4186
        %v4521 = vpack.c.bf16 %v4315, %v4314
        %v4522 = vpack.c.bf16 %v4347, %v4346
        %v4523 = vpack.c.bf16 %v4379, %v4378
        %v4524 = vld [vmem:[#allocation2] sm:$0xf]
        %v4525 = vld [vmem:[#allocation2 + $0x4] sm:$0xf]
        %v4526 = vld [vmem:[#allocation2 + $0x8] sm:$0xf]
        %v4527 = vld [vmem:[#allocation2 + $0xc] sm:$0xf]
        %v4528 = vld [vmem:[#allocation2 + $0x10] sm:$0xf]
        %v4529 = vld [vmem:[#allocation2 + $0x14] sm:$0xf]
        %v4530 = vld [vmem:[#allocation2 + $0x18] sm:$0xf]
        %v4531 = vld [vmem:[#allocation2 + $0x1c] sm:$0xf]
        %v4532 = vld [vmem:[#allocation2 + $0x20] sm:$0xf]
        %v4533 = vld [vmem:[#allocation2 + $0x24] sm:$0xf]
        %v4534 = vld [vmem:[#allocation2 + $0x28] sm:$0xf]
        %v4535 = vld [vmem:[#allocation2 + $0x2c] sm:$0xf]
        %v4536 = vld [vmem:[#allocation2 + $0x30] sm:$0xf]
        %v4537 = vld [vmem:[#allocation2 + $0x34] sm:$0xf]
        %v4538 = vld [vmem:[#allocation2 + $0x38] sm:$0xf]
        %v4539 = vld [vmem:[#allocation2 + $0x3c] sm:$0xf]
        %v4540 = vld [vmem:[#allocation2 + $0x40] sm:$0xf]
        %v4541 = vld [vmem:[#allocation2 + $0x44] sm:$0xf]
        %v4542 = vld [vmem:[#allocation2 + $0x48] sm:$0xf]
        %v4543 = vld [vmem:[#allocation2 + $0x4c] sm:$0xf]
        %v4544 = vld [vmem:[#allocation2 + $0x50] sm:$0xf]
        %v4545 = vld [vmem:[#allocation2 + $0x54] sm:$0xf]
        %v4546 = vld [vmem:[#allocation2 + $0x58] sm:$0xf]
        %v4547 = vld [vmem:[#allocation2 + $0x5c] sm:$0xf]
        %v4548 = vld [vmem:[#allocation2 + $0x60] sm:$0xf]
        %v4549 = vld [vmem:[#allocation2 + $0x64] sm:$0xf]
        %v4550 = vld [vmem:[#allocation2 + $0x68] sm:$0xf]
        %v4551 = vld [vmem:[#allocation2 + $0x6c] sm:$0xf]
        %v4552 = vld [vmem:[#allocation2 + $0x70] sm:$0xf]
        %v4553 = vld [vmem:[#allocation2 + $0x74] sm:$0xf]
        %v4554 = vld [vmem:[#allocation2 + $0x78] sm:$0xf]
        %v4555 = vld [vmem:[#allocation2 + $0x7c] sm:$0xf]
        %v4556 = vld [vmem:[#allocation2 + $0x80] sm:$0xf]
        %v4557 = vld [vmem:[#allocation2 + $0x84] sm:$0xf]
        %v4558 = vld [vmem:[#allocation2 + $0x88] sm:$0xf]
        %v4559 = vld [vmem:[#allocation2 + $0x8c] sm:$0xf]
        %v4560 = vld [vmem:[#allocation2 + $0x90] sm:$0xf]
        %v4561 = vld [vmem:[#allocation2 + $0x94] sm:$0xf]
        %v4562 = vld [vmem:[#allocation2 + $0x98] sm:$0xf]
        %v4563 = vld [vmem:[#allocation2 + $0x9c] sm:$0xf]
        %v4564 = vld [vmem:[#allocation2 + $0xa0] sm:$0xf]
        %v4565 = vld [vmem:[#allocation2 + $0xa4] sm:$0xf]
        %v4566 = vld [vmem:[#allocation2 + $0xa8] sm:$0xf]
        %v4567 = vld [vmem:[#allocation2 + $0xac] sm:$0xf]
        %v4568 = vld [vmem:[#allocation2 + $0xb0] sm:$0xf]
        %v4569 = vld [vmem:[#allocation2 + $0xb4] sm:$0xf]
        %v4570 = vld [vmem:[#allocation2 + $0xb8] sm:$0xf]
        %v4571 = vld [vmem:[#allocation2 + $0xbc] sm:$0xf]
        %v4572 = vld [vmem:[#allocation2 + $0xc0] sm:$0xf]
        %v4573 = vld [vmem:[#allocation2 + $0xc4] sm:$0xf]
        %v4574 = vld [vmem:[#allocation2 + $0xc8] sm:$0xf]
        %v4575 = vld [vmem:[#allocation2 + $0xcc] sm:$0xf]
        %v4576 = vld [vmem:[#allocation2 + $0xd0] sm:$0xf]
        %v4577 = vld [vmem:[#allocation2 + $0xd4] sm:$0xf]
        %v4578 = vld [vmem:[#allocation2 + $0xd8] sm:$0xf]
        %v4579 = vld [vmem:[#allocation2 + $0xdc] sm:$0xf]
        %v4580 = vld [vmem:[#allocation2 + $0xe0] sm:$0xf]
        %v4581 = vld [vmem:[#allocation2 + $0xe4] sm:$0xf]
        %v4582 = vld [vmem:[#allocation2 + $0xe8] sm:$0xf]
        %v4583 = vld [vmem:[#allocation2 + $0xec] sm:$0xf]
        %v4584 = vld [vmem:[#allocation2 + $0xf0] sm:$0xf]
        %v4585 = vld [vmem:[#allocation2 + $0xf4] sm:$0xf]
        %v4586 = vld [vmem:[#allocation2 + $0xf8] sm:$0xf]
        %v4587 = vld [vmem:[#allocation2 + $0xfc] sm:$0xf]
        %v4588 = vld [vmem:[#allocation2 + $0x100] sm:$0xf]
        %v4589 = vld [vmem:[#allocation2 + $0x104] sm:$0xf]
        %v4590 = vld [vmem:[#allocation2 + $0x108] sm:$0xf]
        %v4591 = vld [vmem:[#allocation2 + $0x10c] sm:$0xf]
        %v4592 = vld [vmem:[#allocation2 + $0x110] sm:$0xf]
        %v4593 = vld [vmem:[#allocation2 + $0x114] sm:$0xf]
        %v4594 = vld [vmem:[#allocation2 + $0x118] sm:$0xf]
        %v4595 = vld [vmem:[#allocation2 + $0x11c] sm:$0xf]
        %v4596 = vld [vmem:[#allocation2 + $0x120] sm:$0xf]
        %v4597 = vld [vmem:[#allocation2 + $0x124] sm:$0xf]
        %v4598 = vld [vmem:[#allocation2 + $0x128] sm:$0xf]
        %v4599 = vld [vmem:[#allocation2 + $0x12c] sm:$0xf]
        %v4600 = vld [vmem:[#allocation2 + $0x130] sm:$0xf]
        %v4601 = vld [vmem:[#allocation2 + $0x134] sm:$0xf]
        %v4602 = vld [vmem:[#allocation2 + $0x138] sm:$0xf]
        %v4603 = vld [vmem:[#allocation2 + $0x13c] sm:$0xf]
        %v4604 = vld [vmem:[#allocation2 + $0x140] sm:$0xf]
        %v4605 = vld [vmem:[#allocation2 + $0x144] sm:$0xf]
        %v4606 = vld [vmem:[#allocation2 + $0x148] sm:$0xf]
        %v4607 = vld [vmem:[#allocation2 + $0x14c] sm:$0xf]
        %v4608 = vld [vmem:[#allocation2 + $0x150] sm:$0xf]
        %v4609 = vld [vmem:[#allocation2 + $0x154] sm:$0xf]
        %v4610 = vld [vmem:[#allocation2 + $0x158] sm:$0xf]
        %v4611 = vld [vmem:[#allocation2 + $0x15c] sm:$0xf]
        %v4612 = vld [vmem:[#allocation2 + $0x160] sm:$0xf]
        %v4613 = vld [vmem:[#allocation2 + $0x164] sm:$0xf]
        %v4614 = vld [vmem:[#allocation2 + $0x168] sm:$0xf]
        %v4615 = vld [vmem:[#allocation2 + $0x16c] sm:$0xf]
        %v4616 = vld [vmem:[#allocation2 + $0x170] sm:$0xf]
        %v4617 = vld [vmem:[#allocation2 + $0x174] sm:$0xf]
        %v4618 = vld [vmem:[#allocation2 + $0x178] sm:$0xf]
        %v4619 = vld [vmem:[#allocation2 + $0x17c] sm:$0xf]
        %v4620 = vld [vmem:[#allocation2 + $0x180] sm:$0xf]
        %v4621 = vld [vmem:[#allocation2 + $0x184] sm:$0xf]
        %v4622 = vld [vmem:[#allocation2 + $0x188] sm:$0xf]
        %v4623 = vld [vmem:[#allocation2 + $0x18c] sm:$0xf]
        %v4624 = vld [vmem:[#allocation2 + $0x190] sm:$0xf]
        %v4625 = vld [vmem:[#allocation2 + $0x194] sm:$0xf]
        %v4626 = vld [vmem:[#allocation2 + $0x198] sm:$0xf]
        %v4627 = vld [vmem:[#allocation2 + $0x19c] sm:$0xf]
        %v4628 = vld [vmem:[#allocation2 + $0x1a0] sm:$0xf]
        %v4629 = vld [vmem:[#allocation2 + $0x1a4] sm:$0xf]
        %v4630 = vld [vmem:[#allocation2 + $0x1a8] sm:$0xf]
        %v4631 = vld [vmem:[#allocation2 + $0x1ac] sm:$0xf]
        %v4632 = vld [vmem:[#allocation2 + $0x1b0] sm:$0xf]
        %v4633 = vld [vmem:[#allocation2 + $0x1b4] sm:$0xf]
        %v4634 = vld [vmem:[#allocation2 + $0x1b8] sm:$0xf]
        %v4635 = vld [vmem:[#allocation2 + $0x1bc] sm:$0xf]
        %v4636 = vld [vmem:[#allocation2 + $0x1c0] sm:$0xf]
        %v4637 = vld [vmem:[#allocation2 + $0x1c4] sm:$0xf]
        %v4638 = vld [vmem:[#allocation2 + $0x1c8] sm:$0xf]
        %v4639 = vld [vmem:[#allocation2 + $0x1cc] sm:$0xf]
        %v4640 = vld [vmem:[#allocation2 + $0x1d0] sm:$0xf]
        %v4641 = vld [vmem:[#allocation2 + $0x1d4] sm:$0xf]
        %v4642 = vld [vmem:[#allocation2 + $0x1d8] sm:$0xf]
        %v4643 = vld [vmem:[#allocation2 + $0x1dc] sm:$0xf]
        %v4644 = vld [vmem:[#allocation2 + $0x1e0] sm:$0xf]
        %v4645 = vld [vmem:[#allocation2 + $0x1e4] sm:$0xf]
        %v4646 = vld [vmem:[#allocation2 + $0x1e8] sm:$0xf]
        %v4647 = vld [vmem:[#allocation2 + $0x1ec] sm:$0xf]
        %v4648 = vld [vmem:[#allocation2 + $0x1f0] sm:$0xf]
        %v4649 = vld [vmem:[#allocation2 + $0x1f4] sm:$0xf]
        %v4650 = vld [vmem:[#allocation2 + $0x1f8] sm:$0xf]
        %v4651 = vld [vmem:[#allocation2 + $0x1fc] sm:$0xf]
        %v4652 = vld [vmem:[#allocation2 + $0x200] sm:$0xf]
        %v4653 = vld [vmem:[#allocation2 + $0x204] sm:$0xf]
        %v4654 = vld [vmem:[#allocation2 + $0x208] sm:$0xf]
        %v4655 = vld [vmem:[#allocation2 + $0x20c] sm:$0xf]
        %v4656 = vld [vmem:[#allocation2 + $0x210] sm:$0xf]
        %v4657 = vld [vmem:[#allocation2 + $0x214] sm:$0xf]
        %v4658 = vld [vmem:[#allocation2 + $0x218] sm:$0xf]
        %v4659 = vld [vmem:[#allocation2 + $0x21c] sm:$0xf]
        %v4660 = vld [vmem:[#allocation2 + $0x220] sm:$0xf]
        %v4661 = vld [vmem:[#allocation2 + $0x224] sm:$0xf]
        %v4662 = vld [vmem:[#allocation2 + $0x228] sm:$0xf]
        %v4663 = vld [vmem:[#allocation2 + $0x22c] sm:$0xf]
        %v4664 = vld [vmem:[#allocation2 + $0x230] sm:$0xf]
        %v4665 = vld [vmem:[#allocation2 + $0x234] sm:$0xf]
        %v4666 = vld [vmem:[#allocation2 + $0x238] sm:$0xf]
        %v4667 = vld [vmem:[#allocation2 + $0x23c] sm:$0xf]
        %v4668 = vld [vmem:[#allocation2 + $0x240] sm:$0xf]
        %v4669 = vld [vmem:[#allocation2 + $0x244] sm:$0xf]
        %v4670 = vld [vmem:[#allocation2 + $0x248] sm:$0xf]
        %v4671 = vld [vmem:[#allocation2 + $0x24c] sm:$0xf]
        %v4672 = vld [vmem:[#allocation2 + $0x250] sm:$0xf]
        %v4673 = vld [vmem:[#allocation2 + $0x254] sm:$0xf]
        %v4674 = vld [vmem:[#allocation2 + $0x258] sm:$0xf]
        %v4675 = vld [vmem:[#allocation2 + $0x25c] sm:$0xf]
        %v4676 = vld [vmem:[#allocation2 + $0x260] sm:$0xf]
        %v4677 = vld [vmem:[#allocation2 + $0x264] sm:$0xf]
        %v4678 = vld [vmem:[#allocation2 + $0x268] sm:$0xf]
        %v4679 = vld [vmem:[#allocation2 + $0x26c] sm:$0xf]
        %v4680 = vld [vmem:[#allocation2 + $0x270] sm:$0xf]
        %v4681 = vld [vmem:[#allocation2 + $0x274] sm:$0xf]
        %v4682 = vld [vmem:[#allocation2 + $0x278] sm:$0xf]
        %v4683 = vld [vmem:[#allocation2 + $0x27c] sm:$0xf]
        %v4684 = vld [vmem:[%s4] sm:$0x1]
        %v4686 = vlaneseq
        %v4687 = vshrl.u32 %v4686, 7
        %v4688 = vsub.s32 0, %v4687
        %v4689 = vrot.slane %v4684, %v4688
        %v4851 = vunpack.c.l.b16 %v4524
        %v4852 = vunpack.c.l.b16 %v4525
        %v4853 = vunpack.c.l.b16 %v4526
        %v4854 = vunpack.c.l.b16 %v4527
        %v4855 = vunpack.c.l.b16 %v4528
        %v4856 = vunpack.c.l.b16 %v4529
        %v4857 = vunpack.c.l.b16 %v4530
        %v4858 = vunpack.c.l.b16 %v4531
        %v4859 = vunpack.c.l.b16 %v4532
        %v4860 = vunpack.c.l.b16 %v4533
        %v4861 = vunpack.c.l.b16 %v4534
        %v4862 = vunpack.c.l.b16 %v4535
        %v4863 = vunpack.c.l.b16 %v4536
        %v4864 = vunpack.c.l.b16 %v4537
        %v4865 = vunpack.c.l.b16 %v4538
        %v4866 = vunpack.c.l.b16 %v4539
        %v4867 = vunpack.c.l.b16 %v4540
        %v4868 = vunpack.c.l.b16 %v4541
        %v4869 = vunpack.c.l.b16 %v4542
        %v4870 = vunpack.c.l.b16 %v4543
        %v4871 = vunpack.c.l.b16 %v4544
        %v4872 = vunpack.c.l.b16 %v4545
        %v4873 = vunpack.c.l.b16 %v4546
        %v4874 = vunpack.c.l.b16 %v4547
        %v4875 = vunpack.c.l.b16 %v4548
        %v4876 = vunpack.c.l.b16 %v4549
        %v4877 = vunpack.c.l.b16 %v4550
        %v4878 = vunpack.c.l.b16 %v4551
        %v4879 = vunpack.c.l.b16 %v4552
        %v4880 = vunpack.c.l.b16 %v4553
        %v4881 = vunpack.c.l.b16 %v4554
        %v4882 = vunpack.c.l.b16 %v4555
        %v4883 = vunpack.c.l.b16 %v4556
        %v4884 = vunpack.c.l.b16 %v4557
        %v4885 = vunpack.c.l.b16 %v4558
        %v4886 = vunpack.c.l.b16 %v4559
        %v4887 = vunpack.c.l.b16 %v4560
        %v4888 = vunpack.c.l.b16 %v4561
        %v4889 = vunpack.c.l.b16 %v4562
        %v4890 = vunpack.c.l.b16 %v4563
        %v4891 = vunpack.c.l.b16 %v4564
        %v4892 = vunpack.c.l.b16 %v4565
        %v4893 = vunpack.c.l.b16 %v4566
        %v4894 = vunpack.c.l.b16 %v4567
        %v4895 = vunpack.c.l.b16 %v4568
        %v4896 = vunpack.c.l.b16 %v4569
        %v4897 = vunpack.c.l.b16 %v4570
        %v4898 = vunpack.c.l.b16 %v4571
        %v4899 = vunpack.c.l.b16 %v4572
        %v4900 = vunpack.c.l.b16 %v4573
        %v4901 = vunpack.c.l.b16 %v4574
        %v4902 = vunpack.c.l.b16 %v4575
        %v4903 = vunpack.c.l.b16 %v4576
        %v4904 = vunpack.c.l.b16 %v4577
        %v4905 = vunpack.c.l.b16 %v4578
        %v4906 = vunpack.c.l.b16 %v4579
        %v4907 = vunpack.c.l.b16 %v4580
        %v4908 = vunpack.c.l.b16 %v4581
        %v4909 = vunpack.c.l.b16 %v4582
        %v4910 = vunpack.c.l.b16 %v4583
        %v4911 = vunpack.c.l.b16 %v4584
        %v4912 = vunpack.c.l.b16 %v4585
        %v4913 = vunpack.c.l.b16 %v4586
        %v4914 = vunpack.c.l.b16 %v4587
        %v4915 = vunpack.c.l.b16 %v4588
        %v4916 = vunpack.c.l.b16 %v4589
        %v4917 = vunpack.c.l.b16 %v4590
        %v4918 = vunpack.c.l.b16 %v4591
        %v4919 = vunpack.c.l.b16 %v4592
        %v4920 = vunpack.c.l.b16 %v4593
        %v4921 = vunpack.c.l.b16 %v4594
        %v4922 = vunpack.c.l.b16 %v4595
        %v4923 = vunpack.c.l.b16 %v4596
        %v4924 = vunpack.c.l.b16 %v4597
        %v4925 = vunpack.c.l.b16 %v4598
        %v4926 = vunpack.c.l.b16 %v4599
        %v4927 = vunpack.c.l.b16 %v4600
        %v4928 = vunpack.c.l.b16 %v4601
        %v4929 = vunpack.c.l.b16 %v4602
        %v4930 = vunpack.c.l.b16 %v4603
        %v4931 = vunpack.c.l.b16 %v4604
        %v4932 = vunpack.c.l.b16 %v4605
        %v4933 = vunpack.c.l.b16 %v4606
        %v4934 = vunpack.c.l.b16 %v4607
        %v4935 = vunpack.c.l.b16 %v4608
        %v4936 = vunpack.c.l.b16 %v4609
        %v4937 = vunpack.c.l.b16 %v4610
        %v4938 = vunpack.c.l.b16 %v4611
        %v4939 = vunpack.c.l.b16 %v4612
        %v4940 = vunpack.c.l.b16 %v4613
        %v4941 = vunpack.c.l.b16 %v4614
        %v4942 = vunpack.c.l.b16 %v4615
        %v4943 = vunpack.c.l.b16 %v4616
        %v4944 = vunpack.c.l.b16 %v4617
        %v4945 = vunpack.c.l.b16 %v4618
        %v4946 = vunpack.c.l.b16 %v4619
        %v4947 = vunpack.c.l.b16 %v4620
        %v4948 = vunpack.c.l.b16 %v4621
        %v4949 = vunpack.c.l.b16 %v4622
        %v4950 = vunpack.c.l.b16 %v4623
        %v4951 = vunpack.c.l.b16 %v4624
        %v4952 = vunpack.c.l.b16 %v4625
        %v4953 = vunpack.c.l.b16 %v4626
        %v4954 = vunpack.c.l.b16 %v4627
        %v4955 = vunpack.c.l.b16 %v4628
        %v4956 = vunpack.c.l.b16 %v4629
        %v4957 = vunpack.c.l.b16 %v4630
        %v4958 = vunpack.c.l.b16 %v4631
        %v4959 = vunpack.c.l.b16 %v4632
        %v4960 = vunpack.c.l.b16 %v4633
        %v4961 = vunpack.c.l.b16 %v4634
        %v4962 = vunpack.c.l.b16 %v4635
        %v4963 = vunpack.c.l.b16 %v4636
        %v4964 = vunpack.c.l.b16 %v4637
        %v4965 = vunpack.c.l.b16 %v4638
        %v4966 = vunpack.c.l.b16 %v4639
        %v4967 = vunpack.c.l.b16 %v4640
        %v4968 = vunpack.c.l.b16 %v4641
        %v4969 = vunpack.c.l.b16 %v4642
        %v4970 = vunpack.c.l.b16 %v4643
        %v4971 = vunpack.c.l.b16 %v4644
        %v4972 = vunpack.c.l.b16 %v4645
        %v4973 = vunpack.c.l.b16 %v4646
        %v4974 = vunpack.c.l.b16 %v4647
        %v4975 = vunpack.c.l.b16 %v4648
        %v4976 = vunpack.c.l.b16 %v4649
        %v4977 = vunpack.c.l.b16 %v4650
        %v4978 = vunpack.c.l.b16 %v4651
        %v4979 = vunpack.c.l.b16 %v4652
        %v4980 = vunpack.c.l.b16 %v4653
        %v4981 = vunpack.c.l.b16 %v4654
        %v4982 = vunpack.c.l.b16 %v4655
        %v4983 = vunpack.c.l.b16 %v4656
        %v4984 = vunpack.c.l.b16 %v4657
        %v4985 = vunpack.c.l.b16 %v4658
        %v4986 = vunpack.c.l.b16 %v4659
        %v4987 = vunpack.c.l.b16 %v4660
        %v4988 = vunpack.c.l.b16 %v4661
        %v4989 = vunpack.c.l.b16 %v4662
        %v4990 = vunpack.c.l.b16 %v4663
        %v4991 = vunpack.c.l.b16 %v4664
        %v4992 = vunpack.c.l.b16 %v4665
        %v4993 = vunpack.c.l.b16 %v4666
        %v4994 = vunpack.c.l.b16 %v4667
        %v4995 = vunpack.c.l.b16 %v4668
        %v4996 = vunpack.c.l.b16 %v4669
        %v4997 = vunpack.c.l.b16 %v4670
        %v4998 = vunpack.c.l.b16 %v4671
        %v4999 = vunpack.c.l.b16 %v4672
        %v5000 = vunpack.c.l.b16 %v4673
        %v5001 = vunpack.c.l.b16 %v4674
        %v5002 = vunpack.c.l.b16 %v4675
        %v5003 = vunpack.c.l.b16 %v4676
        %v5004 = vunpack.c.l.b16 %v4677
        %v5005 = vunpack.c.l.b16 %v4678
        %v5006 = vunpack.c.l.b16 %v4679
        %v5007 = vunpack.c.l.b16 %v4680
        %v5008 = vunpack.c.l.b16 %v4681
        %v5009 = vunpack.c.l.b16 %v4682
        %v5010 = vunpack.c.l.b16 %v4683
        %v5011 = vpack.c.b16 %v4852, %v4851
        %v5012 = vpack.c.b16 %v4854, %v4853
        %v5013 = vpack.c.b16 %v4856, %v4855
        %v5014 = vpack.c.b16 %v4858, %v4857
        %v5015 = vpack.c.b16 %v4860, %v4859
        %v5016 = vpack.c.b16 %v4862, %v4861
        %v5017 = vpack.c.b16 %v4864, %v4863
        %v5018 = vpack.c.b16 %v4866, %v4865
        %v5019 = vpack.c.b16 %v4868, %v4867
        %v5020 = vpack.c.b16 %v4870, %v4869
        %v5021 = vpack.c.b16 %v4872, %v4871
        %v5022 = vpack.c.b16 %v4874, %v4873
        %v5023 = vpack.c.b16 %v4876, %v4875
        %v5024 = vpack.c.b16 %v4878, %v4877
        %v5025 = vpack.c.b16 %v4880, %v4879
        %v5026 = vpack.c.b16 %v4882, %v4881
        %v5027 = vpack.c.b16 %v4884, %v4883
        %v5028 = vpack.c.b16 %v4886, %v4885
        %v5029 = vpack.c.b16 %v4888, %v4887
        %v5030 = vpack.c.b16 %v4890, %v4889
        %v5031 = vpack.c.b16 %v4892, %v4891
        %v5032 = vpack.c.b16 %v4894, %v4893
        %v5033 = vpack.c.b16 %v4896, %v4895
        %v5034 = vpack.c.b16 %v4898, %v4897
        %v5035 = vpack.c.b16 %v4900, %v4899
        %v5036 = vpack.c.b16 %v4902, %v4901
        %v5037 = vpack.c.b16 %v4904, %v4903
        %v5038 = vpack.c.b16 %v4906, %v4905
        %v5039 = vpack.c.b16 %v4908, %v4907
        %v5040 = vpack.c.b16 %v4910, %v4909
        %v5041 = vpack.c.b16 %v4912, %v4911
        %v5042 = vpack.c.b16 %v4914, %v4913
        %v5043 = vpack.c.b16 %v4916, %v4915
        %v5044 = vpack.c.b16 %v4918, %v4917
        %v5045 = vpack.c.b16 %v4920, %v4919
        %v5046 = vpack.c.b16 %v4922, %v4921
        %v5047 = vpack.c.b16 %v4924, %v4923
        %v5048 = vpack.c.b16 %v4926, %v4925
        %v5049 = vpack.c.b16 %v4928, %v4927
        %v5050 = vpack.c.b16 %v4930, %v4929
        %v5051 = vpack.c.b16 %v4932, %v4931
        %v5052 = vpack.c.b16 %v4934, %v4933
        %v5053 = vpack.c.b16 %v4936, %v4935
        %v5054 = vpack.c.b16 %v4938, %v4937
        %v5055 = vpack.c.b16 %v4940, %v4939
        %v5056 = vpack.c.b16 %v4942, %v4941
        %v5057 = vpack.c.b16 %v4944, %v4943
        %v5058 = vpack.c.b16 %v4946, %v4945
        %v5059 = vpack.c.b16 %v4948, %v4947
        %v5060 = vpack.c.b16 %v4950, %v4949
        %v5061 = vpack.c.b16 %v4952, %v4951
        %v5062 = vpack.c.b16 %v4954, %v4953
        %v5063 = vpack.c.b16 %v4956, %v4955
        %v5064 = vpack.c.b16 %v4958, %v4957
        %v5065 = vpack.c.b16 %v4960, %v4959
        %v5066 = vpack.c.b16 %v4962, %v4961
        %v5067 = vpack.c.b16 %v4964, %v4963
        %v5068 = vpack.c.b16 %v4966, %v4965
        %v5069 = vpack.c.b16 %v4968, %v4967
        %v5070 = vpack.c.b16 %v4970, %v4969
        %v5071 = vpack.c.b16 %v4972, %v4971
        %v5072 = vpack.c.b16 %v4974, %v4973
        %v5073 = vpack.c.b16 %v4976, %v4975
        %v5074 = vpack.c.b16 %v4978, %v4977
        %v5075 = vpack.c.b16 %v4980, %v4979
        %v5076 = vpack.c.b16 %v4982, %v4981
        %v5077 = vpack.c.b16 %v4984, %v4983
        %v5078 = vpack.c.b16 %v4986, %v4985
        %v5079 = vpack.c.b16 %v4988, %v4987
        %v5080 = vpack.c.b16 %v4990, %v4989
        %v5081 = vpack.c.b16 %v4992, %v4991
        %v5082 = vpack.c.b16 %v4994, %v4993
        %v5083 = vpack.c.b16 %v4996, %v4995
        %v5084 = vpack.c.b16 %v4998, %v4997
        %v5085 = vpack.c.b16 %v5000, %v4999
        %v5086 = vpack.c.b16 %v5002, %v5001
        %v5087 = vpack.c.b16 %v5004, %v5003
        %v5088 = vpack.c.b16 %v5006, %v5005
        %v5089 = vpack.c.b16 %v5008, %v5007
        %v5090 = vpack.c.b16 %v5010, %v5009
        %5171 = vmatprep.subr.bf16.mxu0 0
        %5172 = vmatpush1.bf16.msra.mxu0 %v5011
        %5173 = vmatprep.subr.bf16.mxu0 0
        %5174 = vmatpush1.bf16.msra.mxu0 %v5012
        %5175 = vmatprep.subr.bf16.mxu0 0
        %5176 = vmatpush1.bf16.msra.mxu0 %v5013
        %5177 = vmatprep.subr.bf16.mxu0 0
        %5178 = vmatpush1.bf16.msra.mxu0 %v5014
        %5179 = vmatprep.subr.bf16.mxu0 0
        %5180 = vmatpush1.bf16.msra.mxu0 %v5015
        %5181 = vmatprep.subr.bf16.mxu0 0
        %5182 = vmatpush1.bf16.msra.mxu0 %v5016
        %5183 = vmatprep.subr.bf16.mxu0 0
        %5184 = vmatpush1.bf16.msra.mxu0 %v5017
        %5185 = vmatprep.subr.bf16.mxu0 0
        %5186 = vmatpush1.bf16.msra.mxu0 %v5018
        %5187 = vmatprep.subr.bf16.mxu0 0
        %5188 = vmatpush1.bf16.msra.mxu0 %v5019
        %5189 = vmatprep.subr.bf16.mxu0 0
        %5190 = vmatpush1.bf16.msra.mxu0 %v5020
        %5191 = vmatprep.subr.bf16.mxu0 0
        %5192 = vmatpush1.bf16.msra.mxu0 %v5021
        %5193 = vmatprep.subr.bf16.mxu0 0
        %5194 = vmatpush1.bf16.msra.mxu0 %v5022
        %5195 = vmatprep.subr.bf16.mxu0 0
        %5196 = vmatpush1.bf16.msra.mxu0 %v5023
        %5197 = vmatprep.subr.bf16.mxu0 0
        %5198 = vmatpush1.bf16.msra.mxu0 %v5024
        %5199 = vmatprep.subr.bf16.mxu0 0
        %5200 = vmatpush1.bf16.msra.mxu0 %v5025
        %5201 = vmatprep.subr.bf16.mxu0 0
        %5202 = vmatpush1.bf16.msra.mxu0 %v5026
        %5203 = vmatprep.mubr.bf16.mxu0 %v4381
        %5204 = vmatmul.mubr.bf16.gmra.mrb[0].mxu0 %v4380
        %v5205 = vpop.f32.mrb[0].mxu0
        %v5206 = vadd.f32 %v4689, %v5205
        %v5207 = vpop.f32.mrb[0].mxu0
        %v5208 = vpop.f32.mrb[0].mxu0
        %v5209 = vadd.f32 %v4689, %v5208
        %v5210 = vpop.f32.mrb[0].mxu0
        %5211 = vmatprep.mubr.bf16.mxu0 %v4390
        %5212 = vmatmul.mubr.bf16.gmra.mrb[0].mxu0 %v4389
        %v5213 = vpop.f32.mrb[0].mxu0
        %v5214 = vadd.f32 %v4689, %v5213
        %v5215 = vpop.f32.mrb[0].mxu0
        %v5216 = vpop.f32.mrb[0].mxu0
        %v5217 = vadd.f32 %v4689, %v5216
        %v5218 = vpop.f32.mrb[0].mxu0
        %5219 = vmatprep.mubr.bf16.mxu0 %v4399
        %5220 = vmatmul.mubr.bf16.gmra.mrb[0].mxu0 %v4398
        %v5221 = vpop.f32.mrb[0].mxu0
        %v5222 = vadd.f32 %v4689, %v5221
        %v5223 = vpop.f32.mrb[0].mxu0
        %v5224 = vpop.f32.mrb[0].mxu0
        %v5225 = vadd.f32 %v4689, %v5224
        %v5226 = vpop.f32.mrb[0].mxu0
        %5227 = vmatprep.mubr.bf16.mxu0 %v4408
        %5228 = vmatmul.mubr.bf16.gmra.mrb[0].mxu0 %v4407
        %v5229 = vpop.f32.mrb[0].mxu0
        %v5230 = vadd.f32 %v4689, %v5229
        %v5231 = vpop.f32.mrb[0].mxu0
        %v5232 = vpop.f32.mrb[0].mxu0
        %v5233 = vadd.f32 %v4689, %v5232
        %v5234 = vpop.f32.mrb[0].mxu0
        %5235 = vmatprep.mubr.bf16.mxu0 %v4417
        %5236 = vmatmul.mubr.bf16.gmra.mrb[0].mxu0 %v4416
        %v5237 = vpop.f32.mrb[0].mxu0
        %v5238 = vadd.f32 %v4689, %v5237
        %v5239 = vpop.f32.mrb[0].mxu0
        %v5240 = vpop.f32.mrb[0].mxu0
        %v5241 = vadd.f32 %v4689, %v5240
        %v5242 = vpop.f32.mrb[0].mxu0
        %5243 = vmatprep.mubr.bf16.mxu0 %v4426
        %5244 = vmatmul.mubr.bf16.gmra.mrb[0].mxu0 %v4425
        %v5245 = vpop.f32.mrb[0].mxu0
        %v5246 = vadd.f32 %v4689, %v5245
        %v5247 = vpop.f32.mrb[0].mxu0
        %v5248 = vpop.f32.mrb[0].mxu0
        %v5249 = vadd.f32 %v4689, %v5248
        %v5250 = vpop.f32.mrb[0].mxu0
        %5251 = vmatprep.mubr.bf16.mxu0 %v4435
        %5252 = vmatmul.mubr.bf16.gmra.mrb[0].mxu0 %v4434
        %v5253 = vpop.f32.mrb[0].mxu0
        %v5254 = vadd.f32 %v4689, %v5253
        %v5255 = vpop.f32.mrb[0].mxu0
        %v5256 = vpop.f32.mrb[0].mxu0
        %v5257 = vadd.f32 %v4689, %v5256
        %v5258 = vpop.f32.mrb[0].mxu0
        %5259 = vmatprep.mubr.bf16.mxu0 %v4444
        %5260 = vmatmul.mubr.bf16.gmra.mrb[0].mxu0 %v4443
        %v5261 = vpop.f32.mrb[0].mxu0
        %v5262 = vadd.f32 %v4689, %v5261
        %v5263 = vpop.f32.mrb[0].mxu0
        %v5264 = vpop.f32.mrb[0].mxu0
        %v5265 = vadd.f32 %v4689, %v5264
        %v5266 = vpop.f32.mrb[0].mxu0
        %5267 = vmatprep.mubr.bf16.mxu0 %v4453
        %5268 = vmatmul.mubr.bf16.gmra.mrb[0].mxu0 %v4452
        %v5269 = vpop.f32.mrb[0].mxu0
        %v5270 = vadd.f32 %v4689, %v5269
        %v5271 = vpop.f32.mrb[0].mxu0
        %v5272 = vpop.f32.mrb[0].mxu0
        %v5273 = vadd.f32 %v4689, %v5272
        %v5274 = vpop.f32.mrb[0].mxu0
        %5275 = vmatprep.mubr.bf16.mxu0 %v4462
        %5276 = vmatmul.mubr.bf16.gmra.mrb[0].mxu0 %v4461
        %v5277 = vpop.f32.mrb[0].mxu0
        %v5278 = vadd.f32 %v4689, %v5277
        %v5279 = vpop.f32.mrb[0].mxu0
        %v5280 = vpop.f32.mrb[0].mxu0
        %v5281 = vadd.f32 %v4689, %v5280
        %v5282 = vpop.f32.mrb[0].mxu0
        %5283 = vmatprep.mubr.bf16.mxu0 %v4471
        %5284 = vmatmul.mubr.bf16.gmra.mrb[0].mxu0 %v4470
        %v5285 = vpop.f32.mrb[0].mxu0
        %v5286 = vadd.f32 %v4689, %v5285
        %v5287 = vpop.f32.mrb[0].mxu0
        %v5288 = vpop.f32.mrb[0].mxu0
        %v5289 = vadd.f32 %v4689, %v5288
        %v5290 = vpop.f32.mrb[0].mxu0
        %5291 = vmatprep.mubr.bf16.mxu0 %v4480
        %5292 = vmatmul.mubr.bf16.gmra.mrb[0].mxu0 %v4479
        %v5293 = vpop.f32.mrb[0].mxu0
        %v5294 = vadd.f32 %v4689, %v5293
        %v5295 = vpop.f32.mrb[0].mxu0
        %v5296 = vpop.f32.mrb[0].mxu0
        %v5297 = vadd.f32 %v4689, %v5296
        %v5298 = vpop.f32.mrb[0].mxu0
        %5299 = vmatprep.mubr.bf16.mxu0 %v4489
        %5300 = vmatmul.mubr.bf16.gmra.mrb[0].mxu0 %v4488
        %v5301 = vpop.f32.mrb[0].mxu0
        %v5302 = vadd.f32 %v4689, %v5301
        %v5303 = vpop.f32.mrb[0].mxu0
        %v5304 = vpop.f32.mrb[0].mxu0
        %v5305 = vadd.f32 %v4689, %v5304
        %v5306 = vpop.f32.mrb[0].mxu0
        %5307 = vmatprep.mubr.bf16.mxu0 %v4498
        %5308 = vmatmul.mubr.bf16.gmra.mrb[0].mxu0 %v4497
        %v5309 = vpop.f32.mrb[0].mxu0
        %v5310 = vadd.f32 %v4689, %v5309
        %v5311 = vpop.f32.mrb[0].mxu0
        %v5312 = vpop.f32.mrb[0].mxu0
        %v5313 = vadd.f32 %v4689, %v5312
        %v5314 = vpop.f32.mrb[0].mxu0
        %5315 = vmatprep.mubr.bf16.mxu0 %v4507
        %5316 = vmatmul.mubr.bf16.gmra.mrb[0].mxu0 %v4506
        %v5317 = vpop.f32.mrb[0].mxu0
        %v5318 = vadd.f32 %v4689, %v5317
        %v5319 = vpop.f32.mrb[0].mxu0
        %v5320 = vpop.f32.mrb[0].mxu0
        %v5321 = vadd.f32 %v4689, %v5320
        %v5322 = vpop.f32.mrb[0].mxu0
        %5323 = vmatprep.mubr.bf16.mxu0 %v4516
        %5324 = vmatmul.mubr.bf16.gmra.mrb[0].mxu0 %v4515
        %v5325 = vpop.f32.mrb[0].mxu0
        %v5326 = vadd.f32 %v4689, %v5325
        %v5327 = vpop.f32.mrb[0].mxu0
        %v5328 = vpop.f32.mrb[0].mxu0
        %v5329 = vadd.f32 %v4689, %v5328
        %v5330 = vpop.f32.mrb[0].mxu0
        %5331 = vdwg.mxu0
        %5332 = vmatprep.subr.bf16.mxu0 0
        %5333 = vmatpush1.bf16.msra.mxu0 %v5027
        %5334 = vmatprep.subr.bf16.mxu0 0
        %5335 = vmatpush1.bf16.msra.mxu0 %v5028
        %5336 = vmatprep.subr.bf16.mxu0 0
        %5337 = vmatpush1.bf16.msra.mxu0 %v5029
        %5338 = vmatprep.subr.bf16.mxu0 0
        %5339 = vmatpush1.bf16.msra.mxu0 %v5030
        %5340 = vmatprep.subr.bf16.mxu0 0
        %5341 = vmatpush1.bf16.msra.mxu0 %v5031
        %5342 = vmatprep.subr.bf16.mxu0 0
        %5343 = vmatpush1.bf16.msra.mxu0 %v5032
        %5344 = vmatprep.subr.bf16.mxu0 0
        %5345 = vmatpush1.bf16.msra.mxu0 %v5033
        %5346 = vmatprep.subr.bf16.mxu0 0
        %5347 = vmatpush1.bf16.msra.mxu0 %v5034
        %5348 = vmatprep.subr.bf16.mxu0 0
        %5349 = vmatpush1.bf16.msra.mxu0 %v5035
        %5350 = vmatprep.subr.bf16.mxu0 0
        %5351 = vmatpush1.bf16.msra.mxu0 %v5036
        %5352 = vmatprep.subr.bf16.mxu0 0
        %5353 = vmatpush1.bf16.msra.mxu0 %v5037
        %5354 = vmatprep.subr.bf16.mxu0 0
        %5355 = vmatpush1.bf16.msra.mxu0 %v5038
        %5356 = vmatprep.subr.bf16.mxu0 0
        %5357 = vmatpush1.bf16.msra.mxu0 %v5039
        %5358 = vmatprep.subr.bf16.mxu0 0
        %5359 = vmatpush1.bf16.msra.mxu0 %v5040
        %5360 = vmatprep.subr.bf16.mxu0 0
        %5361 = vmatpush1.bf16.msra.mxu0 %v5041
        %5362 = vmatprep.subr.bf16.mxu0 0
        %5363 = vmatpush1.bf16.msra.mxu0 %v5042
        %5364 = vmatprep.mubr.bf16.mxu0 %v4383
        %5365 = vmatmul.mubr.bf16.gmra.mrb[0].mxu0 %v4382
        %v5366 = vpop.f32.mrb[0].mxu0
        %v5367 = vadd.f32 %v5206, %v5366
        %v5368 = vpop.f32.mrb[0].mxu0
        %v5369 = vpop.f32.mrb[0].mxu0
        %v5370 = vadd.f32 %v5209, %v5369
        %v5371 = vpop.f32.mrb[0].mxu0
        %5372 = vmatprep.mubr.bf16.mxu0 %v4392
        %5373 = vmatmul.mubr.bf16.gmra.mrb[0].mxu0 %v4391
        %v5374 = vpop.f32.mrb[0].mxu0
        %v5375 = vadd.f32 %v5214, %v5374
        %v5376 = vpop.f32.mrb[0].mxu0
        %v5377 = vpop.f32.mrb[0].mxu0
        %v5378 = vadd.f32 %v5217, %v5377
        %v5379 = vpop.f32.mrb[0].mxu0
        %5380 = vmatprep.mubr.bf16.mxu0 %v4401
        %5381 = vmatmul.mubr.bf16.gmra.mrb[0].mxu0 %v4400
        %v5382 = vpop.f32.mrb[0].mxu0
        %v5383 = vadd.f32 %v5222, %v5382
        %v5384 = vpop.f32.mrb[0].mxu0
        %v5385 = vpop.f32.mrb[0].mxu0
        %v5386 = vadd.f32 %v5225, %v5385
        %v5387 = vpop.f32.mrb[0].mxu0
        %5388 = vmatprep.mubr.bf16.mxu0 %v4410
        %5389 = vmatmul.mubr.bf16.gmra.mrb[0].mxu0 %v4409
        %v5390 = vpop.f32.mrb[0].mxu0
        %v5391 = vadd.f32 %v5230, %v5390
        %v5392 = vpop.f32.mrb[0].mxu0
        %v5393 = vpop.f32.mrb[0].mxu0
        %v5394 = vadd.f32 %v5233, %v5393
        %v5395 = vpop.f32.mrb[0].mxu0
        %5396 = vmatprep.mubr.bf16.mxu0 %v4419
        %5397 = vmatmul.mubr.bf16.gmra.mrb[0].mxu0 %v4418
        %v5398 = vpop.f32.mrb[0].mxu0
        %v5399 = vadd.f32 %v5238, %v5398
        %v5400 = vpop.f32.mrb[0].mxu0
        %v5401 = vpop.f32.mrb[0].mxu0
        %v5402 = vadd.f32 %v5241, %v5401
        %v5403 = vpop.f32.mrb[0].mxu0
        %5404 = vmatprep.mubr.bf16.mxu0 %v4428
        %5405 = vmatmul.mubr.bf16.gmra.mrb[0].mxu0 %v4427
        %v5406 = vpop.f32.mrb[0].mxu0
        %v5407 = vadd.f32 %v5246, %v5406
        %v5408 = vpop.f32.mrb[0].mxu0
        %v5409 = vpop.f32.mrb[0].mxu0
        %v5410 = vadd.f32 %v5249, %v5409
        %v5411 = vpop.f32.mrb[0].mxu0
        %5412 = vmatprep.mubr.bf16.mxu0 %v4437
        %5413 = vmatmul.mubr.bf16.gmra.mrb[0].mxu0 %v4436
        %v5414 = vpop.f32.mrb[0].mxu0
        %v5415 = vadd.f32 %v5254, %v5414
        %v5416 = vpop.f32.mrb[0].mxu0
        %v5417 = vpop.f32.mrb[0].mxu0
        %v5418 = vadd.f32 %v5257, %v5417
        %v5419 = vpop.f32.mrb[0].mxu0
        %5420 = vmatprep.mubr.bf16.mxu0 %v4446
        %5421 = vmatmul.mubr.bf16.gmra.mrb[0].mxu0 %v4445
        %v5422 = vpop.f32.mrb[0].mxu0
        %v5423 = vadd.f32 %v5262, %v5422
        %v5424 = vpop.f32.mrb[0].mxu0
        %v5425 = vpop.f32.mrb[0].mxu0
        %v5426 = vadd.f32 %v5265, %v5425
        %v5427 = vpop.f32.mrb[0].mxu0
        %5428 = vmatprep.mubr.bf16.mxu0 %v4455
        %5429 = vmatmul.mubr.bf16.gmra.mrb[0].mxu0 %v4454
        %v5430 = vpop.f32.mrb[0].mxu0
        %v5431 = vadd.f32 %v5270, %v5430
        %v5432 = vpop.f32.mrb[0].mxu0
        %v5433 = vpop.f32.mrb[0].mxu0
        %v5434 = vadd.f32 %v5273, %v5433
        %v5435 = vpop.f32.mrb[0].mxu0
        %5436 = vmatprep.mubr.bf16.mxu0 %v4464
        %5437 = vmatmul.mubr.bf16.gmra.mrb[0].mxu0 %v4463
        %v5438 = vpop.f32.mrb[0].mxu0
        %v5439 = vadd.f32 %v5278, %v5438
        %v5440 = vpop.f32.mrb[0].mxu0
        %v5441 = vpop.f32.mrb[0].mxu0
        %v5442 = vadd.f32 %v5281, %v5441
        %v5443 = vpop.f32.mrb[0].mxu0
        %5444 = vmatprep.mubr.bf16.mxu0 %v4473
        %5445 = vmatmul.mubr.bf16.gmra.mrb[0].mxu0 %v4472
        %v5446 = vpop.f32.mrb[0].mxu0
        %v5447 = vadd.f32 %v5286, %v5446
        %v5448 = vpop.f32.mrb[0].mxu0
        %v5449 = vpop.f32.mrb[0].mxu0
        %v5450 = vadd.f32 %v5289, %v5449
        %v5451 = vpop.f32.mrb[0].mxu0
        %5452 = vmatprep.mubr.bf16.mxu0 %v4482
        %5453 = vmatmul.mubr.bf16.gmra.mrb[0].mxu0 %v4481
        %v5454 = vpop.f32.mrb[0].mxu0
        %v5455 = vadd.f32 %v5294, %v5454
        %v5456 = vpop.f32.mrb[0].mxu0
        %v5457 = vpop.f32.mrb[0].mxu0
        %v5458 = vadd.f32 %v5297, %v5457
        %v5459 = vpop.f32.mrb[0].mxu0
        %5460 = vmatprep.mubr.bf16.mxu0 %v4491
        %5461 = vmatmul.mubr.bf16.gmra.mrb[0].mxu0 %v4490
        %v5462 = vpop.f32.mrb[0].mxu0
        %v5463 = vadd.f32 %v5302, %v5462
        %v5464 = vpop.f32.mrb[0].mxu0
        %v5465 = vpop.f32.mrb[0].mxu0
        %v5466 = vadd.f32 %v5305, %v5465
        %v5467 = vpop.f32.mrb[0].mxu0
        %5468 = vmatprep.mubr.bf16.mxu0 %v4500
        %5469 = vmatmul.mubr.bf16.gmra.mrb[0].mxu0 %v4499
        %v5470 = vpop.f32.mrb[0].mxu0
        %v5471 = vadd.f32 %v5310, %v5470
        %v5472 = vpop.f32.mrb[0].mxu0
        %v5473 = vpop.f32.mrb[0].mxu0
        %v5474 = vadd.f32 %v5313, %v5473
        %v5475 = vpop.f32.mrb[0].mxu0
        %5476 = vmatprep.mubr.bf16.mxu0 %v4509
        %5477 = vmatmul.mubr.bf16.gmra.mrb[0].mxu0 %v4508
        %v5478 = vpop.f32.mrb[0].mxu0
        %v5479 = vadd.f32 %v5318, %v5478
        %v5480 = vpop.f32.mrb[0].mxu0
        %v5481 = vpop.f32.mrb[0].mxu0
        %v5482 = vadd.f32 %v5321, %v5481
        %v5483 = vpop.f32.mrb[0].mxu0
        %5484 = vmatprep.mubr.bf16.mxu0 %v4518
        %5485 = vmatmul.mubr.bf16.gmra.mrb[0].mxu0 %v4517
        %v5486 = vpop.f32.mrb[0].mxu0
        %v5487 = vadd.f32 %v5326, %v5486
        %v5488 = vpop.f32.mrb[0].mxu0
        %v5489 = vpop.f32.mrb[0].mxu0
        %v5490 = vadd.f32 %v5329, %v5489
        %v5491 = vpop.f32.mrb[0].mxu0
        %5492 = vdwg.mxu0
        %5493 = vmatprep.subr.bf16.mxu0 0
        %5494 = vmatpush1.bf16.msra.mxu0 %v5043
        %5495 = vmatprep.subr.bf16.mxu0 0
        %5496 = vmatpush1.bf16.msra.mxu0 %v5044
        %5497 = vmatprep.subr.bf16.mxu0 0
        %5498 = vmatpush1.bf16.msra.mxu0 %v5045
        %5499 = vmatprep.subr.bf16.mxu0 0
        %5500 = vmatpush1.bf16.msra.mxu0 %v5046
        %5501 = vmatprep.subr.bf16.mxu0 0
        %5502 = vmatpush1.bf16.msra.mxu0 %v5047
        %5503 = vmatprep.subr.bf16.mxu0 0
        %5504 = vmatpush1.bf16.msra.mxu0 %v5048
        %5505 = vmatprep.subr.bf16.mxu0 0
        %5506 = vmatpush1.bf16.msra.mxu0 %v5049
        %5507 = vmatprep.subr.bf16.mxu0 0
        %5508 = vmatpush1.bf16.msra.mxu0 %v5050
        %5509 = vmatprep.subr.bf16.mxu0 0
        %5510 = vmatpush1.bf16.msra.mxu0 %v5051
        %5511 = vmatprep.subr.bf16.mxu0 0
        %5512 = vmatpush1.bf16.msra.mxu0 %v5052
        %5513 = vmatprep.subr.bf16.mxu0 0
        %5514 = vmatpush1.bf16.msra.mxu0 %v5053
        %5515 = vmatprep.subr.bf16.mxu0 0
        %5516 = vmatpush1.bf16.msra.mxu0 %v5054
        %5517 = vmatprep.subr.bf16.mxu0 0
        %5518 = vmatpush1.bf16.msra.mxu0 %v5055
        %5519 = vmatprep.subr.bf16.mxu0 0
        %5520 = vmatpush1.bf16.msra.mxu0 %v5056
        %5521 = vmatprep.subr.bf16.mxu0 0
        %5522 = vmatpush1.bf16.msra.mxu0 %v5057
        %5523 = vmatprep.subr.bf16.mxu0 0
        %5524 = vmatpush1.bf16.msra.mxu0 %v5058
        %5525 = vmatprep.mubr.bf16.mxu0 %v4385
        %5526 = vmatmul.mubr.bf16.gmra.mrb[0].mxu0 %v4384
        %v5527 = vpop.f32.mrb[0].mxu0
        %v5528 = vadd.f32 %v5367, %v5527
        %v5529 = vpop.f32.mrb[0].mxu0
        %v5530 = vpop.f32.mrb[0].mxu0
        %v5531 = vadd.f32 %v5370, %v5530
        %v5532 = vpop.f32.mrb[0].mxu0
        %5533 = vmatprep.mubr.bf16.mxu0 %v4394
        %5534 = vmatmul.mubr.bf16.gmra.mrb[0].mxu0 %v4393
        %v5535 = vpop.f32.mrb[0].mxu0
        %v5536 = vadd.f32 %v5375, %v5535
        %v5537 = vpop.f32.mrb[0].mxu0
        %v5538 = vpop.f32.mrb[0].mxu0
        %v5539 = vadd.f32 %v5378, %v5538
        %v5540 = vpop.f32.mrb[0].mxu0
        %5541 = vmatprep.mubr.bf16.mxu0 %v4403
        %5542 = vmatmul.mubr.bf16.gmra.mrb[0].mxu0 %v4402
        %v5543 = vpop.f32.mrb[0].mxu0
        %v5544 = vadd.f32 %v5383, %v5543
        %v5545 = vpop.f32.mrb[0].mxu0
        %v5546 = vpop.f32.mrb[0].mxu0
        %v5547 = vadd.f32 %v5386, %v5546
        %v5548 = vpop.f32.mrb[0].mxu0
        %5549 = vmatprep.mubr.bf16.mxu0 %v4412
        %5550 = vmatmul.mubr.bf16.gmra.mrb[0].mxu0 %v4411
        %v5551 = vpop.f32.mrb[0].mxu0
        %v5552 = vadd.f32 %v5391, %v5551
        %v5553 = vpop.f32.mrb[0].mxu0
        %v5554 = vpop.f32.mrb[0].mxu0
        %v5555 = vadd.f32 %v5394, %v5554
        %v5556 = vpop.f32.mrb[0].mxu0
        %5557 = vmatprep.mubr.bf16.mxu0 %v4421
        %5558 = vmatmul.mubr.bf16.gmra.mrb[0].mxu0 %v4420
        %v5559 = vpop.f32.mrb[0].mxu0
        %v5560 = vadd.f32 %v5399, %v5559
        %v5561 = vpop.f32.mrb[0].mxu0
        %v5562 = vpop.f32.mrb[0].mxu0
        %v5563 = vadd.f32 %v5402, %v5562
        %v5564 = vpop.f32.mrb[0].mxu0
        %5565 = vmatprep.mubr.bf16.mxu0 %v4430
        %5566 = vmatmul.mubr.bf16.gmra.mrb[0].mxu0 %v4429
        %v5567 = vpop.f32.mrb[0].mxu0
        %v5568 = vadd.f32 %v5407, %v5567
        %v5569 = vpop.f32.mrb[0].mxu0
        %v5570 = vpop.f32.mrb[0].mxu0
        %v5571 = vadd.f32 %v5410, %v5570
        %v5572 = vpop.f32.mrb[0].mxu0
        %5573 = vmatprep.mubr.bf16.mxu0 %v4439
        %5574 = vmatmul.mubr.bf16.gmra.mrb[0].mxu0 %v4438
        %v5575 = vpop.f32.mrb[0].mxu0
        %v5576 = vadd.f32 %v5415, %v5575
        %v5577 = vpop.f32.mrb[0].mxu0
        %v5578 = vpop.f32.mrb[0].mxu0
        %v5579 = vadd.f32 %v5418, %v5578
        %v5580 = vpop.f32.mrb[0].mxu0
        %5581 = vmatprep.mubr.bf16.mxu0 %v4448
        %5582 = vmatmul.mubr.bf16.gmra.mrb[0].mxu0 %v4447
        %v5583 = vpop.f32.mrb[0].mxu0
        %v5584 = vadd.f32 %v5423, %v5583
        %v5585 = vpop.f32.mrb[0].mxu0
        %v5586 = vpop.f32.mrb[0].mxu0
        %v5587 = vadd.f32 %v5426, %v5586
        %v5588 = vpop.f32.mrb[0].mxu0
        %5589 = vmatprep.mubr.bf16.mxu0 %v4457
        %5590 = vmatmul.mubr.bf16.gmra.mrb[0].mxu0 %v4456
        %v5591 = vpop.f32.mrb[0].mxu0
        %v5592 = vadd.f32 %v5431, %v5591
        %v5593 = vpop.f32.mrb[0].mxu0
        %v5594 = vpop.f32.mrb[0].mxu0
        %v5595 = vadd.f32 %v5434, %v5594
        %v5596 = vpop.f32.mrb[0].mxu0
        %5597 = vmatprep.mubr.bf16.mxu0 %v4466
        %5598 = vmatmul.mubr.bf16.gmra.mrb[0].mxu0 %v4465
        %v5599 = vpop.f32.mrb[0].mxu0
        %v5600 = vadd.f32 %v5439, %v5599
        %v5601 = vpop.f32.mrb[0].mxu0
        %v5602 = vpop.f32.mrb[0].mxu0
        %v5603 = vadd.f32 %v5442, %v5602
        %v5604 = vpop.f32.mrb[0].mxu0
        %5605 = vmatprep.mubr.bf16.mxu0 %v4475
        %5606 = vmatmul.mubr.bf16.gmra.mrb[0].mxu0 %v4474
        %v5607 = vpop.f32.mrb[0].mxu0
        %v5608 = vadd.f32 %v5447, %v5607
        %v5609 = vpop.f32.mrb[0].mxu0
        %v5610 = vpop.f32.mrb[0].mxu0
        %v5611 = vadd.f32 %v5450, %v5610
        %v5612 = vpop.f32.mrb[0].mxu0
        %5613 = vmatprep.mubr.bf16.mxu0 %v4484
        %5614 = vmatmul.mubr.bf16.gmra.mrb[0].mxu0 %v4483
        %v5615 = vpop.f32.mrb[0].mxu0
        %v5616 = vadd.f32 %v5455, %v5615
        %v5617 = vpop.f32.mrb[0].mxu0
        %v5618 = vpop.f32.mrb[0].mxu0
        %v5619 = vadd.f32 %v5458, %v5618
        %v5620 = vpop.f32.mrb[0].mxu0
        %5621 = vmatprep.mubr.bf16.mxu0 %v4493
        %5622 = vmatmul.mubr.bf16.gmra.mrb[0].mxu0 %v4492
        %v5623 = vpop.f32.mrb[0].mxu0
        %v5624 = vadd.f32 %v5463, %v5623
        %v5625 = vpop.f32.mrb[0].mxu0
        %v5626 = vpop.f32.mrb[0].mxu0
        %v5627 = vadd.f32 %v5466, %v5626
        %v5628 = vpop.f32.mrb[0].mxu0
        %5629 = vmatprep.mubr.bf16.mxu0 %v4502
        %5630 = vmatmul.mubr.bf16.gmra.mrb[0].mxu0 %v4501
        %v5631 = vpop.f32.mrb[0].mxu0
        %v5632 = vadd.f32 %v5471, %v5631
        %v5633 = vpop.f32.mrb[0].mxu0
        %v5634 = vpop.f32.mrb[0].mxu0
        %v5635 = vadd.f32 %v5474, %v5634
        %v5636 = vpop.f32.mrb[0].mxu0
        %5637 = vmatprep.mubr.bf16.mxu0 %v4511
        %5638 = vmatmul.mubr.bf16.gmra.mrb[0].mxu0 %v4510
        %v5639 = vpop.f32.mrb[0].mxu0
        %v5640 = vadd.f32 %v5479, %v5639
        %v5641 = vpop.f32.mrb[0].mxu0
        %v5642 = vpop.f32.mrb[0].mxu0
        %v5643 = vadd.f32 %v5482, %v5642
        %v5644 = vpop.f32.mrb[0].mxu0
        %5645 = vmatprep.mubr.bf16.mxu0 %v4520
        %5646 = vmatmul.mubr.bf16.gmra.mrb[0].mxu0 %v4519
        %v5647 = vpop.f32.mrb[0].mxu0
        %v5648 = vadd.f32 %v5487, %v5647
        %v5649 = vpop.f32.mrb[0].mxu0
        %v5650 = vpop.f32.mrb[0].mxu0
        %v5651 = vadd.f32 %v5490, %v5650
        %v5652 = vpop.f32.mrb[0].mxu0
        %5653 = vdwg.mxu0
        %5654 = vmatprep.subr.bf16.mxu0 0
        %5655 = vmatpush1.bf16.msra.mxu0 %v5059
        %5656 = vmatprep.subr.bf16.mxu0 0
        %5657 = vmatpush1.bf16.msra.mxu0 %v5060
        %5658 = vmatprep.subr.bf16.mxu0 0
        %5659 = vmatpush1.bf16.msra.mxu0 %v5061
        %5660 = vmatprep.subr.bf16.mxu0 0
        %5661 = vmatpush1.bf16.msra.mxu0 %v5062
        %5662 = vmatprep.subr.bf16.mxu0 0
        %5663 = vmatpush1.bf16.msra.mxu0 %v5063
        %5664 = vmatprep.subr.bf16.mxu0 0
        %5665 = vmatpush1.bf16.msra.mxu0 %v5064
        %5666 = vmatprep.subr.bf16.mxu0 0
        %5667 = vmatpush1.bf16.msra.mxu0 %v5065
        %5668 = vmatprep.subr.bf16.mxu0 0
        %5669 = vmatpush1.bf16.msra.mxu0 %v5066
        %5670 = vmatprep.subr.bf16.mxu0 0
        %5671 = vmatpush1.bf16.msra.mxu0 %v5067
        %5672 = vmatprep.subr.bf16.mxu0 0
        %5673 = vmatpush1.bf16.msra.mxu0 %v5068
        %5674 = vmatprep.subr.bf16.mxu0 0
        %5675 = vmatpush1.bf16.msra.mxu0 %v5069
        %5676 = vmatprep.subr.bf16.mxu0 0
        %5677 = vmatpush1.bf16.msra.mxu0 %v5070
        %5678 = vmatprep.subr.bf16.mxu0 0
        %5679 = vmatpush1.bf16.msra.mxu0 %v5071
        %5680 = vmatprep.subr.bf16.mxu0 0
        %5681 = vmatpush1.bf16.msra.mxu0 %v5072
        %5682 = vmatprep.subr.bf16.mxu0 0
        %5683 = vmatpush1.bf16.msra.mxu0 %v5073
        %5684 = vmatprep.subr.bf16.mxu0 0
        %5685 = vmatpush1.bf16.msra.mxu0 %v5074
        %5686 = vmatprep.mubr.bf16.mxu0 %v4387
        %5687 = vmatmul.mubr.bf16.gmra.mrb[0].mxu0 %v4386
        %v5688 = vpop.f32.mrb[0].mxu0
        %v5689 = vadd.f32 %v5528, %v5688
        %v5690 = vpop.f32.mrb[0].mxu0
        %v5691 = vpop.f32.mrb[0].mxu0
        %v5692 = vadd.f32 %v5531, %v5691
        %v5693 = vpop.f32.mrb[0].mxu0
        %5694 = vmatprep.mubr.bf16.mxu0 %v4396
        %5695 = vmatmul.mubr.bf16.gmra.mrb[0].mxu0 %v4395
        %v5696 = vpop.f32.mrb[0].mxu0
        %v5697 = vadd.f32 %v5536, %v5696
        %v5698 = vpop.f32.mrb[0].mxu0
        %v5699 = vpop.f32.mrb[0].mxu0
        %v5700 = vadd.f32 %v5539, %v5699
        %v5701 = vpop.f32.mrb[0].mxu0
        %5702 = vmatprep.mubr.bf16.mxu0 %v4405
        %5703 = vmatmul.mubr.bf16.gmra.mrb[0].mxu0 %v4404
        %v5704 = vpop.f32.mrb[0].mxu0
        %v5705 = vadd.f32 %v5544, %v5704
        %v5706 = vpop.f32.mrb[0].mxu0
        %v5707 = vpop.f32.mrb[0].mxu0
        %v5708 = vadd.f32 %v5547, %v5707
        %v5709 = vpop.f32.mrb[0].mxu0
        %5710 = vmatprep.mubr.bf16.mxu0 %v4414
        %5711 = vmatmul.mubr.bf16.gmra.mrb[0].mxu0 %v4413
        %v5712 = vpop.f32.mrb[0].mxu0
        %v5713 = vadd.f32 %v5552, %v5712
        %v5714 = vpop.f32.mrb[0].mxu0
        %v5715 = vpop.f32.mrb[0].mxu0
        %v5716 = vadd.f32 %v5555, %v5715
        %v5717 = vpop.f32.mrb[0].mxu0
        %5718 = vmatprep.mubr.bf16.mxu0 %v4423
        %5719 = vmatmul.mubr.bf16.gmra.mrb[0].mxu0 %v4422
        %v5720 = vpop.f32.mrb[0].mxu0
        %v5721 = vadd.f32 %v5560, %v5720
        %v5722 = vpop.f32.mrb[0].mxu0
        %v5723 = vpop.f32.mrb[0].mxu0
        %v5724 = vadd.f32 %v5563, %v5723
        %v5725 = vpop.f32.mrb[0].mxu0
        %5726 = vmatprep.mubr.bf16.mxu0 %v4432
        %5727 = vmatmul.mubr.bf16.gmra.mrb[0].mxu0 %v4431
        %v5728 = vpop.f32.mrb[0].mxu0
        %v5729 = vadd.f32 %v5568, %v5728
        %v5730 = vpop.f32.mrb[0].mxu0
        %v5731 = vpop.f32.mrb[0].mxu0
        %v5732 = vadd.f32 %v5571, %v5731
        %v5733 = vpop.f32.mrb[0].mxu0
        %5734 = vmatprep.mubr.bf16.mxu0 %v4441
        %5735 = vmatmul.mubr.bf16.gmra.mrb[0].mxu0 %v4440
        %v5736 = vpop.f32.mrb[0].mxu0
        %v5737 = vadd.f32 %v5576, %v5736
        %v5738 = vpop.f32.mrb[0].mxu0
        %v5739 = vpop.f32.mrb[0].mxu0
        %v5740 = vadd.f32 %v5579, %v5739
        %v5741 = vpop.f32.mrb[0].mxu0
        %5742 = vmatprep.mubr.bf16.mxu0 %v4450
        %5743 = vmatmul.mubr.bf16.gmra.mrb[0].mxu0 %v4449
        %v5744 = vpop.f32.mrb[0].mxu0
        %v5745 = vadd.f32 %v5584, %v5744
        %v5746 = vpop.f32.mrb[0].mxu0
        %v5747 = vpop.f32.mrb[0].mxu0
        %v5748 = vadd.f32 %v5587, %v5747
        %v5749 = vpop.f32.mrb[0].mxu0
        %5750 = vmatprep.mubr.bf16.mxu0 %v4459
        %5751 = vmatmul.mubr.bf16.gmra.mrb[0].mxu0 %v4458
        %v5752 = vpop.f32.mrb[0].mxu0
        %v5753 = vadd.f32 %v5592, %v5752
        %v5754 = vpop.f32.mrb[0].mxu0
        %v5755 = vpop.f32.mrb[0].mxu0
        %v5756 = vadd.f32 %v5595, %v5755
        %v5757 = vpop.f32.mrb[0].mxu0
        %5758 = vmatprep.mubr.bf16.mxu0 %v4468
        %5759 = vmatmul.mubr.bf16.gmra.mrb[0].mxu0 %v4467
        %v5760 = vpop.f32.mrb[0].mxu0
        %v5761 = vadd.f32 %v5600, %v5760
        %v5762 = vpop.f32.mrb[0].mxu0
        %v5763 = vpop.f32.mrb[0].mxu0
        %v5764 = vadd.f32 %v5603, %v5763
        %v5765 = vpop.f32.mrb[0].mxu0
        %5766 = vmatprep.mubr.bf16.mxu0 %v4477
        %5767 = vmatmul.mubr.bf16.gmra.mrb[0].mxu0 %v4476
        %v5768 = vpop.f32.mrb[0].mxu0
        %v5769 = vadd.f32 %v5608, %v5768
        %v5770 = vpop.f32.mrb[0].mxu0
        %v5771 = vpop.f32.mrb[0].mxu0
        %v5772 = vadd.f32 %v5611, %v5771
        %v5773 = vpop.f32.mrb[0].mxu0
        %5774 = vmatprep.mubr.bf16.mxu0 %v4486
        %5775 = vmatmul.mubr.bf16.gmra.mrb[0].mxu0 %v4485
        %v5776 = vpop.f32.mrb[0].mxu0
        %v5777 = vadd.f32 %v5616, %v5776
        %v5778 = vpop.f32.mrb[0].mxu0
        %v5779 = vpop.f32.mrb[0].mxu0
        %v5780 = vadd.f32 %v5619, %v5779
        %v5781 = vpop.f32.mrb[0].mxu0
        %5782 = vmatprep.mubr.bf16.mxu0 %v4495
        %5783 = vmatmul.mubr.bf16.gmra.mrb[0].mxu0 %v4494
        %v5784 = vpop.f32.mrb[0].mxu0
        %v5785 = vadd.f32 %v5624, %v5784
        %v5786 = vpop.f32.mrb[0].mxu0
        %v5787 = vpop.f32.mrb[0].mxu0
        %v5788 = vadd.f32 %v5627, %v5787
        %v5789 = vpop.f32.mrb[0].mxu0
        %5790 = vmatprep.mubr.bf16.mxu0 %v4504
        %5791 = vmatmul.mubr.bf16.gmra.mrb[0].mxu0 %v4503
        %v5792 = vpop.f32.mrb[0].mxu0
        %v5793 = vadd.f32 %v5632, %v5792
        %v5794 = vpop.f32.mrb[0].mxu0
        %v5795 = vpop.f32.mrb[0].mxu0
        %v5796 = vadd.f32 %v5635, %v5795
        %v5797 = vpop.f32.mrb[0].mxu0
        %5798 = vmatprep.mubr.bf16.mxu0 %v4513
        %5799 = vmatmul.mubr.bf16.gmra.mrb[0].mxu0 %v4512
        %v5800 = vpop.f32.mrb[0].mxu0
        %v5801 = vadd.f32 %v5640, %v5800
        %v5802 = vpop.f32.mrb[0].mxu0
        %v5803 = vpop.f32.mrb[0].mxu0
        %v5804 = vadd.f32 %v5643, %v5803
        %v5805 = vpop.f32.mrb[0].mxu0
        %5806 = vmatprep.mubr.bf16.mxu0 %v4522
        %5807 = vmatmul.mubr.bf16.gmra.mrb[0].mxu0 %v4521
        %v5808 = vpop.f32.mrb[0].mxu0
        %v5809 = vadd.f32 %v5648, %v5808
        %v5810 = vpop.f32.mrb[0].mxu0
        %v5811 = vpop.f32.mrb[0].mxu0
        %v5812 = vadd.f32 %v5651, %v5811
        %v5813 = vpop.f32.mrb[0].mxu0
        %5814 = vdwg.mxu0
        %5815 = vmatprep.subr.bf16.mxu0 0
        %5816 = vmatpush1.bf16.msra.mxu0 %v5075
        %5817 = vmatprep.subr.bf16.mxu0 0
        %5818 = vmatpush1.bf16.msra.mxu0 %v5076
        %5819 = vmatprep.subr.bf16.mxu0 0
        %5820 = vmatpush1.bf16.msra.mxu0 %v5077
        %5821 = vmatprep.subr.bf16.mxu0 0
        %5822 = vmatpush1.bf16.msra.mxu0 %v5078
        %5823 = vmatprep.subr.bf16.mxu0 0
        %5824 = vmatpush1.bf16.msra.mxu0 %v5079
        %5825 = vmatprep.subr.bf16.mxu0 0
        %5826 = vmatpush1.bf16.msra.mxu0 %v5080
        %5827 = vmatprep.subr.bf16.mxu0 0
        %5828 = vmatpush1.bf16.msra.mxu0 %v5081
        %5829 = vmatprep.subr.bf16.mxu0 0
        %5830 = vmatpush1.bf16.msra.mxu0 %v5082
        %5831 = vmatprep.subr.bf16.mxu0 0
        %5832 = vmatpush1.bf16.msra.mxu0 %v5083
        %5833 = vmatprep.subr.bf16.mxu0 0
        %5834 = vmatpush1.bf16.msra.mxu0 %v5084
        %5835 = vmatprep.subr.bf16.mxu0 0
        %5836 = vmatpush1.bf16.msra.mxu0 %v5085
        %5837 = vmatprep.subr.bf16.mxu0 0
        %5838 = vmatpush1.bf16.msra.mxu0 %v5086
        %5839 = vmatprep.subr.bf16.mxu0 0
        %5840 = vmatpush1.bf16.msra.mxu0 %v5087
        %5841 = vmatprep.subr.bf16.mxu0 0
        %5842 = vmatpush1.bf16.msra.mxu0 %v5088
        %5843 = vmatprep.subr.bf16.mxu0 0
        %5844 = vmatpush1.bf16.msra.mxu0 %v5089
        %5845 = vmatprep.subr.bf16.mxu0 0
        %5846 = vmatpush1.bf16.msra.mxu0 %v5090
        %5847 = vmatprep.mubr.bf16.mxu0 %v957
        %5848 = vmatmul.mubr.bf16.gmra.mrb[0].mxu0 %v4388
        %v5849 = vpop.f32.mrb[0].mxu0
        %v5850 = vadd.f32 %v5689, %v5849
        %v5851 = vpop.f32.mrb[0].mxu0
        %v5852 = vpop.f32.mrb[0].mxu0
        %v5853 = vadd.f32 %v5692, %v5852
        %v5854 = vpop.f32.mrb[0].mxu0
        %5855 = vmatprep.mubr.bf16.mxu0 %v966
        %5856 = vmatmul.mubr.bf16.gmra.mrb[0].mxu0 %v4397
        %v5857 = vpop.f32.mrb[0].mxu0
        %v5858 = vadd.f32 %v5697, %v5857
        %v5859 = vpop.f32.mrb[0].mxu0
        %v5860 = vpop.f32.mrb[0].mxu0
        %v5861 = vadd.f32 %v5700, %v5860
        %v5862 = vpop.f32.mrb[0].mxu0
        %5863 = vmatprep.mubr.bf16.mxu0 %v975
        %5864 = vmatmul.mubr.bf16.gmra.mrb[0].mxu0 %v4406
        %v5865 = vpop.f32.mrb[0].mxu0
        %v5866 = vadd.f32 %v5705, %v5865
        %v5867 = vpop.f32.mrb[0].mxu0
        %v5868 = vpop.f32.mrb[0].mxu0
        %v5869 = vadd.f32 %v5708, %v5868
        %v5870 = vpop.f32.mrb[0].mxu0
        %5871 = vmatprep.mubr.bf16.mxu0 %v984
        %5872 = vmatmul.mubr.bf16.gmra.mrb[0].mxu0 %v4415
        %v5873 = vpop.f32.mrb[0].mxu0
        %v5874 = vadd.f32 %v5713, %v5873
        %v5875 = vpop.f32.mrb[0].mxu0
        %v5876 = vpop.f32.mrb[0].mxu0
        %v5877 = vadd.f32 %v5716, %v5876
        %v5878 = vpop.f32.mrb[0].mxu0
        %5879 = vmatprep.mubr.bf16.mxu0 %v993
        %5880 = vmatmul.mubr.bf16.gmra.mrb[0].mxu0 %v4424
        %v5881 = vpop.f32.mrb[0].mxu0
        %v5882 = vadd.f32 %v5721, %v5881
        %v5883 = vpop.f32.mrb[0].mxu0
        %v5884 = vpop.f32.mrb[0].mxu0
        %v5885 = vadd.f32 %v5724, %v5884
        %v5886 = vpop.f32.mrb[0].mxu0
        %5887 = vmatprep.mubr.bf16.mxu0 %v1002
        %5888 = vmatmul.mubr.bf16.gmra.mrb[0].mxu0 %v4433
        %v5889 = vpop.f32.mrb[0].mxu0
        %v5890 = vadd.f32 %v5729, %v5889
        %v5891 = vpop.f32.mrb[0].mxu0
        %v5892 = vpop.f32.mrb[0].mxu0
        %v5893 = vadd.f32 %v5732, %v5892
        %v5894 = vpop.f32.mrb[0].mxu0
        %5895 = vmatprep.mubr.bf16.mxu0 %v1011
        %5896 = vmatmul.mubr.bf16.gmra.mrb[0].mxu0 %v4442
        %v5897 = vpop.f32.mrb[0].mxu0
        %v5898 = vadd.f32 %v5737, %v5897
        %v5899 = vpop.f32.mrb[0].mxu0
        %v5900 = vpop.f32.mrb[0].mxu0
        %v5901 = vadd.f32 %v5740, %v5900
        %v5902 = vpop.f32.mrb[0].mxu0
        %5903 = vmatprep.mubr.bf16.mxu0 %v1020
        %5904 = vmatmul.mubr.bf16.gmra.mrb[0].mxu0 %v4451
        %v5905 = vpop.f32.mrb[0].mxu0
        %v5906 = vadd.f32 %v5745, %v5905
        %v5907 = vpop.f32.mrb[0].mxu0
        %v5908 = vpop.f32.mrb[0].mxu0
        %v5909 = vadd.f32 %v5748, %v5908
        %v5910 = vpop.f32.mrb[0].mxu0
        %5911 = vmatprep.mubr.bf16.mxu0 %v1029
        %5912 = vmatmul.mubr.bf16.gmra.mrb[0].mxu0 %v4460
        %v5913 = vpop.f32.mrb[0].mxu0
        %v5914 = vadd.f32 %v5753, %v5913
        %v5915 = vpop.f32.mrb[0].mxu0
        %v5916 = vpop.f32.mrb[0].mxu0
        %v5917 = vadd.f32 %v5756, %v5916
        %v5918 = vpop.f32.mrb[0].mxu0
        %5919 = vmatprep.mubr.bf16.mxu0 %v1038
        %5920 = vmatmul.mubr.bf16.gmra.mrb[0].mxu0 %v4469
        %v5921 = vpop.f32.mrb[0].mxu0
        %v5922 = vadd.f32 %v5761, %v5921
        %v5923 = vpop.f32.mrb[0].mxu0
        %v5924 = vpop.f32.mrb[0].mxu0
        %v5925 = vadd.f32 %v5764, %v5924
        %v5926 = vpop.f32.mrb[0].mxu0
        %5927 = vmatprep.mubr.bf16.mxu0 %v1047
        %5928 = vmatmul.mubr.bf16.gmra.mrb[0].mxu0 %v4478
        %v5929 = vpop.f32.mrb[0].mxu0
        %v5930 = vadd.f32 %v5769, %v5929
        %v5931 = vpop.f32.mrb[0].mxu0
        %v5932 = vpop.f32.mrb[0].mxu0
        %v5933 = vadd.f32 %v5772, %v5932
        %v5934 = vpop.f32.mrb[0].mxu0
        %5935 = vmatprep.mubr.bf16.mxu0 %v1056
        %5936 = vmatmul.mubr.bf16.gmra.mrb[0].mxu0 %v4487
        %v5937 = vpop.f32.mrb[0].mxu0
        %v5938 = vadd.f32 %v5777, %v5937
        %v5939 = vpop.f32.mrb[0].mxu0
        %v5940 = vpop.f32.mrb[0].mxu0
        %v5941 = vadd.f32 %v5780, %v5940
        %v5942 = vpop.f32.mrb[0].mxu0
        %5943 = vmatprep.mubr.bf16.mxu0 %v1065
        %5944 = vmatmul.mubr.bf16.gmra.mrb[0].mxu0 %v4496
        %v5945 = vpop.f32.mrb[0].mxu0
        %v5946 = vadd.f32 %v5785, %v5945
        %v5947 = vpop.f32.mrb[0].mxu0
        %v5948 = vpop.f32.mrb[0].mxu0
        %v5949 = vadd.f32 %v5788, %v5948
        %v5950 = vpop.f32.mrb[0].mxu0
        %5951 = vmatprep.mubr.bf16.mxu0 %v1074
        %5952 = vmatmul.mubr.bf16.gmra.mrb[0].mxu0 %v4505
        %v5953 = vpop.f32.mrb[0].mxu0
        %v5954 = vadd.f32 %v5793, %v5953
        %v5955 = vpop.f32.mrb[0].mxu0
        %v5956 = vpop.f32.mrb[0].mxu0
        %v5957 = vadd.f32 %v5796, %v5956
        %v5958 = vpop.f32.mrb[0].mxu0
        %5959 = vmatprep.mubr.bf16.mxu0 %v1083
        %5960 = vmatmul.mubr.bf16.gmra.mrb[0].mxu0 %v4514
        %v5961 = vpop.f32.mrb[0].mxu0
        %v5962 = vadd.f32 %v5801, %v5961
        %v5963 = vpop.f32.mrb[0].mxu0
        %v5964 = vpop.f32.mrb[0].mxu0
        %v5965 = vadd.f32 %v5804, %v5964
        %v5966 = vpop.f32.mrb[0].mxu0
        %5967 = vmatprep.mubr.bf16.mxu0 %v1092
        %5968 = vmatmul.mubr.bf16.gmra.mrb[0].mxu0 %v4523
        %v5969 = vpop.f32.mrb[0].mxu0
        %v5970 = vadd.f32 %v5809, %v5969
        %v5971 = vpop.f32.mrb[0].mxu0
        %v5972 = vpop.f32.mrb[0].mxu0
        %v5973 = vadd.f32 %v5812, %v5972
        %v5974 = vpop.f32.mrb[0].mxu0
        %5975 = vdwg.mxu0
        %v5976 = vmax.f32 %v5850, 0.0
        %v5977 = vmax.f32 %v5853, 0.0
        %v5978 = vmax.f32 %v5858, 0.0
        %v5979 = vmax.f32 %v5861, 0.0
        %v5980 = vmax.f32 %v5866, 0.0
        %v5981 = vmax.f32 %v5869, 0.0
        %v5982 = vmax.f32 %v5874, 0.0
        %v5983 = vmax.f32 %v5877, 0.0
        %v5984 = vmax.f32 %v5882, 0.0
        %v5985 = vmax.f32 %v5885, 0.0
        %v5986 = vmax.f32 %v5890, 0.0
        %v5987 = vmax.f32 %v5893, 0.0
        %v5988 = vmax.f32 %v5898, 0.0
        %v5989 = vmax.f32 %v5901, 0.0
        %v5990 = vmax.f32 %v5906, 0.0
        %v5991 = vmax.f32 %v5909, 0.0
        %v5992 = vmax.f32 %v5914, 0.0
        %v5993 = vmax.f32 %v5917, 0.0
        %v5994 = vmax.f32 %v5922, 0.0
        %v5995 = vmax.f32 %v5925, 0.0
        %v5996 = vmax.f32 %v5930, 0.0
        %v5997 = vmax.f32 %v5933, 0.0
        %v5998 = vmax.f32 %v5938, 0.0
        %v5999 = vmax.f32 %v5941, 0.0
        %v6000 = vmax.f32 %v5946, 0.0
        %v6001 = vmax.f32 %v5949, 0.0
        %v6002 = vmax.f32 %v5954, 0.0
        %v6003 = vmax.f32 %v5957, 0.0
        %v6004 = vmax.f32 %v5962, 0.0
        %v6005 = vmax.f32 %v5965, 0.0
        %v6006 = vmax.f32 %v5970, 0.0
        %v6007 = vmax.f32 %v5973, 0.0
        %v6008 = vrot.slane %v5976, 7
        %v6009 = vrot.slane %v5977, 7
        %v6010 = vrot.slane %v5978, 7
        %v6011 = vrot.slane %v5979, 7
        %v6012 = vrot.slane %v5980, 7
        %v6013 = vrot.slane %v5981, 7
        %v6014 = vrot.slane %v5982, 7
        %v6015 = vrot.slane %v5983, 7
        %v6016 = vrot.slane %v5984, 7
        %v6017 = vrot.slane %v5985, 7
        %v6018 = vrot.slane %v5986, 7
        %v6019 = vrot.slane %v5987, 7
        %v6020 = vrot.slane %v5988, 7
        %v6021 = vrot.slane %v5989, 7
        %v6022 = vrot.slane %v5990, 7
        %v6023 = vrot.slane %v5991, 7
        %v6024 = vrot.slane %v5992, 7
        %v6025 = vrot.slane %v5993, 7
        %v6026 = vrot.slane %v5994, 7
        %v6027 = vrot.slane %v5995, 7
        %v6028 = vrot.slane %v5996, 7
        %v6029 = vrot.slane %v5997, 7
        %v6030 = vrot.slane %v5998, 7
        %v6031 = vrot.slane %v5999, 7
        %v6032 = vrot.slane %v6000, 7
        %v6033 = vrot.slane %v6001, 7
        %v6034 = vrot.slane %v6002, 7
        %v6035 = vrot.slane %v6003, 7
        %v6036 = vrot.slane %v6004, 7
        %v6037 = vrot.slane %v6005, 7
        %v6038 = vrot.slane %v6006, 7
        %v6039 = vrot.slane %v6007, 7
        %v6040 = vsel %vm503, %v6038, %v6039
        %v6041 = vsel %vm503, %v6037, %v6038
        %v6042 = vsel %vm503, %v6036, %v6037
        %v6043 = vsel %vm503, %v6035, %v6036
        %v6044 = vsel %vm503, %v6034, %v6035
        %v6045 = vsel %vm503, %v6033, %v6034
        %v6046 = vsel %vm503, %v6032, %v6033
        %v6047 = vsel %vm503, %v6031, %v6032
        %v6048 = vsel %vm503, %v6030, %v6031
        %v6049 = vsel %vm503, %v6029, %v6030
        %v6050 = vsel %vm503, %v6028, %v6029
        %v6051 = vsel %vm503, %v6027, %v6028
        %v6052 = vsel %vm503, %v6026, %v6027
        %v6053 = vsel %vm503, %v6025, %v6026
        %v6054 = vsel %vm503, %v6024, %v6025
        %v6055 = vsel %vm503, %v6023, %v6024
        %v6056 = vsel %vm503, %v6022, %v6023
        %v6057 = vsel %vm503, %v6021, %v6022
        %v6058 = vsel %vm503, %v6020, %v6021
        %v6059 = vsel %vm503, %v6019, %v6020
        %v6060 = vsel %vm503, %v6018, %v6019
        %v6061 = vsel %vm503, %v6017, %v6018
        %v6062 = vsel %vm503, %v6016, %v6017
        %v6063 = vsel %vm503, %v6015, %v6016
        %v6064 = vsel %vm503, %v6014, %v6015
        %v6065 = vsel %vm503, %v6013, %v6014
        %v6066 = vsel %vm503, %v6012, %v6013
        %v6067 = vsel %vm503, %v6011, %v6012
        %v6068 = vsel %vm503, %v6010, %v6011
        %v6069 = vsel %vm503, %v6009, %v6010
        %v6070 = vsel %vm503, %v6008, %v6009
        %v6071 = vsel %vm503, %v6039, %v6008
        %v6072 = vsel %vm439, %v6071, 0.0
        %v6073 = vsel %vm440, %v6070, 0.0
        %v6074 = vsel %vm441, %v6069, 0.0
        %v6075 = vsel %vm442, %v6068, 0.0
        %v6076 = vsel %vm443, %v6067, 0.0
        %v6077 = vsel %vm444, %v6066, 0.0
        %v6078 = vsel %vm445, %v6065, 0.0
        %v6079 = vsel %vm446, %v6064, 0.0
        %v6080 = vsel %vm447, %v6063, 0.0
        %v6081 = vsel %vm448, %v6062, 0.0
        %v6082 = vsel %vm449, %v6061, 0.0
        %v6083 = vsel %vm450, %v6060, 0.0
        %v6084 = vsel %vm451, %v6059, 0.0
        %v6085 = vsel %vm452, %v6058, 0.0
        %v6086 = vsel %vm453, %v6057, 0.0
        %v6087 = vsel %vm454, %v6056, 0.0
        %v6088 = vsel %vm455, %v6055, 0.0
        %v6089 = vsel %vm456, %v6054, 0.0
        %v6090 = vsel %vm457, %v6053, 0.0
        %v6091 = vsel %vm458, %v6052, 0.0
        %v6092 = vsel %vm459, %v6051, 0.0
        %v6093 = vsel %vm460, %v6050, 0.0
        %v6094 = vsel %vm461, %v6049, 0.0
        %v6095 = vsel %vm462, %v6048, 0.0
        %v6096 = vsel %vm463, %v6047, 0.0
        %v6097 = vsel %vm464, %v6046, 0.0
        %v6098 = vsel %vm465, %v6045, 0.0
        %v6099 = vsel %vm466, %v6044, 0.0
        %v6100 = vsel %vm467, %v6043, 0.0
        %v6101 = vsel %vm468, %v6042, 0.0
        %v6102 = vsel %vm469, %v6041, 0.0
        %v6103 = vsel %vm470, %v6040, 0.0
        %v6104 = vrot.slane %v5976, 1
        %v6105 = vrot.slane %v5977, 1
        %v6106 = vrot.slane %v5978, 1
        %v6107 = vrot.slane %v5979, 1
        %v6108 = vrot.slane %v5980, 1
        %v6109 = vrot.slane %v5981, 1
        %v6110 = vrot.slane %v5982, 1
        %v6111 = vrot.slane %v5983, 1
        %v6112 = vrot.slane %v5984, 1
        %v6113 = vrot.slane %v5985, 1
        %v6114 = vrot.slane %v5986, 1
        %v6115 = vrot.slane %v5987, 1
        %v6116 = vrot.slane %v5988, 1
        %v6117 = vrot.slane %v5989, 1
        %v6118 = vrot.slane %v5990, 1
        %v6119 = vrot.slane %v5991, 1
        %v6120 = vrot.slane %v5992, 1
        %v6121 = vrot.slane %v5993, 1
        %v6122 = vrot.slane %v5994, 1
        %v6123 = vrot.slane %v5995, 1
        %v6124 = vrot.slane %v5996, 1
        %v6125 = vrot.slane %v5997, 1
        %v6126 = vrot.slane %v5998, 1
        %v6127 = vrot.slane %v5999, 1
        %v6128 = vrot.slane %v6000, 1
        %v6129 = vrot.slane %v6001, 1
        %v6130 = vrot.slane %v6002, 1
        %v6131 = vrot.slane %v6003, 1
        %v6132 = vrot.slane %v6004, 1
        %v6133 = vrot.slane %v6005, 1
        %v6134 = vrot.slane %v6006, 1
        %v6135 = vrot.slane %v6007, 1
        %v6136 = vsel %vm632, %v6134, %v6135
        %v6137 = vsel %vm632, %v6133, %v6134
        %v6138 = vsel %vm632, %v6132, %v6133
        %v6139 = vsel %vm632, %v6131, %v6132
        %v6140 = vsel %vm632, %v6130, %v6131
        %v6141 = vsel %vm632, %v6129, %v6130
        %v6142 = vsel %vm632, %v6128, %v6129
        %v6143 = vsel %vm632, %v6127, %v6128
        %v6144 = vsel %vm632, %v6126, %v6127
        %v6145 = vsel %vm632, %v6125, %v6126
        %v6146 = vsel %vm632, %v6124, %v6125
        %v6147 = vsel %vm632, %v6123, %v6124
        %v6148 = vsel %vm632, %v6122, %v6123
        %v6149 = vsel %vm632, %v6121, %v6122
        %v6150 = vsel %vm632, %v6120, %v6121
        %v6151 = vsel %vm632, %v6119, %v6120
        %v6152 = vsel %vm632, %v6118, %v6119
        %v6153 = vsel %vm632, %v6117, %v6118
        %v6154 = vsel %vm632, %v6116, %v6117
        %v6155 = vsel %vm632, %v6115, %v6116
        %v6156 = vsel %vm632, %v6114, %v6115
        %v6157 = vsel %vm632, %v6113, %v6114
        %v6158 = vsel %vm632, %v6112, %v6113
        %v6159 = vsel %vm632, %v6111, %v6112
        %v6160 = vsel %vm632, %v6110, %v6111
        %v6161 = vsel %vm632, %v6109, %v6110
        %v6162 = vsel %vm632, %v6108, %v6109
        %v6163 = vsel %vm632, %v6107, %v6108
        %v6164 = vsel %vm632, %v6106, %v6107
        %v6165 = vsel %vm632, %v6105, %v6106
        %v6166 = vsel %vm632, %v6104, %v6105
        %v6167 = vsel %vm632, %v6135, %v6104
        %v6168 = vsel %vm568, %v6166, 0.0
        %v6169 = vsel %vm569, %v6165, 0.0
        %v6170 = vsel %vm570, %v6164, 0.0
        %v6171 = vsel %vm571, %v6163, 0.0
        %v6172 = vsel %vm572, %v6162, 0.0
        %v6173 = vsel %vm573, %v6161, 0.0
        %v6174 = vsel %vm574, %v6160, 0.0
        %v6175 = vsel %vm575, %v6159, 0.0
        %v6176 = vsel %vm576, %v6158, 0.0
        %v6177 = vsel %vm577, %v6157, 0.0
        %v6178 = vsel %vm578, %v6156, 0.0
        %v6179 = vsel %vm579, %v6155, 0.0
        %v6180 = vsel %vm580, %v6154, 0.0
        %v6181 = vsel %vm581, %v6153, 0.0
        %v6182 = vsel %vm582, %v6152, 0.0
        %v6183 = vsel %vm583, %v6151, 0.0
        %v6184 = vsel %vm584, %v6150, 0.0
        %v6185 = vsel %vm585, %v6149, 0.0
        %v6186 = vsel %vm586, %v6148, 0.0
        %v6187 = vsel %vm587, %v6147, 0.0
        %v6188 = vsel %vm588, %v6146, 0.0
        %v6189 = vsel %vm589, %v6145, 0.0
        %v6190 = vsel %vm590, %v6144, 0.0
        %v6191 = vsel %vm591, %v6143, 0.0
        %v6192 = vsel %vm592, %v6142, 0.0
        %v6193 = vsel %vm593, %v6141, 0.0
        %v6194 = vsel %vm594, %v6140, 0.0
        %v6195 = vsel %vm595, %v6139, 0.0
        %v6196 = vsel %vm596, %v6138, 0.0
        %v6197 = vsel %vm597, %v6137, 0.0
        %v6198 = vsel %vm598, %v6136, 0.0
        %v6199 = vsel %vm599, %v6167, 0.0
        %v6200 = vsel %vm697, %v6102, 0.0
        %v6201 = vsel %vm698, %v6103, 0.0
        %v6202 = vsel %vm699, %v6072, 0.0
        %v6203 = vsel %vm700, %v6073, 0.0
        %v6204 = vsel %vm701, %v6074, 0.0
        %v6205 = vsel %vm702, %v6075, 0.0
        %v6206 = vsel %vm703, %v6076, 0.0
        %v6207 = vsel %vm704, %v6077, 0.0
        %v6208 = vsel %vm705, %v6078, 0.0
        %v6209 = vsel %vm706, %v6079, 0.0
        %v6210 = vsel %vm707, %v6080, 0.0
        %v6211 = vsel %vm708, %v6081, 0.0
        %v6212 = vsel %vm709, %v6082, 0.0
        %v6213 = vsel %vm710, %v6083, 0.0
        %v6214 = vsel %vm711, %v6084, 0.0
        %v6215 = vsel %vm712, %v6085, 0.0
        %v6216 = vsel %vm713, %v6086, 0.0
        %v6217 = vsel %vm714, %v6087, 0.0
        %v6218 = vsel %vm715, %v6088, 0.0
        %v6219 = vsel %vm716, %v6089, 0.0
        %v6220 = vsel %vm717, %v6090, 0.0
        %v6221 = vsel %vm718, %v6091, 0.0
        %v6222 = vsel %vm719, %v6092, 0.0
        %v6223 = vsel %vm720, %v6093, 0.0
        %v6224 = vsel %vm721, %v6094, 0.0
        %v6225 = vsel %vm722, %v6095, 0.0
        %v6226 = vsel %vm723, %v6096, 0.0
        %v6227 = vsel %vm724, %v6097, 0.0
        %v6228 = vsel %vm725, %v6098, 0.0
        %v6229 = vsel %vm726, %v6099, 0.0
        %v6230 = vsel %vm727, %v6100, 0.0
        %v6231 = vsel %vm728, %v6101, 0.0
        %v6232 = vsel %vm697, %v6006, 0.0
        %v6233 = vsel %vm698, %v6007, 0.0
        %v6234 = vsel %vm699, %v5976, 0.0
        %v6235 = vsel %vm700, %v5977, 0.0
        %v6236 = vsel %vm701, %v5978, 0.0
        %v6237 = vsel %vm702, %v5979, 0.0
        %v6238 = vsel %vm703, %v5980, 0.0
        %v6239 = vsel %vm704, %v5981, 0.0
        %v6240 = vsel %vm705, %v5982, 0.0
        %v6241 = vsel %vm706, %v5983, 0.0
        %v6242 = vsel %vm707, %v5984, 0.0
        %v6243 = vsel %vm708, %v5985, 0.0
        %v6244 = vsel %vm709, %v5986, 0.0
        %v6245 = vsel %vm710, %v5987, 0.0
        %v6246 = vsel %vm711, %v5988, 0.0
        %v6247 = vsel %vm712, %v5989, 0.0
        %v6248 = vsel %vm713, %v5990, 0.0
        %v6249 = vsel %vm714, %v5991, 0.0
        %v6250 = vsel %vm715, %v5992, 0.0
        %v6251 = vsel %vm716, %v5993, 0.0
        %v6252 = vsel %vm717, %v5994, 0.0
        %v6253 = vsel %vm718, %v5995, 0.0
        %v6254 = vsel %vm719, %v5996, 0.0
        %v6255 = vsel %vm720, %v5997, 0.0
        %v6256 = vsel %vm721, %v5998, 0.0
        %v6257 = vsel %vm722, %v5999, 0.0
        %v6258 = vsel %vm723, %v6000, 0.0
        %v6259 = vsel %vm724, %v6001, 0.0
        %v6260 = vsel %vm725, %v6002, 0.0
        %v6261 = vsel %vm726, %v6003, 0.0
        %v6262 = vsel %vm727, %v6004, 0.0
        %v6263 = vsel %vm728, %v6005, 0.0
        %v6264 = vsel %vm697, %v6198, 0.0
        %v6265 = vsel %vm698, %v6199, 0.0
        %v6266 = vsel %vm699, %v6168, 0.0
        %v6267 = vsel %vm700, %v6169, 0.0
        %v6268 = vsel %vm701, %v6170, 0.0
        %v6269 = vsel %vm702, %v6171, 0.0
        %v6270 = vsel %vm703, %v6172, 0.0
        %v6271 = vsel %vm704, %v6173, 0.0
        %v6272 = vsel %vm705, %v6174, 0.0
        %v6273 = vsel %vm706, %v6175, 0.0
        %v6274 = vsel %vm707, %v6176, 0.0
        %v6275 = vsel %vm708, %v6177, 0.0
        %v6276 = vsel %vm709, %v6178, 0.0
        %v6277 = vsel %vm710, %v6179, 0.0
        %v6278 = vsel %vm711, %v6180, 0.0
        %v6279 = vsel %vm712, %v6181, 0.0
        %v6280 = vsel %vm713, %v6182, 0.0
        %v6281 = vsel %vm714, %v6183, 0.0
        %v6282 = vsel %vm715, %v6184, 0.0
        %v6283 = vsel %vm716, %v6185, 0.0
        %v6284 = vsel %vm717, %v6186, 0.0
        %v6285 = vsel %vm718, %v6187, 0.0
        %v6286 = vsel %vm719, %v6188, 0.0
        %v6287 = vsel %vm720, %v6189, 0.0
        %v6288 = vsel %vm721, %v6190, 0.0
        %v6289 = vsel %vm722, %v6191, 0.0
        %v6290 = vsel %vm723, %v6192, 0.0
        %v6291 = vsel %vm724, %v6193, 0.0
        %v6292 = vsel %vm725, %v6194, 0.0
        %v6293 = vsel %vm726, %v6195, 0.0
        %v6294 = vsel %vm727, %v6196, 0.0
        %v6295 = vsel %vm728, %v6197, 0.0
        %v6296 = vsel %vm729, %v6074, 0.0
        %v6297 = vsel %vm730, %v6075, 0.0
        %v6298 = vsel %vm731, %v6076, 0.0
        %v6299 = vsel %vm732, %v6077, 0.0
        %v6300 = vsel %vm733, %v6078, 0.0
        %v6301 = vsel %vm734, %v6079, 0.0
        %v6302 = vsel %vm735, %v6080, 0.0
        %v6303 = vsel %vm736, %v6081, 0.0
        %v6304 = vsel %vm737, %v6082, 0.0
        %v6305 = vsel %vm738, %v6083, 0.0
        %v6306 = vsel %vm739, %v6084, 0.0
        %v6307 = vsel %vm740, %v6085, 0.0
        %v6308 = vsel %vm741, %v6086, 0.0
        %v6309 = vsel %vm742, %v6087, 0.0
        %v6310 = vsel %vm743, %v6088, 0.0
        %v6311 = vsel %vm744, %v6089, 0.0
        %v6312 = vsel %vm745, %v6090, 0.0
        %v6313 = vsel %vm746, %v6091, 0.0
        %v6314 = vsel %vm747, %v6092, 0.0
        %v6315 = vsel %vm748, %v6093, 0.0
        %v6316 = vsel %vm749, %v6094, 0.0
        %v6317 = vsel %vm750, %v6095, 0.0
        %v6318 = vsel %vm751, %v6096, 0.0
        %v6319 = vsel %vm752, %v6097, 0.0
        %v6320 = vsel %vm753, %v6098, 0.0
        %v6321 = vsel %vm754, %v6099, 0.0
        %v6322 = vsel %vm755, %v6100, 0.0
        %v6323 = vsel %vm756, %v6101, 0.0
        %v6324 = vsel %vm757, %v6102, 0.0
        %v6325 = vsel %vm758, %v6103, 0.0
        %v6326 = vsel %vm759, %v6072, 0.0
        %v6327 = vsel %vm760, %v6073, 0.0
        %v6328 = vsel %vm729, %v5978, 0.0
        %v6329 = vsel %vm730, %v5979, 0.0
        %v6330 = vsel %vm731, %v5980, 0.0
        %v6331 = vsel %vm732, %v5981, 0.0
        %v6332 = vsel %vm733, %v5982, 0.0
        %v6333 = vsel %vm734, %v5983, 0.0
        %v6334 = vsel %vm735, %v5984, 0.0
        %v6335 = vsel %vm736, %v5985, 0.0
        %v6336 = vsel %vm737, %v5986, 0.0
        %v6337 = vsel %vm738, %v5987, 0.0
        %v6338 = vsel %vm739, %v5988, 0.0
        %v6339 = vsel %vm740, %v5989, 0.0
        %v6340 = vsel %vm741, %v5990, 0.0
        %v6341 = vsel %vm742, %v5991, 0.0
        %v6342 = vsel %vm743, %v5992, 0.0
        %v6343 = vsel %vm744, %v5993, 0.0
        %v6344 = vsel %vm745, %v5994, 0.0
        %v6345 = vsel %vm746, %v5995, 0.0
        %v6346 = vsel %vm747, %v5996, 0.0
        %v6347 = vsel %vm748, %v5997, 0.0
        %v6348 = vsel %vm749, %v5998, 0.0
        %v6349 = vsel %vm750, %v5999, 0.0
        %v6350 = vsel %vm751, %v6000, 0.0
        %v6351 = vsel %vm752, %v6001, 0.0
        %v6352 = vsel %vm753, %v6002, 0.0
        %v6353 = vsel %vm754, %v6003, 0.0
        %v6354 = vsel %vm755, %v6004, 0.0
        %v6355 = vsel %vm756, %v6005, 0.0
        %v6356 = vsel %vm757, %v6006, 0.0
        %v6357 = vsel %vm758, %v6007, 0.0
        %v6358 = vsel %vm759, %v5976, 0.0
        %v6359 = vsel %vm760, %v5977, 0.0
        %v6360 = vsel %vm729, %v6170, 0.0
        %v6361 = vsel %vm730, %v6171, 0.0
        %v6362 = vsel %vm731, %v6172, 0.0
        %v6363 = vsel %vm732, %v6173, 0.0
        %v6364 = vsel %vm733, %v6174, 0.0
        %v6365 = vsel %vm734, %v6175, 0.0
        %v6366 = vsel %vm735, %v6176, 0.0
        %v6367 = vsel %vm736, %v6177, 0.0
        %v6368 = vsel %vm737, %v6178, 0.0
        %v6369 = vsel %vm738, %v6179, 0.0
        %v6370 = vsel %vm739, %v6180, 0.0
        %v6371 = vsel %vm740, %v6181, 0.0
        %v6372 = vsel %vm741, %v6182, 0.0
        %v6373 = vsel %vm742, %v6183, 0.0
        %v6374 = vsel %vm743, %v6184, 0.0
        %v6375 = vsel %vm744, %v6185, 0.0
        %v6376 = vsel %vm745, %v6186, 0.0
        %v6377 = vsel %vm746, %v6187, 0.0
        %v6378 = vsel %vm747, %v6188, 0.0
        %v6379 = vsel %vm748, %v6189, 0.0
        %v6380 = vsel %vm749, %v6190, 0.0
        %v6381 = vsel %vm750, %v6191, 0.0
        %v6382 = vsel %vm751, %v6192, 0.0
        %v6383 = vsel %vm752, %v6193, 0.0
        %v6384 = vsel %vm753, %v6194, 0.0
        %v6385 = vsel %vm754, %v6195, 0.0
        %v6386 = vsel %vm755, %v6196, 0.0
        %v6387 = vsel %vm756, %v6197, 0.0
        %v6388 = vsel %vm757, %v6198, 0.0
        %v6389 = vsel %vm758, %v6199, 0.0
        %v6390 = vsel %vm759, %v6168, 0.0
        %v6391 = vsel %vm760, %v6169, 0.0
        %v6392 = vpack.c.bf16 %v6201, %v6200
        %v6393 = vpack.c.bf16 %v6233, %v6232
        %v6394 = vpack.c.bf16 %v6265, %v6264
        %v6395 = vpack.c.bf16 %v6073, %v6072
        %v6396 = vpack.c.bf16 %v5977, %v5976
        %v6397 = vpack.c.bf16 %v6169, %v6168
        %v6398 = vpack.c.bf16 %v6297, %v6296
        %v6399 = vpack.c.bf16 %v6329, %v6328
        %v6400 = vpack.c.bf16 %v6361, %v6360
        %v6401 = vpack.c.bf16 %v6203, %v6202
        %v6402 = vpack.c.bf16 %v6235, %v6234
        %v6403 = vpack.c.bf16 %v6267, %v6266
        %v6404 = vpack.c.bf16 %v6075, %v6074
        %v6405 = vpack.c.bf16 %v5979, %v5978
        %v6406 = vpack.c.bf16 %v6171, %v6170
        %v6407 = vpack.c.bf16 %v6299, %v6298
        %v6408 = vpack.c.bf16 %v6331, %v6330
        %v6409 = vpack.c.bf16 %v6363, %v6362
        %v6410 = vpack.c.bf16 %v6205, %v6204
        %v6411 = vpack.c.bf16 %v6237, %v6236
        %v6412 = vpack.c.bf16 %v6269, %v6268
        %v6413 = vpack.c.bf16 %v6077, %v6076
        %v6414 = vpack.c.bf16 %v5981, %v5980
        %v6415 = vpack.c.bf16 %v6173, %v6172
        %v6416 = vpack.c.bf16 %v6301, %v6300
        %v6417 = vpack.c.bf16 %v6333, %v6332
        %v6418 = vpack.c.bf16 %v6365, %v6364
        %v6419 = vpack.c.bf16 %v6207, %v6206
        %v6420 = vpack.c.bf16 %v6239, %v6238
        %v6421 = vpack.c.bf16 %v6271, %v6270
        %v6422 = vpack.c.bf16 %v6079, %v6078
        %v6423 = vpack.c.bf16 %v5983, %v5982
        %v6424 = vpack.c.bf16 %v6175, %v6174
        %v6425 = vpack.c.bf16 %v6303, %v6302
        %v6426 = vpack.c.bf16 %v6335, %v6334
        %v6427 = vpack.c.bf16 %v6367, %v6366
        %v6428 = vpack.c.bf16 %v6209, %v6208
        %v6429 = vpack.c.bf16 %v6241, %v6240
        %v6430 = vpack.c.bf16 %v6273, %v6272
        %v6431 = vpack.c.bf16 %v6081, %v6080
        %v6432 = vpack.c.bf16 %v5985, %v5984
        %v6433 = vpack.c.bf16 %v6177, %v6176
        %v6434 = vpack.c.bf16 %v6305, %v6304
        %v6435 = vpack.c.bf16 %v6337, %v6336
        %v6436 = vpack.c.bf16 %v6369, %v6368
        %v6437 = vpack.c.bf16 %v6211, %v6210
        %v6438 = vpack.c.bf16 %v6243, %v6242
        %v6439 = vpack.c.bf16 %v6275, %v6274
        %v6440 = vpack.c.bf16 %v6083, %v6082
        %v6441 = vpack.c.bf16 %v5987, %v5986
        %v6442 = vpack.c.bf16 %v6179, %v6178
        %v6443 = vpack.c.bf16 %v6307, %v6306
        %v6444 = vpack.c.bf16 %v6339, %v6338
        %v6445 = vpack.c.bf16 %v6371, %v6370
        %v6446 = vpack.c.bf16 %v6213, %v6212
        %v6447 = vpack.c.bf16 %v6245, %v6244
        %v6448 = vpack.c.bf16 %v6277, %v6276
        %v6449 = vpack.c.bf16 %v6085, %v6084
        %v6450 = vpack.c.bf16 %v5989, %v5988
        %v6451 = vpack.c.bf16 %v6181, %v6180
        %v6452 = vpack.c.bf16 %v6309, %v6308
        %v6453 = vpack.c.bf16 %v6341, %v6340
        %v6454 = vpack.c.bf16 %v6373, %v6372
        %v6455 = vpack.c.bf16 %v6215, %v6214
        %v6456 = vpack.c.bf16 %v6247, %v6246
        %v6457 = vpack.c.bf16 %v6279, %v6278
        %v6458 = vpack.c.bf16 %v6087, %v6086
        %v6459 = vpack.c.bf16 %v5991, %v5990
        %v6460 = vpack.c.bf16 %v6183, %v6182
        %v6461 = vpack.c.bf16 %v6311, %v6310
        %v6462 = vpack.c.bf16 %v6343, %v6342
        %v6463 = vpack.c.bf16 %v6375, %v6374
        %v6464 = vpack.c.bf16 %v6217, %v6216
        %v6465 = vpack.c.bf16 %v6249, %v6248
        %v6466 = vpack.c.bf16 %v6281, %v6280
        %v6467 = vpack.c.bf16 %v6089, %v6088
        %v6468 = vpack.c.bf16 %v5993, %v5992
        %v6469 = vpack.c.bf16 %v6185, %v6184
        %v6470 = vpack.c.bf16 %v6313, %v6312
        %v6471 = vpack.c.bf16 %v6345, %v6344
        %v6472 = vpack.c.bf16 %v6377, %v6376
        %v6473 = vpack.c.bf16 %v6219, %v6218
        %v6474 = vpack.c.bf16 %v6251, %v6250
        %v6475 = vpack.c.bf16 %v6283, %v6282
        %v6476 = vpack.c.bf16 %v6091, %v6090
        %v6477 = vpack.c.bf16 %v5995, %v5994
        %v6478 = vpack.c.bf16 %v6187, %v6186
        %v6479 = vpack.c.bf16 %v6315, %v6314
        %v6480 = vpack.c.bf16 %v6347, %v6346
        %v6481 = vpack.c.bf16 %v6379, %v6378
        %v6482 = vpack.c.bf16 %v6221, %v6220
        %v6483 = vpack.c.bf16 %v6253, %v6252
        %v6484 = vpack.c.bf16 %v6285, %v6284
        %v6485 = vpack.c.bf16 %v6093, %v6092
        %v6486 = vpack.c.bf16 %v5997, %v5996
        %v6487 = vpack.c.bf16 %v6189, %v6188
        %v6488 = vpack.c.bf16 %v6317, %v6316
        %v6489 = vpack.c.bf16 %v6349, %v6348
        %v6490 = vpack.c.bf16 %v6381, %v6380
        %v6491 = vpack.c.bf16 %v6223, %v6222
        %v6492 = vpack.c.bf16 %v6255, %v6254
        %v6493 = vpack.c.bf16 %v6287, %v6286
        %v6494 = vpack.c.bf16 %v6095, %v6094
        %v6495 = vpack.c.bf16 %v5999, %v5998
        %v6496 = vpack.c.bf16 %v6191, %v6190
        %v6497 = vpack.c.bf16 %v6319, %v6318
        %v6498 = vpack.c.bf16 %v6351, %v6350
        %v6499 = vpack.c.bf16 %v6383, %v6382
        %v6500 = vpack.c.bf16 %v6225, %v6224
        %v6501 = vpack.c.bf16 %v6257, %v6256
        %v6502 = vpack.c.bf16 %v6289, %v6288
        %v6503 = vpack.c.bf16 %v6097, %v6096
        %v6504 = vpack.c.bf16 %v6001, %v6000
        %v6505 = vpack.c.bf16 %v6193, %v6192
        %v6506 = vpack.c.bf16 %v6321, %v6320
        %v6507 = vpack.c.bf16 %v6353, %v6352
        %v6508 = vpack.c.bf16 %v6385, %v6384
        %v6509 = vpack.c.bf16 %v6227, %v6226
        %v6510 = vpack.c.bf16 %v6259, %v6258
        %v6511 = vpack.c.bf16 %v6291, %v6290
        %v6512 = vpack.c.bf16 %v6099, %v6098
        %v6513 = vpack.c.bf16 %v6003, %v6002
        %v6514 = vpack.c.bf16 %v6195, %v6194
        %v6515 = vpack.c.bf16 %v6323, %v6322
        %v6516 = vpack.c.bf16 %v6355, %v6354
        %v6517 = vpack.c.bf16 %v6387, %v6386
        %v6518 = vpack.c.bf16 %v6229, %v6228
        %v6519 = vpack.c.bf16 %v6261, %v6260
        %v6520 = vpack.c.bf16 %v6293, %v6292
        %v6521 = vpack.c.bf16 %v6101, %v6100
        %v6522 = vpack.c.bf16 %v6005, %v6004
        %v6523 = vpack.c.bf16 %v6197, %v6196
        %v6524 = vpack.c.bf16 %v6325, %v6324
        %v6525 = vpack.c.bf16 %v6357, %v6356
        %v6526 = vpack.c.bf16 %v6389, %v6388
        %v6527 = vpack.c.bf16 %v6231, %v6230
        %v6528 = vpack.c.bf16 %v6263, %v6262
        %v6529 = vpack.c.bf16 %v6295, %v6294
        %v6530 = vpack.c.bf16 %v6103, %v6102
        %v6531 = vpack.c.bf16 %v6007, %v6006
        %v6532 = vpack.c.bf16 %v6199, %v6198
        %v6533 = vpack.c.bf16 %v6327, %v6326
        %v6534 = vpack.c.bf16 %v6359, %v6358
        %v6535 = vpack.c.bf16 %v6391, %v6390
        %v6536 = vld [vmem:[#allocation4] sm:$0xf]
        %v6537 = vld [vmem:[#allocation4 + $0x4] sm:$0xf]
        %v6538 = vld [vmem:[#allocation4 + $0x8] sm:$0xf]
        %v6539 = vld [vmem:[#allocation4 + $0xc] sm:$0xf]
        %v6540 = vld [vmem:[#allocation4 + $0x10] sm:$0xf]
        %v6541 = vld [vmem:[#allocation4 + $0x14] sm:$0xf]
        %v6542 = vld [vmem:[#allocation4 + $0x18] sm:$0xf]
        %v6543 = vld [vmem:[#allocation4 + $0x1c] sm:$0xf]
        %v6544 = vld [vmem:[#allocation4 + $0x20] sm:$0xf]
        %v6545 = vld [vmem:[#allocation4 + $0x24] sm:$0xf]
        %v6546 = vld [vmem:[#allocation4 + $0x28] sm:$0xf]
        %v6547 = vld [vmem:[#allocation4 + $0x2c] sm:$0xf]
        %v6548 = vld [vmem:[#allocation4 + $0x30] sm:$0xf]
        %v6549 = vld [vmem:[#allocation4 + $0x34] sm:$0xf]
        %v6550 = vld [vmem:[#allocation4 + $0x38] sm:$0xf]
        %v6551 = vld [vmem:[#allocation4 + $0x3c] sm:$0xf]
        %v6552 = vld [vmem:[#allocation4 + $0x40] sm:$0xf]
        %v6553 = vld [vmem:[#allocation4 + $0x44] sm:$0xf]
        %v6554 = vld [vmem:[#allocation4 + $0x48] sm:$0xf]
        %v6555 = vld [vmem:[#allocation4 + $0x4c] sm:$0xf]
        %v6556 = vld [vmem:[#allocation4 + $0x50] sm:$0xf]
        %v6557 = vld [vmem:[#allocation4 + $0x54] sm:$0xf]
        %v6558 = vld [vmem:[#allocation4 + $0x58] sm:$0xf]
        %v6559 = vld [vmem:[#allocation4 + $0x5c] sm:$0xf]
        %v6560 = vld [vmem:[#allocation4 + $0x60] sm:$0xf]
        %v6561 = vld [vmem:[#allocation4 + $0x64] sm:$0xf]
        %v6562 = vld [vmem:[#allocation4 + $0x68] sm:$0xf]
        %v6563 = vld [vmem:[#allocation4 + $0x6c] sm:$0xf]
        %v6564 = vld [vmem:[#allocation4 + $0x70] sm:$0xf]
        %v6565 = vld [vmem:[#allocation4 + $0x74] sm:$0xf]
        %v6566 = vld [vmem:[#allocation4 + $0x78] sm:$0xf]
        %v6567 = vld [vmem:[#allocation4 + $0x7c] sm:$0xf]
        %v6568 = vld [vmem:[#allocation4 + $0x80] sm:$0xf]
        %v6569 = vld [vmem:[#allocation4 + $0x84] sm:$0xf]
        %v6570 = vld [vmem:[#allocation4 + $0x88] sm:$0xf]
        %v6571 = vld [vmem:[#allocation4 + $0x8c] sm:$0xf]
        %v6572 = vld [vmem:[#allocation4 + $0x90] sm:$0xf]
        %v6573 = vld [vmem:[#allocation4 + $0x94] sm:$0xf]
        %v6574 = vld [vmem:[#allocation4 + $0x98] sm:$0xf]
        %v6575 = vld [vmem:[#allocation4 + $0x9c] sm:$0xf]
        %v6576 = vld [vmem:[#allocation4 + $0xa0] sm:$0xf]
        %v6577 = vld [vmem:[#allocation4 + $0xa4] sm:$0xf]
        %v6578 = vld [vmem:[#allocation4 + $0xa8] sm:$0xf]
        %v6579 = vld [vmem:[#allocation4 + $0xac] sm:$0xf]
        %v6580 = vld [vmem:[#allocation4 + $0xb0] sm:$0xf]
        %v6581 = vld [vmem:[#allocation4 + $0xb4] sm:$0xf]
        %v6582 = vld [vmem:[#allocation4 + $0xb8] sm:$0xf]
        %v6583 = vld [vmem:[#allocation4 + $0xbc] sm:$0xf]
        %v6584 = vld [vmem:[#allocation4 + $0xc0] sm:$0xf]
        %v6585 = vld [vmem:[#allocation4 + $0xc4] sm:$0xf]
        %v6586 = vld [vmem:[#allocation4 + $0xc8] sm:$0xf]
        %v6587 = vld [vmem:[#allocation4 + $0xcc] sm:$0xf]
        %v6588 = vld [vmem:[#allocation4 + $0xd0] sm:$0xf]
        %v6589 = vld [vmem:[#allocation4 + $0xd4] sm:$0xf]
        %v6590 = vld [vmem:[#allocation4 + $0xd8] sm:$0xf]
        %v6591 = vld [vmem:[#allocation4 + $0xdc] sm:$0xf]
        %v6592 = vld [vmem:[#allocation4 + $0xe0] sm:$0xf]
        %v6593 = vld [vmem:[#allocation4 + $0xe4] sm:$0xf]
        %v6594 = vld [vmem:[#allocation4 + $0xe8] sm:$0xf]
        %v6595 = vld [vmem:[#allocation4 + $0xec] sm:$0xf]
        %v6596 = vld [vmem:[#allocation4 + $0xf0] sm:$0xf]
        %v6597 = vld [vmem:[#allocation4 + $0xf4] sm:$0xf]
        %v6598 = vld [vmem:[#allocation4 + $0xf8] sm:$0xf]
        %v6599 = vld [vmem:[#allocation4 + $0xfc] sm:$0xf]
        %v6600 = vld [vmem:[#allocation4 + $0x100] sm:$0xf]
        %v6601 = vld [vmem:[#allocation4 + $0x104] sm:$0xf]
        %v6602 = vld [vmem:[#allocation4 + $0x108] sm:$0xf]
        %v6603 = vld [vmem:[#allocation4 + $0x10c] sm:$0xf]
        %v6604 = vld [vmem:[#allocation4 + $0x110] sm:$0xf]
        %v6605 = vld [vmem:[#allocation4 + $0x114] sm:$0xf]
        %v6606 = vld [vmem:[#allocation4 + $0x118] sm:$0xf]
        %v6607 = vld [vmem:[#allocation4 + $0x11c] sm:$0xf]
        %v6608 = vld [vmem:[#allocation4 + $0x120] sm:$0xf]
        %v6609 = vld [vmem:[#allocation4 + $0x124] sm:$0xf]
        %v6610 = vld [vmem:[#allocation4 + $0x128] sm:$0xf]
        %v6611 = vld [vmem:[#allocation4 + $0x12c] sm:$0xf]
        %v6612 = vld [vmem:[#allocation4 + $0x130] sm:$0xf]
        %v6613 = vld [vmem:[#allocation4 + $0x134] sm:$0xf]
        %v6614 = vld [vmem:[#allocation4 + $0x138] sm:$0xf]
        %v6615 = vld [vmem:[#allocation4 + $0x13c] sm:$0xf]
        %v6616 = vld [vmem:[#allocation4 + $0x140] sm:$0xf]
        %v6617 = vld [vmem:[#allocation4 + $0x144] sm:$0xf]
        %v6618 = vld [vmem:[#allocation4 + $0x148] sm:$0xf]
        %v6619 = vld [vmem:[#allocation4 + $0x14c] sm:$0xf]
        %v6620 = vld [vmem:[#allocation4 + $0x150] sm:$0xf]
        %v6621 = vld [vmem:[#allocation4 + $0x154] sm:$0xf]
        %v6622 = vld [vmem:[#allocation4 + $0x158] sm:$0xf]
        %v6623 = vld [vmem:[#allocation4 + $0x15c] sm:$0xf]
        %v6624 = vld [vmem:[#allocation4 + $0x160] sm:$0xf]
        %v6625 = vld [vmem:[#allocation4 + $0x164] sm:$0xf]
        %v6626 = vld [vmem:[#allocation4 + $0x168] sm:$0xf]
        %v6627 = vld [vmem:[#allocation4 + $0x16c] sm:$0xf]
        %v6628 = vld [vmem:[#allocation4 + $0x170] sm:$0xf]
        %v6629 = vld [vmem:[#allocation4 + $0x174] sm:$0xf]
        %v6630 = vld [vmem:[#allocation4 + $0x178] sm:$0xf]
        %v6631 = vld [vmem:[#allocation4 + $0x17c] sm:$0xf]
        %v6632 = vld [vmem:[#allocation4 + $0x180] sm:$0xf]
        %v6633 = vld [vmem:[#allocation4 + $0x184] sm:$0xf]
        %v6634 = vld [vmem:[#allocation4 + $0x188] sm:$0xf]
        %v6635 = vld [vmem:[#allocation4 + $0x18c] sm:$0xf]
        %v6636 = vld [vmem:[#allocation4 + $0x190] sm:$0xf]
        %v6637 = vld [vmem:[#allocation4 + $0x194] sm:$0xf]
        %v6638 = vld [vmem:[#allocation4 + $0x198] sm:$0xf]
        %v6639 = vld [vmem:[#allocation4 + $0x19c] sm:$0xf]
        %v6640 = vld [vmem:[#allocation4 + $0x1a0] sm:$0xf]
        %v6641 = vld [vmem:[#allocation4 + $0x1a4] sm:$0xf]
        %v6642 = vld [vmem:[#allocation4 + $0x1a8] sm:$0xf]
        %v6643 = vld [vmem:[#allocation4 + $0x1ac] sm:$0xf]
        %v6644 = vld [vmem:[#allocation4 + $0x1b0] sm:$0xf]
        %v6645 = vld [vmem:[#allocation4 + $0x1b4] sm:$0xf]
        %v6646 = vld [vmem:[#allocation4 + $0x1b8] sm:$0xf]
        %v6647 = vld [vmem:[#allocation4 + $0x1bc] sm:$0xf]
        %v6648 = vld [vmem:[#allocation4 + $0x1c0] sm:$0xf]
        %v6649 = vld [vmem:[#allocation4 + $0x1c4] sm:$0xf]
        %v6650 = vld [vmem:[#allocation4 + $0x1c8] sm:$0xf]
        %v6651 = vld [vmem:[#allocation4 + $0x1cc] sm:$0xf]
        %v6652 = vld [vmem:[#allocation4 + $0x1d0] sm:$0xf]
        %v6653 = vld [vmem:[#allocation4 + $0x1d4] sm:$0xf]
        %v6654 = vld [vmem:[#allocation4 + $0x1d8] sm:$0xf]
        %v6655 = vld [vmem:[#allocation4 + $0x1dc] sm:$0xf]
        %v6656 = vld [vmem:[#allocation4 + $0x1e0] sm:$0xf]
        %v6657 = vld [vmem:[#allocation4 + $0x1e4] sm:$0xf]
        %v6658 = vld [vmem:[#allocation4 + $0x1e8] sm:$0xf]
        %v6659 = vld [vmem:[#allocation4 + $0x1ec] sm:$0xf]
        %v6660 = vld [vmem:[#allocation4 + $0x1f0] sm:$0xf]
        %v6661 = vld [vmem:[#allocation4 + $0x1f4] sm:$0xf]
        %v6662 = vld [vmem:[#allocation4 + $0x1f8] sm:$0xf]
        %v6663 = vld [vmem:[#allocation4 + $0x1fc] sm:$0xf]
        %v6664 = vld [vmem:[#allocation4 + $0x200] sm:$0xf]
        %v6665 = vld [vmem:[#allocation4 + $0x204] sm:$0xf]
        %v6666 = vld [vmem:[#allocation4 + $0x208] sm:$0xf]
        %v6667 = vld [vmem:[#allocation4 + $0x20c] sm:$0xf]
        %v6668 = vld [vmem:[#allocation4 + $0x210] sm:$0xf]
        %v6669 = vld [vmem:[#allocation4 + $0x214] sm:$0xf]
        %v6670 = vld [vmem:[#allocation4 + $0x218] sm:$0xf]
        %v6671 = vld [vmem:[#allocation4 + $0x21c] sm:$0xf]
        %v6672 = vld [vmem:[#allocation4 + $0x220] sm:$0xf]
        %v6673 = vld [vmem:[#allocation4 + $0x224] sm:$0xf]
        %v6674 = vld [vmem:[#allocation4 + $0x228] sm:$0xf]
        %v6675 = vld [vmem:[#allocation4 + $0x22c] sm:$0xf]
        %v6676 = vld [vmem:[#allocation4 + $0x230] sm:$0xf]
        %v6677 = vld [vmem:[#allocation4 + $0x234] sm:$0xf]
        %v6678 = vld [vmem:[#allocation4 + $0x238] sm:$0xf]
        %v6679 = vld [vmem:[#allocation4 + $0x23c] sm:$0xf]
        %v6680 = vld [vmem:[%s6] sm:$0x1]
        %v6682 = vlaneseq
        %v6683 = vshrl.u32 %v6682, 7
        %v6684 = vsub.s32 0, %v6683
        %v6685 = vrot.slane %v6680, %v6684
        %v6831 = vunpack.c.l.b16 %v6536
        %v6832 = vunpack.c.l.b16 %v6537
        %v6833 = vunpack.c.l.b16 %v6538
        %v6834 = vunpack.c.l.b16 %v6539
        %v6835 = vunpack.c.l.b16 %v6540
        %v6836 = vunpack.c.l.b16 %v6541
        %v6837 = vunpack.c.l.b16 %v6542
        %v6838 = vunpack.c.l.b16 %v6543
        %v6839 = vunpack.c.l.b16 %v6544
        %v6840 = vunpack.c.l.b16 %v6545
        %v6841 = vunpack.c.l.b16 %v6546
        %v6842 = vunpack.c.l.b16 %v6547
        %v6843 = vunpack.c.l.b16 %v6548
        %v6844 = vunpack.c.l.b16 %v6549
        %v6845 = vunpack.c.l.b16 %v6550
        %v6846 = vunpack.c.l.b16 %v6551
        %v6847 = vunpack.c.l.b16 %v6552
        %v6848 = vunpack.c.l.b16 %v6553
        %v6849 = vunpack.c.l.b16 %v6554
        %v6850 = vunpack.c.l.b16 %v6555
        %v6851 = vunpack.c.l.b16 %v6556
        %v6852 = vunpack.c.l.b16 %v6557
        %v6853 = vunpack.c.l.b16 %v6558
        %v6854 = vunpack.c.l.b16 %v6559
        %v6855 = vunpack.c.l.b16 %v6560
        %v6856 = vunpack.c.l.b16 %v6561
        %v6857 = vunpack.c.l.b16 %v6562
        %v6858 = vunpack.c.l.b16 %v6563
        %v6859 = vunpack.c.l.b16 %v6564
        %v6860 = vunpack.c.l.b16 %v6565
        %v6861 = vunpack.c.l.b16 %v6566
        %v6862 = vunpack.c.l.b16 %v6567
        %v6863 = vunpack.c.l.b16 %v6568
        %v6864 = vunpack.c.l.b16 %v6569
        %v6865 = vunpack.c.l.b16 %v6570
        %v6866 = vunpack.c.l.b16 %v6571
        %v6867 = vunpack.c.l.b16 %v6572
        %v6868 = vunpack.c.l.b16 %v6573
        %v6869 = vunpack.c.l.b16 %v6574
        %v6870 = vunpack.c.l.b16 %v6575
        %v6871 = vunpack.c.l.b16 %v6576
        %v6872 = vunpack.c.l.b16 %v6577
        %v6873 = vunpack.c.l.b16 %v6578
        %v6874 = vunpack.c.l.b16 %v6579
        %v6875 = vunpack.c.l.b16 %v6580
        %v6876 = vunpack.c.l.b16 %v6581
        %v6877 = vunpack.c.l.b16 %v6582
        %v6878 = vunpack.c.l.b16 %v6583
        %v6879 = vunpack.c.l.b16 %v6584
        %v6880 = vunpack.c.l.b16 %v6585
        %v6881 = vunpack.c.l.b16 %v6586
        %v6882 = vunpack.c.l.b16 %v6587
        %v6883 = vunpack.c.l.b16 %v6588
        %v6884 = vunpack.c.l.b16 %v6589
        %v6885 = vunpack.c.l.b16 %v6590
        %v6886 = vunpack.c.l.b16 %v6591
        %v6887 = vunpack.c.l.b16 %v6592
        %v6888 = vunpack.c.l.b16 %v6593
        %v6889 = vunpack.c.l.b16 %v6594
        %v6890 = vunpack.c.l.b16 %v6595
        %v6891 = vunpack.c.l.b16 %v6596
        %v6892 = vunpack.c.l.b16 %v6597
        %v6893 = vunpack.c.l.b16 %v6598
        %v6894 = vunpack.c.l.b16 %v6599
        %v6895 = vunpack.c.l.b16 %v6600
        %v6896 = vunpack.c.l.b16 %v6601
        %v6897 = vunpack.c.l.b16 %v6602
        %v6898 = vunpack.c.l.b16 %v6603
        %v6899 = vunpack.c.l.b16 %v6604
        %v6900 = vunpack.c.l.b16 %v6605
        %v6901 = vunpack.c.l.b16 %v6606
        %v6902 = vunpack.c.l.b16 %v6607
        %v6903 = vunpack.c.l.b16 %v6608
        %v6904 = vunpack.c.l.b16 %v6609
        %v6905 = vunpack.c.l.b16 %v6610
        %v6906 = vunpack.c.l.b16 %v6611
        %v6907 = vunpack.c.l.b16 %v6612
        %v6908 = vunpack.c.l.b16 %v6613
        %v6909 = vunpack.c.l.b16 %v6614
        %v6910 = vunpack.c.l.b16 %v6615
        %v6911 = vunpack.c.l.b16 %v6616
        %v6912 = vunpack.c.l.b16 %v6617
        %v6913 = vunpack.c.l.b16 %v6618
        %v6914 = vunpack.c.l.b16 %v6619
        %v6915 = vunpack.c.l.b16 %v6620
        %v6916 = vunpack.c.l.b16 %v6621
        %v6917 = vunpack.c.l.b16 %v6622
        %v6918 = vunpack.c.l.b16 %v6623
        %v6919 = vunpack.c.l.b16 %v6624
        %v6920 = vunpack.c.l.b16 %v6625
        %v6921 = vunpack.c.l.b16 %v6626
        %v6922 = vunpack.c.l.b16 %v6627
        %v6923 = vunpack.c.l.b16 %v6628
        %v6924 = vunpack.c.l.b16 %v6629
        %v6925 = vunpack.c.l.b16 %v6630
        %v6926 = vunpack.c.l.b16 %v6631
        %v6927 = vunpack.c.l.b16 %v6632
        %v6928 = vunpack.c.l.b16 %v6633
        %v6929 = vunpack.c.l.b16 %v6634
        %v6930 = vunpack.c.l.b16 %v6635
        %v6931 = vunpack.c.l.b16 %v6636
        %v6932 = vunpack.c.l.b16 %v6637
        %v6933 = vunpack.c.l.b16 %v6638
        %v6934 = vunpack.c.l.b16 %v6639
        %v6935 = vunpack.c.l.b16 %v6640
        %v6936 = vunpack.c.l.b16 %v6641
        %v6937 = vunpack.c.l.b16 %v6642
        %v6938 = vunpack.c.l.b16 %v6643
        %v6939 = vunpack.c.l.b16 %v6644
        %v6940 = vunpack.c.l.b16 %v6645
        %v6941 = vunpack.c.l.b16 %v6646
        %v6942 = vunpack.c.l.b16 %v6647
        %v6943 = vunpack.c.l.b16 %v6648
        %v6944 = vunpack.c.l.b16 %v6649
        %v6945 = vunpack.c.l.b16 %v6650
        %v6946 = vunpack.c.l.b16 %v6651
        %v6947 = vunpack.c.l.b16 %v6652
        %v6948 = vunpack.c.l.b16 %v6653
        %v6949 = vunpack.c.l.b16 %v6654
        %v6950 = vunpack.c.l.b16 %v6655
        %v6951 = vunpack.c.l.b16 %v6656
        %v6952 = vunpack.c.l.b16 %v6657
        %v6953 = vunpack.c.l.b16 %v6658
        %v6954 = vunpack.c.l.b16 %v6659
        %v6955 = vunpack.c.l.b16 %v6660
        %v6956 = vunpack.c.l.b16 %v6661
        %v6957 = vunpack.c.l.b16 %v6662
        %v6958 = vunpack.c.l.b16 %v6663
        %v6959 = vunpack.c.l.b16 %v6664
        %v6960 = vunpack.c.l.b16 %v6665
        %v6961 = vunpack.c.l.b16 %v6666
        %v6962 = vunpack.c.l.b16 %v6667
        %v6963 = vunpack.c.l.b16 %v6668
        %v6964 = vunpack.c.l.b16 %v6669
        %v6965 = vunpack.c.l.b16 %v6670
        %v6966 = vunpack.c.l.b16 %v6671
        %v6967 = vunpack.c.l.b16 %v6672
        %v6968 = vunpack.c.l.b16 %v6673
        %v6969 = vunpack.c.l.b16 %v6674
        %v6970 = vunpack.c.l.b16 %v6675
        %v6971 = vunpack.c.l.b16 %v6676
        %v6972 = vunpack.c.l.b16 %v6677
        %v6973 = vunpack.c.l.b16 %v6678
        %v6974 = vunpack.c.l.b16 %v6679
        %v6975 = vpack.c.b16 %v6832, %v6831
        %v6976 = vpack.c.b16 %v6834, %v6833
        %v6977 = vpack.c.b16 %v6836, %v6835
        %v6978 = vpack.c.b16 %v6838, %v6837
        %v6979 = vpack.c.b16 %v6840, %v6839
        %v6980 = vpack.c.b16 %v6842, %v6841
        %v6981 = vpack.c.b16 %v6844, %v6843
        %v6982 = vpack.c.b16 %v6846, %v6845
        %v6983 = vpack.c.b16 %v6848, %v6847
        %v6984 = vpack.c.b16 %v6850, %v6849
        %v6985 = vpack.c.b16 %v6852, %v6851
        %v6986 = vpack.c.b16 %v6854, %v6853
        %v6987 = vpack.c.b16 %v6856, %v6855
        %v6988 = vpack.c.b16 %v6858, %v6857
        %v6989 = vpack.c.b16 %v6860, %v6859
        %v6990 = vpack.c.b16 %v6862, %v6861
        %v6991 = vpack.c.b16 %v6864, %v6863
        %v6992 = vpack.c.b16 %v6866, %v6865
        %v6993 = vpack.c.b16 %v6868, %v6867
        %v6994 = vpack.c.b16 %v6870, %v6869
        %v6995 = vpack.c.b16 %v6872, %v6871
        %v6996 = vpack.c.b16 %v6874, %v6873
        %v6997 = vpack.c.b16 %v6876, %v6875
        %v6998 = vpack.c.b16 %v6878, %v6877
        %v6999 = vpack.c.b16 %v6880, %v6879
        %v7000 = vpack.c.b16 %v6882, %v6881
        %v7001 = vpack.c.b16 %v6884, %v6883
        %v7002 = vpack.c.b16 %v6886, %v6885
        %v7003 = vpack.c.b16 %v6888, %v6887
        %v7004 = vpack.c.b16 %v6890, %v6889
        %v7005 = vpack.c.b16 %v6892, %v6891
        %v7006 = vpack.c.b16 %v6894, %v6893
        %v7007 = vpack.c.b16 %v6896, %v6895
        %v7008 = vpack.c.b16 %v6898, %v6897
        %v7009 = vpack.c.b16 %v6900, %v6899
        %v7010 = vpack.c.b16 %v6902, %v6901
        %v7011 = vpack.c.b16 %v6904, %v6903
        %v7012 = vpack.c.b16 %v6906, %v6905
        %v7013 = vpack.c.b16 %v6908, %v6907
        %v7014 = vpack.c.b16 %v6910, %v6909
        %v7015 = vpack.c.b16 %v6912, %v6911
        %v7016 = vpack.c.b16 %v6914, %v6913
        %v7017 = vpack.c.b16 %v6916, %v6915
        %v7018 = vpack.c.b16 %v6918, %v6917
        %v7019 = vpack.c.b16 %v6920, %v6919
        %v7020 = vpack.c.b16 %v6922, %v6921
        %v7021 = vpack.c.b16 %v6924, %v6923
        %v7022 = vpack.c.b16 %v6926, %v6925
        %v7023 = vpack.c.b16 %v6928, %v6927
        %v7024 = vpack.c.b16 %v6930, %v6929
        %v7025 = vpack.c.b16 %v6932, %v6931
        %v7026 = vpack.c.b16 %v6934, %v6933
        %v7027 = vpack.c.b16 %v6936, %v6935
        %v7028 = vpack.c.b16 %v6938, %v6937
        %v7029 = vpack.c.b16 %v6940, %v6939
        %v7030 = vpack.c.b16 %v6942, %v6941
        %v7031 = vpack.c.b16 %v6944, %v6943
        %v7032 = vpack.c.b16 %v6946, %v6945
        %v7033 = vpack.c.b16 %v6948, %v6947
        %v7034 = vpack.c.b16 %v6950, %v6949
        %v7035 = vpack.c.b16 %v6952, %v6951
        %v7036 = vpack.c.b16 %v6954, %v6953
        %v7037 = vpack.c.b16 %v6956, %v6955
        %v7038 = vpack.c.b16 %v6958, %v6957
        %v7039 = vpack.c.b16 %v6960, %v6959
        %v7040 = vpack.c.b16 %v6962, %v6961
        %v7041 = vpack.c.b16 %v6964, %v6963
        %v7042 = vpack.c.b16 %v6966, %v6965
        %v7043 = vpack.c.b16 %v6968, %v6967
        %v7044 = vpack.c.b16 %v6970, %v6969
        %v7045 = vpack.c.b16 %v6972, %v6971
        %v7046 = vpack.c.b16 %v6974, %v6973
        %7119 = vmatprep.subr.bf16.mxu0 0
        %7120 = vmatpush1.bf16.msra.mxu0 %v6975
        %7121 = vmatprep.subr.bf16.mxu0 0
        %7122 = vmatpush1.bf16.msra.mxu0 %v6976
        %7123 = vmatprep.subr.bf16.mxu0 0
        %7124 = vmatpush1.bf16.msra.mxu0 %v6977
        %7125 = vmatprep.subr.bf16.mxu0 0
        %7126 = vmatpush1.bf16.msra.mxu0 %v6978
        %7127 = vmatprep.subr.bf16.mxu0 0
        %7128 = vmatpush1.bf16.msra.mxu0 %v6979
        %7129 = vmatprep.subr.bf16.mxu0 0
        %7130 = vmatpush1.bf16.msra.mxu0 %v6980
        %7131 = vmatprep.subr.bf16.mxu0 0
        %7132 = vmatpush1.bf16.msra.mxu0 %v6981
        %7133 = vmatprep.subr.bf16.mxu0 0
        %7134 = vmatpush1.bf16.msra.mxu0 %v6982
        %7135 = vmatprep.subr.bf16.mxu0 0
        %7136 = vmatpush1.bf16.msra.mxu0 %v6983
        %7137 = vmatprep.subr.bf16.mxu0 0
        %7138 = vmatpush1.bf16.msra.mxu0 %v6984
        %7139 = vmatprep.subr.bf16.mxu0 0
        %7140 = vmatpush1.bf16.msra.mxu0 %v6985
        %7141 = vmatprep.subr.bf16.mxu0 0
        %7142 = vmatpush1.bf16.msra.mxu0 %v6986
        %7143 = vmatprep.subr.bf16.mxu0 0
        %7144 = vmatpush1.bf16.msra.mxu0 %v6987
        %7145 = vmatprep.subr.bf16.mxu0 0
        %7146 = vmatpush1.bf16.msra.mxu0 %v6988
        %7147 = vmatprep.subr.bf16.mxu0 0
        %7148 = vmatpush1.bf16.msra.mxu0 %v6989
        %7149 = vmatprep.subr.bf16.mxu0 0
        %7150 = vmatpush1.bf16.msra.mxu0 %v6990
        %7151 = vmatprep.mubr.bf16.mxu0 %v6393
        %7152 = vmatmul.mubr.bf16.gmra.mrb[0].mxu0 %v6392
        %v7153 = vpop.f32.mrb[0].mxu0
        %v7154 = vadd.f32 %v6685, %v7153
        %v7155 = vpop.f32.mrb[0].mxu0
        %v7156 = vpop.f32.mrb[0].mxu0
        %v7157 = vadd.f32 %v6685, %v7156
        %v7158 = vpop.f32.mrb[0].mxu0
        %7159 = vmatprep.mubr.bf16.mxu0 %v6402
        %7160 = vmatmul.mubr.bf16.gmra.mrb[0].mxu0 %v6401
        %v7161 = vpop.f32.mrb[0].mxu0
        %v7162 = vadd.f32 %v6685, %v7161
        %v7163 = vpop.f32.mrb[0].mxu0
        %v7164 = vpop.f32.mrb[0].mxu0
        %v7165 = vadd.f32 %v6685, %v7164
        %v7166 = vpop.f32.mrb[0].mxu0
        %7167 = vmatprep.mubr.bf16.mxu0 %v6411
        %7168 = vmatmul.mubr.bf16.gmra.mrb[0].mxu0 %v6410
        %v7169 = vpop.f32.mrb[0].mxu0
        %v7170 = vadd.f32 %v6685, %v7169
        %v7171 = vpop.f32.mrb[0].mxu0
        %v7172 = vpop.f32.mrb[0].mxu0
        %v7173 = vadd.f32 %v6685, %v7172
        %v7174 = vpop.f32.mrb[0].mxu0
        %7175 = vmatprep.mubr.bf16.mxu0 %v6420
        %7176 = vmatmul.mubr.bf16.gmra.mrb[0].mxu0 %v6419
        %v7177 = vpop.f32.mrb[0].mxu0
        %v7178 = vadd.f32 %v6685, %v7177
        %v7179 = vpop.f32.mrb[0].mxu0
        %v7180 = vpop.f32.mrb[0].mxu0
        %v7181 = vadd.f32 %v6685, %v7180
        %v7182 = vpop.f32.mrb[0].mxu0
        %7183 = vmatprep.mubr.bf16.mxu0 %v6429
        %7184 = vmatmul.mubr.bf16.gmra.mrb[0].mxu0 %v6428
        %v7185 = vpop.f32.mrb[0].mxu0
        %v7186 = vadd.f32 %v6685, %v7185
        %v7187 = vpop.f32.mrb[0].mxu0
        %v7188 = vpop.f32.mrb[0].mxu0
        %v7189 = vadd.f32 %v6685, %v7188
        %v7190 = vpop.f32.mrb[0].mxu0
        %7191 = vmatprep.mubr.bf16.mxu0 %v6438
        %7192 = vmatmul.mubr.bf16.gmra.mrb[0].mxu0 %v6437
        %v7193 = vpop.f32.mrb[0].mxu0
        %v7194 = vadd.f32 %v6685, %v7193
        %v7195 = vpop.f32.mrb[0].mxu0
        %v7196 = vpop.f32.mrb[0].mxu0
        %v7197 = vadd.f32 %v6685, %v7196
        %v7198 = vpop.f32.mrb[0].mxu0
        %7199 = vmatprep.mubr.bf16.mxu0 %v6447
        %7200 = vmatmul.mubr.bf16.gmra.mrb[0].mxu0 %v6446
        %v7201 = vpop.f32.mrb[0].mxu0
        %v7202 = vadd.f32 %v6685, %v7201
        %v7203 = vpop.f32.mrb[0].mxu0
        %v7204 = vpop.f32.mrb[0].mxu0
        %v7205 = vadd.f32 %v6685, %v7204
        %v7206 = vpop.f32.mrb[0].mxu0
        %7207 = vmatprep.mubr.bf16.mxu0 %v6456
        %7208 = vmatmul.mubr.bf16.gmra.mrb[0].mxu0 %v6455
        %v7209 = vpop.f32.mrb[0].mxu0
        %v7210 = vadd.f32 %v6685, %v7209
        %v7211 = vpop.f32.mrb[0].mxu0
        %v7212 = vpop.f32.mrb[0].mxu0
        %v7213 = vadd.f32 %v6685, %v7212
        %v7214 = vpop.f32.mrb[0].mxu0
        %7215 = vmatprep.mubr.bf16.mxu0 %v6465
        %7216 = vmatmul.mubr.bf16.gmra.mrb[0].mxu0 %v6464
        %v7217 = vpop.f32.mrb[0].mxu0
        %v7218 = vadd.f32 %v6685, %v7217
        %v7219 = vpop.f32.mrb[0].mxu0
        %v7220 = vpop.f32.mrb[0].mxu0
        %v7221 = vadd.f32 %v6685, %v7220
        %v7222 = vpop.f32.mrb[0].mxu0
        %7223 = vmatprep.mubr.bf16.mxu0 %v6474
        %7224 = vmatmul.mubr.bf16.gmra.mrb[0].mxu0 %v6473
        %v7225 = vpop.f32.mrb[0].mxu0
        %v7226 = vadd.f32 %v6685, %v7225
        %v7227 = vpop.f32.mrb[0].mxu0
        %v7228 = vpop.f32.mrb[0].mxu0
        %v7229 = vadd.f32 %v6685, %v7228
        %v7230 = vpop.f32.mrb[0].mxu0
        %7231 = vmatprep.mubr.bf16.mxu0 %v6483
        %7232 = vmatmul.mubr.bf16.gmra.mrb[0].mxu0 %v6482
        %v7233 = vpop.f32.mrb[0].mxu0
        %v7234 = vadd.f32 %v6685, %v7233
        %v7235 = vpop.f32.mrb[0].mxu0
        %v7236 = vpop.f32.mrb[0].mxu0
        %v7237 = vadd.f32 %v6685, %v7236
        %v7238 = vpop.f32.mrb[0].mxu0
        %7239 = vmatprep.mubr.bf16.mxu0 %v6492
        %7240 = vmatmul.mubr.bf16.gmra.mrb[0].mxu0 %v6491
        %v7241 = vpop.f32.mrb[0].mxu0
        %v7242 = vadd.f32 %v6685, %v7241
        %v7243 = vpop.f32.mrb[0].mxu0
        %v7244 = vpop.f32.mrb[0].mxu0
        %v7245 = vadd.f32 %v6685, %v7244
        %v7246 = vpop.f32.mrb[0].mxu0
        %7247 = vmatprep.mubr.bf16.mxu0 %v6501
        %7248 = vmatmul.mubr.bf16.gmra.mrb[0].mxu0 %v6500
        %v7249 = vpop.f32.mrb[0].mxu0
        %v7250 = vadd.f32 %v6685, %v7249
        %v7251 = vpop.f32.mrb[0].mxu0
        %v7252 = vpop.f32.mrb[0].mxu0
        %v7253 = vadd.f32 %v6685, %v7252
        %v7254 = vpop.f32.mrb[0].mxu0
        %7255 = vmatprep.mubr.bf16.mxu0 %v6510
        %7256 = vmatmul.mubr.bf16.gmra.mrb[0].mxu0 %v6509
        %v7257 = vpop.f32.mrb[0].mxu0
        %v7258 = vadd.f32 %v6685, %v7257
        %v7259 = vpop.f32.mrb[0].mxu0
        %v7260 = vpop.f32.mrb[0].mxu0
        %v7261 = vadd.f32 %v6685, %v7260
        %v7262 = vpop.f32.mrb[0].mxu0
        %7263 = vmatprep.mubr.bf16.mxu0 %v6519
        %7264 = vmatmul.mubr.bf16.gmra.mrb[0].mxu0 %v6518
        %v7265 = vpop.f32.mrb[0].mxu0
        %v7266 = vadd.f32 %v6685, %v7265
        %v7267 = vpop.f32.mrb[0].mxu0
        %v7268 = vpop.f32.mrb[0].mxu0
        %v7269 = vadd.f32 %v6685, %v7268
        %v7270 = vpop.f32.mrb[0].mxu0
        %7271 = vmatprep.mubr.bf16.mxu0 %v6528
        %7272 = vmatmul.mubr.bf16.gmra.mrb[0].mxu0 %v6527
        %v7273 = vpop.f32.mrb[0].mxu0
        %v7274 = vadd.f32 %v6685, %v7273
        %v7275 = vpop.f32.mrb[0].mxu0
        %v7276 = vpop.f32.mrb[0].mxu0
        %v7277 = vadd.f32 %v6685, %v7276
        %v7278 = vpop.f32.mrb[0].mxu0
        %7279 = vdwg.mxu0
        %7280 = vmatprep.subr.bf16.mxu0 0
        %7281 = vmatpush1.bf16.msra.mxu0 %v6991
        %7282 = vmatprep.subr.bf16.mxu0 0
        %7283 = vmatpush1.bf16.msra.mxu0 %v6992
        %7284 = vmatprep.subr.bf16.mxu0 0
        %7285 = vmatpush1.bf16.msra.mxu0 %v6993
        %7286 = vmatprep.subr.bf16.mxu0 0
        %7287 = vmatpush1.bf16.msra.mxu0 %v6994
        %7288 = vmatprep.subr.bf16.mxu0 0
        %7289 = vmatpush1.bf16.msra.mxu0 %v6995
        %7290 = vmatprep.subr.bf16.mxu0 0
        %7291 = vmatpush1.bf16.msra.mxu0 %v6996
        %7292 = vmatprep.subr.bf16.mxu0 0
        %7293 = vmatpush1.bf16.msra.mxu0 %v6997
        %7294 = vmatprep.subr.bf16.mxu0 0
        %7295 = vmatpush1.bf16.msra.mxu0 %v6998
        %7296 = vmatprep.subr.bf16.mxu0 0
        %7297 = vmatpush1.bf16.msra.mxu0 %v6999
        %7298 = vmatprep.subr.bf16.mxu0 0
        %7299 = vmatpush1.bf16.msra.mxu0 %v7000
        %7300 = vmatprep.subr.bf16.mxu0 0
        %7301 = vmatpush1.bf16.msra.mxu0 %v7001
        %7302 = vmatprep.subr.bf16.mxu0 0
        %7303 = vmatpush1.bf16.msra.mxu0 %v7002
        %7304 = vmatprep.subr.bf16.mxu0 0
        %7305 = vmatpush1.bf16.msra.mxu0 %v7003
        %7306 = vmatprep.subr.bf16.mxu0 0
        %7307 = vmatpush1.bf16.msra.mxu0 %v7004
        %7308 = vmatprep.subr.bf16.mxu0 0
        %7309 = vmatpush1.bf16.msra.mxu0 %v7005
        %7310 = vmatprep.subr.bf16.mxu0 0
        %7311 = vmatpush1.bf16.msra.mxu0 %v7006
        %7312 = vmatprep.mubr.bf16.mxu0 %v6395
        %7313 = vmatmul.mubr.bf16.gmra.mrb[0].mxu0 %v6394
        %v7314 = vpop.f32.mrb[0].mxu0
        %v7315 = vadd.f32 %v7154, %v7314
        %v7316 = vpop.f32.mrb[0].mxu0
        %v7317 = vpop.f32.mrb[0].mxu0
        %v7318 = vadd.f32 %v7157, %v7317
        %v7319 = vpop.f32.mrb[0].mxu0
        %7320 = vmatprep.mubr.bf16.mxu0 %v6404
        %7321 = vmatmul.mubr.bf16.gmra.mrb[0].mxu0 %v6403
        %v7322 = vpop.f32.mrb[0].mxu0
        %v7323 = vadd.f32 %v7162, %v7322
        %v7324 = vpop.f32.mrb[0].mxu0
        %v7325 = vpop.f32.mrb[0].mxu0
        %v7326 = vadd.f32 %v7165, %v7325
        %v7327 = vpop.f32.mrb[0].mxu0
        %7328 = vmatprep.mubr.bf16.mxu0 %v6413
        %7329 = vmatmul.mubr.bf16.gmra.mrb[0].mxu0 %v6412
        %v7330 = vpop.f32.mrb[0].mxu0
        %v7331 = vadd.f32 %v7170, %v7330
        %v7332 = vpop.f32.mrb[0].mxu0
        %v7333 = vpop.f32.mrb[0].mxu0
        %v7334 = vadd.f32 %v7173, %v7333
        %v7335 = vpop.f32.mrb[0].mxu0
        %7336 = vmatprep.mubr.bf16.mxu0 %v6422
        %7337 = vmatmul.mubr.bf16.gmra.mrb[0].mxu0 %v6421
        %v7338 = vpop.f32.mrb[0].mxu0
        %v7339 = vadd.f32 %v7178, %v7338
        %v7340 = vpop.f32.mrb[0].mxu0
        %v7341 = vpop.f32.mrb[0].mxu0
        %v7342 = vadd.f32 %v7181, %v7341
        %v7343 = vpop.f32.mrb[0].mxu0
        %7344 = vmatprep.mubr.bf16.mxu0 %v6431
        %7345 = vmatmul.mubr.bf16.gmra.mrb[0].mxu0 %v6430
        %v7346 = vpop.f32.mrb[0].mxu0
        %v7347 = vadd.f32 %v7186, %v7346
        %v7348 = vpop.f32.mrb[0].mxu0
        %v7349 = vpop.f32.mrb[0].mxu0
        %v7350 = vadd.f32 %v7189, %v7349
        %v7351 = vpop.f32.mrb[0].mxu0
        %7352 = vmatprep.mubr.bf16.mxu0 %v6440
        %7353 = vmatmul.mubr.bf16.gmra.mrb[0].mxu0 %v6439
        %v7354 = vpop.f32.mrb[0].mxu0
        %v7355 = vadd.f32 %v7194, %v7354
        %v7356 = vpop.f32.mrb[0].mxu0
        %v7357 = vpop.f32.mrb[0].mxu0
        %v7358 = vadd.f32 %v7197, %v7357
        %v7359 = vpop.f32.mrb[0].mxu0
        %7360 = vmatprep.mubr.bf16.mxu0 %v6449
        %7361 = vmatmul.mubr.bf16.gmra.mrb[0].mxu0 %v6448
        %v7362 = vpop.f32.mrb[0].mxu0
        %v7363 = vadd.f32 %v7202, %v7362
        %v7364 = vpop.f32.mrb[0].mxu0
        %v7365 = vpop.f32.mrb[0].mxu0
        %v7366 = vadd.f32 %v7205, %v7365
        %v7367 = vpop.f32.mrb[0].mxu0
        %7368 = vmatprep.mubr.bf16.mxu0 %v6458
        %7369 = vmatmul.mubr.bf16.gmra.mrb[0].mxu0 %v6457
        %v7370 = vpop.f32.mrb[0].mxu0
        %v7371 = vadd.f32 %v7210, %v7370
        %v7372 = vpop.f32.mrb[0].mxu0
        %v7373 = vpop.f32.mrb[0].mxu0
        %v7374 = vadd.f32 %v7213, %v7373
        %v7375 = vpop.f32.mrb[0].mxu0
        %7376 = vmatprep.mubr.bf16.mxu0 %v6467
        %7377 = vmatmul.mubr.bf16.gmra.mrb[0].mxu0 %v6466
        %v7378 = vpop.f32.mrb[0].mxu0
        %v7379 = vadd.f32 %v7218, %v7378
        %v7380 = vpop.f32.mrb[0].mxu0
        %v7381 = vpop.f32.mrb[0].mxu0
        %v7382 = vadd.f32 %v7221, %v7381
        %v7383 = vpop.f32.mrb[0].mxu0
        %7384 = vmatprep.mubr.bf16.mxu0 %v6476
        %7385 = vmatmul.mubr.bf16.gmra.mrb[0].mxu0 %v6475
        %v7386 = vpop.f32.mrb[0].mxu0
        %v7387 = vadd.f32 %v7226, %v7386
        %v7388 = vpop.f32.mrb[0].mxu0
        %v7389 = vpop.f32.mrb[0].mxu0
        %v7390 = vadd.f32 %v7229, %v7389
        %v7391 = vpop.f32.mrb[0].mxu0
        %7392 = vmatprep.mubr.bf16.mxu0 %v6485
        %7393 = vmatmul.mubr.bf16.gmra.mrb[0].mxu0 %v6484
        %v7394 = vpop.f32.mrb[0].mxu0
        %v7395 = vadd.f32 %v7234, %v7394
        %v7396 = vpop.f32.mrb[0].mxu0
        %v7397 = vpop.f32.mrb[0].mxu0
        %v7398 = vadd.f32 %v7237, %v7397
        %v7399 = vpop.f32.mrb[0].mxu0
        %7400 = vmatprep.mubr.bf16.mxu0 %v6494
        %7401 = vmatmul.mubr.bf16.gmra.mrb[0].mxu0 %v6493
        %v7402 = vpop.f32.mrb[0].mxu0
        %v7403 = vadd.f32 %v7242, %v7402
        %v7404 = vpop.f32.mrb[0].mxu0
        %v7405 = vpop.f32.mrb[0].mxu0
        %v7406 = vadd.f32 %v7245, %v7405
        %v7407 = vpop.f32.mrb[0].mxu0
        %7408 = vmatprep.mubr.bf16.mxu0 %v6503
        %7409 = vmatmul.mubr.bf16.gmra.mrb[0].mxu0 %v6502
        %v7410 = vpop.f32.mrb[0].mxu0
        %v7411 = vadd.f32 %v7250, %v7410
        %v7412 = vpop.f32.mrb[0].mxu0
        %v7413 = vpop.f32.mrb[0].mxu0
        %v7414 = vadd.f32 %v7253, %v7413
        %v7415 = vpop.f32.mrb[0].mxu0
        %7416 = vmatprep.mubr.bf16.mxu0 %v6512
        %7417 = vmatmul.mubr.bf16.gmra.mrb[0].mxu0 %v6511
        %v7418 = vpop.f32.mrb[0].mxu0
        %v7419 = vadd.f32 %v7258, %v7418
        %v7420 = vpop.f32.mrb[0].mxu0
        %v7421 = vpop.f32.mrb[0].mxu0
        %v7422 = vadd.f32 %v7261, %v7421
        %v7423 = vpop.f32.mrb[0].mxu0
        %7424 = vmatprep.mubr.bf16.mxu0 %v6521
        %7425 = vmatmul.mubr.bf16.gmra.mrb[0].mxu0 %v6520
        %v7426 = vpop.f32.mrb[0].mxu0
        %v7427 = vadd.f32 %v7266, %v7426
        %v7428 = vpop.f32.mrb[0].mxu0
        %v7429 = vpop.f32.mrb[0].mxu0
        %v7430 = vadd.f32 %v7269, %v7429
        %v7431 = vpop.f32.mrb[0].mxu0
        %7432 = vmatprep.mubr.bf16.mxu0 %v6530
        %7433 = vmatmul.mubr.bf16.gmra.mrb[0].mxu0 %v6529
        %v7434 = vpop.f32.mrb[0].mxu0
        %v7435 = vadd.f32 %v7274, %v7434
        %v7436 = vpop.f32.mrb[0].mxu0
        %v7437 = vpop.f32.mrb[0].mxu0
        %v7438 = vadd.f32 %v7277, %v7437
        %v7439 = vpop.f32.mrb[0].mxu0
        %7440 = vdwg.mxu0
        %7441 = vmatprep.subr.bf16.mxu0 0
        %7442 = vmatpush1.bf16.msra.mxu0 %v7007
        %7443 = vmatprep.subr.bf16.mxu0 0
        %7444 = vmatpush1.bf16.msra.mxu0 %v7008
        %7445 = vmatprep.subr.bf16.mxu0 0
        %7446 = vmatpush1.bf16.msra.mxu0 %v7009
        %7447 = vmatprep.subr.bf16.mxu0 0
        %7448 = vmatpush1.bf16.msra.mxu0 %v7010
        %7449 = vmatprep.subr.bf16.mxu0 0
        %7450 = vmatpush1.bf16.msra.mxu0 %v7011
        %7451 = vmatprep.subr.bf16.mxu0 0
        %7452 = vmatpush1.bf16.msra.mxu0 %v7012
        %7453 = vmatprep.subr.bf16.mxu0 0
        %7454 = vmatpush1.bf16.msra.mxu0 %v7013
        %7455 = vmatprep.subr.bf16.mxu0 0
        %7456 = vmatpush1.bf16.msra.mxu0 %v7014
        %7457 = vmatprep.subr.bf16.mxu0 0
        %7458 = vmatpush1.bf16.msra.mxu0 %v7015
        %7459 = vmatprep.subr.bf16.mxu0 0
        %7460 = vmatpush1.bf16.msra.mxu0 %v7016
        %7461 = vmatprep.subr.bf16.mxu0 0
        %7462 = vmatpush1.bf16.msra.mxu0 %v7017
        %7463 = vmatprep.subr.bf16.mxu0 0
        %7464 = vmatpush1.bf16.msra.mxu0 %v7018
        %7465 = vmatprep.subr.bf16.mxu0 0
        %7466 = vmatpush1.bf16.msra.mxu0 %v7019
        %7467 = vmatprep.subr.bf16.mxu0 0
        %7468 = vmatpush1.bf16.msra.mxu0 %v7020
        %7469 = vmatprep.subr.bf16.mxu0 0
        %7470 = vmatpush1.bf16.msra.mxu0 %v7021
        %7471 = vmatprep.subr.bf16.mxu0 0
        %7472 = vmatpush1.bf16.msra.mxu0 %v7022
        %7473 = vmatprep.mubr.bf16.mxu0 %v6397
        %7474 = vmatmul.mubr.bf16.gmra.mrb[0].mxu0 %v6396
        %v7475 = vpop.f32.mrb[0].mxu0
        %v7476 = vadd.f32 %v7315, %v7475
        %v7477 = vpop.f32.mrb[0].mxu0
        %v7478 = vpop.f32.mrb[0].mxu0
        %v7479 = vadd.f32 %v7318, %v7478
        %v7480 = vpop.f32.mrb[0].mxu0
        %7481 = vmatprep.mubr.bf16.mxu0 %v6406
        %7482 = vmatmul.mubr.bf16.gmra.mrb[0].mxu0 %v6405
        %v7483 = vpop.f32.mrb[0].mxu0
        %v7484 = vadd.f32 %v7323, %v7483
        %v7485 = vpop.f32.mrb[0].mxu0
        %v7486 = vpop.f32.mrb[0].mxu0
        %v7487 = vadd.f32 %v7326, %v7486
        %v7488 = vpop.f32.mrb[0].mxu0
        %7489 = vmatprep.mubr.bf16.mxu0 %v6415
        %7490 = vmatmul.mubr.bf16.gmra.mrb[0].mxu0 %v6414
        %v7491 = vpop.f32.mrb[0].mxu0
        %v7492 = vadd.f32 %v7331, %v7491
        %v7493 = vpop.f32.mrb[0].mxu0
        %v7494 = vpop.f32.mrb[0].mxu0
        %v7495 = vadd.f32 %v7334, %v7494
        %v7496 = vpop.f32.mrb[0].mxu0
        %7497 = vmatprep.mubr.bf16.mxu0 %v6424
        %7498 = vmatmul.mubr.bf16.gmra.mrb[0].mxu0 %v6423
        %v7499 = vpop.f32.mrb[0].mxu0
        %v7500 = vadd.f32 %v7339, %v7499
        %v7501 = vpop.f32.mrb[0].mxu0
        %v7502 = vpop.f32.mrb[0].mxu0
        %v7503 = vadd.f32 %v7342, %v7502
        %v7504 = vpop.f32.mrb[0].mxu0
        %7505 = vmatprep.mubr.bf16.mxu0 %v6433
        %7506 = vmatmul.mubr.bf16.gmra.mrb[0].mxu0 %v6432
        %v7507 = vpop.f32.mrb[0].mxu0
        %v7508 = vadd.f32 %v7347, %v7507
        %v7509 = vpop.f32.mrb[0].mxu0
        %v7510 = vpop.f32.mrb[0].mxu0
        %v7511 = vadd.f32 %v7350, %v7510
        %v7512 = vpop.f32.mrb[0].mxu0
        %7513 = vmatprep.mubr.bf16.mxu0 %v6442
        %7514 = vmatmul.mubr.bf16.gmra.mrb[0].mxu0 %v6441
        %v7515 = vpop.f32.mrb[0].mxu0
        %v7516 = vadd.f32 %v7355, %v7515
        %v7517 = vpop.f32.mrb[0].mxu0
        %v7518 = vpop.f32.mrb[0].mxu0
        %v7519 = vadd.f32 %v7358, %v7518
        %v7520 = vpop.f32.mrb[0].mxu0
        %7521 = vmatprep.mubr.bf16.mxu0 %v6451
        %7522 = vmatmul.mubr.bf16.gmra.mrb[0].mxu0 %v6450
        %v7523 = vpop.f32.mrb[0].mxu0
        %v7524 = vadd.f32 %v7363, %v7523
        %v7525 = vpop.f32.mrb[0].mxu0
        %v7526 = vpop.f32.mrb[0].mxu0
        %v7527 = vadd.f32 %v7366, %v7526
        %v7528 = vpop.f32.mrb[0].mxu0
        %7529 = vmatprep.mubr.bf16.mxu0 %v6460
        %7530 = vmatmul.mubr.bf16.gmra.mrb[0].mxu0 %v6459
        %v7531 = vpop.f32.mrb[0].mxu0
        %v7532 = vadd.f32 %v7371, %v7531
        %v7533 = vpop.f32.mrb[0].mxu0
        %v7534 = vpop.f32.mrb[0].mxu0
        %v7535 = vadd.f32 %v7374, %v7534
        %v7536 = vpop.f32.mrb[0].mxu0
        %7537 = vmatprep.mubr.bf16.mxu0 %v6469
        %7538 = vmatmul.mubr.bf16.gmra.mrb[0].mxu0 %v6468
        %v7539 = vpop.f32.mrb[0].mxu0
        %v7540 = vadd.f32 %v7379, %v7539
        %v7541 = vpop.f32.mrb[0].mxu0
        %v7542 = vpop.f32.mrb[0].mxu0
        %v7543 = vadd.f32 %v7382, %v7542
        %v7544 = vpop.f32.mrb[0].mxu0
        %7545 = vmatprep.mubr.bf16.mxu0 %v6478
        %7546 = vmatmul.mubr.bf16.gmra.mrb[0].mxu0 %v6477
        %v7547 = vpop.f32.mrb[0].mxu0
        %v7548 = vadd.f32 %v7387, %v7547
        %v7549 = vpop.f32.mrb[0].mxu0
        %v7550 = vpop.f32.mrb[0].mxu0
        %v7551 = vadd.f32 %v7390, %v7550
        %v7552 = vpop.f32.mrb[0].mxu0
        %7553 = vmatprep.mubr.bf16.mxu0 %v6487
        %7554 = vmatmul.mubr.bf16.gmra.mrb[0].mxu0 %v6486
        %v7555 = vpop.f32.mrb[0].mxu0
        %v7556 = vadd.f32 %v7395, %v7555
        %v7557 = vpop.f32.mrb[0].mxu0
        %v7558 = vpop.f32.mrb[0].mxu0
        %v7559 = vadd.f32 %v7398, %v7558
        %v7560 = vpop.f32.mrb[0].mxu0
        %7561 = vmatprep.mubr.bf16.mxu0 %v6496
        %7562 = vmatmul.mubr.bf16.gmra.mrb[0].mxu0 %v6495
        %v7563 = vpop.f32.mrb[0].mxu0
        %v7564 = vadd.f32 %v7403, %v7563
        %v7565 = vpop.f32.mrb[0].mxu0
        %v7566 = vpop.f32.mrb[0].mxu0
        %v7567 = vadd.f32 %v7406, %v7566
        %v7568 = vpop.f32.mrb[0].mxu0
        %7569 = vmatprep.mubr.bf16.mxu0 %v6505
        %7570 = vmatmul.mubr.bf16.gmra.mrb[0].mxu0 %v6504
        %v7571 = vpop.f32.mrb[0].mxu0
        %v7572 = vadd.f32 %v7411, %v7571
        %v7573 = vpop.f32.mrb[0].mxu0
        %v7574 = vpop.f32.mrb[0].mxu0
        %v7575 = vadd.f32 %v7414, %v7574
        %v7576 = vpop.f32.mrb[0].mxu0
        %7577 = vmatprep.mubr.bf16.mxu0 %v6514
        %7578 = vmatmul.mubr.bf16.gmra.mrb[0].mxu0 %v6513
        %v7579 = vpop.f32.mrb[0].mxu0
        %v7580 = vadd.f32 %v7419, %v7579
        %v7581 = vpop.f32.mrb[0].mxu0
        %v7582 = vpop.f32.mrb[0].mxu0
        %v7583 = vadd.f32 %v7422, %v7582
        %v7584 = vpop.f32.mrb[0].mxu0
        %7585 = vmatprep.mubr.bf16.mxu0 %v6523
        %7586 = vmatmul.mubr.bf16.gmra.mrb[0].mxu0 %v6522
        %v7587 = vpop.f32.mrb[0].mxu0
        %v7588 = vadd.f32 %v7427, %v7587
        %v7589 = vpop.f32.mrb[0].mxu0
        %v7590 = vpop.f32.mrb[0].mxu0
        %v7591 = vadd.f32 %v7430, %v7590
        %v7592 = vpop.f32.mrb[0].mxu0
        %7593 = vmatprep.mubr.bf16.mxu0 %v6532
        %7594 = vmatmul.mubr.bf16.gmra.mrb[0].mxu0 %v6531
        %v7595 = vpop.f32.mrb[0].mxu0
        %v7596 = vadd.f32 %v7435, %v7595
        %v7597 = vpop.f32.mrb[0].mxu0
        %v7598 = vpop.f32.mrb[0].mxu0
        %v7599 = vadd.f32 %v7438, %v7598
        %v7600 = vpop.f32.mrb[0].mxu0
        %7601 = vdwg.mxu0
        %7602 = vmatprep.subr.bf16.mxu0 0
        %7603 = vmatpush1.bf16.msra.mxu0 %v7023
        %7604 = vmatprep.subr.bf16.mxu0 0
        %7605 = vmatpush1.bf16.msra.mxu0 %v7024
        %7606 = vmatprep.subr.bf16.mxu0 0
        %7607 = vmatpush1.bf16.msra.mxu0 %v7025
        %7608 = vmatprep.subr.bf16.mxu0 0
        %7609 = vmatpush1.bf16.msra.mxu0 %v7026
        %7610 = vmatprep.subr.bf16.mxu0 0
        %7611 = vmatpush1.bf16.msra.mxu0 %v7027
        %7612 = vmatprep.subr.bf16.mxu0 0
        %7613 = vmatpush1.bf16.msra.mxu0 %v7028
        %7614 = vmatprep.subr.bf16.mxu0 0
        %7615 = vmatpush1.bf16.msra.mxu0 %v7029
        %7616 = vmatprep.subr.bf16.mxu0 0
        %7617 = vmatpush1.bf16.msra.mxu0 %v7030
        %7618 = vmatprep.subr.bf16.mxu0 0
        %7619 = vmatpush1.bf16.msra.mxu0 %v7031
        %7620 = vmatprep.subr.bf16.mxu0 0
        %7621 = vmatpush1.bf16.msra.mxu0 %v7032
        %7622 = vmatprep.subr.bf16.mxu0 0
        %7623 = vmatpush1.bf16.msra.mxu0 %v7033
        %7624 = vmatprep.subr.bf16.mxu0 0
        %7625 = vmatpush1.bf16.msra.mxu0 %v7034
        %7626 = vmatprep.subr.bf16.mxu0 0
        %7627 = vmatpush1.bf16.msra.mxu0 %v7035
        %7628 = vmatprep.subr.bf16.mxu0 0
        %7629 = vmatpush1.bf16.msra.mxu0 %v7036
        %7630 = vmatprep.subr.bf16.mxu0 0
        %7631 = vmatpush1.bf16.msra.mxu0 %v7037
        %7632 = vmatprep.subr.bf16.mxu0 0
        %7633 = vmatpush1.bf16.msra.mxu0 %v7038
        %7634 = vmatprep.mubr.bf16.mxu0 %v6399
        %7635 = vmatmul.mubr.bf16.gmra.mrb[0].mxu0 %v6398
        %v7636 = vpop.f32.mrb[0].mxu0
        %v7637 = vadd.f32 %v7476, %v7636
        %v7638 = vpop.f32.mrb[0].mxu0
        %v7639 = vpop.f32.mrb[0].mxu0
        %v7640 = vadd.f32 %v7479, %v7639
        %v7641 = vpop.f32.mrb[0].mxu0
        %7642 = vmatprep.mubr.bf16.mxu0 %v6408
        %7643 = vmatmul.mubr.bf16.gmra.mrb[0].mxu0 %v6407
        %v7644 = vpop.f32.mrb[0].mxu0
        %v7645 = vadd.f32 %v7484, %v7644
        %v7646 = vpop.f32.mrb[0].mxu0
        %v7647 = vpop.f32.mrb[0].mxu0
        %v7648 = vadd.f32 %v7487, %v7647
        %v7649 = vpop.f32.mrb[0].mxu0
        %7650 = vmatprep.mubr.bf16.mxu0 %v6417
        %7651 = vmatmul.mubr.bf16.gmra.mrb[0].mxu0 %v6416
        %v7652 = vpop.f32.mrb[0].mxu0
        %v7653 = vadd.f32 %v7492, %v7652
        %v7654 = vpop.f32.mrb[0].mxu0
        %v7655 = vpop.f32.mrb[0].mxu0
        %v7656 = vadd.f32 %v7495, %v7655
        %v7657 = vpop.f32.mrb[0].mxu0
        %7658 = vmatprep.mubr.bf16.mxu0 %v6426
        %7659 = vmatmul.mubr.bf16.gmra.mrb[0].mxu0 %v6425
        %v7660 = vpop.f32.mrb[0].mxu0
        %v7661 = vadd.f32 %v7500, %v7660
        %v7662 = vpop.f32.mrb[0].mxu0
        %v7663 = vpop.f32.mrb[0].mxu0
        %v7664 = vadd.f32 %v7503, %v7663
        %v7665 = vpop.f32.mrb[0].mxu0
        %7666 = vmatprep.mubr.bf16.mxu0 %v6435
        %7667 = vmatmul.mubr.bf16.gmra.mrb[0].mxu0 %v6434
        %v7668 = vpop.f32.mrb[0].mxu0
        %v7669 = vadd.f32 %v7508, %v7668
        %v7670 = vpop.f32.mrb[0].mxu0
        %v7671 = vpop.f32.mrb[0].mxu0
        %v7672 = vadd.f32 %v7511, %v7671
        %v7673 = vpop.f32.mrb[0].mxu0
        %7674 = vmatprep.mubr.bf16.mxu0 %v6444
        %7675 = vmatmul.mubr.bf16.gmra.mrb[0].mxu0 %v6443
        %v7676 = vpop.f32.mrb[0].mxu0
        %v7677 = vadd.f32 %v7516, %v7676
        %v7678 = vpop.f32.mrb[0].mxu0
        %v7679 = vpop.f32.mrb[0].mxu0
        %v7680 = vadd.f32 %v7519, %v7679
        %v7681 = vpop.f32.mrb[0].mxu0
        %7682 = vmatprep.mubr.bf16.mxu0 %v6453
        %7683 = vmatmul.mubr.bf16.gmra.mrb[0].mxu0 %v6452
        %v7684 = vpop.f32.mrb[0].mxu0
        %v7685 = vadd.f32 %v7524, %v7684
        %v7686 = vpop.f32.mrb[0].mxu0
        %v7687 = vpop.f32.mrb[0].mxu0
        %v7688 = vadd.f32 %v7527, %v7687
        %v7689 = vpop.f32.mrb[0].mxu0
        %7690 = vmatprep.mubr.bf16.mxu0 %v6462
        %7691 = vmatmul.mubr.bf16.gmra.mrb[0].mxu0 %v6461
        %v7692 = vpop.f32.mrb[0].mxu0
        %v7693 = vadd.f32 %v7532, %v7692
        %v7694 = vpop.f32.mrb[0].mxu0
        %v7695 = vpop.f32.mrb[0].mxu0
        %v7696 = vadd.f32 %v7535, %v7695
        %v7697 = vpop.f32.mrb[0].mxu0
        %7698 = vmatprep.mubr.bf16.mxu0 %v6471
        %7699 = vmatmul.mubr.bf16.gmra.mrb[0].mxu0 %v6470
        %v7700 = vpop.f32.mrb[0].mxu0
        %v7701 = vadd.f32 %v7540, %v7700
        %v7702 = vpop.f32.mrb[0].mxu0
        %v7703 = vpop.f32.mrb[0].mxu0
        %v7704 = vadd.f32 %v7543, %v7703
        %v7705 = vpop.f32.mrb[0].mxu0
        %7706 = vmatprep.mubr.bf16.mxu0 %v6480
        %7707 = vmatmul.mubr.bf16.gmra.mrb[0].mxu0 %v6479
        %v7708 = vpop.f32.mrb[0].mxu0
        %v7709 = vadd.f32 %v7548, %v7708
        %v7710 = vpop.f32.mrb[0].mxu0
        %v7711 = vpop.f32.mrb[0].mxu0
        %v7712 = vadd.f32 %v7551, %v7711
        %v7713 = vpop.f32.mrb[0].mxu0
        %7714 = vmatprep.mubr.bf16.mxu0 %v6489
        %7715 = vmatmul.mubr.bf16.gmra.mrb[0].mxu0 %v6488
        %v7716 = vpop.f32.mrb[0].mxu0
        %v7717 = vadd.f32 %v7556, %v7716
        %v7718 = vpop.f32.mrb[0].mxu0
        %v7719 = vpop.f32.mrb[0].mxu0
        %v7720 = vadd.f32 %v7559, %v7719
        %v7721 = vpop.f32.mrb[0].mxu0
        %7722 = vmatprep.mubr.bf16.mxu0 %v6498
        %7723 = vmatmul.mubr.bf16.gmra.mrb[0].mxu0 %v6497
        %v7724 = vpop.f32.mrb[0].mxu0
        %v7725 = vadd.f32 %v7564, %v7724
        %v7726 = vpop.f32.mrb[0].mxu0
        %v7727 = vpop.f32.mrb[0].mxu0
        %v7728 = vadd.f32 %v7567, %v7727
        %v7729 = vpop.f32.mrb[0].mxu0
        %7730 = vmatprep.mubr.bf16.mxu0 %v6507
        %7731 = vmatmul.mubr.bf16.gmra.mrb[0].mxu0 %v6506
        %v7732 = vpop.f32.mrb[0].mxu0
        %v7733 = vadd.f32 %v7572, %v7732
        %v7734 = vpop.f32.mrb[0].mxu0
        %v7735 = vpop.f32.mrb[0].mxu0
        %v7736 = vadd.f32 %v7575, %v7735
        %v7737 = vpop.f32.mrb[0].mxu0
        %7738 = vmatprep.mubr.bf16.mxu0 %v6516
        %7739 = vmatmul.mubr.bf16.gmra.mrb[0].mxu0 %v6515
        %v7740 = vpop.f32.mrb[0].mxu0
        %v7741 = vadd.f32 %v7580, %v7740
        %v7742 = vpop.f32.mrb[0].mxu0
        %v7743 = vpop.f32.mrb[0].mxu0
        %v7744 = vadd.f32 %v7583, %v7743
        %v7745 = vpop.f32.mrb[0].mxu0
        %7746 = vmatprep.mubr.bf16.mxu0 %v6525
        %7747 = vmatmul.mubr.bf16.gmra.mrb[0].mxu0 %v6524
        %v7748 = vpop.f32.mrb[0].mxu0
        %v7749 = vadd.f32 %v7588, %v7748
        %v7750 = vpop.f32.mrb[0].mxu0
        %v7751 = vpop.f32.mrb[0].mxu0
        %v7752 = vadd.f32 %v7591, %v7751
        %v7753 = vpop.f32.mrb[0].mxu0
        %7754 = vmatprep.mubr.bf16.mxu0 %v6534
        %7755 = vmatmul.mubr.bf16.gmra.mrb[0].mxu0 %v6533
        %v7756 = vpop.f32.mrb[0].mxu0
        %v7757 = vadd.f32 %v7596, %v7756
        %v7758 = vpop.f32.mrb[0].mxu0
        %v7759 = vpop.f32.mrb[0].mxu0
        %v7760 = vadd.f32 %v7599, %v7759
        %v7761 = vpop.f32.mrb[0].mxu0
        %7762 = vdwg.mxu0
        %7763 = vmatprep.subr.bf16.mxu0 0
        %7764 = vmatpush1.bf16.msra.mxu0 %v7039
        %7765 = vmatprep.subr.bf16.mxu0 0
        %7766 = vmatpush1.bf16.msra.mxu0 %v7040
        %7767 = vmatprep.subr.bf16.mxu0 0
        %7768 = vmatpush1.bf16.msra.mxu0 %v7041
        %7769 = vmatprep.subr.bf16.mxu0 0
        %7770 = vmatpush1.bf16.msra.mxu0 %v7042
        %7771 = vmatprep.subr.bf16.mxu0 0
        %7772 = vmatpush1.bf16.msra.mxu0 %v7043
        %7773 = vmatprep.subr.bf16.mxu0 0
        %7774 = vmatpush1.bf16.msra.mxu0 %v7044
        %7775 = vmatprep.subr.bf16.mxu0 0
        %7776 = vmatpush1.bf16.msra.mxu0 %v7045
        %7777 = vmatprep.subr.bf16.mxu0 0
        %7778 = vmatpush1.bf16.msra.mxu0 %v7046
        %7779 = vmatprep.subr.bf16.mxu0 0
        %7780 = vmatpush1.bf16.msra.mxu0 0
        %7781 = vmatprep.subr.bf16.mxu0 0
        %7782 = vmatpush1.bf16.msra.mxu0 0
        %7783 = vmatprep.subr.bf16.mxu0 0
        %7784 = vmatpush1.bf16.msra.mxu0 0
        %7785 = vmatprep.subr.bf16.mxu0 0
        %7786 = vmatpush1.bf16.msra.mxu0 0
        %7787 = vmatprep.subr.bf16.mxu0 0
        %7788 = vmatpush1.bf16.msra.mxu0 0
        %7789 = vmatprep.subr.bf16.mxu0 0
        %7790 = vmatpush1.bf16.msra.mxu0 0
        %7791 = vmatprep.subr.bf16.mxu0 0
        %7792 = vmatpush1.bf16.msra.mxu0 0
        %7793 = vmatprep.subr.bf16.mxu0 0
        %7794 = vmatpush1.bf16.msra.mxu0 0
        %7795 = vmatprep.mubr.bf16.mxu0 0
        %7796 = vmatmul.mubr.bf16.gmra.mrb[0].mxu0 %v6400
        %v7797 = vpop.f32.mrb[0].mxu0
        %v7798 = vadd.f32 %v7637, %v7797
        %v7799 = vpop.f32.mrb[0].mxu0
        %v7800 = vpop.f32.mrb[0].mxu0
        %v7801 = vadd.f32 %v7640, %v7800
        %v7802 = vpop.f32.mrb[0].mxu0
        %7803 = vmatprep.mubr.bf16.mxu0 0
        %7804 = vmatmul.mubr.bf16.gmra.mrb[0].mxu0 %v6409
        %v7805 = vpop.f32.mrb[0].mxu0
        %v7806 = vadd.f32 %v7645, %v7805
        %v7807 = vpop.f32.mrb[0].mxu0
        %v7808 = vpop.f32.mrb[0].mxu0
        %v7809 = vadd.f32 %v7648, %v7808
        %v7810 = vpop.f32.mrb[0].mxu0
        %7811 = vmatprep.mubr.bf16.mxu0 0
        %7812 = vmatmul.mubr.bf16.gmra.mrb[0].mxu0 %v6418
        %v7813 = vpop.f32.mrb[0].mxu0
        %v7814 = vadd.f32 %v7653, %v7813
        %v7815 = vpop.f32.mrb[0].mxu0
        %v7816 = vpop.f32.mrb[0].mxu0
        %v7817 = vadd.f32 %v7656, %v7816
        %v7818 = vpop.f32.mrb[0].mxu0
        %7819 = vmatprep.mubr.bf16.mxu0 0
        %7820 = vmatmul.mubr.bf16.gmra.mrb[0].mxu0 %v6427
        %v7821 = vpop.f32.mrb[0].mxu0
        %v7822 = vadd.f32 %v7661, %v7821
        %v7823 = vpop.f32.mrb[0].mxu0
        %v7824 = vpop.f32.mrb[0].mxu0
        %v7825 = vadd.f32 %v7664, %v7824
        %v7826 = vpop.f32.mrb[0].mxu0
        %7827 = vmatprep.mubr.bf16.mxu0 0
        %7828 = vmatmul.mubr.bf16.gmra.mrb[0].mxu0 %v6436
        %v7829 = vpop.f32.mrb[0].mxu0
        %v7830 = vadd.f32 %v7669, %v7829
        %v7831 = vpop.f32.mrb[0].mxu0
        %v7832 = vpop.f32.mrb[0].mxu0
        %v7833 = vadd.f32 %v7672, %v7832
        %v7834 = vpop.f32.mrb[0].mxu0
        %7835 = vmatprep.mubr.bf16.mxu0 0
        %7836 = vmatmul.mubr.bf16.gmra.mrb[0].mxu0 %v6445
        %v7837 = vpop.f32.mrb[0].mxu0
        %v7838 = vadd.f32 %v7677, %v7837
        %v7839 = vpop.f32.mrb[0].mxu0
        %v7840 = vpop.f32.mrb[0].mxu0
        %v7841 = vadd.f32 %v7680, %v7840
        %v7842 = vpop.f32.mrb[0].mxu0
        %7843 = vmatprep.mubr.bf16.mxu0 0
        %7844 = vmatmul.mubr.bf16.gmra.mrb[0].mxu0 %v6454
        %v7845 = vpop.f32.mrb[0].mxu0
        %v7846 = vadd.f32 %v7685, %v7845
        %v7847 = vpop.f32.mrb[0].mxu0
        %v7848 = vpop.f32.mrb[0].mxu0
        %v7849 = vadd.f32 %v7688, %v7848
        %v7850 = vpop.f32.mrb[0].mxu0
        %7851 = vmatprep.mubr.bf16.mxu0 0
        %7852 = vmatmul.mubr.bf16.gmra.mrb[0].mxu0 %v6463
        %v7853 = vpop.f32.mrb[0].mxu0
        %v7854 = vadd.f32 %v7693, %v7853
        %v7855 = vpop.f32.mrb[0].mxu0
        %v7856 = vpop.f32.mrb[0].mxu0
        %v7857 = vadd.f32 %v7696, %v7856
        %v7858 = vpop.f32.mrb[0].mxu0
        %7859 = vmatprep.mubr.bf16.mxu0 0
        %7860 = vmatmul.mubr.bf16.gmra.mrb[0].mxu0 %v6472
        %v7861 = vpop.f32.mrb[0].mxu0
        %v7862 = vadd.f32 %v7701, %v7861
        %v7863 = vpop.f32.mrb[0].mxu0
        %v7864 = vpop.f32.mrb[0].mxu0
        %v7865 = vadd.f32 %v7704, %v7864
        %v7866 = vpop.f32.mrb[0].mxu0
        %7867 = vmatprep.mubr.bf16.mxu0 0
        %7868 = vmatmul.mubr.bf16.gmra.mrb[0].mxu0 %v6481
        %v7869 = vpop.f32.mrb[0].mxu0
        %v7870 = vadd.f32 %v7709, %v7869
        %v7871 = vpop.f32.mrb[0].mxu0
        %v7872 = vpop.f32.mrb[0].mxu0
        %v7873 = vadd.f32 %v7712, %v7872
        %v7874 = vpop.f32.mrb[0].mxu0
        %7875 = vmatprep.mubr.bf16.mxu0 0
        %7876 = vmatmul.mubr.bf16.gmra.mrb[0].mxu0 %v6490
        %v7877 = vpop.f32.mrb[0].mxu0
        %v7878 = vadd.f32 %v7717, %v7877
        %v7879 = vpop.f32.mrb[0].mxu0
        %v7880 = vpop.f32.mrb[0].mxu0
        %v7881 = vadd.f32 %v7720, %v7880
        %v7882 = vpop.f32.mrb[0].mxu0
        %7883 = vmatprep.mubr.bf16.mxu0 0
        %7884 = vmatmul.mubr.bf16.gmra.mrb[0].mxu0 %v6499
        %v7885 = vpop.f32.mrb[0].mxu0
        %v7886 = vadd.f32 %v7725, %v7885
        %v7887 = vpop.f32.mrb[0].mxu0
        %v7888 = vpop.f32.mrb[0].mxu0
        %v7889 = vadd.f32 %v7728, %v7888
        %v7890 = vpop.f32.mrb[0].mxu0
        %7891 = vmatprep.mubr.bf16.mxu0 0
        %7892 = vmatmul.mubr.bf16.gmra.mrb[0].mxu0 %v6508
        %v7893 = vpop.f32.mrb[0].mxu0
        %v7894 = vadd.f32 %v7733, %v7893
        %v7895 = vpop.f32.mrb[0].mxu0
        %v7896 = vpop.f32.mrb[0].mxu0
        %v7897 = vadd.f32 %v7736, %v7896
        %v7898 = vpop.f32.mrb[0].mxu0
        %7899 = vmatprep.mubr.bf16.mxu0 0
        %7900 = vmatmul.mubr.bf16.gmra.mrb[0].mxu0 %v6517
        %v7901 = vpop.f32.mrb[0].mxu0
        %v7902 = vadd.f32 %v7741, %v7901
        %v7903 = vpop.f32.mrb[0].mxu0
        %v7904 = vpop.f32.mrb[0].mxu0
        %v7905 = vadd.f32 %v7744, %v7904
        %v7906 = vpop.f32.mrb[0].mxu0
        %7907 = vmatprep.mubr.bf16.mxu0 0
        %7908 = vmatmul.mubr.bf16.gmra.mrb[0].mxu0 %v6526
        %v7909 = vpop.f32.mrb[0].mxu0
        %v7910 = vadd.f32 %v7749, %v7909
        %v7911 = vpop.f32.mrb[0].mxu0
        %v7912 = vpop.f32.mrb[0].mxu0
        %v7913 = vadd.f32 %v7752, %v7912
        %v7914 = vpop.f32.mrb[0].mxu0
        %7915 = vmatprep.mubr.bf16.mxu0 0
        %7916 = vmatmul.mubr.bf16.gmra.mrb[0].mxu0 %v6535
        %v7917 = vpop.f32.mrb[0].mxu0
        %v7918 = vadd.f32 %v7757, %v7917
        %v7919 = vpop.f32.mrb[0].mxu0
        %v7920 = vpop.f32.mrb[0].mxu0
        %v7921 = vadd.f32 %v7760, %v7920
        %v7922 = vpop.f32.mrb[0].mxu0
        %7923 = vdwg.mxu0
        %v7924 = vmax.f32 %v7798, 0.0
        %v7925 = vmax.f32 %v7801, 0.0
        %v7926 = vmax.f32 %v7806, 0.0
        %v7927 = vmax.f32 %v7809, 0.0
        %v7928 = vmax.f32 %v7814, 0.0
        %v7929 = vmax.f32 %v7817, 0.0
        %v7930 = vmax.f32 %v7822, 0.0
        %v7931 = vmax.f32 %v7825, 0.0
        %v7932 = vmax.f32 %v7830, 0.0
        %v7933 = vmax.f32 %v7833, 0.0
        %v7934 = vmax.f32 %v7838, 0.0
        %v7935 = vmax.f32 %v7841, 0.0
        %v7936 = vmax.f32 %v7846, 0.0
        %v7937 = vmax.f32 %v7849, 0.0
        %v7938 = vmax.f32 %v7854, 0.0
        %v7939 = vmax.f32 %v7857, 0.0
        %v7940 = vmax.f32 %v7862, 0.0
        %v7941 = vmax.f32 %v7865, 0.0
        %v7942 = vmax.f32 %v7870, 0.0
        %v7943 = vmax.f32 %v7873, 0.0
        %v7944 = vmax.f32 %v7878, 0.0
        %v7945 = vmax.f32 %v7881, 0.0
        %v7946 = vmax.f32 %v7886, 0.0
        %v7947 = vmax.f32 %v7889, 0.0
        %v7948 = vmax.f32 %v7894, 0.0
        %v7949 = vmax.f32 %v7897, 0.0
        %v7950 = vmax.f32 %v7902, 0.0
        %v7951 = vmax.f32 %v7905, 0.0
        %v7952 = vmax.f32 %v7910, 0.0
        %v7953 = vmax.f32 %v7913, 0.0
        %v7954 = vmax.f32 %v7918, 0.0
        %v7955 = vmax.f32 %v7921, 0.0
        %7956 = vst [vmem:[%s308] sm:$0xff] %v7924
        %7957 = vst [vmem:[%s308 + $0x8] sm:$0xff] %v7925
        %7958 = vst [vmem:[%s308 + $0x10] sm:$0xff] %v7926
        %7959 = vst [vmem:[%s308 + $0x18] sm:$0xff] %v7927
        %7960 = vst [vmem:[%s308 + $0x20] sm:$0xff] %v7928
        %7961 = vst [vmem:[%s308 + $0x28] sm:$0xff] %v7929
        %7962 = vst [vmem:[%s308 + $0x30] sm:$0xff] %v7930
        %7963 = vst [vmem:[%s308 + $0x38] sm:$0xff] %v7931
        %7964 = vst [vmem:[%s308 + $0x40] sm:$0xff] %v7932
        %7965 = vst [vmem:[%s308 + $0x48] sm:$0xff] %v7933
        %7966 = vst [vmem:[%s308 + $0x50] sm:$0xff] %v7934
        %7967 = vst [vmem:[%s308 + $0x58] sm:$0xff] %v7935
        %7968 = vst [vmem:[%s308 + $0x60] sm:$0xff] %v7936
        %7969 = vst [vmem:[%s308 + $0x68] sm:$0xff] %v7937
        %7970 = vst [vmem:[%s308 + $0x70] sm:$0xff] %v7938
        %7971 = vst [vmem:[%s308 + $0x78] sm:$0xff] %v7939
        %7972 = vst [vmem:[%s308 + $0x80] sm:$0xff] %v7940
        %7973 = vst [vmem:[%s308 + $0x88] sm:$0xff] %v7941
        %7974 = vst [vmem:[%s308 + $0x90] sm:$0xff] %v7942
        %7975 = vst [vmem:[%s308 + $0x98] sm:$0xff] %v7943
        %7976 = vst [vmem:[%s308 + $0xa0] sm:$0xff] %v7944
        %7977 = vst [vmem:[%s308 + $0xa8] sm:$0xff] %v7945
        %7978 = vst [vmem:[%s308 + $0xb0] sm:$0xff] %v7946
        %7979 = vst [vmem:[%s308 + $0xb8] sm:$0xff] %v7947
        %7980 = vst [vmem:[%s308 + $0xc0] sm:$0xff] %v7948
        %7981 = vst [vmem:[%s308 + $0xc8] sm:$0xff] %v7949
        %7982 = vst [vmem:[%s308 + $0xd0] sm:$0xff] %v7950
        %7983 = vst [vmem:[%s308 + $0xd8] sm:$0xff] %v7951
        %7984 = vst [vmem:[%s308 + $0xe0] sm:$0xff] %v7952
        %7985 = vst [vmem:[%s308 + $0xe8] sm:$0xff] %v7953
        %7986 = vst [vmem:[%s308 + $0xf0] sm:$0xff] %v7954
        %7987 = vst [vmem:[%s308 + $0xf8] sm:$0xff] %v7955
        %p7988 = scmp.lt.s32.totalorder %s20, 1
        %s7989 = scalar_select %p7988, %s20, 1
        %s7990 = smul.addr %s7989, 32
        %s7991 = smul.addr %s7990, 8
        %s7992 = scalar_lea.vmem %s7, %s7991
        // Predicated region
        $region57: #{pool_forward.1} parent=47 // pred_check
          %p7993 = pneg %p190
        $region58: #{pool_forward.1} parent=47 // pred_check_branch
          %7995 = sbr.rel (%p7993) target = $region60
        $region59: #{pool_forward.1} parent=47 // pred_region
          _
        $region60: #{pool_forward.1} parent=47 // pred_fallthru
          _
      $region48: #{pool_forward.1} parent=5 // pred_fallthru
        _
      %p7996 = scmp.le.s32.totalorder 2, %s15
      // Predicated region
      $region61: #{pool_forward.1} parent=5 // pred_check
        %p7997 = pneg %p7996
      $region62: #{pool_forward.1} parent=5 // pred_check_branch
        %7999 = sbr.rel (%p7997) target = $region64
      $region63: #{pool_forward.1} parent=5 // pred_region
        %s8000 = ssub.s32 %s15, 2
        // Predicated region
        $region65: #{pool_forward.1} parent=63 // pred_check
          %p8001 = pneg %p196
        $region66: #{pool_forward.1} parent=63 // pred_check_branch
          %8003 = sbr.rel (%p8001) target = $region68
        $region67: #{pool_forward.1} parent=63 // pred_region
          %p8004 = scmp.lt.s32.totalorder %s21, 1
          %s8005 = scalar_select %p8004, %s21, 1
          %s8006 = smul.addr %s8005, 32
          %s8007 = smul.addr %s8006, 8
          %s8008 = scalar_lea.vmem %s7, %s8007
        $region68: #{pool_forward.1} parent=63 // pred_fallthru
          _
      $region64: #{pool_forward.1} parent=5 // pred_fallthru
        _
    $region6: #{pool_forward.1} parent=1 // loop_footer
      %s19 = sadd.s32 1, %s15
    $region7: #{pool_forward.1} parent=1 // loop_footer_branch
      %14 = sbr.rel target = $region3
    $region8: #{pool_forward.1} parent=1 // loop_exit
      _
    %8009 = vsyncpa [#allocation3], 1
    %s8010 = scalar_lea.sflag [#allocation3], 1
    %8011 = vsyncpa %s8010, 1
    %8012 = vsyncpa [#allocation5], 1

</llo_original>
